<compile_context>
chip_gen: v7x
topology: tpu7x:2x2x1
jax: 0.10.0
libtpu: 0.0.40
codegen_flags: <defaults>
</compile_context>

<pallas_src>
import numpy as np

import jax
import jax.numpy as jnp
from jax.experimental import pallas as pl
from jax.experimental.pallas import tpu as pltpu

# ----------------------------- configuration -------------------------------
B = 2            # batch
T = 2            # num_frames
C_IN = 3         # in_chans
IMG = 16         # img_size
PATCH = 8        # patch_size
EMBED = 32       # embed_dim
DEPTH = 2        # depth
NUM_HEADS = 4    # num_heads
MLP_RATIO = 4.0
HIDDEN = int(EMBED * MLP_RATIO)
GRID_P = IMG // PATCH
NUM_PATCHES = GRID_P * GRID_P          # n = spatial tokens per frame
HEAD_DIM = EMBED // NUM_HEADS
SCALE = HEAD_DIM ** (-0.5)
LN_EPS = 1e-5
NEG = -1e30                            # additive mask value (exp underflows to 0)

GRP = NUM_PATCHES + 1                  # rows per (batch, frame) group: [cls, hw...]
ROWS = B * T * GRP                     # folded-batch state rows
CPP = C_IN * PATCH * PATCH             # flattened patch size

# packed-slab row offsets
W32_PB = 192                           # rows of patch_w in the w32 slab
W32_PER_BLOCK = 32 + 128 + 128         # tfc_w + fc1_w^T + fc2_w
VB0 = ROWS + 2                         # vecs: tok_bias rows, norm_g, norm_b, then blocks
VECS_PER_BLOCK = 10


# ------------------------- constant masks / routing -------------------------
def _aux_constants():
    """(4, ROWS, ROWS): [temporal mask, spatial mask, temporal route, spatial route]."""
    rows = ROWS

    def bof(r): return r // (T * GRP)
    def tof(r): return (r % (T * GRP)) // GRP
    def kof(r): return r % GRP          # 0 = cls copy, 1..n = spatial token hw+1

    mask_t = np.full((rows, rows), NEG, np.float32)
    mask_s = np.full((rows, rows), NEG, np.float32)
    route_t = np.zeros((rows, rows), np.float32)
    route_s = np.zeros((rows, rows), np.float32)
    for i in range(rows):
        bi, ti, ki = bof(i), tof(i), kof(i)
        for j in range(rows):
            bj, tj, kj = bof(j), tof(j), kof(j)
            # temporal attention: token rows attend within same (batch, spatial pos)
            if ki > 0 and kj > 0 and bi == bj and ki == kj:
                mask_t[i, j] = 0.0
            # spatial attention: rows attend within same (batch, frame) group
            if bi == bj and ti == tj:
                mask_s[i, j] = 0.0
        if ki == 0:
            mask_t[i, i] = 0.0          # cls rows attend to themselves (output discarded)
            for j in range(rows):
                if bof(j) == bi and kof(j) == 0:
                    route_s[i, j] = 1.0 / T   # per-batch mean of spatial cls residuals
        else:
            route_t[i, i] = 1.0          # temporal residual only hits token rows
            route_s[i, i] = 1.0          # spatial residual hits token rows unchanged
    return jnp.asarray(np.stack([mask_t, mask_s, route_t, route_s]))


# ------------------------------ fused kernel --------------------------------
def _fused_vit_kernel(patches_ref, attnw_ref, w32_ref, vecs_ref, aux_ref,
                      fc1b_ref, o_ref):
    f32 = jnp.float32
    bf16 = jnp.bfloat16

    def vec(r):                                   # (1, D) f32 row of the bias/norm slab
        return vecs_ref[r:r + 1, :]

    def ln(x2d, g, b):
        mu = jnp.mean(x2d, axis=-1, keepdims=True)
        var = jnp.mean((x2d - mu) ** 2, axis=-1, keepdims=True)
        return (x2d - mu) * jax.lax.rsqrt(var + LN_EPS) * g + b

    def mha(xin, widx, bo, mask):
        # attnw_ref[widx + 0..3] -> wq / wk / wv / wo, each (H, head_dim, D) bf16,
        # softmax scale already folded into wq.  All einsums are plain batched
        # matmuls with head leading — no reshapes, transposes or lane slices.
        xb = jnp.broadcast_to(xin.astype(bf16)[None, :, :], (NUM_HEADS, ROWS, EMBED))
        q = jnp.einsum('hnc,hdc->hnd', xb, attnw_ref[widx + 0],
                       preferred_element_type=f32)
        k = jnp.einsum('hnc,hdc->hnd', xb, attnw_ref[widx + 1],
                       preferred_element_type=f32)
        v = jnp.einsum('hnc,hdc->hnd', xb, attnw_ref[widx + 2],
                       preferred_element_type=f32)
        s = jnp.einsum('hnd,hmd->hnm', q.astype(bf16), k.astype(bf16),
                       preferred_element_type=f32) + mask
        s = s - jnp.max(s, axis=-1, keepdims=True)
        e = jnp.exp(s)
        p = e * pl.reciprocal(jnp.sum(e, axis=-1, keepdims=True), approx=True)
        o = jnp.einsum('hnm,hmd->hnd', p.astype(bf16), v.astype(bf16),
                       preferred_element_type=f32)
        o = jnp.einsum('hnd,hde->hne', o.astype(bf16), attnw_ref[widx + 3],
                       preferred_element_type=f32)
        return jnp.sum(o, axis=0) + bo                                    # (ROWS, D)

    mask_t = aux_ref[0]
    mask_s = aux_ref[1]
    route_t = aux_ref[2]
    route_s = aux_ref[3]

    # --- PatchEmbed GEMM + cls / positional / temporal embeddings ---
    # cls rows carry zero patches, so the GEMM contributes nothing there; the
    # bias slab carries cls_token + pos_embed[0] for those rows and
    # patch_b + pos_embed[1+hw] + time_embed[t] for token rows.
    x = jnp.dot(patches_ref[...].astype(bf16), w32_ref[0:CPP, :],
                preferred_element_type=f32) + vecs_ref[0:ROWS, :]

    # --- transformer blocks (unrolled, fully VMEM resident) ---
    for li in range(DEPTH):
        vb = VB0 + li * VECS_PER_BLOCK
        wb = W32_PB + li * W32_PER_BLOCK
        ab = li * 8

        # temporal attention (token rows attend within their (b, hw) group)
        att_t = mha(ln(x, vec(vb + 0), vec(vb + 1)), ab + 0, vec(vb + 2), mask_t)
        res_t = jnp.dot(att_t.astype(jnp.bfloat16), w32_ref[wb:wb + 32, :],
                        preferred_element_type=f32) + vec(vb + 3)
        x = x + jnp.dot(route_t, res_t, preferred_element_type=f32)

        # spatial attention (rows attend within their (b, t) group incl. cls copy)
        att_s = mha(ln(x, vec(vb + 4), vec(vb + 5)), ab + 4, vec(vb + 6), mask_s)
        x = x + jnp.dot(route_s, att_s, preferred_element_type=f32)

        # MLP (row-wise; the replicated cls copies stay consistent automatically)
        h = ln(x, vec(vb + 7), vec(vb + 8)).astype(jnp.bfloat16)
        h1 = jnp.einsum('nc,kc->nk', h, w32_ref[wb + 32:wb + 160, :],
                        preferred_element_type=f32) + fc1b_ref[li]
        h1 = 0.5 * h1 * (1.0 + jax.lax.erf(h1 * (2.0 ** -0.5)))          # exact GELU
        h2 = jnp.dot(h1.astype(jnp.bfloat16), w32_ref[wb + 160:wb + 288, :],
                     preferred_element_type=f32) + vec(vb + 9)
        x = x + h2

    # final LayerNorm; module returns norm(x)[:, 0] -> per-batch cls row
    xn = ln(x, vec(ROWS), vec(ROWS + 1))
    for bb in range(B):
        r = bb * T * GRP
        o_ref[bb:bb + 1, :] = xn[r:r + 1, :]


# ------------------------------- wrapper -------------------------------------
def vit_forward(x, params):
    """x: (B, T, C, H, W) float32 -> (B, EMBED)."""
    Bb, Tt, Cc, Hh, Ww = x.shape
    assert (Bb, Tt, Cc, Hh, Ww) == (B, T, C_IN, IMG, IMG)
    D = EMBED
    f32 = jnp.float32
    bf16 = jnp.bfloat16

    # Patch extraction into the kernel row layout (b, t, [cls(=0 patch), hw...]);
    # per-patch flatten order is (c, py, px), matching the Conv2d weight layout.
    pt = (x.reshape(B, T, C_IN, GRID_P, PATCH, GRID_P, PATCH)
            .transpose(0, 1, 3, 5, 2, 4, 6)
            .reshape(B, T, NUM_PATCHES, CPP))
    patches = jnp.concatenate(
        [jnp.zeros((B, T, 1, CPP), f32), pt], axis=2).reshape(ROWS, CPP)

    # Per-row additive bias slab (cls token + pos/time embeddings + patch bias).
    cls_row = params["cls_token"].reshape(1, D) + params["pos_embed"][0, 0:1, :]
    pos_sp = params["pos_embed"][0, 1:, :]                                 # (n, D)
    time_e = params["time_embed"][0]                                       # (T, D)
    tok_b = (params["patch_b"].reshape(1, 1, 1, D)
             + pos_sp[None, None, :, :] + time_e[None, :, None, :])
    tok_b = jnp.broadcast_to(tok_b, (B, T, NUM_PATCHES, D))
    cls_b = jnp.broadcast_to(cls_row.reshape(1, 1, 1, D), (B, T, 1, D))
    tok_bias = jnp.concatenate([cls_b, tok_b], axis=2).reshape(ROWS, D)

    # Head-major attention weights, softmax scale folded into Q.
    def attn_pack(wqkv, wproj):
        wq = (wqkv[:, 0:D] * SCALE).T.reshape(NUM_HEADS, HEAD_DIM, D)
        wk = wqkv[:, D:2 * D].T.reshape(NUM_HEADS, HEAD_DIM, D)
        wv = wqkv[:, 2 * D:3 * D].T.reshape(NUM_HEADS, HEAD_DIM, D)
        wo = wproj.reshape(NUM_HEADS, HEAD_DIM, D)
        return [wq, wk, wv, wo]

    aw = []
    w32_rows = [params["patch_w"]]
    vec_rows = [tok_bias, params["norm_g"].reshape(1, D), params["norm_b"].reshape(1, D)]
    fc1b_rows = []
    for blk in params["blocks"]:
        aw += attn_pack(blk["tqkv_w"], blk["tproj_w"])
        aw += attn_pack(blk["qkv_w"], blk["proj_w"])
        w32_rows += [blk["tfc_w"], blk["fc1_w"].T, blk["fc2_w"]]
        vec_rows += [blk["tnorm1_g"].reshape(1, D), blk["tnorm1_b"].reshape(1, D),
                     blk["tproj_b"].reshape(1, D), blk["tfc_b"].reshape(1, D),
                     blk["norm1_g"].reshape(1, D), blk["norm1_b"].reshape(1, D),
                     blk["proj_b"].reshape(1, D),
                     blk["norm2_g"].reshape(1, D), blk["norm2_b"].reshape(1, D),
                     blk["fc2_b"].reshape(1, D)]
        fc1b_rows.append(blk["fc1_b"].reshape(1, HIDDEN))

    attn_w = jnp.stack(aw, axis=0).astype(bf16)            # (DEPTH*2*4, H, hd, D)
    w32 = jnp.concatenate(w32_rows, axis=0).astype(bf16)   # (192 + DEPTH*288, D)
    vecs = jnp.concatenate(vec_rows, axis=0)               # (ROWS + 2 + DEPTH*10, D) f32
    fc1b = jnp.stack(fc1b_rows, axis=0)                    # (DEPTH, 1, HIDDEN) f32
    aux = _aux_constants()                                  # (4, ROWS, ROWS) f32

    inputs = [patches, attn_w, w32, vecs, aux, fc1b]
    in_specs = [pl.BlockSpec(a.shape, lambda i, nd=a.ndim: (0,) * nd) for a in inputs]

    out = pl.pallas_call(
        _fused_vit_kernel,
        out_shape=jax.ShapeDtypeStruct((B, D), f32),
        grid=(1,),
        in_specs=in_specs,
        out_specs=pl.BlockSpec((B, D), lambda i: (0, 0)),
        compiler_params=pltpu.CompilerParams(dimension_semantics=("arbitrary",)),
    )(*inputs)
    return out


# ----------------------------- parameter init -------------------------------
def init_params(key):
    keys = iter(jax.random.split(key, 128))

    def nrm(shape, std=0.02):
        return std * jax.random.normal(next(keys), shape, jnp.float32)

    params = {
        # conv weight (D, C, p, p) flattened to (C*p*p, D) in (c, py, px) order
        "patch_w": nrm((CPP, EMBED)),
        "patch_b": nrm((EMBED,)),
        "cls_token": nrm((1, 1, EMBED)),
        "pos_embed": nrm((1, NUM_PATCHES + 1, EMBED)),
        "time_embed": jnp.zeros((1, T, EMBED), jnp.float32),   # torch.zeros init
        "norm_g": jnp.ones((EMBED,), jnp.float32),
        "norm_b": jnp.zeros((EMBED,), jnp.float32),
        "blocks": [],
    }
    for i in range(DEPTH):
        blk = {
            "norm1_g": jnp.ones((EMBED,), jnp.float32),
            "norm1_b": jnp.zeros((EMBED,), jnp.float32),
            "qkv_w": nrm((EMBED, 3 * EMBED)),                  # qkv_bias=False
            "proj_w": nrm((EMBED, EMBED)),
            "proj_b": jnp.zeros((EMBED,), jnp.float32),
            "tnorm1_g": jnp.ones((EMBED,), jnp.float32),
            "tnorm1_b": jnp.zeros((EMBED,), jnp.float32),
            "tqkv_w": nrm((EMBED, 3 * EMBED)),
            "tproj_w": nrm((EMBED, EMBED)),
            "tproj_b": jnp.zeros((EMBED,), jnp.float32),
            # temporal_fc is zero-initialized for all blocks except the first
            "tfc_w": nrm((EMBED, EMBED)) if i == 0 else jnp.zeros((EMBED, EMBED), jnp.float32),
            "tfc_b": jnp.zeros((EMBED,), jnp.float32),
            "norm2_g": jnp.ones((EMBED,), jnp.float32),
            "norm2_b": jnp.zeros((EMBED,), jnp.float32),
            "fc1_w": nrm((EMBED, HIDDEN)),
            "fc1_b": jnp.zeros((HIDDEN,), jnp.float32),
            "fc2_w": nrm((HIDDEN, EMBED)),
            "fc2_b": jnp.zeros((EMBED,), jnp.float32),
        }
        params["blocks"].append(blk)
    return params


# ---------------------------------- main -------------------------------------
if __name__ == "__main__":
    key = jax.random.PRNGKey(0)
    pkey, xkey = jax.random.split(key)
    params = init_params(pkey)
    x = jax.random.normal(xkey, (B, T, C_IN, IMG, IMG), jnp.float32)

    fwd = jax.jit(vit_forward)
    out = fwd(x, params)
    out = jax.block_until_ready(out)

    assert out.shape == (B, EMBED), out.shape
    assert bool(jnp.all(jnp.isfinite(out)))
    print("KERNEL_OK")
</pallas_src>

<mosaic_0001>
module attributes {stable_mosaic.version = 11 : i64} {
  func.func @_fused_vit_kernel(%arg0: i32, %arg1: memref<20x192xf32, #tpu.memory_space<vmem>>, %arg2: memref<16x4x8x32xbf16, #tpu.memory_space<vmem>>, %arg3: memref<768x32xbf16, #tpu.memory_space<vmem>>, %arg4: memref<42x32xf32, #tpu.memory_space<vmem>>, %arg5: memref<4x20x20xf32, #tpu.memory_space<vmem>>, %arg6: memref<2x1x128xf32, #tpu.memory_space<vmem>>, %arg7: memref<2x32xf32, #tpu.memory_space<vmem>>) attributes {dimension_semantics = [#tpu.dimension_semantics<arbitrary>], iteration_bounds = array<i64: 1>, scalar_prefetch = 0 : i64, scratch_operands = 0 : i64, tpu.core_type = #tpu.core_type<tc>, window_params = [{pipeline_mode = #tpu.pipeline_mode<synchronous>, transform_indices = @transform_0, window_bounds = array<i64: 20, 192>}, {pipeline_mode = #tpu.pipeline_mode<synchronous>, transform_indices = @transform_1, window_bounds = array<i64: 16, 4, 8, 32>}, {pipeline_mode = #tpu.pipeline_mode<synchronous>, transform_indices = @transform_2, window_bounds = array<i64: 768, 32>}, {pipeline_mode = #tpu.pipeline_mode<synchronous>, transform_indices = @transform_3, window_bounds = array<i64: 42, 32>}, {pipeline_mode = #tpu.pipeline_mode<synchronous>, transform_indices = @transform_4, window_bounds = array<i64: 4, 20, 20>}, {pipeline_mode = #tpu.pipeline_mode<synchronous>, transform_indices = @transform_5, window_bounds = array<i64: 2, 1, 128>}, {pipeline_mode = #tpu.pipeline_mode<synchronous>, transform_indices = @transform_6, window_bounds = array<i64: 2, 32>}]} {
    %c0 = arith.constant 0 : index
    %c0_0 = arith.constant 0 : index
    %c0_1 = arith.constant 0 : index
    %0 = vector.load %arg5[%c0, %c0_0, %c0_1] : memref<4x20x20xf32, #tpu.memory_space<vmem>>, vector<1x20x20xf32>
    %1 = vector.shape_cast %0 : vector<1x20x20xf32> to vector<20x20xf32>
    %c1 = arith.constant 1 : index
    %c0_2 = arith.constant 0 : index
    %c0_3 = arith.constant 0 : index
    %2 = vector.load %arg5[%c1, %c0_2, %c0_3] : memref<4x20x20xf32, #tpu.memory_space<vmem>>, vector<1x20x20xf32>
    %3 = vector.shape_cast %2 : vector<1x20x20xf32> to vector<20x20xf32>
    %c2 = arith.constant 2 : index
    %c0_4 = arith.constant 0 : index
    %c0_5 = arith.constant 0 : index
    %4 = vector.load %arg5[%c2, %c0_4, %c0_5] : memref<4x20x20xf32, #tpu.memory_space<vmem>>, vector<1x20x20xf32>
    %5 = vector.shape_cast %4 : vector<1x20x20xf32> to vector<20x20xf32>
    %c3 = arith.constant 3 : index
    %c0_6 = arith.constant 0 : index
    %c0_7 = arith.constant 0 : index
    %6 = vector.load %arg5[%c3, %c0_6, %c0_7] : memref<4x20x20xf32, #tpu.memory_space<vmem>>, vector<1x20x20xf32>
    %7 = vector.shape_cast %6 : vector<1x20x20xf32> to vector<20x20xf32>
    %c0_8 = arith.constant 0 : index
    %c0_9 = arith.constant 0 : index
    %8 = vector.load %arg1[%c0_8, %c0_9] : memref<20x192xf32, #tpu.memory_space<vmem>>, vector<20x192xf32>
    %9 = arith.truncf %8 : vector<20x192xf32> to vector<20x192xbf16>
    %c0_10 = arith.constant 0 : index
    %c0_11 = arith.constant 0 : index
    %10 = vector.load %arg3[%c0_10, %c0_11] : memref<768x32xbf16, #tpu.memory_space<vmem>>, vector<192x32xbf16>
    %cst = arith.constant dense<0.000000e+00> : vector<20x32xf32>
    %11 = tpu.matmul %9, %10, %cst {dimension_numbers = #tpu.dot_dimension_numbers<[1], [0], [0], [1], [0, 0, 1, 1], [], []>} : vector<20x192xbf16>, vector<192x32xbf16>, vector<20x32xf32> -> vector<20x32xf32>
    %c0_12 = arith.constant 0 : index
    %c0_13 = arith.constant 0 : index
    %12 = vector.load %arg4[%c0_12, %c0_13] : memref<42x32xf32, #tpu.memory_space<vmem>>, vector<20x32xf32>
    %13 = arith.addf %11, %12 : vector<20x32xf32>
    %c22 = arith.constant 22 : index
    %c0_14 = arith.constant 0 : index
    %14 = vector.load %arg4[%c22, %c0_14] : memref<42x32xf32, #tpu.memory_space<vmem>>, vector<1x32xf32>
    %c23 = arith.constant 23 : index
    %c0_15 = arith.constant 0 : index
    %15 = vector.load %arg4[%c23, %c0_15] : memref<42x32xf32, #tpu.memory_space<vmem>>, vector<1x32xf32>
    %cst_16 = arith.constant dense<0.000000e+00> : vector<20xf32>
    %16 = vector.multi_reduction <add>, %13, %cst_16 [1] : vector<20x32xf32> to vector<20xf32>
    %17 = vector.shape_cast %16 : vector<20xf32> to vector<20x1xf32>
    %cst_17 = arith.constant 3.200000e+01 : f32
    %18 = vector.broadcast %cst_17 : f32 to vector<20x1xf32>
    %19 = arith.divf %17, %18 : vector<20x1xf32>
    %20 = vector.broadcast %19 : vector<20x1xf32> to vector<20x32xf32>
    %21 = arith.subf %13, %20 : vector<20x32xf32>
    %22 = arith.mulf %21, %21 : vector<20x32xf32>
    %cst_18 = arith.constant dense<0.000000e+00> : vector<20xf32>
    %23 = vector.multi_reduction <add>, %22, %cst_18 [1] : vector<20x32xf32> to vector<20xf32>
    %24 = vector.shape_cast %23 : vector<20xf32> to vector<20x1xf32>
    %cst_19 = arith.constant 3.200000e+01 : f32
    %25 = vector.broadcast %cst_19 : f32 to vector<20x1xf32>
    %26 = arith.divf %24, %25 : vector<20x1xf32>
    %27 = vector.broadcast %19 : vector<20x1xf32> to vector<20x32xf32>
    %28 = arith.subf %13, %27 : vector<20x32xf32>
    %cst_20 = arith.constant 9.99999974E-6 : f32
    %29 = vector.broadcast %cst_20 : f32 to vector<20x1xf32>
    %30 = arith.addf %26, %29 : vector<20x1xf32>
    %31 = math.rsqrt %30 : vector<20x1xf32>
    %32 = vector.broadcast %31 : vector<20x1xf32> to vector<20x32xf32>
    %33 = arith.mulf %28, %32 : vector<20x32xf32>
    %34 = vector.broadcast %14 : vector<1x32xf32> to vector<20x32xf32>
    %35 = arith.mulf %33, %34 : vector<20x32xf32>
    %36 = vector.broadcast %15 : vector<1x32xf32> to vector<20x32xf32>
    %37 = arith.addf %35, %36 : vector<20x32xf32>
    %c24 = arith.constant 24 : index
    %c0_21 = arith.constant 0 : index
    %38 = vector.load %arg4[%c24, %c0_21] : memref<42x32xf32, #tpu.memory_space<vmem>>, vector<1x32xf32>
    %39 = arith.truncf %37 : vector<20x32xf32> to vector<20x32xbf16>
    %40 = vector.shape_cast %39 : vector<20x32xbf16> to vector<1x20x32xbf16>
    %41 = vector.shape_cast %40 : vector<1x20x32xbf16> to vector<1x20x32xbf16>
    %42 = vector.broadcast %41 : vector<1x20x32xbf16> to vector<4x20x32xbf16>
    %c0_22 = arith.constant 0 : index
    %c0_23 = arith.constant 0 : index
    %c0_24 = arith.constant 0 : index
    %c0_25 = arith.constant 0 : index
    %43 = vector.load %arg2[%c0_22, %c0_23, %c0_24, %c0_25] : memref<16x4x8x32xbf16, #tpu.memory_space<vmem>>, vector<1x4x8x32xbf16>
    %44 = vector.shape_cast %43 : vector<1x4x8x32xbf16> to vector<4x8x32xbf16>
    "tpu.trace_start"() <{level = 10 : i32, message = "hnc,hdc->hnd"}> : () -> ()
    %cst_26 = arith.constant dense<0.000000e+00> : vector<4x20x8xf32>
    %45 = tpu.matmul %42, %44, %cst_26 {dimension_numbers = #tpu.dot_dimension_numbers<[2], [2], [1], [1], [0, 0, 0, 1, 1, 1], [0], [0]>} : vector<4x20x32xbf16>, vector<4x8x32xbf16>, vector<4x20x8xf32> -> vector<4x20x8xf32>
    "tpu.trace_stop"() : () -> ()
    %c1_27 = arith.constant 1 : index
    %c0_28 = arith.constant 0 : index
    %c0_29 = arith.constant 0 : index
    %c0_30 = arith.constant 0 : index
    %46 = vector.load %arg2[%c1_27, %c0_28, %c0_29, %c0_30] : memref<16x4x8x32xbf16, #tpu.memory_space<vmem>>, vector<1x4x8x32xbf16>
    %47 = vector.shape_cast %46 : vector<1x4x8x32xbf16> to vector<4x8x32xbf16>
    "tpu.trace_start"() <{level = 10 : i32, message = "hnc,hdc->hnd"}> : () -> ()
    %cst_31 = arith.constant dense<0.000000e+00> : vector<4x20x8xf32>
    %48 = tpu.matmul %42, %47, %cst_31 {dimension_numbers = #tpu.dot_dimension_numbers<[2], [2], [1], [1], [0, 0, 0, 1, 1, 1], [0], [0]>} : vector<4x20x32xbf16>, vector<4x8x32xbf16>, vector<4x20x8xf32> -> vector<4x20x8xf32>
    "tpu.trace_stop"() : () -> ()
    %c2_32 = arith.constant 2 : index
    %c0_33 = arith.constant 0 : index
    %c0_34 = arith.constant 0 : index
    %c0_35 = arith.constant 0 : index
    %49 = vector.load %arg2[%c2_32, %c0_33, %c0_34, %c0_35] : memref<16x4x8x32xbf16, #tpu.memory_space<vmem>>, vector<1x4x8x32xbf16>
    %50 = vector.shape_cast %49 : vector<1x4x8x32xbf16> to vector<4x8x32xbf16>
    "tpu.trace_start"() <{level = 10 : i32, message = "hnc,hdc->hnd"}> : () -> ()
    %cst_36 = arith.constant dense<0.000000e+00> : vector<4x20x8xf32>
    %51 = tpu.matmul %42, %50, %cst_36 {dimension_numbers = #tpu.dot_dimension_numbers<[2], [2], [1], [1], [0, 0, 0, 1, 1, 1], [0], [0]>} : vector<4x20x32xbf16>, vector<4x8x32xbf16>, vector<4x20x8xf32> -> vector<4x20x8xf32>
    "tpu.trace_stop"() : () -> ()
    %52 = arith.truncf %45 : vector<4x20x8xf32> to vector<4x20x8xbf16>
    %53 = arith.truncf %48 : vector<4x20x8xf32> to vector<4x20x8xbf16>
    "tpu.trace_start"() <{level = 10 : i32, message = "hnd,hmd->hnm"}> : () -> ()
    %cst_37 = arith.constant dense<0.000000e+00> : vector<4x20x20xf32>
    %54 = tpu.matmul %52, %53, %cst_37 {dimension_numbers = #tpu.dot_dimension_numbers<[2], [2], [1], [1], [0, 0, 0, 1, 1, 1], [0], [0]>} : vector<4x20x8xbf16>, vector<4x20x8xbf16>, vector<4x20x20xf32> -> vector<4x20x20xf32>
    "tpu.trace_stop"() : () -> ()
    %55 = vector.shape_cast %1 : vector<20x20xf32> to vector<1x20x20xf32>
    %56 = vector.broadcast %55 : vector<1x20x20xf32> to vector<4x20x20xf32>
    %57 = arith.addf %54, %56 : vector<4x20x20xf32>
    %cst_38 = arith.constant dense<0xFF800000> : vector<4x20xf32>
    %58 = vector.multi_reduction <maximumf>, %57, %cst_38 [2] : vector<4x20x20xf32> to vector<4x20xf32>
    %59 = vector.shape_cast %58 : vector<4x20xf32> to vector<4x20x1xf32>
    %60 = vector.broadcast %59 : vector<4x20x1xf32> to vector<4x20x20xf32>
    %61 = arith.subf %57, %60 : vector<4x20x20xf32>
    %62 = math.exp %61 : vector<4x20x20xf32>
    %cst_39 = arith.constant dense<0.000000e+00> : vector<4x20xf32>
    %63 = vector.multi_reduction <add>, %62, %cst_39 [2] : vector<4x20x20xf32> to vector<4x20xf32>
    %64 = vector.shape_cast %63 : vector<4x20xf32> to vector<4x20x1xf32>
    %65 = tpu.reciprocal %64 {approx = true} : vector<4x20x1xf32> -> vector<4x20x1xf32>
    %66 = vector.broadcast %65 : vector<4x20x1xf32> to vector<4x20x20xf32>
    %67 = arith.mulf %62, %66 : vector<4x20x20xf32>
    %68 = arith.truncf %67 : vector<4x20x20xf32> to vector<4x20x20xbf16>
    %69 = arith.truncf %51 : vector<4x20x8xf32> to vector<4x20x8xbf16>
    "tpu.trace_start"() <{level = 10 : i32, message = "hnm,hmd->hnd"}> : () -> ()
    %cst_40 = arith.constant dense<0.000000e+00> : vector<4x20x8xf32>
    %70 = tpu.matmul %68, %69, %cst_40 {dimension_numbers = #tpu.dot_dimension_numbers<[2], [1], [1], [2], [0, 0, 0, 1, 1, 2], [0], [0]>} : vector<4x20x20xbf16>, vector<4x20x8xbf16>, vector<4x20x8xf32> -> vector<4x20x8xf32>
    "tpu.trace_stop"() : () -> ()
    %71 = arith.truncf %70 : vector<4x20x8xf32> to vector<4x20x8xbf16>
    %c3_41 = arith.constant 3 : index
    %c0_42 = arith.constant 0 : index
    %c0_43 = arith.constant 0 : index
    %c0_44 = arith.constant 0 : index
    %72 = vector.load %arg2[%c3_41, %c0_42, %c0_43, %c0_44] : memref<16x4x8x32xbf16, #tpu.memory_space<vmem>>, vector<1x4x8x32xbf16>
    %73 = vector.shape_cast %72 : vector<1x4x8x32xbf16> to vector<4x8x32xbf16>
    "tpu.trace_start"() <{level = 10 : i32, message = "hnd,hde->hne"}> : () -> ()
    %cst_45 = arith.constant dense<0.000000e+00> : vector<4x20x32xf32>
    %74 = tpu.matmul %71, %73, %cst_45 {dimension_numbers = #tpu.dot_dimension_numbers<[2], [1], [1], [2], [0, 0, 0, 1, 1, 2], [0], [0]>} : vector<4x20x8xbf16>, vector<4x8x32xbf16>, vector<4x20x32xf32> -> vector<4x20x32xf32>
    "tpu.trace_stop"() : () -> ()
    %cst_46 = arith.constant dense<0.000000e+00> : vector<20x32xf32>
    %75 = vector.multi_reduction <add>, %74, %cst_46 [0] : vector<4x20x32xf32> to vector<20x32xf32>
    %76 = vector.broadcast %38 : vector<1x32xf32> to vector<20x32xf32>
    %77 = arith.addf %75, %76 : vector<20x32xf32>
    %78 = arith.truncf %77 : vector<20x32xf32> to vector<20x32xbf16>
    %c192 = arith.constant 192 : index
    %c0_47 = arith.constant 0 : index
    %79 = vector.load %arg3[%c192, %c0_47] : memref<768x32xbf16, #tpu.memory_space<vmem>>, vector<32x32xbf16>
    %cst_48 = arith.constant dense<0.000000e+00> : vector<20x32xf32>
    %80 = tpu.matmul %78, %79, %cst_48 {dimension_numbers = #tpu.dot_dimension_numbers<[1], [0], [0], [1], [0, 0, 1, 1], [], []>} : vector<20x32xbf16>, vector<32x32xbf16>, vector<20x32xf32> -> vector<20x32xf32>
    %c25 = arith.constant 25 : index
    %c0_49 = arith.constant 0 : index
    %81 = vector.load %arg4[%c25, %c0_49] : memref<42x32xf32, #tpu.memory_space<vmem>>, vector<1x32xf32>
    %82 = vector.broadcast %81 : vector<1x32xf32> to vector<20x32xf32>
    %83 = arith.addf %80, %82 : vector<20x32xf32>
    %cst_50 = arith.constant dense<0.000000e+00> : vector<20x32xf32>
    %84 = tpu.matmul %5, %83, %cst_50 {dimension_numbers = #tpu.dot_dimension_numbers<[1], [0], [0], [1], [0, 0, 1, 1], [], []>} : vector<20x20xf32>, vector<20x32xf32>, vector<20x32xf32> -> vector<20x32xf32>
    %85 = arith.addf %13, %84 : vector<20x32xf32>
    %c26 = arith.constant 26 : index
    %c0_51 = arith.constant 0 : index
    %86 = vector.load %arg4[%c26, %c0_51] : memref<42x32xf32, #tpu.memory_space<vmem>>, vector<1x32xf32>
    %c27 = arith.constant 27 : index
    %c0_52 = arith.constant 0 : index
    %87 = vector.load %arg4[%c27, %c0_52] : memref<42x32xf32, #tpu.memory_space<vmem>>, vector<1x32xf32>
    %cst_53 = arith.constant dense<0.000000e+00> : vector<20xf32>
    %88 = vector.multi_reduction <add>, %85, %cst_53 [1] : vector<20x32xf32> to vector<20xf32>
    %89 = vector.shape_cast %88 : vector<20xf32> to vector<20x1xf32>
    %cst_54 = arith.constant 3.200000e+01 : f32
    %90 = vector.broadcast %cst_54 : f32 to vector<20x1xf32>
    %91 = arith.divf %89, %90 : vector<20x1xf32>
    %92 = vector.broadcast %91 : vector<20x1xf32> to vector<20x32xf32>
    %93 = arith.subf %85, %92 : vector<20x32xf32>
    %94 = arith.mulf %93, %93 : vector<20x32xf32>
    %cst_55 = arith.constant dense<0.000000e+00> : vector<20xf32>
    %95 = vector.multi_reduction <add>, %94, %cst_55 [1] : vector<20x32xf32> to vector<20xf32>
    %96 = vector.shape_cast %95 : vector<20xf32> to vector<20x1xf32>
    %cst_56 = arith.constant 3.200000e+01 : f32
    %97 = vector.broadcast %cst_56 : f32 to vector<20x1xf32>
    %98 = arith.divf %96, %97 : vector<20x1xf32>
    %99 = vector.broadcast %91 : vector<20x1xf32> to vector<20x32xf32>
    %100 = arith.subf %85, %99 : vector<20x32xf32>
    %cst_57 = arith.constant 9.99999974E-6 : f32
    %101 = vector.broadcast %cst_57 : f32 to vector<20x1xf32>
    %102 = arith.addf %98, %101 : vector<20x1xf32>
    %103 = math.rsqrt %102 : vector<20x1xf32>
    %104 = vector.broadcast %103 : vector<20x1xf32> to vector<20x32xf32>
    %105 = arith.mulf %100, %104 : vector<20x32xf32>
    %106 = vector.broadcast %86 : vector<1x32xf32> to vector<20x32xf32>
    %107 = arith.mulf %105, %106 : vector<20x32xf32>
    %108 = vector.broadcast %87 : vector<1x32xf32> to vector<20x32xf32>
    %109 = arith.addf %107, %108 : vector<20x32xf32>
    %c28 = arith.constant 28 : index
    %c0_58 = arith.constant 0 : index
    %110 = vector.load %arg4[%c28, %c0_58] : memref<42x32xf32, #tpu.memory_space<vmem>>, vector<1x32xf32>
    %111 = arith.truncf %109 : vector<20x32xf32> to vector<20x32xbf16>
    %112 = vector.shape_cast %111 : vector<20x32xbf16> to vector<1x20x32xbf16>
    %113 = vector.shape_cast %112 : vector<1x20x32xbf16> to vector<1x20x32xbf16>
    %114 = vector.broadcast %113 : vector<1x20x32xbf16> to vector<4x20x32xbf16>
    %c4 = arith.constant 4 : index
    %c0_59 = arith.constant 0 : index
    %c0_60 = arith.constant 0 : index
    %c0_61 = arith.constant 0 : index
    %115 = vector.load %arg2[%c4, %c0_59, %c0_60, %c0_61] : memref<16x4x8x32xbf16, #tpu.memory_space<vmem>>, vector<1x4x8x32xbf16>
    %116 = vector.shape_cast %115 : vector<1x4x8x32xbf16> to vector<4x8x32xbf16>
    "tpu.trace_start"() <{level = 10 : i32, message = "hnc,hdc->hnd"}> : () -> ()
    %cst_62 = arith.constant dense<0.000000e+00> : vector<4x20x8xf32>
    %117 = tpu.matmul %114, %116, %cst_62 {dimension_numbers = #tpu.dot_dimension_numbers<[2], [2], [1], [1], [0, 0, 0, 1, 1, 1], [0], [0]>} : vector<4x20x32xbf16>, vector<4x8x32xbf16>, vector<4x20x8xf32> -> vector<4x20x8xf32>
    "tpu.trace_stop"() : () -> ()
    %c5 = arith.constant 5 : index
    %c0_63 = arith.constant 0 : index
    %c0_64 = arith.constant 0 : index
    %c0_65 = arith.constant 0 : index
    %118 = vector.load %arg2[%c5, %c0_63, %c0_64, %c0_65] : memref<16x4x8x32xbf16, #tpu.memory_space<vmem>>, vector<1x4x8x32xbf16>
    %119 = vector.shape_cast %118 : vector<1x4x8x32xbf16> to vector<4x8x32xbf16>
    "tpu.trace_start"() <{level = 10 : i32, message = "hnc,hdc->hnd"}> : () -> ()
    %cst_66 = arith.constant dense<0.000000e+00> : vector<4x20x8xf32>
    %120 = tpu.matmul %114, %119, %cst_66 {dimension_numbers = #tpu.dot_dimension_numbers<[2], [2], [1], [1], [0, 0, 0, 1, 1, 1], [0], [0]>} : vector<4x20x32xbf16>, vector<4x8x32xbf16>, vector<4x20x8xf32> -> vector<4x20x8xf32>
    "tpu.trace_stop"() : () -> ()
    %c6 = arith.constant 6 : index
    %c0_67 = arith.constant 0 : index
    %c0_68 = arith.constant 0 : index
    %c0_69 = arith.constant 0 : index
    %121 = vector.load %arg2[%c6, %c0_67, %c0_68, %c0_69] : memref<16x4x8x32xbf16, #tpu.memory_space<vmem>>, vector<1x4x8x32xbf16>
    %122 = vector.shape_cast %121 : vector<1x4x8x32xbf16> to vector<4x8x32xbf16>
    "tpu.trace_start"() <{level = 10 : i32, message = "hnc,hdc->hnd"}> : () -> ()
    %cst_70 = arith.constant dense<0.000000e+00> : vector<4x20x8xf32>
    %123 = tpu.matmul %114, %122, %cst_70 {dimension_numbers = #tpu.dot_dimension_numbers<[2], [2], [1], [1], [0, 0, 0, 1, 1, 1], [0], [0]>} : vector<4x20x32xbf16>, vector<4x8x32xbf16>, vector<4x20x8xf32> -> vector<4x20x8xf32>
    "tpu.trace_stop"() : () -> ()
    %124 = arith.truncf %117 : vector<4x20x8xf32> to vector<4x20x8xbf16>
    %125 = arith.truncf %120 : vector<4x20x8xf32> to vector<4x20x8xbf16>
    "tpu.trace_start"() <{level = 10 : i32, message = "hnd,hmd->hnm"}> : () -> ()
    %cst_71 = arith.constant dense<0.000000e+00> : vector<4x20x20xf32>
    %126 = tpu.matmul %124, %125, %cst_71 {dimension_numbers = #tpu.dot_dimension_numbers<[2], [2], [1], [1], [0, 0, 0, 1, 1, 1], [0], [0]>} : vector<4x20x8xbf16>, vector<4x20x8xbf16>, vector<4x20x20xf32> -> vector<4x20x20xf32>
    "tpu.trace_stop"() : () -> ()
    %127 = vector.shape_cast %3 : vector<20x20xf32> to vector<1x20x20xf32>
    %128 = vector.broadcast %127 : vector<1x20x20xf32> to vector<4x20x20xf32>
    %129 = arith.addf %126, %128 : vector<4x20x20xf32>
    %cst_72 = arith.constant dense<0xFF800000> : vector<4x20xf32>
    %130 = vector.multi_reduction <maximumf>, %129, %cst_72 [2] : vector<4x20x20xf32> to vector<4x20xf32>
    %131 = vector.shape_cast %130 : vector<4x20xf32> to vector<4x20x1xf32>
    %132 = vector.broadcast %131 : vector<4x20x1xf32> to vector<4x20x20xf32>
    %133 = arith.subf %129, %132 : vector<4x20x20xf32>
    %134 = math.exp %133 : vector<4x20x20xf32>
    %cst_73 = arith.constant dense<0.000000e+00> : vector<4x20xf32>
    %135 = vector.multi_reduction <add>, %134, %cst_73 [2] : vector<4x20x20xf32> to vector<4x20xf32>
    %136 = vector.shape_cast %135 : vector<4x20xf32> to vector<4x20x1xf32>
    %137 = tpu.reciprocal %136 {approx = true} : vector<4x20x1xf32> -> vector<4x20x1xf32>
    %138 = vector.broadcast %137 : vector<4x20x1xf32> to vector<4x20x20xf32>
    %139 = arith.mulf %134, %138 : vector<4x20x20xf32>
    %140 = arith.truncf %139 : vector<4x20x20xf32> to vector<4x20x20xbf16>
    %141 = arith.truncf %123 : vector<4x20x8xf32> to vector<4x20x8xbf16>
    "tpu.trace_start"() <{level = 10 : i32, message = "hnm,hmd->hnd"}> : () -> ()
    %cst_74 = arith.constant dense<0.000000e+00> : vector<4x20x8xf32>
    %142 = tpu.matmul %140, %141, %cst_74 {dimension_numbers = #tpu.dot_dimension_numbers<[2], [1], [1], [2], [0, 0, 0, 1, 1, 2], [0], [0]>} : vector<4x20x20xbf16>, vector<4x20x8xbf16>, vector<4x20x8xf32> -> vector<4x20x8xf32>
    "tpu.trace_stop"() : () -> ()
    %143 = arith.truncf %142 : vector<4x20x8xf32> to vector<4x20x8xbf16>
    %c7 = arith.constant 7 : index
    %c0_75 = arith.constant 0 : index
    %c0_76 = arith.constant 0 : index
    %c0_77 = arith.constant 0 : index
    %144 = vector.load %arg2[%c7, %c0_75, %c0_76, %c0_77] : memref<16x4x8x32xbf16, #tpu.memory_space<vmem>>, vector<1x4x8x32xbf16>
    %145 = vector.shape_cast %144 : vector<1x4x8x32xbf16> to vector<4x8x32xbf16>
    "tpu.trace_start"() <{level = 10 : i32, message = "hnd,hde->hne"}> : () -> ()
    %cst_78 = arith.constant dense<0.000000e+00> : vector<4x20x32xf32>
    %146 = tpu.matmul %143, %145, %cst_78 {dimension_numbers = #tpu.dot_dimension_numbers<[2], [1], [1], [2], [0, 0, 0, 1, 1, 2], [0], [0]>} : vector<4x20x8xbf16>, vector<4x8x32xbf16>, vector<4x20x32xf32> -> vector<4x20x32xf32>
    "tpu.trace_stop"() : () -> ()
    %cst_79 = arith.constant dense<0.000000e+00> : vector<20x32xf32>
    %147 = vector.multi_reduction <add>, %146, %cst_79 [0] : vector<4x20x32xf32> to vector<20x32xf32>
    %148 = vector.broadcast %110 : vector<1x32xf32> to vector<20x32xf32>
    %149 = arith.addf %147, %148 : vector<20x32xf32>
    %cst_80 = arith.constant dense<0.000000e+00> : vector<20x32xf32>
    %150 = tpu.matmul %7, %149, %cst_80 {dimension_numbers = #tpu.dot_dimension_numbers<[1], [0], [0], [1], [0, 0, 1, 1], [], []>} : vector<20x20xf32>, vector<20x32xf32>, vector<20x32xf32> -> vector<20x32xf32>
    %151 = arith.addf %85, %150 : vector<20x32xf32>
    %c29 = arith.constant 29 : index
    %c0_81 = arith.constant 0 : index
    %152 = vector.load %arg4[%c29, %c0_81] : memref<42x32xf32, #tpu.memory_space<vmem>>, vector<1x32xf32>
    %c30 = arith.constant 30 : index
    %c0_82 = arith.constant 0 : index
    %153 = vector.load %arg4[%c30, %c0_82] : memref<42x32xf32, #tpu.memory_space<vmem>>, vector<1x32xf32>
    %cst_83 = arith.constant dense<0.000000e+00> : vector<20xf32>
    %154 = vector.multi_reduction <add>, %151, %cst_83 [1] : vector<20x32xf32> to vector<20xf32>
    %155 = vector.shape_cast %154 : vector<20xf32> to vector<20x1xf32>
    %cst_84 = arith.constant 3.200000e+01 : f32
    %156 = vector.broadcast %cst_84 : f32 to vector<20x1xf32>
    %157 = arith.divf %155, %156 : vector<20x1xf32>
    %158 = vector.broadcast %157 : vector<20x1xf32> to vector<20x32xf32>
    %159 = arith.subf %151, %158 : vector<20x32xf32>
    %160 = arith.mulf %159, %159 : vector<20x32xf32>
    %cst_85 = arith.constant dense<0.000000e+00> : vector<20xf32>
    %161 = vector.multi_reduction <add>, %160, %cst_85 [1] : vector<20x32xf32> to vector<20xf32>
    %162 = vector.shape_cast %161 : vector<20xf32> to vector<20x1xf32>
    %cst_86 = arith.constant 3.200000e+01 : f32
    %163 = vector.broadcast %cst_86 : f32 to vector<20x1xf32>
    %164 = arith.divf %162, %163 : vector<20x1xf32>
    %165 = vector.broadcast %157 : vector<20x1xf32> to vector<20x32xf32>
    %166 = arith.subf %151, %165 : vector<20x32xf32>
    %cst_87 = arith.constant 9.99999974E-6 : f32
    %167 = vector.broadcast %cst_87 : f32 to vector<20x1xf32>
    %168 = arith.addf %164, %167 : vector<20x1xf32>
    %169 = math.rsqrt %168 : vector<20x1xf32>
    %170 = vector.broadcast %169 : vector<20x1xf32> to vector<20x32xf32>
    %171 = arith.mulf %166, %170 : vector<20x32xf32>
    %172 = vector.broadcast %152 : vector<1x32xf32> to vector<20x32xf32>
    %173 = arith.mulf %171, %172 : vector<20x32xf32>
    %174 = vector.broadcast %153 : vector<1x32xf32> to vector<20x32xf32>
    %175 = arith.addf %173, %174 : vector<20x32xf32>
    %176 = arith.truncf %175 : vector<20x32xf32> to vector<20x32xbf16>
    %c224 = arith.constant 224 : index
    %c0_88 = arith.constant 0 : index
    %177 = vector.load %arg3[%c224, %c0_88] : memref<768x32xbf16, #tpu.memory_space<vmem>>, vector<128x32xbf16>
    "tpu.trace_start"() <{level = 10 : i32, message = "nc,kc->nk"}> : () -> ()
    %cst_89 = arith.constant dense<0.000000e+00> : vector<20x128xf32>
    %178 = tpu.matmul %176, %177, %cst_89 {dimension_numbers = #tpu.dot_dimension_numbers<[1], [1], [0], [0], [0, 0, 1, 0], [], []>} : vector<20x32xbf16>, vector<128x32xbf16>, vector<20x128xf32> -> vector<20x128xf32>
    "tpu.trace_stop"() : () -> ()
    %c0_90 = arith.constant 0 : index
    %c0_91 = arith.constant 0 : index
    %c0_92 = arith.constant 0 : index
    %179 = vector.load %arg6[%c0_90, %c0_91, %c0_92] : memref<2x1x128xf32, #tpu.memory_space<vmem>>, vector<1x1x128xf32>
    %180 = vector.shape_cast %179 : vector<1x1x128xf32> to vector<1x128xf32>
    %181 = vector.broadcast %180 : vector<1x128xf32> to vector<20x128xf32>
    %182 = arith.addf %178, %181 : vector<20x128xf32>
    %cst_93 = arith.constant 5.000000e-01 : f32
    %183 = vector.broadcast %cst_93 : f32 to vector<20x128xf32>
    %184 = arith.mulf %183, %182 : vector<20x128xf32>
    %cst_94 = arith.constant 0.707106769 : f32
    %185 = vector.broadcast %cst_94 : f32 to vector<20x128xf32>
    %186 = arith.mulf %182, %185 : vector<20x128xf32>
    %187 = math.erf %186 : vector<20x128xf32>
    %cst_95 = arith.constant 1.000000e+00 : f32
    %188 = vector.broadcast %cst_95 : f32 to vector<20x128xf32>
    %189 = arith.addf %188, %187 : vector<20x128xf32>
    %190 = arith.mulf %184, %189 : vector<20x128xf32>
    %191 = arith.truncf %190 : vector<20x128xf32> to vector<20x128xbf16>
    %c352 = arith.constant 352 : index
    %c0_96 = arith.constant 0 : index
    %192 = vector.load %arg3[%c352, %c0_96] : memref<768x32xbf16, #tpu.memory_space<vmem>>, vector<128x32xbf16>
    %cst_97 = arith.constant dense<0.000000e+00> : vector<20x32xf32>
    %193 = tpu.matmul %191, %192, %cst_97 {dimension_numbers = #tpu.dot_dimension_numbers<[1], [0], [0], [1], [0, 0, 1, 1], [], []>} : vector<20x128xbf16>, vector<128x32xbf16>, vector<20x32xf32> -> vector<20x32xf32>
    %c31 = arith.constant 31 : index
    %c0_98 = arith.constant 0 : index
    %194 = vector.load %arg4[%c31, %c0_98] : memref<42x32xf32, #tpu.memory_space<vmem>>, vector<1x32xf32>
    %195 = vector.broadcast %194 : vector<1x32xf32> to vector<20x32xf32>
    %196 = arith.addf %193, %195 : vector<20x32xf32>
    %197 = arith.addf %151, %196 : vector<20x32xf32>
    %c32 = arith.constant 32 : index
    %c0_99 = arith.constant 0 : index
    %198 = vector.load %arg4[%c32, %c0_99] : memref<42x32xf32, #tpu.memory_space<vmem>>, vector<1x32xf32>
    %c33 = arith.constant 33 : index
    %c0_100 = arith.constant 0 : index
    %199 = vector.load %arg4[%c33, %c0_100] : memref<42x32xf32, #tpu.memory_space<vmem>>, vector<1x32xf32>
    %cst_101 = arith.constant dense<0.000000e+00> : vector<20xf32>
    %200 = vector.multi_reduction <add>, %197, %cst_101 [1] : vector<20x32xf32> to vector<20xf32>
    %201 = vector.shape_cast %200 : vector<20xf32> to vector<20x1xf32>
    %cst_102 = arith.constant 3.200000e+01 : f32
    %202 = vector.broadcast %cst_102 : f32 to vector<20x1xf32>
    %203 = arith.divf %201, %202 : vector<20x1xf32>
    %204 = vector.broadcast %203 : vector<20x1xf32> to vector<20x32xf32>
    %205 = arith.subf %197, %204 : vector<20x32xf32>
    %206 = arith.mulf %205, %205 : vector<20x32xf32>
    %cst_103 = arith.constant dense<0.000000e+00> : vector<20xf32>
    %207 = vector.multi_reduction <add>, %206, %cst_103 [1] : vector<20x32xf32> to vector<20xf32>
    %208 = vector.shape_cast %207 : vector<20xf32> to vector<20x1xf32>
    %cst_104 = arith.constant 3.200000e+01 : f32
    %209 = vector.broadcast %cst_104 : f32 to vector<20x1xf32>
    %210 = arith.divf %208, %209 : vector<20x1xf32>
    %211 = vector.broadcast %203 : vector<20x1xf32> to vector<20x32xf32>
    %212 = arith.subf %197, %211 : vector<20x32xf32>
    %cst_105 = arith.constant 9.99999974E-6 : f32
    %213 = vector.broadcast %cst_105 : f32 to vector<20x1xf32>
    %214 = arith.addf %210, %213 : vector<20x1xf32>
    %215 = math.rsqrt %214 : vector<20x1xf32>
    %216 = vector.broadcast %215 : vector<20x1xf32> to vector<20x32xf32>
    %217 = arith.mulf %212, %216 : vector<20x32xf32>
    %218 = vector.broadcast %198 : vector<1x32xf32> to vector<20x32xf32>
    %219 = arith.mulf %217, %218 : vector<20x32xf32>
    %220 = vector.broadcast %199 : vector<1x32xf32> to vector<20x32xf32>
    %221 = arith.addf %219, %220 : vector<20x32xf32>
    %c34 = arith.constant 34 : index
    %c0_106 = arith.constant 0 : index
    %222 = vector.load %arg4[%c34, %c0_106] : memref<42x32xf32, #tpu.memory_space<vmem>>, vector<1x32xf32>
    %223 = arith.truncf %221 : vector<20x32xf32> to vector<20x32xbf16>
    %224 = vector.shape_cast %223 : vector<20x32xbf16> to vector<1x20x32xbf16>
    %225 = vector.shape_cast %224 : vector<1x20x32xbf16> to vector<1x20x32xbf16>
    %226 = vector.broadcast %225 : vector<1x20x32xbf16> to vector<4x20x32xbf16>
    %c8 = arith.constant 8 : index
    %c0_107 = arith.constant 0 : index
    %c0_108 = arith.constant 0 : index
    %c0_109 = arith.constant 0 : index
    %227 = vector.load %arg2[%c8, %c0_107, %c0_108, %c0_109] : memref<16x4x8x32xbf16, #tpu.memory_space<vmem>>, vector<1x4x8x32xbf16>
    %228 = vector.shape_cast %227 : vector<1x4x8x32xbf16> to vector<4x8x32xbf16>
    "tpu.trace_start"() <{level = 10 : i32, message = "hnc,hdc->hnd"}> : () -> ()
    %cst_110 = arith.constant dense<0.000000e+00> : vector<4x20x8xf32>
    %229 = tpu.matmul %226, %228, %cst_110 {dimension_numbers = #tpu.dot_dimension_numbers<[2], [2], [1], [1], [0, 0, 0, 1, 1, 1], [0], [0]>} : vector<4x20x32xbf16>, vector<4x8x32xbf16>, vector<4x20x8xf32> -> vector<4x20x8xf32>
    "tpu.trace_stop"() : () -> ()
    %c9 = arith.constant 9 : index
    %c0_111 = arith.constant 0 : index
    %c0_112 = arith.constant 0 : index
    %c0_113 = arith.constant 0 : index
    %230 = vector.load %arg2[%c9, %c0_111, %c0_112, %c0_113] : memref<16x4x8x32xbf16, #tpu.memory_space<vmem>>, vector<1x4x8x32xbf16>
    %231 = vector.shape_cast %230 : vector<1x4x8x32xbf16> to vector<4x8x32xbf16>
    "tpu.trace_start"() <{level = 10 : i32, message = "hnc,hdc->hnd"}> : () -> ()
    %cst_114 = arith.constant dense<0.000000e+00> : vector<4x20x8xf32>
    %232 = tpu.matmul %226, %231, %cst_114 {dimension_numbers = #tpu.dot_dimension_numbers<[2], [2], [1], [1], [0, 0, 0, 1, 1, 1], [0], [0]>} : vector<4x20x32xbf16>, vector<4x8x32xbf16>, vector<4x20x8xf32> -> vector<4x20x8xf32>
    "tpu.trace_stop"() : () -> ()
    %c10 = arith.constant 10 : index
    %c0_115 = arith.constant 0 : index
    %c0_116 = arith.constant 0 : index
    %c0_117 = arith.constant 0 : index
    %233 = vector.load %arg2[%c10, %c0_115, %c0_116, %c0_117] : memref<16x4x8x32xbf16, #tpu.memory_space<vmem>>, vector<1x4x8x32xbf16>
    %234 = vector.shape_cast %233 : vector<1x4x8x32xbf16> to vector<4x8x32xbf16>
    "tpu.trace_start"() <{level = 10 : i32, message = "hnc,hdc->hnd"}> : () -> ()
    %cst_118 = arith.constant dense<0.000000e+00> : vector<4x20x8xf32>
    %235 = tpu.matmul %226, %234, %cst_118 {dimension_numbers = #tpu.dot_dimension_numbers<[2], [2], [1], [1], [0, 0, 0, 1, 1, 1], [0], [0]>} : vector<4x20x32xbf16>, vector<4x8x32xbf16>, vector<4x20x8xf32> -> vector<4x20x8xf32>
    "tpu.trace_stop"() : () -> ()
    %236 = arith.truncf %229 : vector<4x20x8xf32> to vector<4x20x8xbf16>
    %237 = arith.truncf %232 : vector<4x20x8xf32> to vector<4x20x8xbf16>
    "tpu.trace_start"() <{level = 10 : i32, message = "hnd,hmd->hnm"}> : () -> ()
    %cst_119 = arith.constant dense<0.000000e+00> : vector<4x20x20xf32>
    %238 = tpu.matmul %236, %237, %cst_119 {dimension_numbers = #tpu.dot_dimension_numbers<[2], [2], [1], [1], [0, 0, 0, 1, 1, 1], [0], [0]>} : vector<4x20x8xbf16>, vector<4x20x8xbf16>, vector<4x20x20xf32> -> vector<4x20x20xf32>
    "tpu.trace_stop"() : () -> ()
    %239 = vector.shape_cast %1 : vector<20x20xf32> to vector<1x20x20xf32>
    %240 = vector.broadcast %239 : vector<1x20x20xf32> to vector<4x20x20xf32>
    %241 = arith.addf %238, %240 : vector<4x20x20xf32>
    %cst_120 = arith.constant dense<0xFF800000> : vector<4x20xf32>
    %242 = vector.multi_reduction <maximumf>, %241, %cst_120 [2] : vector<4x20x20xf32> to vector<4x20xf32>
    %243 = vector.shape_cast %242 : vector<4x20xf32> to vector<4x20x1xf32>
    %244 = vector.broadcast %243 : vector<4x20x1xf32> to vector<4x20x20xf32>
    %245 = arith.subf %241, %244 : vector<4x20x20xf32>
    %246 = math.exp %245 : vector<4x20x20xf32>
    %cst_121 = arith.constant dense<0.000000e+00> : vector<4x20xf32>
    %247 = vector.multi_reduction <add>, %246, %cst_121 [2] : vector<4x20x20xf32> to vector<4x20xf32>
    %248 = vector.shape_cast %247 : vector<4x20xf32> to vector<4x20x1xf32>
    %249 = tpu.reciprocal %248 {approx = true} : vector<4x20x1xf32> -> vector<4x20x1xf32>
    %250 = vector.broadcast %249 : vector<4x20x1xf32> to vector<4x20x20xf32>
    %251 = arith.mulf %246, %250 : vector<4x20x20xf32>
    %252 = arith.truncf %251 : vector<4x20x20xf32> to vector<4x20x20xbf16>
    %253 = arith.truncf %235 : vector<4x20x8xf32> to vector<4x20x8xbf16>
    "tpu.trace_start"() <{level = 10 : i32, message = "hnm,hmd->hnd"}> : () -> ()
    %cst_122 = arith.constant dense<0.000000e+00> : vector<4x20x8xf32>
    %254 = tpu.matmul %252, %253, %cst_122 {dimension_numbers = #tpu.dot_dimension_numbers<[2], [1], [1], [2], [0, 0, 0, 1, 1, 2], [0], [0]>} : vector<4x20x20xbf16>, vector<4x20x8xbf16>, vector<4x20x8xf32> -> vector<4x20x8xf32>
    "tpu.trace_stop"() : () -> ()
    %255 = arith.truncf %254 : vector<4x20x8xf32> to vector<4x20x8xbf16>
    %c11 = arith.constant 11 : index
    %c0_123 = arith.constant 0 : index
    %c0_124 = arith.constant 0 : index
    %c0_125 = arith.constant 0 : index
    %256 = vector.load %arg2[%c11, %c0_123, %c0_124, %c0_125] : memref<16x4x8x32xbf16, #tpu.memory_space<vmem>>, vector<1x4x8x32xbf16>
    %257 = vector.shape_cast %256 : vector<1x4x8x32xbf16> to vector<4x8x32xbf16>
    "tpu.trace_start"() <{level = 10 : i32, message = "hnd,hde->hne"}> : () -> ()
    %cst_126 = arith.constant dense<0.000000e+00> : vector<4x20x32xf32>
    %258 = tpu.matmul %255, %257, %cst_126 {dimension_numbers = #tpu.dot_dimension_numbers<[2], [1], [1], [2], [0, 0, 0, 1, 1, 2], [0], [0]>} : vector<4x20x8xbf16>, vector<4x8x32xbf16>, vector<4x20x32xf32> -> vector<4x20x32xf32>
    "tpu.trace_stop"() : () -> ()
    %cst_127 = arith.constant dense<0.000000e+00> : vector<20x32xf32>
    %259 = vector.multi_reduction <add>, %258, %cst_127 [0] : vector<4x20x32xf32> to vector<20x32xf32>
    %260 = vector.broadcast %222 : vector<1x32xf32> to vector<20x32xf32>
    %261 = arith.addf %259, %260 : vector<20x32xf32>
    %262 = arith.truncf %261 : vector<20x32xf32> to vector<20x32xbf16>
    %c480 = arith.constant 480 : index
    %c0_128 = arith.constant 0 : index
    %263 = vector.load %arg3[%c480, %c0_128] : memref<768x32xbf16, #tpu.memory_space<vmem>>, vector<32x32xbf16>
    %cst_129 = arith.constant dense<0.000000e+00> : vector<20x32xf32>
    %264 = tpu.matmul %262, %263, %cst_129 {dimension_numbers = #tpu.dot_dimension_numbers<[1], [0], [0], [1], [0, 0, 1, 1], [], []>} : vector<20x32xbf16>, vector<32x32xbf16>, vector<20x32xf32> -> vector<20x32xf32>
    %c35 = arith.constant 35 : index
    %c0_130 = arith.constant 0 : index
    %265 = vector.load %arg4[%c35, %c0_130] : memref<42x32xf32, #tpu.memory_space<vmem>>, vector<1x32xf32>
    %266 = vector.broadcast %265 : vector<1x32xf32> to vector<20x32xf32>
    %267 = arith.addf %264, %266 : vector<20x32xf32>
    %cst_131 = arith.constant dense<0.000000e+00> : vector<20x32xf32>
    %268 = tpu.matmul %5, %267, %cst_131 {dimension_numbers = #tpu.dot_dimension_numbers<[1], [0], [0], [1], [0, 0, 1, 1], [], []>} : vector<20x20xf32>, vector<20x32xf32>, vector<20x32xf32> -> vector<20x32xf32>
    %269 = arith.addf %197, %268 : vector<20x32xf32>
    %c36 = arith.constant 36 : index
    %c0_132 = arith.constant 0 : index
    %270 = vector.load %arg4[%c36, %c0_132] : memref<42x32xf32, #tpu.memory_space<vmem>>, vector<1x32xf32>
    %c37 = arith.constant 37 : index
    %c0_133 = arith.constant 0 : index
    %271 = vector.load %arg4[%c37, %c0_133] : memref<42x32xf32, #tpu.memory_space<vmem>>, vector<1x32xf32>
    %cst_134 = arith.constant dense<0.000000e+00> : vector<20xf32>
    %272 = vector.multi_reduction <add>, %269, %cst_134 [1] : vector<20x32xf32> to vector<20xf32>
    %273 = vector.shape_cast %272 : vector<20xf32> to vector<20x1xf32>
    %cst_135 = arith.constant 3.200000e+01 : f32
    %274 = vector.broadcast %cst_135 : f32 to vector<20x1xf32>
    %275 = arith.divf %273, %274 : vector<20x1xf32>
    %276 = vector.broadcast %275 : vector<20x1xf32> to vector<20x32xf32>
    %277 = arith.subf %269, %276 : vector<20x32xf32>
    %278 = arith.mulf %277, %277 : vector<20x32xf32>
    %cst_136 = arith.constant dense<0.000000e+00> : vector<20xf32>
    %279 = vector.multi_reduction <add>, %278, %cst_136 [1] : vector<20x32xf32> to vector<20xf32>
    %280 = vector.shape_cast %279 : vector<20xf32> to vector<20x1xf32>
    %cst_137 = arith.constant 3.200000e+01 : f32
    %281 = vector.broadcast %cst_137 : f32 to vector<20x1xf32>
    %282 = arith.divf %280, %281 : vector<20x1xf32>
    %283 = vector.broadcast %275 : vector<20x1xf32> to vector<20x32xf32>
    %284 = arith.subf %269, %283 : vector<20x32xf32>
    %cst_138 = arith.constant 9.99999974E-6 : f32
    %285 = vector.broadcast %cst_138 : f32 to vector<20x1xf32>
    %286 = arith.addf %282, %285 : vector<20x1xf32>
    %287 = math.rsqrt %286 : vector<20x1xf32>
    %288 = vector.broadcast %287 : vector<20x1xf32> to vector<20x32xf32>
    %289 = arith.mulf %284, %288 : vector<20x32xf32>
    %290 = vector.broadcast %270 : vector<1x32xf32> to vector<20x32xf32>
    %291 = arith.mulf %289, %290 : vector<20x32xf32>
    %292 = vector.broadcast %271 : vector<1x32xf32> to vector<20x32xf32>
    %293 = arith.addf %291, %292 : vector<20x32xf32>
    %c38 = arith.constant 38 : index
    %c0_139 = arith.constant 0 : index
    %294 = vector.load %arg4[%c38, %c0_139] : memref<42x32xf32, #tpu.memory_space<vmem>>, vector<1x32xf32>
    %295 = arith.truncf %293 : vector<20x32xf32> to vector<20x32xbf16>
    %296 = vector.shape_cast %295 : vector<20x32xbf16> to vector<1x20x32xbf16>
    %297 = vector.shape_cast %296 : vector<1x20x32xbf16> to vector<1x20x32xbf16>
    %298 = vector.broadcast %297 : vector<1x20x32xbf16> to vector<4x20x32xbf16>
    %c12 = arith.constant 12 : index
    %c0_140 = arith.constant 0 : index
    %c0_141 = arith.constant 0 : index
    %c0_142 = arith.constant 0 : index
    %299 = vector.load %arg2[%c12, %c0_140, %c0_141, %c0_142] : memref<16x4x8x32xbf16, #tpu.memory_space<vmem>>, vector<1x4x8x32xbf16>
    %300 = vector.shape_cast %299 : vector<1x4x8x32xbf16> to vector<4x8x32xbf16>
    "tpu.trace_start"() <{level = 10 : i32, message = "hnc,hdc->hnd"}> : () -> ()
    %cst_143 = arith.constant dense<0.000000e+00> : vector<4x20x8xf32>
    %301 = tpu.matmul %298, %300, %cst_143 {dimension_numbers = #tpu.dot_dimension_numbers<[2], [2], [1], [1], [0, 0, 0, 1, 1, 1], [0], [0]>} : vector<4x20x32xbf16>, vector<4x8x32xbf16>, vector<4x20x8xf32> -> vector<4x20x8xf32>
    "tpu.trace_stop"() : () -> ()
    %c13 = arith.constant 13 : index
    %c0_144 = arith.constant 0 : index
    %c0_145 = arith.constant 0 : index
    %c0_146 = arith.constant 0 : index
    %302 = vector.load %arg2[%c13, %c0_144, %c0_145, %c0_146] : memref<16x4x8x32xbf16, #tpu.memory_space<vmem>>, vector<1x4x8x32xbf16>
    %303 = vector.shape_cast %302 : vector<1x4x8x32xbf16> to vector<4x8x32xbf16>
    "tpu.trace_start"() <{level = 10 : i32, message = "hnc,hdc->hnd"}> : () -> ()
    %cst_147 = arith.constant dense<0.000000e+00> : vector<4x20x8xf32>
    %304 = tpu.matmul %298, %303, %cst_147 {dimension_numbers = #tpu.dot_dimension_numbers<[2], [2], [1], [1], [0, 0, 0, 1, 1, 1], [0], [0]>} : vector<4x20x32xbf16>, vector<4x8x32xbf16>, vector<4x20x8xf32> -> vector<4x20x8xf32>
    "tpu.trace_stop"() : () -> ()
    %c14 = arith.constant 14 : index
    %c0_148 = arith.constant 0 : index
    %c0_149 = arith.constant 0 : index
    %c0_150 = arith.constant 0 : index
    %305 = vector.load %arg2[%c14, %c0_148, %c0_149, %c0_150] : memref<16x4x8x32xbf16, #tpu.memory_space<vmem>>, vector<1x4x8x32xbf16>
    %306 = vector.shape_cast %305 : vector<1x4x8x32xbf16> to vector<4x8x32xbf16>
    "tpu.trace_start"() <{level = 10 : i32, message = "hnc,hdc->hnd"}> : () -> ()
    %cst_151 = arith.constant dense<0.000000e+00> : vector<4x20x8xf32>
    %307 = tpu.matmul %298, %306, %cst_151 {dimension_numbers = #tpu.dot_dimension_numbers<[2], [2], [1], [1], [0, 0, 0, 1, 1, 1], [0], [0]>} : vector<4x20x32xbf16>, vector<4x8x32xbf16>, vector<4x20x8xf32> -> vector<4x20x8xf32>
    "tpu.trace_stop"() : () -> ()
    %308 = arith.truncf %301 : vector<4x20x8xf32> to vector<4x20x8xbf16>
    %309 = arith.truncf %304 : vector<4x20x8xf32> to vector<4x20x8xbf16>
    "tpu.trace_start"() <{level = 10 : i32, message = "hnd,hmd->hnm"}> : () -> ()
    %cst_152 = arith.constant dense<0.000000e+00> : vector<4x20x20xf32>
    %310 = tpu.matmul %308, %309, %cst_152 {dimension_numbers = #tpu.dot_dimension_numbers<[2], [2], [1], [1], [0, 0, 0, 1, 1, 1], [0], [0]>} : vector<4x20x8xbf16>, vector<4x20x8xbf16>, vector<4x20x20xf32> -> vector<4x20x20xf32>
    "tpu.trace_stop"() : () -> ()
    %311 = vector.shape_cast %3 : vector<20x20xf32> to vector<1x20x20xf32>
    %312 = vector.broadcast %311 : vector<1x20x20xf32> to vector<4x20x20xf32>
    %313 = arith.addf %310, %312 : vector<4x20x20xf32>
    %cst_153 = arith.constant dense<0xFF800000> : vector<4x20xf32>
    %314 = vector.multi_reduction <maximumf>, %313, %cst_153 [2] : vector<4x20x20xf32> to vector<4x20xf32>
    %315 = vector.shape_cast %314 : vector<4x20xf32> to vector<4x20x1xf32>
    %316 = vector.broadcast %315 : vector<4x20x1xf32> to vector<4x20x20xf32>
    %317 = arith.subf %313, %316 : vector<4x20x20xf32>
    %318 = math.exp %317 : vector<4x20x20xf32>
    %cst_154 = arith.constant dense<0.000000e+00> : vector<4x20xf32>
    %319 = vector.multi_reduction <add>, %318, %cst_154 [2] : vector<4x20x20xf32> to vector<4x20xf32>
    %320 = vector.shape_cast %319 : vector<4x20xf32> to vector<4x20x1xf32>
    %321 = tpu.reciprocal %320 {approx = true} : vector<4x20x1xf32> -> vector<4x20x1xf32>
    %322 = vector.broadcast %321 : vector<4x20x1xf32> to vector<4x20x20xf32>
    %323 = arith.mulf %318, %322 : vector<4x20x20xf32>
    %324 = arith.truncf %323 : vector<4x20x20xf32> to vector<4x20x20xbf16>
    %325 = arith.truncf %307 : vector<4x20x8xf32> to vector<4x20x8xbf16>
    "tpu.trace_start"() <{level = 10 : i32, message = "hnm,hmd->hnd"}> : () -> ()
    %cst_155 = arith.constant dense<0.000000e+00> : vector<4x20x8xf32>
    %326 = tpu.matmul %324, %325, %cst_155 {dimension_numbers = #tpu.dot_dimension_numbers<[2], [1], [1], [2], [0, 0, 0, 1, 1, 2], [0], [0]>} : vector<4x20x20xbf16>, vector<4x20x8xbf16>, vector<4x20x8xf32> -> vector<4x20x8xf32>
    "tpu.trace_stop"() : () -> ()
    %327 = arith.truncf %326 : vector<4x20x8xf32> to vector<4x20x8xbf16>
    %c15 = arith.constant 15 : index
    %c0_156 = arith.constant 0 : index
    %c0_157 = arith.constant 0 : index
    %c0_158 = arith.constant 0 : index
    %328 = vector.load %arg2[%c15, %c0_156, %c0_157, %c0_158] : memref<16x4x8x32xbf16, #tpu.memory_space<vmem>>, vector<1x4x8x32xbf16>
    %329 = vector.shape_cast %328 : vector<1x4x8x32xbf16> to vector<4x8x32xbf16>
    "tpu.trace_start"() <{level = 10 : i32, message = "hnd,hde->hne"}> : () -> ()
    %cst_159 = arith.constant dense<0.000000e+00> : vector<4x20x32xf32>
    %330 = tpu.matmul %327, %329, %cst_159 {dimension_numbers = #tpu.dot_dimension_numbers<[2], [1], [1], [2], [0, 0, 0, 1, 1, 2], [0], [0]>} : vector<4x20x8xbf16>, vector<4x8x32xbf16>, vector<4x20x32xf32> -> vector<4x20x32xf32>
    "tpu.trace_stop"() : () -> ()
    %cst_160 = arith.constant dense<0.000000e+00> : vector<20x32xf32>
    %331 = vector.multi_reduction <add>, %330, %cst_160 [0] : vector<4x20x32xf32> to vector<20x32xf32>
    %332 = vector.broadcast %294 : vector<1x32xf32> to vector<20x32xf32>
    %333 = arith.addf %331, %332 : vector<20x32xf32>
    %cst_161 = arith.constant dense<0.000000e+00> : vector<20x32xf32>
    %334 = tpu.matmul %7, %333, %cst_161 {dimension_numbers = #tpu.dot_dimension_numbers<[1], [0], [0], [1], [0, 0, 1, 1], [], []>} : vector<20x20xf32>, vector<20x32xf32>, vector<20x32xf32> -> vector<20x32xf32>
    %335 = arith.addf %269, %334 : vector<20x32xf32>
    %c39 = arith.constant 39 : index
    %c0_162 = arith.constant 0 : index
    %336 = vector.load %arg4[%c39, %c0_162] : memref<42x32xf32, #tpu.memory_space<vmem>>, vector<1x32xf32>
    %c40 = arith.constant 40 : index
    %c0_163 = arith.constant 0 : index
    %337 = vector.load %arg4[%c40, %c0_163] : memref<42x32xf32, #tpu.memory_space<vmem>>, vector<1x32xf32>
    %cst_164 = arith.constant dense<0.000000e+00> : vector<20xf32>
    %338 = vector.multi_reduction <add>, %335, %cst_164 [1] : vector<20x32xf32> to vector<20xf32>
    %339 = vector.shape_cast %338 : vector<20xf32> to vector<20x1xf32>
    %cst_165 = arith.constant 3.200000e+01 : f32
    %340 = vector.broadcast %cst_165 : f32 to vector<20x1xf32>
    %341 = arith.divf %339, %340 : vector<20x1xf32>
    %342 = vector.broadcast %341 : vector<20x1xf32> to vector<20x32xf32>
    %343 = arith.subf %335, %342 : vector<20x32xf32>
    %344 = arith.mulf %343, %343 : vector<20x32xf32>
    %cst_166 = arith.constant dense<0.000000e+00> : vector<20xf32>
    %345 = vector.multi_reduction <add>, %344, %cst_166 [1] : vector<20x32xf32> to vector<20xf32>
    %346 = vector.shape_cast %345 : vector<20xf32> to vector<20x1xf32>
    %cst_167 = arith.constant 3.200000e+01 : f32
    %347 = vector.broadcast %cst_167 : f32 to vector<20x1xf32>
    %348 = arith.divf %346, %347 : vector<20x1xf32>
    %349 = vector.broadcast %341 : vector<20x1xf32> to vector<20x32xf32>
    %350 = arith.subf %335, %349 : vector<20x32xf32>
    %cst_168 = arith.constant 9.99999974E-6 : f32
    %351 = vector.broadcast %cst_168 : f32 to vector<20x1xf32>
    %352 = arith.addf %348, %351 : vector<20x1xf32>
    %353 = math.rsqrt %352 : vector<20x1xf32>
    %354 = vector.broadcast %353 : vector<20x1xf32> to vector<20x32xf32>
    %355 = arith.mulf %350, %354 : vector<20x32xf32>
    %356 = vector.broadcast %336 : vector<1x32xf32> to vector<20x32xf32>
    %357 = arith.mulf %355, %356 : vector<20x32xf32>
    %358 = vector.broadcast %337 : vector<1x32xf32> to vector<20x32xf32>
    %359 = arith.addf %357, %358 : vector<20x32xf32>
    %360 = arith.truncf %359 : vector<20x32xf32> to vector<20x32xbf16>
    %c512 = arith.constant 512 : index
    %c0_169 = arith.constant 0 : index
    %361 = vector.load %arg3[%c512, %c0_169] : memref<768x32xbf16, #tpu.memory_space<vmem>>, vector<128x32xbf16>
    "tpu.trace_start"() <{level = 10 : i32, message = "nc,kc->nk"}> : () -> ()
    %cst_170 = arith.constant dense<0.000000e+00> : vector<20x128xf32>
    %362 = tpu.matmul %360, %361, %cst_170 {dimension_numbers = #tpu.dot_dimension_numbers<[1], [1], [0], [0], [0, 0, 1, 0], [], []>} : vector<20x32xbf16>, vector<128x32xbf16>, vector<20x128xf32> -> vector<20x128xf32>
    "tpu.trace_stop"() : () -> ()
    %c1_171 = arith.constant 1 : index
    %c0_172 = arith.constant 0 : index
    %c0_173 = arith.constant 0 : index
    %363 = vector.load %arg6[%c1_171, %c0_172, %c0_173] : memref<2x1x128xf32, #tpu.memory_space<vmem>>, vector<1x1x128xf32>
    %364 = vector.shape_cast %363 : vector<1x1x128xf32> to vector<1x128xf32>
    %365 = vector.broadcast %364 : vector<1x128xf32> to vector<20x128xf32>
    %366 = arith.addf %362, %365 : vector<20x128xf32>
    %cst_174 = arith.constant 5.000000e-01 : f32
    %367 = vector.broadcast %cst_174 : f32 to vector<20x128xf32>
    %368 = arith.mulf %367, %366 : vector<20x128xf32>
    %cst_175 = arith.constant 0.707106769 : f32
    %369 = vector.broadcast %cst_175 : f32 to vector<20x128xf32>
    %370 = arith.mulf %366, %369 : vector<20x128xf32>
    %371 = math.erf %370 : vector<20x128xf32>
    %cst_176 = arith.constant 1.000000e+00 : f32
    %372 = vector.broadcast %cst_176 : f32 to vector<20x128xf32>
    %373 = arith.addf %372, %371 : vector<20x128xf32>
    %374 = arith.mulf %368, %373 : vector<20x128xf32>
    %375 = arith.truncf %374 : vector<20x128xf32> to vector<20x128xbf16>
    %c640 = arith.constant 640 : index
    %c0_177 = arith.constant 0 : index
    %376 = vector.load %arg3[%c640, %c0_177] : memref<768x32xbf16, #tpu.memory_space<vmem>>, vector<128x32xbf16>
    %cst_178 = arith.constant dense<0.000000e+00> : vector<20x32xf32>
    %377 = tpu.matmul %375, %376, %cst_178 {dimension_numbers = #tpu.dot_dimension_numbers<[1], [0], [0], [1], [0, 0, 1, 1], [], []>} : vector<20x128xbf16>, vector<128x32xbf16>, vector<20x32xf32> -> vector<20x32xf32>
    %c41 = arith.constant 41 : index
    %c0_179 = arith.constant 0 : index
    %378 = vector.load %arg4[%c41, %c0_179] : memref<42x32xf32, #tpu.memory_space<vmem>>, vector<1x32xf32>
    %379 = vector.broadcast %378 : vector<1x32xf32> to vector<20x32xf32>
    %380 = arith.addf %377, %379 : vector<20x32xf32>
    %381 = arith.addf %335, %380 : vector<20x32xf32>
    %c20 = arith.constant 20 : index
    %c0_180 = arith.constant 0 : index
    %382 = vector.load %arg4[%c20, %c0_180] : memref<42x32xf32, #tpu.memory_space<vmem>>, vector<1x32xf32>
    %c21 = arith.constant 21 : index
    %c0_181 = arith.constant 0 : index
    %383 = vector.load %arg4[%c21, %c0_181] : memref<42x32xf32, #tpu.memory_space<vmem>>, vector<1x32xf32>
    %cst_182 = arith.constant dense<0.000000e+00> : vector<20xf32>
    %384 = vector.multi_reduction <add>, %381, %cst_182 [1] : vector<20x32xf32> to vector<20xf32>
    %385 = vector.shape_cast %384 : vector<20xf32> to vector<20x1xf32>
    %cst_183 = arith.constant 3.200000e+01 : f32
    %386 = vector.broadcast %cst_183 : f32 to vector<20x1xf32>
    %387 = arith.divf %385, %386 : vector<20x1xf32>
    %388 = vector.broadcast %387 : vector<20x1xf32> to vector<20x32xf32>
    %389 = arith.subf %381, %388 : vector<20x32xf32>
    %390 = arith.mulf %389, %389 : vector<20x32xf32>
    %cst_184 = arith.constant dense<0.000000e+00> : vector<20xf32>
    %391 = vector.multi_reduction <add>, %390, %cst_184 [1] : vector<20x32xf32> to vector<20xf32>
    %392 = vector.shape_cast %391 : vector<20xf32> to vector<20x1xf32>
    %cst_185 = arith.constant 3.200000e+01 : f32
    %393 = vector.broadcast %cst_185 : f32 to vector<20x1xf32>
    %394 = arith.divf %392, %393 : vector<20x1xf32>
    %395 = vector.broadcast %387 : vector<20x1xf32> to vector<20x32xf32>
    %396 = arith.subf %381, %395 : vector<20x32xf32>
    %cst_186 = arith.constant 9.99999974E-6 : f32
    %397 = vector.broadcast %cst_186 : f32 to vector<20x1xf32>
    %398 = arith.addf %394, %397 : vector<20x1xf32>
    %399 = math.rsqrt %398 : vector<20x1xf32>
    %400 = vector.broadcast %399 : vector<20x1xf32> to vector<20x32xf32>
    %401 = arith.mulf %396, %400 : vector<20x32xf32>
    %402 = vector.broadcast %382 : vector<1x32xf32> to vector<20x32xf32>
    %403 = arith.mulf %401, %402 : vector<20x32xf32>
    %404 = vector.broadcast %383 : vector<1x32xf32> to vector<20x32xf32>
    %405 = arith.addf %403, %404 : vector<20x32xf32>
    %406 = vector.extract_strided_slice %405 {offsets = [0, 0], sizes = [1, 32], strides = [1, 1]} : vector<20x32xf32> to vector<1x32xf32>
    %c0_187 = arith.constant 0 : index
    %c0_188 = arith.constant 0 : index
    %407 = vector.load %arg7[%c0_187, %c0_188] : memref<2x32xf32, #tpu.memory_space<vmem>>, vector<1x32xf32>
    tpu.vector_store %arg7[%c0_187, %c0_188], %406 {strides = array<i32>} : memref<2x32xf32, #tpu.memory_space<vmem>>, vector<1x32xf32>,
    %408 = vector.extract_strided_slice %405 {offsets = [10, 0], sizes = [1, 32], strides = [1, 1]} : vector<20x32xf32> to vector<1x32xf32>
    %c1_189 = arith.constant 1 : index
    %c0_190 = arith.constant 0 : index
    %409 = vector.load %arg7[%c1_189, %c0_190] : memref<2x32xf32, #tpu.memory_space<vmem>>, vector<1x32xf32>
    tpu.vector_store %arg7[%c1_189, %c0_190], %408 {strides = array<i32>} : memref<2x32xf32, #tpu.memory_space<vmem>>, vector<1x32xf32>,
    return
  }
  func.func @transform_0(%arg0: i32) -> (i32, i32) {
    %c0_i32 = arith.constant 0 : i32
    %c0_i32_0 = arith.constant 0 : i32
    %c0_i32_1 = arith.constant 0 : i32
    return %c0_i32, %c0_i32_0 : i32, i32
  }
  func.func @transform_1(%arg0: i32) -> (i32, i32, i32, i32) {
    %c0_i32 = arith.constant 0 : i32
    %c0_i32_0 = arith.constant 0 : i32
    %c0_i32_1 = arith.constant 0 : i32
    %c0_i32_2 = arith.constant 0 : i32
    %c0_i32_3 = arith.constant 0 : i32
    return %c0_i32, %c0_i32_0, %c0_i32_1, %c0_i32_2 : i32, i32, i32, i32
  }
  func.func @transform_2(%arg0: i32) -> (i32, i32) {
    %c0_i32 = arith.constant 0 : i32
    %c0_i32_0 = arith.constant 0 : i32
    %c0_i32_1 = arith.constant 0 : i32
    return %c0_i32, %c0_i32_0 : i32, i32
  }
  func.func @transform_3(%arg0: i32) -> (i32, i32) {
    %c0_i32 = arith.constant 0 : i32
    %c0_i32_0 = arith.constant 0 : i32
    %c0_i32_1 = arith.constant 0 : i32
    return %c0_i32, %c0_i32_0 : i32, i32
  }
  func.func @transform_4(%arg0: i32) -> (i32, i32, i32) {
    %c0_i32 = arith.constant 0 : i32
    %c0_i32_0 = arith.constant 0 : i32
    %c0_i32_1 = arith.constant 0 : i32
    %c0_i32_2 = arith.constant 0 : i32
    return %c0_i32, %c0_i32_0, %c0_i32_1 : i32, i32, i32
  }
  func.func @transform_5(%arg0: i32) -> (i32, i32, i32) {
    %c0_i32 = arith.constant 0 : i32
    %c0_i32_0 = arith.constant 0 : i32
    %c0_i32_1 = arith.constant 0 : i32
    %c0_i32_2 = arith.constant 0 : i32
    return %c0_i32, %c0_i32_0, %c0_i32_1 : i32, i32, i32
  }
  func.func @transform_6(%arg0: i32) -> (i32, i32) {
    %c0_i32 = arith.constant 0 : i32
    %c0_i32_0 = arith.constant 0 : i32
    %c0_i32_1 = arith.constant 0 : i32
    return %c0_i32, %c0_i32_0 : i32, i32
  }
}

</mosaic_0001>

<llo_original>
// kernel: vit_forward.1
$region0: #{vit_forward.1}
  #allocation0 [shape = 'u32[]', space=smem, size = 0x4, offset = 0x4, fixed_abs, tag = 'smem constant byte address 0x4 - core index']
  #allocation1 [shape = 'u32[144,128]{1,0:T(1,128)}', space=vmem, size = 0x12000, scoped, tag = 'internal scratch']
  %s0 = inlined_call_operand.vmem [shape: f32[20,192], index: 0, kind: input, shape index: {}]
  %s1 = inlined_call_operand.vmem [shape: bf16[16,4,8,32], index: 1, kind: input, shape index: {}]
  %s2 = inlined_call_operand.vmem [shape: bf16[768,32], index: 2, kind: input, shape index: {}]
  %s3 = inlined_call_operand.vmem [shape: f32[42,32], index: 3, kind: input, shape index: {}]
  %s4 = inlined_call_operand.vmem [shape: f32[4,20,20], index: 4, kind: input, shape index: {}]
  %s5 = inlined_call_operand.vmem [shape: f32[2,1,128], index: 5, kind: input, shape index: {}]
  %s6 = inlined_call_operand.hbm [shape: f32[2,32], index: 6, kind: output, shape index: {}]
  %s7 = sld [smem:[#allocation0]]
  $region34: #{vit_forward.1} parent=0
    _
  %s9 = ssub.s32 1, %s7
  %s10 = scalar_select 0, %s9, %s7
  $region1: #{vit_forward.1} parent=0
    #allocation2 [shape = 'u8[1024]{0}', space=vmem, size = 0x400, scoped, tag = 'output window, operand 0, single buffered']
    #allocation3 [shape = 's32[1]{0}', space=sflag, size = 0x4, scoped, tag = 'scoped memory for vit_forward.1']
    %11 = vsyncpa [#allocation3], 0
    // Predicated region
    $region2: #{vit_forward.1} parent=1 // pred_check
      _
    $region3: #{vit_forward.1} parent=1 // pred_check_branch
      %13 = sbr.rel (0) target = $region5
    $region4: #{vit_forward.1} parent=1 // pred_region
      _
    $region5: #{vit_forward.1} parent=1 // pred_fallthru
      _
    // Predicated region
    $region6: #{vit_forward.1} parent=1 // pred_check
      _
    $region7: #{vit_forward.1} parent=1 // pred_check_branch
      %15 = sbr.rel (0) target = $region9
    $region8: #{vit_forward.1} parent=1 // pred_region
      _
    $region9: #{vit_forward.1} parent=1 // pred_fallthru
      _
    // Predicated region
    $region10: #{vit_forward.1} parent=1 // pred_check
      _
    $region11: #{vit_forward.1} parent=1 // pred_check_branch
      %17 = sbr.rel (0) target = $region13
    $region12: #{vit_forward.1} parent=1 // pred_region
      _
    $region13: #{vit_forward.1} parent=1 // pred_fallthru
      _
    // Predicated region
    $region14: #{vit_forward.1} parent=1 // pred_check
      _
    $region15: #{vit_forward.1} parent=1 // pred_check_branch
      %19 = sbr.rel (0) target = $region17
    $region16: #{vit_forward.1} parent=1 // pred_region
      _
    $region17: #{vit_forward.1} parent=1 // pred_fallthru
      _
    // Predicated region
    $region18: #{vit_forward.1} parent=1 // pred_check
      _
    $region19: #{vit_forward.1} parent=1 // pred_check_branch
      %21 = sbr.rel (0) target = $region21
    $region20: #{vit_forward.1} parent=1 // pred_region
      _
    $region21: #{vit_forward.1} parent=1 // pred_fallthru
      _
    // Predicated region
    $region22: #{vit_forward.1} parent=1 // pred_check
      _
    $region23: #{vit_forward.1} parent=1 // pred_check_branch
      %23 = sbr.rel (0) target = $region25
    $region24: #{vit_forward.1} parent=1 // pred_region
      _
    $region25: #{vit_forward.1} parent=1 // pred_fallthru
      _
    %v25 = vld [vmem:[%s4] sm:$0xff]
    %v26 = vld [vmem:[%s4 + $0x8] sm:$0xff]
    %v27 = vld [vmem:[%s4 + $0x10] sm:$0xf]
    %s28 = scalar_lea.vmem %s4, 24
    %v29 = vld [vmem:[%s28] sm:$0xff]
    %v30 = vld [vmem:[%s28 + $0x8] sm:$0xff]
    %v31 = vld [vmem:[%s28 + $0x10] sm:$0xf]
    %s32 = scalar_lea.vmem %s4, 48
    %v33 = vld [vmem:[%s32] sm:$0xff]
    %v34 = vld [vmem:[%s32 + $0x8] sm:$0xff]
    %v35 = vld [vmem:[%s32 + $0x10] sm:$0xf]
    %s36 = scalar_lea.vmem %s4, 72
    %v37 = vld [vmem:[%s36] sm:$0xff]
    %v38 = vld [vmem:[%s36 + $0x8] sm:$0xff]
    %v39 = vld [vmem:[%s36 + $0x10] sm:$0xf]
    %v40 = vld [vmem:[%s0] sm:$0xff]
    %v41 = vld [vmem:[%s0 + $0x8] sm:$0xff]
    %v42 = vld [vmem:[%s0 + $0x10] sm:$0xff]
    %v43 = vld [vmem:[%s0 + $0x18] sm:$0xff]
    %v44 = vld [vmem:[%s0 + $0x20] sm:$0xf]
    %v45 = vld [vmem:[%s0 + $0x28] sm:$0xf]
    %v46 = vpack.c.bf16 %v42, %v40
    %v47 = vpack.c.bf16 %v43, %v41
    %v48 = vpack.c.bf16 %v44, %v44
    %v49 = vpack.c.bf16 %v45, %v45
    %v50 = vld [vmem:[%s2] sm:$0xf]
    %v51 = vld [vmem:[%s2 + $0x4] sm:$0xf]
    %v52 = vld [vmem:[%s2 + $0x8] sm:$0xf]
    %v53 = vld [vmem:[%s2 + $0xc] sm:$0xf]
    %v54 = vld [vmem:[%s2 + $0x10] sm:$0xf]
    %v55 = vld [vmem:[%s2 + $0x14] sm:$0xf]
    %v56 = vld [vmem:[%s2 + $0x18] sm:$0xf]
    %v57 = vld [vmem:[%s2 + $0x1c] sm:$0xf]
    %v58 = vld [vmem:[%s2 + $0x20] sm:$0xf]
    %v59 = vld [vmem:[%s2 + $0x24] sm:$0xf]
    %v60 = vld [vmem:[%s2 + $0x28] sm:$0xf]
    %v61 = vld [vmem:[%s2 + $0x2c] sm:$0xf]
    %v62 = vld [vmem:[%s2 + $0x30] sm:$0xf]
    %v63 = vld [vmem:[%s2 + $0x34] sm:$0xf]
    %v64 = vld [vmem:[%s2 + $0x38] sm:$0xf]
    %v65 = vld [vmem:[%s2 + $0x3c] sm:$0xf]
    %v66 = vld [vmem:[%s2 + $0x40] sm:$0xf]
    %v67 = vld [vmem:[%s2 + $0x44] sm:$0xf]
    %v68 = vld [vmem:[%s2 + $0x48] sm:$0xf]
    %v69 = vld [vmem:[%s2 + $0x4c] sm:$0xf]
    %v70 = vld [vmem:[%s2 + $0x50] sm:$0xf]
    %v71 = vld [vmem:[%s2 + $0x54] sm:$0xf]
    %v72 = vld [vmem:[%s2 + $0x58] sm:$0xf]
    %v73 = vld [vmem:[%s2 + $0x5c] sm:$0xf]
    %v74 = vld [vmem:[%s3] sm:$0xff]
    %v75 = vld [vmem:[%s3 + $0x8] sm:$0xff]
    %v76 = vld [vmem:[%s3 + $0x10] sm:$0xf]
    %v101 = vunpack.c.l.b16 %v50
    %v102 = vunpack.c.l.b16 %v51
    %v103 = vunpack.c.l.b16 %v52
    %v104 = vunpack.c.l.b16 %v53
    %v105 = vunpack.c.l.b16 %v54
    %v106 = vunpack.c.l.b16 %v55
    %v107 = vunpack.c.l.b16 %v56
    %v108 = vunpack.c.l.b16 %v57
    %v109 = vunpack.c.l.b16 %v58
    %v110 = vunpack.c.l.b16 %v59
    %v111 = vunpack.c.l.b16 %v60
    %v112 = vunpack.c.l.b16 %v61
    %v113 = vunpack.c.l.b16 %v62
    %v114 = vunpack.c.l.b16 %v63
    %v115 = vunpack.c.l.b16 %v64
    %v116 = vunpack.c.l.b16 %v65
    %v117 = vunpack.c.l.b16 %v66
    %v118 = vunpack.c.l.b16 %v67
    %v119 = vunpack.c.l.b16 %v68
    %v120 = vunpack.c.l.b16 %v69
    %v121 = vunpack.c.l.b16 %v70
    %v122 = vunpack.c.l.b16 %v71
    %v123 = vunpack.c.l.b16 %v72
    %v124 = vunpack.c.l.b16 %v73
    %v125 = vpack.c.b16 %v102, %v101
    %v126 = vpack.c.b16 %v104, %v103
    %v127 = vpack.c.b16 %v106, %v105
    %v128 = vpack.c.b16 %v108, %v107
    %v129 = vpack.c.b16 %v110, %v109
    %v130 = vpack.c.b16 %v112, %v111
    %v131 = vpack.c.b16 %v114, %v113
    %v132 = vpack.c.b16 %v116, %v115
    %v133 = vpack.c.b16 %v118, %v117
    %v134 = vpack.c.b16 %v120, %v119
    %v135 = vpack.c.b16 %v122, %v121
    %v136 = vpack.c.b16 %v124, %v123
    %vm149 = vcmask 523264
    %v151 = vsel %vm149, %v47, 0
    %v154 = vsel %vm149, %v49, 0
    %156 = vmatprep.subr.bf16.mxu0 0
    %157 = vmatpush1.bf16.msra.mxu0 %v125
    %158 = vmatprep.subr.bf16.mxu0 0
    %159 = vmatpush1.bf16.msra.mxu0 %v126
    %160 = vmatprep.subr.bf16.mxu0 0
    %161 = vmatpush1.bf16.msra.mxu0 %v127
    %162 = vmatprep.subr.bf16.mxu0 0
    %163 = vmatpush1.bf16.msra.mxu0 %v128
    %164 = vmatprep.subr.bf16.mxu0 0
    %165 = vmatpush1.bf16.msra.mxu0 %v129
    %166 = vmatprep.subr.bf16.mxu0 0
    %167 = vmatpush1.bf16.msra.mxu0 %v130
    %168 = vmatprep.subr.bf16.mxu0 0
    %169 = vmatpush1.bf16.msra.mxu0 %v131
    %170 = vmatprep.subr.bf16.mxu0 0
    %171 = vmatpush1.bf16.msra.mxu0 %v132
    %172 = vmatprep.subr.bf16.mxu0 0
    %173 = vmatpush1.bf16.msra.mxu0 %v133
    %174 = vmatprep.subr.bf16.mxu0 0
    %175 = vmatpush1.bf16.msra.mxu0 %v134
    %176 = vmatprep.subr.bf16.mxu0 0
    %177 = vmatpush1.bf16.msra.mxu0 %v135
    %178 = vmatprep.subr.bf16.mxu0 0
    %179 = vmatpush1.bf16.msra.mxu0 %v136
    %180 = vmatprep.subr.bf16.mxu0 0
    %181 = vmatpush1.bf16.msra.mxu0 0
    %182 = vmatprep.subr.bf16.mxu0 0
    %183 = vmatpush1.bf16.msra.mxu0 0
    %184 = vmatprep.subr.bf16.mxu0 0
    %185 = vmatpush1.bf16.msra.mxu0 0
    %186 = vmatprep.subr.bf16.mxu0 0
    %187 = vmatpush1.bf16.msra.mxu0 0
    %188 = vmatprep.mubr.bf16.mxu0 %v151
    %189 = vmatmul.mubr.bf16.gmra.mrb[0].mxu0 %v46
    %v190 = vpop.f32.mrb[0].mxu0
    %v191 = vadd.f32 %v74, %v190
    %v192 = vpop.f32.mrb[0].mxu0
    %v193 = vpop.f32.mrb[0].mxu0
    %v194 = vadd.f32 %v75, %v193
    %v195 = vpop.f32.mrb[0].mxu0
    %196 = vmatprep.mubr.bf16.mxu0 %v154
    %197 = vmatmul.mubr.bf16.gmra.mrb[0].mxu0 %v48
    %v198 = vpop.f32.mrb[0].mxu0
    %v199 = vadd.f32 %v76, %v198
    %v200 = vpop.f32.mrb[0].mxu0
    %v201 = vpop.f32.mrb[0].mxu0
    %v202 = vpop.f32.mrb[0].mxu0
    %203 = vdwg.mxu0
    %v204 = vld [vmem:[%s3 + $0x16] sm:$0x1]
    %v205 = vld [vmem:[%s3 + $0x17] sm:$0x1]
    %vm206 = vcmask 261120
    %v207 = vsel %vm206, %v191, 0.0
    %208 = vadd.xlane.f32.xlu0 %v207
    %v209 = vpop.xlane.xlu0 %208
    %v210 = vsel %vm206, %v194, 0.0
    %211 = vadd.xlane.f32.xlu0 %v210
    %v212 = vpop.xlane.xlu0 %211
    %vm213 = vcmask 257024
    %v214 = vsel %vm213, %v199, 0.0
    %215 = vadd.xlane.f32.xlu0 %v214
    %v216 = vpop.xlane.xlu0 %215
    %v217 = vrcp.pop 32.0
    %v218 = vmul.f32 %v209, %v217
    %v219 = vmul.f32 %v212, %v217
    %v220 = vmul.f32 %v216, %v217
    %v221 = vsub.f32 %v191, %v218
    %v222 = vsub.f32 %v194, %v219
    %v223 = vsub.f32 %v199, %v220
    %v224 = vmul.f32 %v221, %v221
    %v225 = vmul.f32 %v222, %v222
    %v226 = vmul.f32 %v223, %v223
    %v227 = vsel %vm206, %v224, 0.0
    %228 = vadd.xlane.f32.xlu0 %v227
    %v229 = vpop.xlane.xlu0 %228
    %v230 = vsel %vm206, %v225, 0.0
    %231 = vadd.xlane.f32.xlu0 %v230
    %v232 = vpop.xlane.xlu0 %231
    %v233 = vsel %vm213, %v226, 0.0
    %234 = vadd.xlane.f32.xlu0 %v233
    %v235 = vpop.xlane.xlu0 %234
    %v236 = vmul.f32 %v229, %v217
    %v237 = vmul.f32 %v232, %v217
    %v238 = vmul.f32 %v235, %v217
    %v239 = vadd.f32 %v236, 1e-05
    %v240 = vadd.f32 %v237, 1e-05
    %v241 = vadd.f32 %v238, 1e-05
    %v242 = vrsqrt.pop %v239
    %v243 = vrsqrt.pop %v240
    %v244 = vrsqrt.pop %v241
    %v245 = vmul.f32 %v221, %v242
    %v246 = vmul.f32 %v222, %v243
    %v247 = vmul.f32 %v223, %v244
    %v248 = vlaneseq
    %v249 = vshrl.u32 %v248, 7
    %v250 = vsub.s32 0, %v249
    %v251 = vrot.slane %v204, %v250
    %v252 = vmul.f32 %v245, %v251
    %v253 = vmul.f32 %v246, %v251
    %v254 = vmul.f32 %v247, %v251
    %v255 = vlaneseq
    %v256 = vshrl.u32 %v255, 7
    %v257 = vsub.s32 0, %v256
    %v258 = vrot.slane %v205, %v257
    %v259 = vadd.f32 %v252, %v258
    %v260 = vadd.f32 %v253, %v258
    %v261 = vadd.f32 %v254, %v258
    %v262 = vld [vmem:[%s3 + $0x18] sm:$0x1]
    %v263 = vpack.c.bf16 %v260, %v259
    %v264 = vpack.c.bf16 %v261, %v261
    %v265 = vld [vmem:[%s1] sm:$0xf]
    %v266 = vld [vmem:[%s1 + $0x4] sm:$0xf]
    %v267 = vld [vmem:[%s1 + $0x8] sm:$0xf]
    %v268 = vld [vmem:[%s1 + $0xc] sm:$0xf]
    %v270 = vsel %vm206, %v263, 0
    %v273 = vsel %vm206, %v264, 0
    %v276 = vsel %vm206, %v265, 0
    %278 = vmatprep.subr.bf16.mxu0 0
    %279 = vmatpush1.bf16.xpose.msra.mxu0 %v276
    %280 = vmatprep.subr.bf16.mxu0 0
    %281 = vmatpush1.bf16.xpose.msra.mxu0 0
    %282 = vmatprep.subr.bf16.mxu0 0
    %283 = vmatpush1.bf16.xpose.msra.mxu0 0
    %284 = vmatprep.subr.bf16.mxu0 0
    %285 = vmatpush1.bf16.xpose.msra.mxu0 0
    %286 = vmatprep.subr.bf16.mxu0 0
    %287 = vmatpush1.bf16.xpose.msra.mxu0 0
    %288 = vmatprep.subr.bf16.mxu0 0
    %289 = vmatpush1.bf16.xpose.msra.mxu0 0
    %290 = vmatprep.subr.bf16.mxu0 0
    %291 = vmatpush1.bf16.xpose.msra.mxu0 0
    %292 = vmatprep.subr.bf16.mxu0 0
    %293 = vmatpush1.bf16.xpose.msra.mxu0 0
    %294 = vmatprep.subr.bf16.mxu0 0
    %295 = vmatpush1.bf16.xpose.msra.mxu0 0
    %296 = vmatprep.subr.bf16.mxu0 0
    %297 = vmatpush1.bf16.xpose.msra.mxu0 0
    %298 = vmatprep.subr.bf16.mxu0 0
    %299 = vmatpush1.bf16.xpose.msra.mxu0 0
    %300 = vmatprep.subr.bf16.mxu0 0
    %301 = vmatpush1.bf16.xpose.msra.mxu0 0
    %302 = vmatprep.subr.bf16.mxu0 0
    %303 = vmatpush1.bf16.xpose.msra.mxu0 0
    %304 = vmatprep.subr.bf16.mxu0 0
    %305 = vmatpush1.bf16.xpose.msra.mxu0 0
    %306 = vmatprep.subr.bf16.mxu0 0
    %307 = vmatpush1.bf16.xpose.msra.mxu0 0
    %308 = vmatprep.subr.bf16.mxu0 0
    %309 = vmatpush1.bf16.xpose.msra.mxu0 0
    %310 = vmatprep.mubr.bf16.mxu0 0
    %311 = vmatmul.mubr.bf16.gmra.mrb[0].mxu0 %v270
    %v312 = vpop.f32.mrb[0].mxu0
    %v313 = vadd.f32 0.0, %v312
    %v314 = vpop.f32.mrb[0].mxu0
    %v315 = vpop.f32.mrb[0].mxu0
    %v316 = vadd.f32 0.0, %v315
    %v317 = vpop.f32.mrb[0].mxu0
    %318 = vmatprep.mubr.bf16.mxu0 0
    %319 = vmatmul.mubr.bf16.gmra.mrb[0].mxu0 %v273
    %v320 = vpop.f32.mrb[0].mxu0
    %v321 = vadd.f32 0.0, %v320
    %v322 = vpop.f32.mrb[0].mxu0
    %v323 = vpop.f32.mrb[0].mxu0
    %v324 = vpop.f32.mrb[0].mxu0
    %325 = vdwg.mxu0
    %v327 = vsel %vm206, %v266, 0
    %329 = vmatprep.subr.bf16.mxu0 0
    %330 = vmatpush1.bf16.xpose.msra.mxu0 %v327
    %331 = vmatprep.subr.bf16.mxu0 0
    %332 = vmatpush1.bf16.xpose.msra.mxu0 0
    %333 = vmatprep.subr.bf16.mxu0 0
    %334 = vmatpush1.bf16.xpose.msra.mxu0 0
    %335 = vmatprep.subr.bf16.mxu0 0
    %336 = vmatpush1.bf16.xpose.msra.mxu0 0
    %337 = vmatprep.subr.bf16.mxu0 0
    %338 = vmatpush1.bf16.xpose.msra.mxu0 0
    %339 = vmatprep.subr.bf16.mxu0 0
    %340 = vmatpush1.bf16.xpose.msra.mxu0 0
    %341 = vmatprep.subr.bf16.mxu0 0
    %342 = vmatpush1.bf16.xpose.msra.mxu0 0
    %343 = vmatprep.subr.bf16.mxu0 0
    %344 = vmatpush1.bf16.xpose.msra.mxu0 0
    %345 = vmatprep.subr.bf16.mxu0 0
    %346 = vmatpush1.bf16.xpose.msra.mxu0 0
    %347 = vmatprep.subr.bf16.mxu0 0
    %348 = vmatpush1.bf16.xpose.msra.mxu0 0
    %349 = vmatprep.subr.bf16.mxu0 0
    %350 = vmatpush1.bf16.xpose.msra.mxu0 0
    %351 = vmatprep.subr.bf16.mxu0 0
    %352 = vmatpush1.bf16.xpose.msra.mxu0 0
    %353 = vmatprep.subr.bf16.mxu0 0
    %354 = vmatpush1.bf16.xpose.msra.mxu0 0
    %355 = vmatprep.subr.bf16.mxu0 0
    %356 = vmatpush1.bf16.xpose.msra.mxu0 0
    %357 = vmatprep.subr.bf16.mxu0 0
    %358 = vmatpush1.bf16.xpose.msra.mxu0 0
    %359 = vmatprep.subr.bf16.mxu0 0
    %360 = vmatpush1.bf16.xpose.msra.mxu0 0
    %361 = vmatprep.mubr.bf16.mxu0 0
    %362 = vmatmul.mubr.bf16.gmra.mrb[0].mxu0 %v270
    %v363 = vpop.f32.mrb[0].mxu0
    %v364 = vadd.f32 0.0, %v363
    %v365 = vpop.f32.mrb[0].mxu0
    %v366 = vpop.f32.mrb[0].mxu0
    %v367 = vadd.f32 0.0, %v366
    %v368 = vpop.f32.mrb[0].mxu0
    %369 = vmatprep.mubr.bf16.mxu0 0
    %370 = vmatmul.mubr.bf16.gmra.mrb[0].mxu0 %v273
    %v371 = vpop.f32.mrb[0].mxu0
    %v372 = vadd.f32 0.0, %v371
    %v373 = vpop.f32.mrb[0].mxu0
    %v374 = vpop.f32.mrb[0].mxu0
    %v375 = vpop.f32.mrb[0].mxu0
    %376 = vdwg.mxu0
    %v378 = vsel %vm206, %v267, 0
    %380 = vmatprep.subr.bf16.mxu0 0
    %381 = vmatpush1.bf16.xpose.msra.mxu0 %v378
    %382 = vmatprep.subr.bf16.mxu0 0
    %383 = vmatpush1.bf16.xpose.msra.mxu0 0
    %384 = vmatprep.subr.bf16.mxu0 0
    %385 = vmatpush1.bf16.xpose.msra.mxu0 0
    %386 = vmatprep.subr.bf16.mxu0 0
    %387 = vmatpush1.bf16.xpose.msra.mxu0 0
    %388 = vmatprep.subr.bf16.mxu0 0
    %389 = vmatpush1.bf16.xpose.msra.mxu0 0
    %390 = vmatprep.subr.bf16.mxu0 0
    %391 = vmatpush1.bf16.xpose.msra.mxu0 0
    %392 = vmatprep.subr.bf16.mxu0 0
    %393 = vmatpush1.bf16.xpose.msra.mxu0 0
    %394 = vmatprep.subr.bf16.mxu0 0
    %395 = vmatpush1.bf16.xpose.msra.mxu0 0
    %396 = vmatprep.subr.bf16.mxu0 0
    %397 = vmatpush1.bf16.xpose.msra.mxu0 0
    %398 = vmatprep.subr.bf16.mxu0 0
    %399 = vmatpush1.bf16.xpose.msra.mxu0 0
    %400 = vmatprep.subr.bf16.mxu0 0
    %401 = vmatpush1.bf16.xpose.msra.mxu0 0
    %402 = vmatprep.subr.bf16.mxu0 0
    %403 = vmatpush1.bf16.xpose.msra.mxu0 0
    %404 = vmatprep.subr.bf16.mxu0 0
    %405 = vmatpush1.bf16.xpose.msra.mxu0 0
    %406 = vmatprep.subr.bf16.mxu0 0
    %407 = vmatpush1.bf16.xpose.msra.mxu0 0
    %408 = vmatprep.subr.bf16.mxu0 0
    %409 = vmatpush1.bf16.xpose.msra.mxu0 0
    %410 = vmatprep.subr.bf16.mxu0 0
    %411 = vmatpush1.bf16.xpose.msra.mxu0 0
    %412 = vmatprep.mubr.bf16.mxu0 0
    %413 = vmatmul.mubr.bf16.gmra.mrb[0].mxu0 %v270
    %v414 = vpop.f32.mrb[0].mxu0
    %v415 = vadd.f32 0.0, %v414
    %v416 = vpop.f32.mrb[0].mxu0
    %v417 = vpop.f32.mrb[0].mxu0
    %v418 = vadd.f32 0.0, %v417
    %v419 = vpop.f32.mrb[0].mxu0
    %420 = vmatprep.mubr.bf16.mxu0 0
    %421 = vmatmul.mubr.bf16.gmra.mrb[0].mxu0 %v273
    %v422 = vpop.f32.mrb[0].mxu0
    %v423 = vadd.f32 0.0, %v422
    %v424 = vpop.f32.mrb[0].mxu0
    %v425 = vpop.f32.mrb[0].mxu0
    %v426 = vpop.f32.mrb[0].mxu0
    %427 = vdwg.mxu0
    %v429 = vsel %vm206, %v268, 0
    %431 = vmatprep.subr.bf16.mxu0 0
    %432 = vmatpush1.bf16.xpose.msra.mxu0 %v429
    %433 = vmatprep.subr.bf16.mxu0 0
    %434 = vmatpush1.bf16.xpose.msra.mxu0 0
    %435 = vmatprep.subr.bf16.mxu0 0
    %436 = vmatpush1.bf16.xpose.msra.mxu0 0
    %437 = vmatprep.subr.bf16.mxu0 0
    %438 = vmatpush1.bf16.xpose.msra.mxu0 0
    %439 = vmatprep.subr.bf16.mxu0 0
    %440 = vmatpush1.bf16.xpose.msra.mxu0 0
    %441 = vmatprep.subr.bf16.mxu0 0
    %442 = vmatpush1.bf16.xpose.msra.mxu0 0
    %443 = vmatprep.subr.bf16.mxu0 0
    %444 = vmatpush1.bf16.xpose.msra.mxu0 0
    %445 = vmatprep.subr.bf16.mxu0 0
    %446 = vmatpush1.bf16.xpose.msra.mxu0 0
    %447 = vmatprep.subr.bf16.mxu0 0
    %448 = vmatpush1.bf16.xpose.msra.mxu0 0
    %449 = vmatprep.subr.bf16.mxu0 0
    %450 = vmatpush1.bf16.xpose.msra.mxu0 0
    %451 = vmatprep.subr.bf16.mxu0 0
    %452 = vmatpush1.bf16.xpose.msra.mxu0 0
    %453 = vmatprep.subr.bf16.mxu0 0
    %454 = vmatpush1.bf16.xpose.msra.mxu0 0
    %455 = vmatprep.subr.bf16.mxu0 0
    %456 = vmatpush1.bf16.xpose.msra.mxu0 0
    %457 = vmatprep.subr.bf16.mxu0 0
    %458 = vmatpush1.bf16.xpose.msra.mxu0 0
    %459 = vmatprep.subr.bf16.mxu0 0
    %460 = vmatpush1.bf16.xpose.msra.mxu0 0
    %461 = vmatprep.subr.bf16.mxu0 0
    %462 = vmatpush1.bf16.xpose.msra.mxu0 0
    %463 = vmatprep.mubr.bf16.mxu0 0
    %464 = vmatmul.mubr.bf16.gmra.mrb[0].mxu0 %v270
    %v465 = vpop.f32.mrb[0].mxu0
    %v466 = vadd.f32 0.0, %v465
    %v467 = vpop.f32.mrb[0].mxu0
    %v468 = vpop.f32.mrb[0].mxu0
    %v469 = vadd.f32 0.0, %v468
    %v470 = vpop.f32.mrb[0].mxu0
    %471 = vmatprep.mubr.bf16.mxu0 0
    %472 = vmatmul.mubr.bf16.gmra.mrb[0].mxu0 %v273
    %v473 = vpop.f32.mrb[0].mxu0
    %v474 = vadd.f32 0.0, %v473
    %v475 = vpop.f32.mrb[0].mxu0
    %v476 = vpop.f32.mrb[0].mxu0
    %v477 = vpop.f32.mrb[0].mxu0
    %478 = vdwg.mxu0
    %s479 = scalar_lea.vmem %s1, 16
    %v480 = vld [vmem:[%s479] sm:$0xf]
    %v481 = vld [vmem:[%s479 + $0x4] sm:$0xf]
    %v482 = vld [vmem:[%s479 + $0x8] sm:$0xf]
    %v483 = vld [vmem:[%s479 + $0xc] sm:$0xf]
    %v485 = vsel %vm206, %v480, 0
    %487 = vmatprep.subr.bf16.mxu0 0
    %488 = vmatpush1.bf16.xpose.msra.mxu0 %v485
    %489 = vmatprep.subr.bf16.mxu0 0
    %490 = vmatpush1.bf16.xpose.msra.mxu0 0
    %491 = vmatprep.subr.bf16.mxu0 0
    %492 = vmatpush1.bf16.xpose.msra.mxu0 0
    %493 = vmatprep.subr.bf16.mxu0 0
    %494 = vmatpush1.bf16.xpose.msra.mxu0 0
    %495 = vmatprep.subr.bf16.mxu0 0
    %496 = vmatpush1.bf16.xpose.msra.mxu0 0
    %497 = vmatprep.subr.bf16.mxu0 0
    %498 = vmatpush1.bf16.xpose.msra.mxu0 0
    %499 = vmatprep.subr.bf16.mxu0 0
    %500 = vmatpush1.bf16.xpose.msra.mxu0 0
    %501 = vmatprep.subr.bf16.mxu0 0
    %502 = vmatpush1.bf16.xpose.msra.mxu0 0
    %503 = vmatprep.subr.bf16.mxu0 0
    %504 = vmatpush1.bf16.xpose.msra.mxu0 0
    %505 = vmatprep.subr.bf16.mxu0 0
    %506 = vmatpush1.bf16.xpose.msra.mxu0 0
    %507 = vmatprep.subr.bf16.mxu0 0
    %508 = vmatpush1.bf16.xpose.msra.mxu0 0
    %509 = vmatprep.subr.bf16.mxu0 0
    %510 = vmatpush1.bf16.xpose.msra.mxu0 0
    %511 = vmatprep.subr.bf16.mxu0 0
    %512 = vmatpush1.bf16.xpose.msra.mxu0 0
    %513 = vmatprep.subr.bf16.mxu0 0
    %514 = vmatpush1.bf16.xpose.msra.mxu0 0
    %515 = vmatprep.subr.bf16.mxu0 0
    %516 = vmatpush1.bf16.xpose.msra.mxu0 0
    %517 = vmatprep.subr.bf16.mxu0 0
    %518 = vmatpush1.bf16.xpose.msra.mxu0 0
    %519 = vmatprep.mubr.bf16.mxu0 0
    %520 = vmatmul.mubr.bf16.gmra.mrb[0].mxu0 %v270
    %v521 = vpop.f32.mrb[0].mxu0
    %v522 = vadd.f32 0.0, %v521
    %v523 = vpop.f32.mrb[0].mxu0
    %v524 = vpop.f32.mrb[0].mxu0
    %v525 = vadd.f32 0.0, %v524
    %v526 = vpop.f32.mrb[0].mxu0
    %527 = vmatprep.mubr.bf16.mxu0 0
    %528 = vmatmul.mubr.bf16.gmra.mrb[0].mxu0 %v273
    %v529 = vpop.f32.mrb[0].mxu0
    %v530 = vadd.f32 0.0, %v529
    %v531 = vpop.f32.mrb[0].mxu0
    %v532 = vpop.f32.mrb[0].mxu0
    %v533 = vpop.f32.mrb[0].mxu0
    %534 = vdwg.mxu0
    %v536 = vsel %vm206, %v481, 0
    %538 = vmatprep.subr.bf16.mxu0 0
    %539 = vmatpush1.bf16.xpose.msra.mxu0 %v536
    %540 = vmatprep.subr.bf16.mxu0 0
    %541 = vmatpush1.bf16.xpose.msra.mxu0 0
    %542 = vmatprep.subr.bf16.mxu0 0
    %543 = vmatpush1.bf16.xpose.msra.mxu0 0
    %544 = vmatprep.subr.bf16.mxu0 0
    %545 = vmatpush1.bf16.xpose.msra.mxu0 0
    %546 = vmatprep.subr.bf16.mxu0 0
    %547 = vmatpush1.bf16.xpose.msra.mxu0 0
    %548 = vmatprep.subr.bf16.mxu0 0
    %549 = vmatpush1.bf16.xpose.msra.mxu0 0
    %550 = vmatprep.subr.bf16.mxu0 0
    %551 = vmatpush1.bf16.xpose.msra.mxu0 0
    %552 = vmatprep.subr.bf16.mxu0 0
    %553 = vmatpush1.bf16.xpose.msra.mxu0 0
    %554 = vmatprep.subr.bf16.mxu0 0
    %555 = vmatpush1.bf16.xpose.msra.mxu0 0
    %556 = vmatprep.subr.bf16.mxu0 0
    %557 = vmatpush1.bf16.xpose.msra.mxu0 0
    %558 = vmatprep.subr.bf16.mxu0 0
    %559 = vmatpush1.bf16.xpose.msra.mxu0 0
    %560 = vmatprep.subr.bf16.mxu0 0
    %561 = vmatpush1.bf16.xpose.msra.mxu0 0
    %562 = vmatprep.subr.bf16.mxu0 0
    %563 = vmatpush1.bf16.xpose.msra.mxu0 0
    %564 = vmatprep.subr.bf16.mxu0 0
    %565 = vmatpush1.bf16.xpose.msra.mxu0 0
    %566 = vmatprep.subr.bf16.mxu0 0
    %567 = vmatpush1.bf16.xpose.msra.mxu0 0
    %568 = vmatprep.subr.bf16.mxu0 0
    %569 = vmatpush1.bf16.xpose.msra.mxu0 0
    %570 = vmatprep.mubr.bf16.mxu0 0
    %571 = vmatmul.mubr.bf16.gmra.mrb[0].mxu0 %v270
    %v572 = vpop.f32.mrb[0].mxu0
    %v573 = vadd.f32 0.0, %v572
    %v574 = vpop.f32.mrb[0].mxu0
    %v575 = vpop.f32.mrb[0].mxu0
    %v576 = vadd.f32 0.0, %v575
    %v577 = vpop.f32.mrb[0].mxu0
    %578 = vmatprep.mubr.bf16.mxu0 0
    %579 = vmatmul.mubr.bf16.gmra.mrb[0].mxu0 %v273
    %v580 = vpop.f32.mrb[0].mxu0
    %v581 = vadd.f32 0.0, %v580
    %v582 = vpop.f32.mrb[0].mxu0
    %v583 = vpop.f32.mrb[0].mxu0
    %v584 = vpop.f32.mrb[0].mxu0
    %585 = vdwg.mxu0
    %v587 = vsel %vm206, %v482, 0
    %589 = vmatprep.subr.bf16.mxu0 0
    %590 = vmatpush1.bf16.xpose.msra.mxu0 %v587
    %591 = vmatprep.subr.bf16.mxu0 0
    %592 = vmatpush1.bf16.xpose.msra.mxu0 0
    %593 = vmatprep.subr.bf16.mxu0 0
    %594 = vmatpush1.bf16.xpose.msra.mxu0 0
    %595 = vmatprep.subr.bf16.mxu0 0
    %596 = vmatpush1.bf16.xpose.msra.mxu0 0
    %597 = vmatprep.subr.bf16.mxu0 0
    %598 = vmatpush1.bf16.xpose.msra.mxu0 0
    %599 = vmatprep.subr.bf16.mxu0 0
    %600 = vmatpush1.bf16.xpose.msra.mxu0 0
    %601 = vmatprep.subr.bf16.mxu0 0
    %602 = vmatpush1.bf16.xpose.msra.mxu0 0
    %603 = vmatprep.subr.bf16.mxu0 0
    %604 = vmatpush1.bf16.xpose.msra.mxu0 0
    %605 = vmatprep.subr.bf16.mxu0 0
    %606 = vmatpush1.bf16.xpose.msra.mxu0 0
    %607 = vmatprep.subr.bf16.mxu0 0
    %608 = vmatpush1.bf16.xpose.msra.mxu0 0
    %609 = vmatprep.subr.bf16.mxu0 0
    %610 = vmatpush1.bf16.xpose.msra.mxu0 0
    %611 = vmatprep.subr.bf16.mxu0 0
    %612 = vmatpush1.bf16.xpose.msra.mxu0 0
    %613 = vmatprep.subr.bf16.mxu0 0
    %614 = vmatpush1.bf16.xpose.msra.mxu0 0
    %615 = vmatprep.subr.bf16.mxu0 0
    %616 = vmatpush1.bf16.xpose.msra.mxu0 0
    %617 = vmatprep.subr.bf16.mxu0 0
    %618 = vmatpush1.bf16.xpose.msra.mxu0 0
    %619 = vmatprep.subr.bf16.mxu0 0
    %620 = vmatpush1.bf16.xpose.msra.mxu0 0
    %621 = vmatprep.mubr.bf16.mxu0 0
    %622 = vmatmul.mubr.bf16.gmra.mrb[0].mxu0 %v270
    %v623 = vpop.f32.mrb[0].mxu0
    %v624 = vadd.f32 0.0, %v623
    %v625 = vpop.f32.mrb[0].mxu0
    %v626 = vpop.f32.mrb[0].mxu0
    %v627 = vadd.f32 0.0, %v626
    %v628 = vpop.f32.mrb[0].mxu0
    %629 = vmatprep.mubr.bf16.mxu0 0
    %630 = vmatmul.mubr.bf16.gmra.mrb[0].mxu0 %v273
    %v631 = vpop.f32.mrb[0].mxu0
    %v632 = vadd.f32 0.0, %v631
    %v633 = vpop.f32.mrb[0].mxu0
    %v634 = vpop.f32.mrb[0].mxu0
    %v635 = vpop.f32.mrb[0].mxu0
    %636 = vdwg.mxu0
    %v638 = vsel %vm206, %v483, 0
    %640 = vmatprep.subr.bf16.mxu0 0
    %641 = vmatpush1.bf16.xpose.msra.mxu0 %v638
    %642 = vmatprep.subr.bf16.mxu0 0
    %643 = vmatpush1.bf16.xpose.msra.mxu0 0
    %644 = vmatprep.subr.bf16.mxu0 0
    %645 = vmatpush1.bf16.xpose.msra.mxu0 0
    %646 = vmatprep.subr.bf16.mxu0 0
    %647 = vmatpush1.bf16.xpose.msra.mxu0 0
    %648 = vmatprep.subr.bf16.mxu0 0
    %649 = vmatpush1.bf16.xpose.msra.mxu0 0
    %650 = vmatprep.subr.bf16.mxu0 0
    %651 = vmatpush1.bf16.xpose.msra.mxu0 0
    %652 = vmatprep.subr.bf16.mxu0 0
    %653 = vmatpush1.bf16.xpose.msra.mxu0 0
    %654 = vmatprep.subr.bf16.mxu0 0
    %655 = vmatpush1.bf16.xpose.msra.mxu0 0
    %656 = vmatprep.subr.bf16.mxu0 0
    %657 = vmatpush1.bf16.xpose.msra.mxu0 0
    %658 = vmatprep.subr.bf16.mxu0 0
    %659 = vmatpush1.bf16.xpose.msra.mxu0 0
    %660 = vmatprep.subr.bf16.mxu0 0
    %661 = vmatpush1.bf16.xpose.msra.mxu0 0
    %662 = vmatprep.subr.bf16.mxu0 0
    %663 = vmatpush1.bf16.xpose.msra.mxu0 0
    %664 = vmatprep.subr.bf16.mxu0 0
    %665 = vmatpush1.bf16.xpose.msra.mxu0 0
    %666 = vmatprep.subr.bf16.mxu0 0
    %667 = vmatpush1.bf16.xpose.msra.mxu0 0
    %668 = vmatprep.subr.bf16.mxu0 0
    %669 = vmatpush1.bf16.xpose.msra.mxu0 0
    %670 = vmatprep.subr.bf16.mxu0 0
    %671 = vmatpush1.bf16.xpose.msra.mxu0 0
    %672 = vmatprep.mubr.bf16.mxu0 0
    %673 = vmatmul.mubr.bf16.gmra.mrb[0].mxu0 %v270
    %v674 = vpop.f32.mrb[0].mxu0
    %v675 = vadd.f32 0.0, %v674
    %v676 = vpop.f32.mrb[0].mxu0
    %v677 = vpop.f32.mrb[0].mxu0
    %v678 = vadd.f32 0.0, %v677
    %v679 = vpop.f32.mrb[0].mxu0
    %680 = vmatprep.mubr.bf16.mxu0 0
    %681 = vmatmul.mubr.bf16.gmra.mrb[0].mxu0 %v273
    %v682 = vpop.f32.mrb[0].mxu0
    %v683 = vadd.f32 0.0, %v682
    %v684 = vpop.f32.mrb[0].mxu0
    %v685 = vpop.f32.mrb[0].mxu0
    %v686 = vpop.f32.mrb[0].mxu0
    %687 = vdwg.mxu0
    %s688 = scalar_lea.vmem %s1, 32
    %v689 = vld [vmem:[%s688] sm:$0xf]
    %v690 = vld [vmem:[%s688 + $0x4] sm:$0xf]
    %v691 = vld [vmem:[%s688 + $0x8] sm:$0xf]
    %v692 = vld [vmem:[%s688 + $0xc] sm:$0xf]
    %v694 = vsel %vm206, %v689, 0
    %696 = vmatprep.subr.bf16.mxu0 0
    %697 = vmatpush1.bf16.xpose.msra.mxu0 %v694
    %698 = vmatprep.subr.bf16.mxu0 0
    %699 = vmatpush1.bf16.xpose.msra.mxu0 0
    %700 = vmatprep.subr.bf16.mxu0 0
    %701 = vmatpush1.bf16.xpose.msra.mxu0 0
    %702 = vmatprep.subr.bf16.mxu0 0
    %703 = vmatpush1.bf16.xpose.msra.mxu0 0
    %704 = vmatprep.subr.bf16.mxu0 0
    %705 = vmatpush1.bf16.xpose.msra.mxu0 0
    %706 = vmatprep.subr.bf16.mxu0 0
    %707 = vmatpush1.bf16.xpose.msra.mxu0 0
    %708 = vmatprep.subr.bf16.mxu0 0
    %709 = vmatpush1.bf16.xpose.msra.mxu0 0
    %710 = vmatprep.subr.bf16.mxu0 0
    %711 = vmatpush1.bf16.xpose.msra.mxu0 0
    %712 = vmatprep.subr.bf16.mxu0 0
    %713 = vmatpush1.bf16.xpose.msra.mxu0 0
    %714 = vmatprep.subr.bf16.mxu0 0
    %715 = vmatpush1.bf16.xpose.msra.mxu0 0
    %716 = vmatprep.subr.bf16.mxu0 0
    %717 = vmatpush1.bf16.xpose.msra.mxu0 0
    %718 = vmatprep.subr.bf16.mxu0 0
    %719 = vmatpush1.bf16.xpose.msra.mxu0 0
    %720 = vmatprep.subr.bf16.mxu0 0
    %721 = vmatpush1.bf16.xpose.msra.mxu0 0
    %722 = vmatprep.subr.bf16.mxu0 0
    %723 = vmatpush1.bf16.xpose.msra.mxu0 0
    %724 = vmatprep.subr.bf16.mxu0 0
    %725 = vmatpush1.bf16.xpose.msra.mxu0 0
    %726 = vmatprep.subr.bf16.mxu0 0
    %727 = vmatpush1.bf16.xpose.msra.mxu0 0
    %728 = vmatprep.mubr.bf16.mxu0 0
    %729 = vmatmul.mubr.bf16.gmra.mrb[0].mxu0 %v270
    %v730 = vpop.f32.mrb[0].mxu0
    %v731 = vadd.f32 0.0, %v730
    %v732 = vpop.f32.mrb[0].mxu0
    %v733 = vpop.f32.mrb[0].mxu0
    %v734 = vadd.f32 0.0, %v733
    %v735 = vpop.f32.mrb[0].mxu0
    %736 = vmatprep.mubr.bf16.mxu0 0
    %737 = vmatmul.mubr.bf16.gmra.mrb[0].mxu0 %v273
    %v738 = vpop.f32.mrb[0].mxu0
    %v739 = vadd.f32 0.0, %v738
    %v740 = vpop.f32.mrb[0].mxu0
    %v741 = vpop.f32.mrb[0].mxu0
    %v742 = vpop.f32.mrb[0].mxu0
    %743 = vdwg.mxu0
    %v745 = vsel %vm206, %v690, 0
    %747 = vmatprep.subr.bf16.mxu0 0
    %748 = vmatpush1.bf16.xpose.msra.mxu0 %v745
    %749 = vmatprep.subr.bf16.mxu0 0
    %750 = vmatpush1.bf16.xpose.msra.mxu0 0
    %751 = vmatprep.subr.bf16.mxu0 0
    %752 = vmatpush1.bf16.xpose.msra.mxu0 0
    %753 = vmatprep.subr.bf16.mxu0 0
    %754 = vmatpush1.bf16.xpose.msra.mxu0 0
    %755 = vmatprep.subr.bf16.mxu0 0
    %756 = vmatpush1.bf16.xpose.msra.mxu0 0
    %757 = vmatprep.subr.bf16.mxu0 0
    %758 = vmatpush1.bf16.xpose.msra.mxu0 0
    %759 = vmatprep.subr.bf16.mxu0 0
    %760 = vmatpush1.bf16.xpose.msra.mxu0 0
    %761 = vmatprep.subr.bf16.mxu0 0
    %762 = vmatpush1.bf16.xpose.msra.mxu0 0
    %763 = vmatprep.subr.bf16.mxu0 0
    %764 = vmatpush1.bf16.xpose.msra.mxu0 0
    %765 = vmatprep.subr.bf16.mxu0 0
    %766 = vmatpush1.bf16.xpose.msra.mxu0 0
    %767 = vmatprep.subr.bf16.mxu0 0
    %768 = vmatpush1.bf16.xpose.msra.mxu0 0
    %769 = vmatprep.subr.bf16.mxu0 0
    %770 = vmatpush1.bf16.xpose.msra.mxu0 0
    %771 = vmatprep.subr.bf16.mxu0 0
    %772 = vmatpush1.bf16.xpose.msra.mxu0 0
    %773 = vmatprep.subr.bf16.mxu0 0
    %774 = vmatpush1.bf16.xpose.msra.mxu0 0
    %775 = vmatprep.subr.bf16.mxu0 0
    %776 = vmatpush1.bf16.xpose.msra.mxu0 0
    %777 = vmatprep.subr.bf16.mxu0 0
    %778 = vmatpush1.bf16.xpose.msra.mxu0 0
    %779 = vmatprep.mubr.bf16.mxu0 0
    %780 = vmatmul.mubr.bf16.gmra.mrb[0].mxu0 %v270
    %v781 = vpop.f32.mrb[0].mxu0
    %v782 = vadd.f32 0.0, %v781
    %v783 = vpop.f32.mrb[0].mxu0
    %v784 = vpop.f32.mrb[0].mxu0
    %v785 = vadd.f32 0.0, %v784
    %v786 = vpop.f32.mrb[0].mxu0
    %787 = vmatprep.mubr.bf16.mxu0 0
    %788 = vmatmul.mubr.bf16.gmra.mrb[0].mxu0 %v273
    %v789 = vpop.f32.mrb[0].mxu0
    %v790 = vadd.f32 0.0, %v789
    %v791 = vpop.f32.mrb[0].mxu0
    %v792 = vpop.f32.mrb[0].mxu0
    %v793 = vpop.f32.mrb[0].mxu0
    %794 = vdwg.mxu0
    %v796 = vsel %vm206, %v691, 0
    %798 = vmatprep.subr.bf16.mxu0 0
    %799 = vmatpush1.bf16.xpose.msra.mxu0 %v796
    %800 = vmatprep.subr.bf16.mxu0 0
    %801 = vmatpush1.bf16.xpose.msra.mxu0 0
    %802 = vmatprep.subr.bf16.mxu0 0
    %803 = vmatpush1.bf16.xpose.msra.mxu0 0
    %804 = vmatprep.subr.bf16.mxu0 0
    %805 = vmatpush1.bf16.xpose.msra.mxu0 0
    %806 = vmatprep.subr.bf16.mxu0 0
    %807 = vmatpush1.bf16.xpose.msra.mxu0 0
    %808 = vmatprep.subr.bf16.mxu0 0
    %809 = vmatpush1.bf16.xpose.msra.mxu0 0
    %810 = vmatprep.subr.bf16.mxu0 0
    %811 = vmatpush1.bf16.xpose.msra.mxu0 0
    %812 = vmatprep.subr.bf16.mxu0 0
    %813 = vmatpush1.bf16.xpose.msra.mxu0 0
    %814 = vmatprep.subr.bf16.mxu0 0
    %815 = vmatpush1.bf16.xpose.msra.mxu0 0
    %816 = vmatprep.subr.bf16.mxu0 0
    %817 = vmatpush1.bf16.xpose.msra.mxu0 0
    %818 = vmatprep.subr.bf16.mxu0 0
    %819 = vmatpush1.bf16.xpose.msra.mxu0 0
    %820 = vmatprep.subr.bf16.mxu0 0
    %821 = vmatpush1.bf16.xpose.msra.mxu0 0
    %822 = vmatprep.subr.bf16.mxu0 0
    %823 = vmatpush1.bf16.xpose.msra.mxu0 0
    %824 = vmatprep.subr.bf16.mxu0 0
    %825 = vmatpush1.bf16.xpose.msra.mxu0 0
    %826 = vmatprep.subr.bf16.mxu0 0
    %827 = vmatpush1.bf16.xpose.msra.mxu0 0
    %828 = vmatprep.subr.bf16.mxu0 0
    %829 = vmatpush1.bf16.xpose.msra.mxu0 0
    %830 = vmatprep.mubr.bf16.mxu0 0
    %831 = vmatmul.mubr.bf16.gmra.mrb[0].mxu0 %v270
    %v832 = vpop.f32.mrb[0].mxu0
    %v833 = vadd.f32 0.0, %v832
    %v834 = vpop.f32.mrb[0].mxu0
    %v835 = vpop.f32.mrb[0].mxu0
    %v836 = vadd.f32 0.0, %v835
    %v837 = vpop.f32.mrb[0].mxu0
    %838 = vmatprep.mubr.bf16.mxu0 0
    %839 = vmatmul.mubr.bf16.gmra.mrb[0].mxu0 %v273
    %v840 = vpop.f32.mrb[0].mxu0
    %v841 = vadd.f32 0.0, %v840
    %v842 = vpop.f32.mrb[0].mxu0
    %v843 = vpop.f32.mrb[0].mxu0
    %v844 = vpop.f32.mrb[0].mxu0
    %845 = vdwg.mxu0
    %v847 = vsel %vm206, %v692, 0
    %849 = vmatprep.subr.bf16.mxu0 0
    %850 = vmatpush1.bf16.xpose.msra.mxu0 %v847
    %851 = vmatprep.subr.bf16.mxu0 0
    %852 = vmatpush1.bf16.xpose.msra.mxu0 0
    %853 = vmatprep.subr.bf16.mxu0 0
    %854 = vmatpush1.bf16.xpose.msra.mxu0 0
    %855 = vmatprep.subr.bf16.mxu0 0
    %856 = vmatpush1.bf16.xpose.msra.mxu0 0
    %857 = vmatprep.subr.bf16.mxu0 0
    %858 = vmatpush1.bf16.xpose.msra.mxu0 0
    %859 = vmatprep.subr.bf16.mxu0 0
    %860 = vmatpush1.bf16.xpose.msra.mxu0 0
    %861 = vmatprep.subr.bf16.mxu0 0
    %862 = vmatpush1.bf16.xpose.msra.mxu0 0
    %863 = vmatprep.subr.bf16.mxu0 0
    %864 = vmatpush1.bf16.xpose.msra.mxu0 0
    %865 = vmatprep.subr.bf16.mxu0 0
    %866 = vmatpush1.bf16.xpose.msra.mxu0 0
    %867 = vmatprep.subr.bf16.mxu0 0
    %868 = vmatpush1.bf16.xpose.msra.mxu0 0
    %869 = vmatprep.subr.bf16.mxu0 0
    %870 = vmatpush1.bf16.xpose.msra.mxu0 0
    %871 = vmatprep.subr.bf16.mxu0 0
    %872 = vmatpush1.bf16.xpose.msra.mxu0 0
    %873 = vmatprep.subr.bf16.mxu0 0
    %874 = vmatpush1.bf16.xpose.msra.mxu0 0
    %875 = vmatprep.subr.bf16.mxu0 0
    %876 = vmatpush1.bf16.xpose.msra.mxu0 0
    %877 = vmatprep.subr.bf16.mxu0 0
    %878 = vmatpush1.bf16.xpose.msra.mxu0 0
    %879 = vmatprep.subr.bf16.mxu0 0
    %880 = vmatpush1.bf16.xpose.msra.mxu0 0
    %881 = vmatprep.mubr.bf16.mxu0 0
    %882 = vmatmul.mubr.bf16.gmra.mrb[0].mxu0 %v270
    %v883 = vpop.f32.mrb[0].mxu0
    %v884 = vadd.f32 0.0, %v883
    %v885 = vpop.f32.mrb[0].mxu0
    %v886 = vpop.f32.mrb[0].mxu0
    %v887 = vadd.f32 0.0, %v886
    %v888 = vpop.f32.mrb[0].mxu0
    %889 = vmatprep.mubr.bf16.mxu0 0
    %890 = vmatmul.mubr.bf16.gmra.mrb[0].mxu0 %v273
    %v891 = vpop.f32.mrb[0].mxu0
    %v892 = vadd.f32 0.0, %v891
    %v893 = vpop.f32.mrb[0].mxu0
    %v894 = vpop.f32.mrb[0].mxu0
    %v895 = vpop.f32.mrb[0].mxu0
    %896 = vdwg.mxu0
    %v897 = vpack.c.bf16 %v316, %v313
    %v898 = vpack.c.bf16 %v321, %v321
    %v899 = vpack.c.bf16 %v367, %v364
    %v900 = vpack.c.bf16 %v372, %v372
    %v901 = vpack.c.bf16 %v418, %v415
    %v902 = vpack.c.bf16 %v423, %v423
    %v903 = vpack.c.bf16 %v469, %v466
    %v904 = vpack.c.bf16 %v474, %v474
    %v905 = vpack.c.bf16 %v525, %v522
    %v906 = vpack.c.bf16 %v530, %v530
    %v907 = vpack.c.bf16 %v576, %v573
    %v908 = vpack.c.bf16 %v581, %v581
    %v909 = vpack.c.bf16 %v627, %v624
    %v910 = vpack.c.bf16 %v632, %v632
    %v911 = vpack.c.bf16 %v678, %v675
    %v912 = vpack.c.bf16 %v683, %v683
    %vm913 = vcmask 64512
    %v915 = vsel %vm913, %v897, 0
    %v918 = vsel %vm913, %v898, 0
    %v921 = vsel %vm913, %v905, 0
    %v924 = vsel %vm913, %v906, 0
    %926 = vmatprep.subr.bf16.mxu0 0
    %927 = vmatpush1.bf16.xpose.msra.mxu0 %v921
    %928 = vmatprep.subr.bf16.mxu0 0
    %929 = vmatpush1.bf16.xpose.msra.mxu0 %v924
    %930 = vmatprep.subr.bf16.mxu0 0
    %931 = vmatpush1.bf16.xpose.msra.mxu0 0
    %932 = vmatprep.subr.bf16.mxu0 0
    %933 = vmatpush1.bf16.xpose.msra.mxu0 0
    %934 = vmatprep.subr.bf16.mxu0 0
    %935 = vmatpush1.bf16.xpose.msra.mxu0 0
    %936 = vmatprep.subr.bf16.mxu0 0
    %937 = vmatpush1.bf16.xpose.msra.mxu0 0
    %938 = vmatprep.subr.bf16.mxu0 0
    %939 = vmatpush1.bf16.xpose.msra.mxu0 0
    %940 = vmatprep.subr.bf16.mxu0 0
    %941 = vmatpush1.bf16.xpose.msra.mxu0 0
    %942 = vmatprep.subr.bf16.mxu0 0
    %943 = vmatpush1.bf16.xpose.msra.mxu0 0
    %944 = vmatprep.subr.bf16.mxu0 0
    %945 = vmatpush1.bf16.xpose.msra.mxu0 0
    %946 = vmatprep.subr.bf16.mxu0 0
    %947 = vmatpush1.bf16.xpose.msra.mxu0 0
    %948 = vmatprep.subr.bf16.mxu0 0
    %949 = vmatpush1.bf16.xpose.msra.mxu0 0
    %950 = vmatprep.subr.bf16.mxu0 0
    %951 = vmatpush1.bf16.xpose.msra.mxu0 0
    %952 = vmatprep.subr.bf16.mxu0 0
    %953 = vmatpush1.bf16.xpose.msra.mxu0 0
    %954 = vmatprep.subr.bf16.mxu0 0
    %955 = vmatpush1.bf16.xpose.msra.mxu0 0
    %956 = vmatprep.subr.bf16.mxu0 0
    %957 = vmatpush1.bf16.xpose.msra.mxu0 0
    %958 = vmatprep.mubr.bf16.mxu0 0
    %959 = vmatmul.mubr.bf16.gmra.mrb[0].mxu0 %v915
    %v960 = vpop.f32.mrb[0].mxu0
    %v961 = vadd.f32 %v25, %v960
    %v962 = vpop.f32.mrb[0].mxu0
    %v963 = vpop.f32.mrb[0].mxu0
    %v964 = vadd.f32 %v26, %v963
    %v965 = vpop.f32.mrb[0].mxu0
    %966 = vmatprep.mubr.bf16.mxu0 0
    %967 = vmatmul.mubr.bf16.gmra.mrb[0].mxu0 %v918
    %v968 = vpop.f32.mrb[0].mxu0
    %v969 = vadd.f32 %v27, %v968
    %v970 = vpop.f32.mrb[0].mxu0
    %v971 = vpop.f32.mrb[0].mxu0
    %v972 = vpop.f32.mrb[0].mxu0
    %973 = vdwg.mxu0
    %v975 = vsel %vm913, %v899, 0
    %v978 = vsel %vm913, %v900, 0
    %v981 = vsel %vm913, %v907, 0
    %v984 = vsel %vm913, %v908, 0
    %986 = vmatprep.subr.bf16.mxu0 0
    %987 = vmatpush1.bf16.xpose.msra.mxu0 %v981
    %988 = vmatprep.subr.bf16.mxu0 0
    %989 = vmatpush1.bf16.xpose.msra.mxu0 %v984
    %990 = vmatprep.subr.bf16.mxu0 0
    %991 = vmatpush1.bf16.xpose.msra.mxu0 0
    %992 = vmatprep.subr.bf16.mxu0 0
    %993 = vmatpush1.bf16.xpose.msra.mxu0 0
    %994 = vmatprep.subr.bf16.mxu0 0
    %995 = vmatpush1.bf16.xpose.msra.mxu0 0
    %996 = vmatprep.subr.bf16.mxu0 0
    %997 = vmatpush1.bf16.xpose.msra.mxu0 0
    %998 = vmatprep.subr.bf16.mxu0 0
    %999 = vmatpush1.bf16.xpose.msra.mxu0 0
    %1000 = vmatprep.subr.bf16.mxu0 0
    %1001 = vmatpush1.bf16.xpose.msra.mxu0 0
    %1002 = vmatprep.subr.bf16.mxu0 0
    %1003 = vmatpush1.bf16.xpose.msra.mxu0 0
    %1004 = vmatprep.subr.bf16.mxu0 0
    %1005 = vmatpush1.bf16.xpose.msra.mxu0 0
    %1006 = vmatprep.subr.bf16.mxu0 0
    %1007 = vmatpush1.bf16.xpose.msra.mxu0 0
    %1008 = vmatprep.subr.bf16.mxu0 0
    %1009 = vmatpush1.bf16.xpose.msra.mxu0 0
    %1010 = vmatprep.subr.bf16.mxu0 0
    %1011 = vmatpush1.bf16.xpose.msra.mxu0 0
    %1012 = vmatprep.subr.bf16.mxu0 0
    %1013 = vmatpush1.bf16.xpose.msra.mxu0 0
    %1014 = vmatprep.subr.bf16.mxu0 0
    %1015 = vmatpush1.bf16.xpose.msra.mxu0 0
    %1016 = vmatprep.subr.bf16.mxu0 0
    %1017 = vmatpush1.bf16.xpose.msra.mxu0 0
    %1018 = vmatprep.mubr.bf16.mxu0 0
    %1019 = vmatmul.mubr.bf16.gmra.mrb[0].mxu0 %v975
    %v1020 = vpop.f32.mrb[0].mxu0
    %v1021 = vadd.f32 %v25, %v1020
    %v1022 = vpop.f32.mrb[0].mxu0
    %v1023 = vpop.f32.mrb[0].mxu0
    %v1024 = vadd.f32 %v26, %v1023
    %v1025 = vpop.f32.mrb[0].mxu0
    %1026 = vmatprep.mubr.bf16.mxu0 0
    %1027 = vmatmul.mubr.bf16.gmra.mrb[0].mxu0 %v978
    %v1028 = vpop.f32.mrb[0].mxu0
    %v1029 = vadd.f32 %v27, %v1028
    %v1030 = vpop.f32.mrb[0].mxu0
    %v1031 = vpop.f32.mrb[0].mxu0
    %v1032 = vpop.f32.mrb[0].mxu0
    %1033 = vdwg.mxu0
    %v1035 = vsel %vm913, %v901, 0
    %v1038 = vsel %vm913, %v902, 0
    %v1041 = vsel %vm913, %v909, 0
    %v1044 = vsel %vm913, %v910, 0
    %1046 = vmatprep.subr.bf16.mxu0 0
    %1047 = vmatpush1.bf16.xpose.msra.mxu0 %v1041
    %1048 = vmatprep.subr.bf16.mxu0 0
    %1049 = vmatpush1.bf16.xpose.msra.mxu0 %v1044
    %1050 = vmatprep.subr.bf16.mxu0 0
    %1051 = vmatpush1.bf16.xpose.msra.mxu0 0
    %1052 = vmatprep.subr.bf16.mxu0 0
    %1053 = vmatpush1.bf16.xpose.msra.mxu0 0
    %1054 = vmatprep.subr.bf16.mxu0 0
    %1055 = vmatpush1.bf16.xpose.msra.mxu0 0
    %1056 = vmatprep.subr.bf16.mxu0 0
    %1057 = vmatpush1.bf16.xpose.msra.mxu0 0
    %1058 = vmatprep.subr.bf16.mxu0 0
    %1059 = vmatpush1.bf16.xpose.msra.mxu0 0
    %1060 = vmatprep.subr.bf16.mxu0 0
    %1061 = vmatpush1.bf16.xpose.msra.mxu0 0
    %1062 = vmatprep.subr.bf16.mxu0 0
    %1063 = vmatpush1.bf16.xpose.msra.mxu0 0
    %1064 = vmatprep.subr.bf16.mxu0 0
    %1065 = vmatpush1.bf16.xpose.msra.mxu0 0
    %1066 = vmatprep.subr.bf16.mxu0 0
    %1067 = vmatpush1.bf16.xpose.msra.mxu0 0
    %1068 = vmatprep.subr.bf16.mxu0 0
    %1069 = vmatpush1.bf16.xpose.msra.mxu0 0
    %1070 = vmatprep.subr.bf16.mxu0 0
    %1071 = vmatpush1.bf16.xpose.msra.mxu0 0
    %1072 = vmatprep.subr.bf16.mxu0 0
    %1073 = vmatpush1.bf16.xpose.msra.mxu0 0
    %1074 = vmatprep.subr.bf16.mxu0 0
    %1075 = vmatpush1.bf16.xpose.msra.mxu0 0
    %1076 = vmatprep.subr.bf16.mxu0 0
    %1077 = vmatpush1.bf16.xpose.msra.mxu0 0
    %1078 = vmatprep.mubr.bf16.mxu0 0
    %1079 = vmatmul.mubr.bf16.gmra.mrb[0].mxu0 %v1035
    %v1080 = vpop.f32.mrb[0].mxu0
    %v1081 = vadd.f32 %v25, %v1080
    %v1082 = vpop.f32.mrb[0].mxu0
    %v1083 = vpop.f32.mrb[0].mxu0
    %v1084 = vadd.f32 %v26, %v1083
    %v1085 = vpop.f32.mrb[0].mxu0
    %1086 = vmatprep.mubr.bf16.mxu0 0
    %1087 = vmatmul.mubr.bf16.gmra.mrb[0].mxu0 %v1038
    %v1088 = vpop.f32.mrb[0].mxu0
    %v1089 = vadd.f32 %v27, %v1088
    %v1090 = vpop.f32.mrb[0].mxu0
    %v1091 = vpop.f32.mrb[0].mxu0
    %v1092 = vpop.f32.mrb[0].mxu0
    %1093 = vdwg.mxu0
    %v1095 = vsel %vm913, %v903, 0
    %v1098 = vsel %vm913, %v904, 0
    %v1101 = vsel %vm913, %v911, 0
    %v1104 = vsel %vm913, %v912, 0
    %1106 = vmatprep.subr.bf16.mxu0 0
    %1107 = vmatpush1.bf16.xpose.msra.mxu0 %v1101
    %1108 = vmatprep.subr.bf16.mxu0 0
    %1109 = vmatpush1.bf16.xpose.msra.mxu0 %v1104
    %1110 = vmatprep.subr.bf16.mxu0 0
    %1111 = vmatpush1.bf16.xpose.msra.mxu0 0
    %1112 = vmatprep.subr.bf16.mxu0 0
    %1113 = vmatpush1.bf16.xpose.msra.mxu0 0
    %1114 = vmatprep.subr.bf16.mxu0 0
    %1115 = vmatpush1.bf16.xpose.msra.mxu0 0
    %1116 = vmatprep.subr.bf16.mxu0 0
    %1117 = vmatpush1.bf16.xpose.msra.mxu0 0
    %1118 = vmatprep.subr.bf16.mxu0 0
    %1119 = vmatpush1.bf16.xpose.msra.mxu0 0
    %1120 = vmatprep.subr.bf16.mxu0 0
    %1121 = vmatpush1.bf16.xpose.msra.mxu0 0
    %1122 = vmatprep.subr.bf16.mxu0 0
    %1123 = vmatpush1.bf16.xpose.msra.mxu0 0
    %1124 = vmatprep.subr.bf16.mxu0 0
    %1125 = vmatpush1.bf16.xpose.msra.mxu0 0
    %1126 = vmatprep.subr.bf16.mxu0 0
    %1127 = vmatpush1.bf16.xpose.msra.mxu0 0
    %1128 = vmatprep.subr.bf16.mxu0 0
    %1129 = vmatpush1.bf16.xpose.msra.mxu0 0
    %1130 = vmatprep.subr.bf16.mxu0 0
    %1131 = vmatpush1.bf16.xpose.msra.mxu0 0
    %1132 = vmatprep.subr.bf16.mxu0 0
    %1133 = vmatpush1.bf16.xpose.msra.mxu0 0
    %1134 = vmatprep.subr.bf16.mxu0 0
    %1135 = vmatpush1.bf16.xpose.msra.mxu0 0
    %1136 = vmatprep.subr.bf16.mxu0 0
    %1137 = vmatpush1.bf16.xpose.msra.mxu0 0
    %1138 = vmatprep.mubr.bf16.mxu0 0
    %1139 = vmatmul.mubr.bf16.gmra.mrb[0].mxu0 %v1095
    %v1140 = vpop.f32.mrb[0].mxu0
    %v1141 = vadd.f32 %v25, %v1140
    %v1142 = vpop.f32.mrb[0].mxu0
    %v1143 = vpop.f32.mrb[0].mxu0
    %v1144 = vadd.f32 %v26, %v1143
    %v1145 = vpop.f32.mrb[0].mxu0
    %1146 = vmatprep.mubr.bf16.mxu0 0
    %1147 = vmatmul.mubr.bf16.gmra.mrb[0].mxu0 %v1098
    %v1148 = vpop.f32.mrb[0].mxu0
    %v1149 = vadd.f32 %v27, %v1148
    %v1150 = vpop.f32.mrb[0].mxu0
    %v1151 = vpop.f32.mrb[0].mxu0
    %v1152 = vpop.f32.mrb[0].mxu0
    %1153 = vdwg.mxu0
    %vm1154 = vcmask 162816
    %v1155 = vsel %vm1154, %v961, -inf
    %1156 = vmax.xlane.f32.xlu0 %v1155
    %v1157 = vpop.xlane.xlu0 %1156
    %v1158 = vsel %vm1154, %v964, -inf
    %1159 = vmax.xlane.f32.xlu0 %v1158
    %v1160 = vpop.xlane.xlu0 %1159
    %vm1161 = vcmask 158720
    %v1162 = vsel %vm1161, %v969, -inf
    %1163 = vmax.xlane.f32.xlu0 %v1162
    %v1164 = vpop.xlane.xlu0 %1163
    %v1165 = vsel %vm1154, %v1021, -inf
    %1166 = vmax.xlane.f32.xlu0 %v1165
    %v1167 = vpop.xlane.xlu0 %1166
    %v1168 = vsel %vm1154, %v1024, -inf
    %1169 = vmax.xlane.f32.xlu0 %v1168
    %v1170 = vpop.xlane.xlu0 %1169
    %v1171 = vsel %vm1161, %v1029, -inf
    %1172 = vmax.xlane.f32.xlu0 %v1171
    %v1173 = vpop.xlane.xlu0 %1172
    %v1174 = vsel %vm1154, %v1081, -inf
    %1175 = vmax.xlane.f32.xlu0 %v1174
    %v1176 = vpop.xlane.xlu0 %1175
    %v1177 = vsel %vm1154, %v1084, -inf
    %1178 = vmax.xlane.f32.xlu0 %v1177
    %v1179 = vpop.xlane.xlu0 %1178
    %v1180 = vsel %vm1161, %v1089, -inf
    %1181 = vmax.xlane.f32.xlu0 %v1180
    %v1182 = vpop.xlane.xlu0 %1181
    %v1183 = vsel %vm1154, %v1141, -inf
    %1184 = vmax.xlane.f32.xlu0 %v1183
    %v1185 = vpop.xlane.xlu0 %1184
    %v1186 = vsel %vm1154, %v1144, -inf
    %1187 = vmax.xlane.f32.xlu0 %v1186
    %v1188 = vpop.xlane.xlu0 %1187
    %v1189 = vsel %vm1161, %v1149, -inf
    %1190 = vmax.xlane.f32.xlu0 %v1189
    %v1191 = vpop.xlane.xlu0 %1190
    %v1192 = vsub.f32 %v961, %v1157
    %v1193 = vsub.f32 %v964, %v1160
    %v1194 = vsub.f32 %v969, %v1164
    %v1195 = vsub.f32 %v1021, %v1167
    %v1196 = vsub.f32 %v1024, %v1170
    %v1197 = vsub.f32 %v1029, %v1173
    %v1198 = vsub.f32 %v1081, %v1176
    %v1199 = vsub.f32 %v1084, %v1179
    %v1200 = vsub.f32 %v1089, %v1182
    %v1201 = vsub.f32 %v1141, %v1185
    %v1202 = vsub.f32 %v1144, %v1188
    %v1203 = vsub.f32 %v1149, %v1191
    %v1204 = vmul.f32 %v1192, 1.442695
    %v1205 = vpow.pop %v1204
    %v1206 = vmul.f32 %v1193, 1.442695
    %v1207 = vpow.pop %v1206
    %v1208 = vmul.f32 %v1194, 1.442695
    %v1209 = vpow.pop %v1208
    %v1210 = vmul.f32 %v1195, 1.442695
    %v1211 = vpow.pop %v1210
    %v1212 = vmul.f32 %v1196, 1.442695
    %v1213 = vpow.pop %v1212
    %v1214 = vmul.f32 %v1197, 1.442695
    %v1215 = vpow.pop %v1214
    %v1216 = vmul.f32 %v1198, 1.442695
    %v1217 = vpow.pop %v1216
    %v1218 = vmul.f32 %v1199, 1.442695
    %v1219 = vpow.pop %v1218
    %v1220 = vmul.f32 %v1200, 1.442695
    %v1221 = vpow.pop %v1220
    %v1222 = vmul.f32 %v1201, 1.442695
    %v1223 = vpow.pop %v1222
    %v1224 = vmul.f32 %v1202, 1.442695
    %v1225 = vpow.pop %v1224
    %v1226 = vmul.f32 %v1203, 1.442695
    %v1227 = vpow.pop %v1226
    %v1228 = vsel %vm1154, %v1205, 0.0
    %1229 = vadd.xlane.f32.xlu0 %v1228
    %v1230 = vpop.xlane.xlu0 %1229
    %v1231 = vsel %vm1154, %v1207, 0.0
    %1232 = vadd.xlane.f32.xlu0 %v1231
    %v1233 = vpop.xlane.xlu0 %1232
    %v1234 = vsel %vm1161, %v1209, 0.0
    %1235 = vadd.xlane.f32.xlu0 %v1234
    %v1236 = vpop.xlane.xlu0 %1235
    %v1237 = vsel %vm1154, %v1211, 0.0
    %1238 = vadd.xlane.f32.xlu0 %v1237
    %v1239 = vpop.xlane.xlu0 %1238
    %v1240 = vsel %vm1154, %v1213, 0.0
    %1241 = vadd.xlane.f32.xlu0 %v1240
    %v1242 = vpop.xlane.xlu0 %1241
    %v1243 = vsel %vm1161, %v1215, 0.0
    %1244 = vadd.xlane.f32.xlu0 %v1243
    %v1245 = vpop.xlane.xlu0 %1244
    %v1246 = vsel %vm1154, %v1217, 0.0
    %1247 = vadd.xlane.f32.xlu0 %v1246
    %v1248 = vpop.xlane.xlu0 %1247
    %v1249 = vsel %vm1154, %v1219, 0.0
    %1250 = vadd.xlane.f32.xlu0 %v1249
    %v1251 = vpop.xlane.xlu0 %1250
    %v1252 = vsel %vm1161, %v1221, 0.0
    %1253 = vadd.xlane.f32.xlu0 %v1252
    %v1254 = vpop.xlane.xlu0 %1253
    %v1255 = vsel %vm1154, %v1223, 0.0
    %1256 = vadd.xlane.f32.xlu0 %v1255
    %v1257 = vpop.xlane.xlu0 %1256
    %v1258 = vsel %vm1154, %v1225, 0.0
    %1259 = vadd.xlane.f32.xlu0 %v1258
    %v1260 = vpop.xlane.xlu0 %1259
    %v1261 = vsel %vm1161, %v1227, 0.0
    %1262 = vadd.xlane.f32.xlu0 %v1261
    %v1263 = vpop.xlane.xlu0 %1262
    %v1264 = vrcp.pop %v1230
    %v1265 = vrcp.pop %v1233
    %v1266 = vrcp.pop %v1236
    %v1267 = vrcp.pop %v1239
    %v1268 = vrcp.pop %v1242
    %v1269 = vrcp.pop %v1245
    %v1270 = vrcp.pop %v1248
    %v1271 = vrcp.pop %v1251
    %v1272 = vrcp.pop %v1254
    %v1273 = vrcp.pop %v1257
    %v1274 = vrcp.pop %v1260
    %v1275 = vrcp.pop %v1263
    %v1276 = vmul.f32 %v1205, %v1264
    %v1277 = vmul.f32 %v1207, %v1265
    %v1278 = vmul.f32 %v1209, %v1266
    %v1279 = vmul.f32 %v1211, %v1267
    %v1280 = vmul.f32 %v1213, %v1268
    %v1281 = vmul.f32 %v1215, %v1269
    %v1282 = vmul.f32 %v1217, %v1270
    %v1283 = vmul.f32 %v1219, %v1271
    %v1284 = vmul.f32 %v1221, %v1272
    %v1285 = vmul.f32 %v1223, %v1273
    %v1286 = vmul.f32 %v1225, %v1274
    %v1287 = vmul.f32 %v1227, %v1275
    %v1288 = vpack.c.bf16 %v1277, %v1276
    %v1289 = vpack.c.bf16 %v1278, %v1278
    %v1290 = vpack.c.bf16 %v1280, %v1279
    %v1291 = vpack.c.bf16 %v1281, %v1281
    %v1292 = vpack.c.bf16 %v1283, %v1282
    %v1293 = vpack.c.bf16 %v1284, %v1284
    %v1294 = vpack.c.bf16 %v1286, %v1285
    %v1295 = vpack.c.bf16 %v1287, %v1287
    %v1296 = vpack.c.bf16 %v734, %v731
    %v1297 = vpack.c.bf16 %v739, %v739
    %v1298 = vpack.c.bf16 %v785, %v782
    %v1299 = vpack.c.bf16 %v790, %v790
    %v1300 = vpack.c.bf16 %v836, %v833
    %v1301 = vpack.c.bf16 %v841, %v841
    %v1302 = vpack.c.bf16 %v887, %v884
    %v1303 = vpack.c.bf16 %v892, %v892
    %v1305 = vsel %vm1154, %v1288, 0
    %v1308 = vsel %vm1154, %v1289, 0
    %vm1310 = vcmask 1041408
    %v1312 = vsel %vm1310, %v1297, 0
    %1314 = vmatprep.subr.bf16.mxu0 0
    %1315 = vmatpush1.bf16.msra.mxu0 %v1296
    %1316 = vmatprep.subr.bf16.mxu0 0
    %1317 = vmatpush1.bf16.msra.mxu0 %v1312
    %1318 = vmatprep.subr.bf16.mxu0 0
    %1319 = vmatpush1.bf16.msra.mxu0 0
    %1320 = vmatprep.subr.bf16.mxu0 0
    %1321 = vmatpush1.bf16.msra.mxu0 0
    %1322 = vmatprep.subr.bf16.mxu0 0
    %1323 = vmatpush1.bf16.msra.mxu0 0
    %1324 = vmatprep.subr.bf16.mxu0 0
    %1325 = vmatpush1.bf16.msra.mxu0 0
    %1326 = vmatprep.subr.bf16.mxu0 0
    %1327 = vmatpush1.bf16.msra.mxu0 0
    %1328 = vmatprep.subr.bf16.mxu0 0
    %1329 = vmatpush1.bf16.msra.mxu0 0
    %1330 = vmatprep.subr.bf16.mxu0 0
    %1331 = vmatpush1.bf16.msra.mxu0 0
    %1332 = vmatprep.subr.bf16.mxu0 0
    %1333 = vmatpush1.bf16.msra.mxu0 0
    %1334 = vmatprep.subr.bf16.mxu0 0
    %1335 = vmatpush1.bf16.msra.mxu0 0
    %1336 = vmatprep.subr.bf16.mxu0 0
    %1337 = vmatpush1.bf16.msra.mxu0 0
    %1338 = vmatprep.subr.bf16.mxu0 0
    %1339 = vmatpush1.bf16.msra.mxu0 0
    %1340 = vmatprep.subr.bf16.mxu0 0
    %1341 = vmatpush1.bf16.msra.mxu0 0
    %1342 = vmatprep.subr.bf16.mxu0 0
    %1343 = vmatpush1.bf16.msra.mxu0 0
    %1344 = vmatprep.subr.bf16.mxu0 0
    %1345 = vmatpush1.bf16.msra.mxu0 0
    %1346 = vmatprep.mubr.bf16.mxu0 0
    %1347 = vmatmul.mubr.bf16.gmra.mrb[0].mxu0 %v1305
    %v1348 = vpop.f32.mrb[0].mxu0
    %v1349 = vadd.f32 0.0, %v1348
    %v1350 = vpop.f32.mrb[0].mxu0
    %v1351 = vpop.f32.mrb[0].mxu0
    %v1352 = vadd.f32 0.0, %v1351
    %v1353 = vpop.f32.mrb[0].mxu0
    %1354 = vmatprep.mubr.bf16.mxu0 0
    %1355 = vmatmul.mubr.bf16.gmra.mrb[0].mxu0 %v1308
    %v1356 = vpop.f32.mrb[0].mxu0
    %v1357 = vadd.f32 0.0, %v1356
    %v1358 = vpop.f32.mrb[0].mxu0
    %v1359 = vpop.f32.mrb[0].mxu0
    %v1360 = vpop.f32.mrb[0].mxu0
    %1361 = vdwg.mxu0
    %v1363 = vsel %vm1154, %v1290, 0
    %v1366 = vsel %vm1154, %v1291, 0
    %v1369 = vsel %vm1310, %v1299, 0
    %1371 = vmatprep.subr.bf16.mxu0 0
    %1372 = vmatpush1.bf16.msra.mxu0 %v1298
    %1373 = vmatprep.subr.bf16.mxu0 0
    %1374 = vmatpush1.bf16.msra.mxu0 %v1369
    %1375 = vmatprep.subr.bf16.mxu0 0
    %1376 = vmatpush1.bf16.msra.mxu0 0
    %1377 = vmatprep.subr.bf16.mxu0 0
    %1378 = vmatpush1.bf16.msra.mxu0 0
    %1379 = vmatprep.subr.bf16.mxu0 0
    %1380 = vmatpush1.bf16.msra.mxu0 0
    %1381 = vmatprep.subr.bf16.mxu0 0
    %1382 = vmatpush1.bf16.msra.mxu0 0
    %1383 = vmatprep.subr.bf16.mxu0 0
    %1384 = vmatpush1.bf16.msra.mxu0 0
    %1385 = vmatprep.subr.bf16.mxu0 0
    %1386 = vmatpush1.bf16.msra.mxu0 0
    %1387 = vmatprep.subr.bf16.mxu0 0
    %1388 = vmatpush1.bf16.msra.mxu0 0
    %1389 = vmatprep.subr.bf16.mxu0 0
    %1390 = vmatpush1.bf16.msra.mxu0 0
    %1391 = vmatprep.subr.bf16.mxu0 0
    %1392 = vmatpush1.bf16.msra.mxu0 0
    %1393 = vmatprep.subr.bf16.mxu0 0
    %1394 = vmatpush1.bf16.msra.mxu0 0
    %1395 = vmatprep.subr.bf16.mxu0 0
    %1396 = vmatpush1.bf16.msra.mxu0 0
    %1397 = vmatprep.subr.bf16.mxu0 0
    %1398 = vmatpush1.bf16.msra.mxu0 0
    %1399 = vmatprep.subr.bf16.mxu0 0
    %1400 = vmatpush1.bf16.msra.mxu0 0
    %1401 = vmatprep.subr.bf16.mxu0 0
    %1402 = vmatpush1.bf16.msra.mxu0 0
    %1403 = vmatprep.mubr.bf16.mxu0 0
    %1404 = vmatmul.mubr.bf16.gmra.mrb[0].mxu0 %v1363
    %v1405 = vpop.f32.mrb[0].mxu0
    %v1406 = vadd.f32 0.0, %v1405
    %v1407 = vpop.f32.mrb[0].mxu0
    %v1408 = vpop.f32.mrb[0].mxu0
    %v1409 = vadd.f32 0.0, %v1408
    %v1410 = vpop.f32.mrb[0].mxu0
    %1411 = vmatprep.mubr.bf16.mxu0 0
    %1412 = vmatmul.mubr.bf16.gmra.mrb[0].mxu0 %v1366
    %v1413 = vpop.f32.mrb[0].mxu0
    %v1414 = vadd.f32 0.0, %v1413
    %v1415 = vpop.f32.mrb[0].mxu0
    %v1416 = vpop.f32.mrb[0].mxu0
    %v1417 = vpop.f32.mrb[0].mxu0
    %1418 = vdwg.mxu0
    %v1420 = vsel %vm1154, %v1292, 0
    %v1423 = vsel %vm1154, %v1293, 0
    %v1426 = vsel %vm1310, %v1301, 0
    %1428 = vmatprep.subr.bf16.mxu0 0
    %1429 = vmatpush1.bf16.msra.mxu0 %v1300
    %1430 = vmatprep.subr.bf16.mxu0 0
    %1431 = vmatpush1.bf16.msra.mxu0 %v1426
    %1432 = vmatprep.subr.bf16.mxu0 0
    %1433 = vmatpush1.bf16.msra.mxu0 0
    %1434 = vmatprep.subr.bf16.mxu0 0
    %1435 = vmatpush1.bf16.msra.mxu0 0
    %1436 = vmatprep.subr.bf16.mxu0 0
    %1437 = vmatpush1.bf16.msra.mxu0 0
    %1438 = vmatprep.subr.bf16.mxu0 0
    %1439 = vmatpush1.bf16.msra.mxu0 0
    %1440 = vmatprep.subr.bf16.mxu0 0
    %1441 = vmatpush1.bf16.msra.mxu0 0
    %1442 = vmatprep.subr.bf16.mxu0 0
    %1443 = vmatpush1.bf16.msra.mxu0 0
    %1444 = vmatprep.subr.bf16.mxu0 0
    %1445 = vmatpush1.bf16.msra.mxu0 0
    %1446 = vmatprep.subr.bf16.mxu0 0
    %1447 = vmatpush1.bf16.msra.mxu0 0
    %1448 = vmatprep.subr.bf16.mxu0 0
    %1449 = vmatpush1.bf16.msra.mxu0 0
    %1450 = vmatprep.subr.bf16.mxu0 0
    %1451 = vmatpush1.bf16.msra.mxu0 0
    %1452 = vmatprep.subr.bf16.mxu0 0
    %1453 = vmatpush1.bf16.msra.mxu0 0
    %1454 = vmatprep.subr.bf16.mxu0 0
    %1455 = vmatpush1.bf16.msra.mxu0 0
    %1456 = vmatprep.subr.bf16.mxu0 0
    %1457 = vmatpush1.bf16.msra.mxu0 0
    %1458 = vmatprep.subr.bf16.mxu0 0
    %1459 = vmatpush1.bf16.msra.mxu0 0
    %1460 = vmatprep.mubr.bf16.mxu0 0
    %1461 = vmatmul.mubr.bf16.gmra.mrb[0].mxu0 %v1420
    %v1462 = vpop.f32.mrb[0].mxu0
    %v1463 = vadd.f32 0.0, %v1462
    %v1464 = vpop.f32.mrb[0].mxu0
    %v1465 = vpop.f32.mrb[0].mxu0
    %v1466 = vadd.f32 0.0, %v1465
    %v1467 = vpop.f32.mrb[0].mxu0
    %1468 = vmatprep.mubr.bf16.mxu0 0
    %1469 = vmatmul.mubr.bf16.gmra.mrb[0].mxu0 %v1423
    %v1470 = vpop.f32.mrb[0].mxu0
    %v1471 = vadd.f32 0.0, %v1470
    %v1472 = vpop.f32.mrb[0].mxu0
    %v1473 = vpop.f32.mrb[0].mxu0
    %v1474 = vpop.f32.mrb[0].mxu0
    %1475 = vdwg.mxu0
    %v1477 = vsel %vm1154, %v1294, 0
    %v1480 = vsel %vm1154, %v1295, 0
    %v1483 = vsel %vm1310, %v1303, 0
    %1485 = vmatprep.subr.bf16.mxu0 0
    %1486 = vmatpush1.bf16.msra.mxu0 %v1302
    %1487 = vmatprep.subr.bf16.mxu0 0
    %1488 = vmatpush1.bf16.msra.mxu0 %v1483
    %1489 = vmatprep.subr.bf16.mxu0 0
    %1490 = vmatpush1.bf16.msra.mxu0 0
    %1491 = vmatprep.subr.bf16.mxu0 0
    %1492 = vmatpush1.bf16.msra.mxu0 0
    %1493 = vmatprep.subr.bf16.mxu0 0
    %1494 = vmatpush1.bf16.msra.mxu0 0
    %1495 = vmatprep.subr.bf16.mxu0 0
    %1496 = vmatpush1.bf16.msra.mxu0 0
    %1497 = vmatprep.subr.bf16.mxu0 0
    %1498 = vmatpush1.bf16.msra.mxu0 0
    %1499 = vmatprep.subr.bf16.mxu0 0
    %1500 = vmatpush1.bf16.msra.mxu0 0
    %1501 = vmatprep.subr.bf16.mxu0 0
    %1502 = vmatpush1.bf16.msra.mxu0 0
    %1503 = vmatprep.subr.bf16.mxu0 0
    %1504 = vmatpush1.bf16.msra.mxu0 0
    %1505 = vmatprep.subr.bf16.mxu0 0
    %1506 = vmatpush1.bf16.msra.mxu0 0
    %1507 = vmatprep.subr.bf16.mxu0 0
    %1508 = vmatpush1.bf16.msra.mxu0 0
    %1509 = vmatprep.subr.bf16.mxu0 0
    %1510 = vmatpush1.bf16.msra.mxu0 0
    %1511 = vmatprep.subr.bf16.mxu0 0
    %1512 = vmatpush1.bf16.msra.mxu0 0
    %1513 = vmatprep.subr.bf16.mxu0 0
    %1514 = vmatpush1.bf16.msra.mxu0 0
    %1515 = vmatprep.subr.bf16.mxu0 0
    %1516 = vmatpush1.bf16.msra.mxu0 0
    %1517 = vmatprep.mubr.bf16.mxu0 0
    %1518 = vmatmul.mubr.bf16.gmra.mrb[0].mxu0 %v1477
    %v1519 = vpop.f32.mrb[0].mxu0
    %v1520 = vadd.f32 0.0, %v1519
    %v1521 = vpop.f32.mrb[0].mxu0
    %v1522 = vpop.f32.mrb[0].mxu0
    %v1523 = vadd.f32 0.0, %v1522
    %v1524 = vpop.f32.mrb[0].mxu0
    %1525 = vmatprep.mubr.bf16.mxu0 0
    %1526 = vmatmul.mubr.bf16.gmra.mrb[0].mxu0 %v1480
    %v1527 = vpop.f32.mrb[0].mxu0
    %v1528 = vadd.f32 0.0, %v1527
    %v1529 = vpop.f32.mrb[0].mxu0
    %v1530 = vpop.f32.mrb[0].mxu0
    %v1531 = vpop.f32.mrb[0].mxu0
    %1532 = vdwg.mxu0
    %v1533 = vpack.c.bf16 %v1352, %v1349
    %v1534 = vpack.c.bf16 %v1357, %v1357
    %v1535 = vpack.c.bf16 %v1409, %v1406
    %v1536 = vpack.c.bf16 %v1414, %v1414
    %v1537 = vpack.c.bf16 %v1466, %v1463
    %v1538 = vpack.c.bf16 %v1471, %v1471
    %v1539 = vpack.c.bf16 %v1523, %v1520
    %v1540 = vpack.c.bf16 %v1528, %v1528
    %s1541 = scalar_lea.vmem %s1, 48
    %v1542 = vld [vmem:[%s1541] sm:$0xf]
    %v1543 = vld [vmem:[%s1541 + $0x4] sm:$0xf]
    %v1544 = vld [vmem:[%s1541 + $0x8] sm:$0xf]
    %v1545 = vld [vmem:[%s1541 + $0xc] sm:$0xf]
    %v1547 = vsel %vm913, %v1533, 0
    %v1550 = vsel %vm913, %v1534, 0
    %vm1552 = vcmask 1043456
    %v1554 = vsel %vm1552, %v1542, 0
    %1556 = vmatprep.subr.bf16.mxu0 0
    %1557 = vmatpush1.bf16.msra.mxu0 %v1554
    %1558 = vmatprep.subr.bf16.mxu0 0
    %1559 = vmatpush1.bf16.msra.mxu0 0
    %1560 = vmatprep.subr.bf16.mxu0 0
    %1561 = vmatpush1.bf16.msra.mxu0 0
    %1562 = vmatprep.subr.bf16.mxu0 0
    %1563 = vmatpush1.bf16.msra.mxu0 0
    %1564 = vmatprep.subr.bf16.mxu0 0
    %1565 = vmatpush1.bf16.msra.mxu0 0
    %1566 = vmatprep.subr.bf16.mxu0 0
    %1567 = vmatpush1.bf16.msra.mxu0 0
    %1568 = vmatprep.subr.bf16.mxu0 0
    %1569 = vmatpush1.bf16.msra.mxu0 0
    %1570 = vmatprep.subr.bf16.mxu0 0
    %1571 = vmatpush1.bf16.msra.mxu0 0
    %1572 = vmatprep.subr.bf16.mxu0 0
    %1573 = vmatpush1.bf16.msra.mxu0 0
    %1574 = vmatprep.subr.bf16.mxu0 0
    %1575 = vmatpush1.bf16.msra.mxu0 0
    %1576 = vmatprep.subr.bf16.mxu0 0
    %1577 = vmatpush1.bf16.msra.mxu0 0
    %1578 = vmatprep.subr.bf16.mxu0 0
    %1579 = vmatpush1.bf16.msra.mxu0 0
    %1580 = vmatprep.subr.bf16.mxu0 0
    %1581 = vmatpush1.bf16.msra.mxu0 0
    %1582 = vmatprep.subr.bf16.mxu0 0
    %1583 = vmatpush1.bf16.msra.mxu0 0
    %1584 = vmatprep.subr.bf16.mxu0 0
    %1585 = vmatpush1.bf16.msra.mxu0 0
    %1586 = vmatprep.subr.bf16.mxu0 0
    %1587 = vmatpush1.bf16.msra.mxu0 0
    %1588 = vmatprep.mubr.bf16.mxu0 0
    %1589 = vmatmul.mubr.bf16.gmra.mrb[0].mxu0 %v1547
    %v1590 = vpop.f32.mrb[0].mxu0
    %v1591 = vadd.f32 0.0, %v1590
    %v1592 = vpop.f32.mrb[0].mxu0
    %v1593 = vpop.f32.mrb[0].mxu0
    %v1594 = vadd.f32 0.0, %v1593
    %v1595 = vpop.f32.mrb[0].mxu0
    %1596 = vmatprep.mubr.bf16.mxu0 0
    %1597 = vmatmul.mubr.bf16.gmra.mrb[0].mxu0 %v1550
    %v1598 = vpop.f32.mrb[0].mxu0
    %v1599 = vadd.f32 0.0, %v1598
    %v1600 = vpop.f32.mrb[0].mxu0
    %v1601 = vpop.f32.mrb[0].mxu0
    %v1602 = vpop.f32.mrb[0].mxu0
    %1603 = vdwg.mxu0
    %v1605 = vsel %vm913, %v1535, 0
    %v1608 = vsel %vm913, %v1536, 0
    %v1611 = vsel %vm1552, %v1543, 0
    %1613 = vmatprep.subr.bf16.mxu0 0
    %1614 = vmatpush1.bf16.msra.mxu0 %v1611
    %1615 = vmatprep.subr.bf16.mxu0 0
    %1616 = vmatpush1.bf16.msra.mxu0 0
    %1617 = vmatprep.subr.bf16.mxu0 0
    %1618 = vmatpush1.bf16.msra.mxu0 0
    %1619 = vmatprep.subr.bf16.mxu0 0
    %1620 = vmatpush1.bf16.msra.mxu0 0
    %1621 = vmatprep.subr.bf16.mxu0 0
    %1622 = vmatpush1.bf16.msra.mxu0 0
    %1623 = vmatprep.subr.bf16.mxu0 0
    %1624 = vmatpush1.bf16.msra.mxu0 0
    %1625 = vmatprep.subr.bf16.mxu0 0
    %1626 = vmatpush1.bf16.msra.mxu0 0
    %1627 = vmatprep.subr.bf16.mxu0 0
    %1628 = vmatpush1.bf16.msra.mxu0 0
    %1629 = vmatprep.subr.bf16.mxu0 0
    %1630 = vmatpush1.bf16.msra.mxu0 0
    %1631 = vmatprep.subr.bf16.mxu0 0
    %1632 = vmatpush1.bf16.msra.mxu0 0
    %1633 = vmatprep.subr.bf16.mxu0 0
    %1634 = vmatpush1.bf16.msra.mxu0 0
    %1635 = vmatprep.subr.bf16.mxu0 0
    %1636 = vmatpush1.bf16.msra.mxu0 0
    %1637 = vmatprep.subr.bf16.mxu0 0
    %1638 = vmatpush1.bf16.msra.mxu0 0
    %1639 = vmatprep.subr.bf16.mxu0 0
    %1640 = vmatpush1.bf16.msra.mxu0 0
    %1641 = vmatprep.subr.bf16.mxu0 0
    %1642 = vmatpush1.bf16.msra.mxu0 0
    %1643 = vmatprep.subr.bf16.mxu0 0
    %1644 = vmatpush1.bf16.msra.mxu0 0
    %1645 = vmatprep.mubr.bf16.mxu0 0
    %1646 = vmatmul.mubr.bf16.gmra.mrb[0].mxu0 %v1605
    %v1647 = vpop.f32.mrb[0].mxu0
    %v1648 = vadd.f32 0.0, %v1647
    %v1649 = vpop.f32.mrb[0].mxu0
    %v1650 = vpop.f32.mrb[0].mxu0
    %v1651 = vadd.f32 0.0, %v1650
    %v1652 = vpop.f32.mrb[0].mxu0
    %1653 = vmatprep.mubr.bf16.mxu0 0
    %1654 = vmatmul.mubr.bf16.gmra.mrb[0].mxu0 %v1608
    %v1655 = vpop.f32.mrb[0].mxu0
    %v1656 = vadd.f32 0.0, %v1655
    %v1657 = vpop.f32.mrb[0].mxu0
    %v1658 = vpop.f32.mrb[0].mxu0
    %v1659 = vpop.f32.mrb[0].mxu0
    %1660 = vdwg.mxu0
    %v1662 = vsel %vm913, %v1537, 0
    %v1665 = vsel %vm913, %v1538, 0
    %v1668 = vsel %vm1552, %v1544, 0
    %1670 = vmatprep.subr.bf16.mxu0 0
    %1671 = vmatpush1.bf16.msra.mxu0 %v1668
    %1672 = vmatprep.subr.bf16.mxu0 0
    %1673 = vmatpush1.bf16.msra.mxu0 0
    %1674 = vmatprep.subr.bf16.mxu0 0
    %1675 = vmatpush1.bf16.msra.mxu0 0
    %1676 = vmatprep.subr.bf16.mxu0 0
    %1677 = vmatpush1.bf16.msra.mxu0 0
    %1678 = vmatprep.subr.bf16.mxu0 0
    %1679 = vmatpush1.bf16.msra.mxu0 0
    %1680 = vmatprep.subr.bf16.mxu0 0
    %1681 = vmatpush1.bf16.msra.mxu0 0
    %1682 = vmatprep.subr.bf16.mxu0 0
    %1683 = vmatpush1.bf16.msra.mxu0 0
    %1684 = vmatprep.subr.bf16.mxu0 0
    %1685 = vmatpush1.bf16.msra.mxu0 0
    %1686 = vmatprep.subr.bf16.mxu0 0
    %1687 = vmatpush1.bf16.msra.mxu0 0
    %1688 = vmatprep.subr.bf16.mxu0 0
    %1689 = vmatpush1.bf16.msra.mxu0 0
    %1690 = vmatprep.subr.bf16.mxu0 0
    %1691 = vmatpush1.bf16.msra.mxu0 0
    %1692 = vmatprep.subr.bf16.mxu0 0
    %1693 = vmatpush1.bf16.msra.mxu0 0
    %1694 = vmatprep.subr.bf16.mxu0 0
    %1695 = vmatpush1.bf16.msra.mxu0 0
    %1696 = vmatprep.subr.bf16.mxu0 0
    %1697 = vmatpush1.bf16.msra.mxu0 0
    %1698 = vmatprep.subr.bf16.mxu0 0
    %1699 = vmatpush1.bf16.msra.mxu0 0
    %1700 = vmatprep.subr.bf16.mxu0 0
    %1701 = vmatpush1.bf16.msra.mxu0 0
    %1702 = vmatprep.mubr.bf16.mxu0 0
    %1703 = vmatmul.mubr.bf16.gmra.mrb[0].mxu0 %v1662
    %v1704 = vpop.f32.mrb[0].mxu0
    %v1705 = vadd.f32 0.0, %v1704
    %v1706 = vpop.f32.mrb[0].mxu0
    %v1707 = vpop.f32.mrb[0].mxu0
    %v1708 = vadd.f32 0.0, %v1707
    %v1709 = vpop.f32.mrb[0].mxu0
    %1710 = vmatprep.mubr.bf16.mxu0 0
    %1711 = vmatmul.mubr.bf16.gmra.mrb[0].mxu0 %v1665
    %v1712 = vpop.f32.mrb[0].mxu0
    %v1713 = vadd.f32 0.0, %v1712
    %v1714 = vpop.f32.mrb[0].mxu0
    %v1715 = vpop.f32.mrb[0].mxu0
    %v1716 = vpop.f32.mrb[0].mxu0
    %1717 = vdwg.mxu0
    %v1719 = vsel %vm913, %v1539, 0
    %v1722 = vsel %vm913, %v1540, 0
    %v1725 = vsel %vm1552, %v1545, 0
    %1727 = vmatprep.subr.bf16.mxu0 0
    %1728 = vmatpush1.bf16.msra.mxu0 %v1725
    %1729 = vmatprep.subr.bf16.mxu0 0
    %1730 = vmatpush1.bf16.msra.mxu0 0
    %1731 = vmatprep.subr.bf16.mxu0 0
    %1732 = vmatpush1.bf16.msra.mxu0 0
    %1733 = vmatprep.subr.bf16.mxu0 0
    %1734 = vmatpush1.bf16.msra.mxu0 0
    %1735 = vmatprep.subr.bf16.mxu0 0
    %1736 = vmatpush1.bf16.msra.mxu0 0
    %1737 = vmatprep.subr.bf16.mxu0 0
    %1738 = vmatpush1.bf16.msra.mxu0 0
    %1739 = vmatprep.subr.bf16.mxu0 0
    %1740 = vmatpush1.bf16.msra.mxu0 0
    %1741 = vmatprep.subr.bf16.mxu0 0
    %1742 = vmatpush1.bf16.msra.mxu0 0
    %1743 = vmatprep.subr.bf16.mxu0 0
    %1744 = vmatpush1.bf16.msra.mxu0 0
    %1745 = vmatprep.subr.bf16.mxu0 0
    %1746 = vmatpush1.bf16.msra.mxu0 0
    %1747 = vmatprep.subr.bf16.mxu0 0
    %1748 = vmatpush1.bf16.msra.mxu0 0
    %1749 = vmatprep.subr.bf16.mxu0 0
    %1750 = vmatpush1.bf16.msra.mxu0 0
    %1751 = vmatprep.subr.bf16.mxu0 0
    %1752 = vmatpush1.bf16.msra.mxu0 0
    %1753 = vmatprep.subr.bf16.mxu0 0
    %1754 = vmatpush1.bf16.msra.mxu0 0
    %1755 = vmatprep.subr.bf16.mxu0 0
    %1756 = vmatpush1.bf16.msra.mxu0 0
    %1757 = vmatprep.subr.bf16.mxu0 0
    %1758 = vmatpush1.bf16.msra.mxu0 0
    %1759 = vmatprep.mubr.bf16.mxu0 0
    %1760 = vmatmul.mubr.bf16.gmra.mrb[0].mxu0 %v1719
    %v1761 = vpop.f32.mrb[0].mxu0
    %v1762 = vadd.f32 0.0, %v1761
    %v1763 = vpop.f32.mrb[0].mxu0
    %v1764 = vpop.f32.mrb[0].mxu0
    %v1765 = vadd.f32 0.0, %v1764
    %v1766 = vpop.f32.mrb[0].mxu0
    %1767 = vmatprep.mubr.bf16.mxu0 0
    %1768 = vmatmul.mubr.bf16.gmra.mrb[0].mxu0 %v1722
    %v1769 = vpop.f32.mrb[0].mxu0
    %v1770 = vadd.f32 0.0, %v1769
    %v1771 = vpop.f32.mrb[0].mxu0
    %v1772 = vpop.f32.mrb[0].mxu0
    %v1773 = vpop.f32.mrb[0].mxu0
    %1774 = vdwg.mxu0
    %v1775 = vsel %vm206, %v1591, 0.0
    %v1776 = vsel %vm206, %v1648, 0.0
    %v1777 = vadd.f32 %v1775, %v1776
    %v1778 = vsel %vm206, %v1705, 0.0
    %v1779 = vadd.f32 %v1777, %v1778
    %v1780 = vsel %vm206, %v1762, 0.0
    %v1781 = vadd.f32 %v1779, %v1780
    %v1782 = vsel %vm206, %v1594, 0.0
    %v1783 = vsel %vm206, %v1651, 0.0
    %v1784 = vadd.f32 %v1782, %v1783
    %v1785 = vsel %vm206, %v1708, 0.0
    %v1786 = vadd.f32 %v1784, %v1785
    %v1787 = vsel %vm206, %v1765, 0.0
    %v1788 = vadd.f32 %v1786, %v1787
    %v1789 = vsel %vm213, %v1599, 0.0
    %v1790 = vsel %vm213, %v1656, 0.0
    %v1791 = vadd.f32 %v1789, %v1790
    %v1792 = vsel %vm213, %v1713, 0.0
    %v1793 = vadd.f32 %v1791, %v1792
    %v1794 = vsel %vm213, %v1770, 0.0
    %v1795 = vadd.f32 %v1793, %v1794
    %v1796 = vlaneseq
    %v1797 = vshrl.u32 %v1796, 7
    %v1798 = vsub.s32 0, %v1797
    %v1799 = vrot.slane %v262, %v1798
    %v1800 = vadd.f32 %v1781, %v1799
    %v1801 = vadd.f32 %v1788, %v1799
    %v1802 = vadd.f32 %v1795, %v1799
    %v1803 = vpack.c.bf16 %v1801, %v1800
    %v1804 = vpack.c.bf16 %v1802, %v1802
    %v1805 = vld [vmem:[%s2 + $0x60] sm:$0xf]
    %v1806 = vld [vmem:[%s2 + $0x64] sm:$0xf]
    %v1807 = vld [vmem:[%s2 + $0x68] sm:$0xf]
    %v1808 = vld [vmem:[%s2 + $0x6c] sm:$0xf]
    %v1809 = vld [vmem:[%s3 + $0x19] sm:$0x1]
    %v1810 = vlaneseq
    %v1811 = vshrl.u32 %v1810, 7
    %v1812 = vsub.s32 0, %v1811
    %v1813 = vrot.slane %v1809, %v1812
    %v1818 = vunpack.c.l.b16 %v1805
    %v1819 = vunpack.c.l.b16 %v1806
    %v1820 = vunpack.c.l.b16 %v1807
    %v1821 = vunpack.c.l.b16 %v1808
    %v1822 = vpack.c.b16 %v1819, %v1818
    %v1823 = vpack.c.b16 %v1821, %v1820
    %v1827 = vsel %vm206, %v1803, 0
    %v1830 = vsel %vm206, %v1804, 0
    %1832 = vmatprep.subr.bf16.mxu0 0
    %1833 = vmatpush1.bf16.msra.mxu0 %v1822
    %1834 = vmatprep.subr.bf16.mxu0 0
    %1835 = vmatpush1.bf16.msra.mxu0 %v1823
    %1836 = vmatprep.subr.bf16.mxu0 0
    %1837 = vmatpush1.bf16.msra.mxu0 0
    %1838 = vmatprep.subr.bf16.mxu0 0
    %1839 = vmatpush1.bf16.msra.mxu0 0
    %1840 = vmatprep.subr.bf16.mxu0 0
    %1841 = vmatpush1.bf16.msra.mxu0 0
    %1842 = vmatprep.subr.bf16.mxu0 0
    %1843 = vmatpush1.bf16.msra.mxu0 0
    %1844 = vmatprep.subr.bf16.mxu0 0
    %1845 = vmatpush1.bf16.msra.mxu0 0
    %1846 = vmatprep.subr.bf16.mxu0 0
    %1847 = vmatpush1.bf16.msra.mxu0 0
    %1848 = vmatprep.subr.bf16.mxu0 0
    %1849 = vmatpush1.bf16.msra.mxu0 0
    %1850 = vmatprep.subr.bf16.mxu0 0
    %1851 = vmatpush1.bf16.msra.mxu0 0
    %1852 = vmatprep.subr.bf16.mxu0 0
    %1853 = vmatpush1.bf16.msra.mxu0 0
    %1854 = vmatprep.subr.bf16.mxu0 0
    %1855 = vmatpush1.bf16.msra.mxu0 0
    %1856 = vmatprep.subr.bf16.mxu0 0
    %1857 = vmatpush1.bf16.msra.mxu0 0
    %1858 = vmatprep.subr.bf16.mxu0 0
    %1859 = vmatpush1.bf16.msra.mxu0 0
    %1860 = vmatprep.subr.bf16.mxu0 0
    %1861 = vmatpush1.bf16.msra.mxu0 0
    %1862 = vmatprep.subr.bf16.mxu0 0
    %1863 = vmatpush1.bf16.msra.mxu0 0
    %1864 = vmatprep.mubr.bf16.mxu0 0
    %1865 = vmatmul.mubr.bf16.gmra.mrb[0].mxu0 %v1827
    %v1866 = vpop.f32.mrb[0].mxu0
    %v1867 = vadd.f32 %v1813, %v1866
    %v1868 = vpop.f32.mrb[0].mxu0
    %v1869 = vpop.f32.mrb[0].mxu0
    %v1870 = vadd.f32 %v1813, %v1869
    %v1871 = vpop.f32.mrb[0].mxu0
    %1872 = vmatprep.mubr.bf16.mxu0 0
    %1873 = vmatmul.mubr.bf16.gmra.mrb[0].mxu0 %v1830
    %v1874 = vpop.f32.mrb[0].mxu0
    %v1875 = vadd.f32 %v1813, %v1874
    %v1876 = vpop.f32.mrb[0].mxu0
    %v1877 = vpop.f32.mrb[0].mxu0
    %v1878 = vpop.f32.mrb[0].mxu0
    %1879 = vdwg.mxu0
    %v1881 = vsel %vm1154, %v33, 0
    %v1884 = vsel %vm1154, %v34, 0
    %v1887 = vsel %vm1154, %v35, 0
    %v1890 = vsel %vm1552, %v1875, 0
    %1892 = vmatprep.subr.mxu0 0.0
    %1893 = vmatpush1.msra.mxu0 %v1867
    %1894 = vmatprep.subr.mxu0 0.0
    %1895 = vmatpush1.msra.mxu0 %v1870
    %1896 = vmatprep.subr.mxu0 0.0
    %1897 = vmatpush1.msra.mxu0 %v1890
    %1898 = vmatprep.subr.mxu0 0.0
    %1899 = vmatpush1.msra.mxu0 0.0
    %1900 = vmatprep.subr.mxu0 0.0
    %1901 = vmatpush1.msra.mxu0 0.0
    %1902 = vmatprep.subr.mxu0 0.0
    %1903 = vmatpush1.msra.mxu0 0.0
    %1904 = vmatprep.subr.mxu0 0.0
    %1905 = vmatpush1.msra.mxu0 0.0
    %1906 = vmatprep.subr.mxu0 0.0
    %1907 = vmatpush1.msra.mxu0 0.0
    %1908 = vmatprep.subr.mxu0 0.0
    %1909 = vmatpush1.msra.mxu0 0.0
    %1910 = vmatprep.subr.mxu0 0.0
    %1911 = vmatpush1.msra.mxu0 0.0
    %1912 = vmatprep.subr.mxu0 0.0
    %1913 = vmatpush1.msra.mxu0 0.0
    %1914 = vmatprep.subr.mxu0 0.0
    %1915 = vmatpush1.msra.mxu0 0.0
    %1916 = vmatprep.subr.mxu0 0.0
    %1917 = vmatpush1.msra.mxu0 0.0
    %1918 = vmatprep.subr.mxu0 0.0
    %1919 = vmatpush1.msra.mxu0 0.0
    %1920 = vmatprep.subr.mxu0 0.0
    %1921 = vmatpush1.msra.mxu0 0.0
    %1922 = vmatprep.subr.mxu0 0.0
    %1923 = vmatpush1.msra.mxu0 0.0
    %1924 = vmatprep.subr.mxu0 0.0
    %1925 = vmatpush1.msra.mxu0 0.0
    %1926 = vmatprep.subr.mxu0 0.0
    %1927 = vmatpush1.msra.mxu0 0.0
    %1928 = vmatprep.subr.mxu0 0.0
    %1929 = vmatpush1.msra.mxu0 0.0
    %1930 = vmatprep.subr.mxu0 0.0
    %1931 = vmatpush1.msra.mxu0 0.0
    %1932 = vmatprep.subr.mxu0 0.0
    %1933 = vmatpush1.msra.mxu0 0.0
    %1934 = vmatprep.subr.mxu0 0.0
    %1935 = vmatpush1.msra.mxu0 0.0
    %1936 = vmatprep.subr.mxu0 0.0
    %1937 = vmatpush1.msra.mxu0 0.0
    %1938 = vmatprep.subr.mxu0 0.0
    %1939 = vmatpush1.msra.mxu0 0.0
    %1940 = vmatprep.subr.mxu0 0.0
    %1941 = vmatpush1.msra.mxu0 0.0
    %1942 = vmatprep.subr.mxu0 0.0
    %1943 = vmatpush1.msra.mxu0 0.0
    %1944 = vmatprep.subr.mxu0 0.0
    %1945 = vmatpush1.msra.mxu0 0.0
    %1946 = vmatprep.subr.mxu0 0.0
    %1947 = vmatpush1.msra.mxu0 0.0
    %1948 = vmatprep.subr.mxu0 0.0
    %1949 = vmatpush1.msra.mxu0 0.0
    %1950 = vmatprep.subr.mxu0 0.0
    %1951 = vmatpush1.msra.mxu0 0.0
    %1952 = vmatprep.subr.mxu0 0.0
    %1953 = vmatpush1.msra.mxu0 0.0
    %1954 = vmatprep.subr.mxu0 0.0
    %1955 = vmatpush1.msra.mxu0 0.0
    %1956 = vmatprep.mubr.f32.mxu0 0.0
    %1957 = vmatmul.mubr.f32.gmra.mrb[0].mxu0 %v1881
    %v1958 = vpop.f32.mrb[0].mxu0
    %v1959 = vadd.f32 0.0, %v1958
    %v1960 = vpop.f32.mrb[0].mxu0
    %1961 = vmatprep.mubr.f32.mxu0 0.0
    %1962 = vmatmul.mubr.f32.gmra.mrb[0].mxu0 %v1884
    %v1963 = vpop.f32.mrb[0].mxu0
    %v1964 = vadd.f32 0.0, %v1963
    %v1965 = vpop.f32.mrb[0].mxu0
    %1966 = vmatprep.mubr.f32.mxu0 0.0
    %1967 = vmatmul.mubr.f32.gmra.mrb[0].mxu0 %v1887
    %v1968 = vpop.f32.mrb[0].mxu0
    %v1969 = vadd.f32 0.0, %v1968
    %v1970 = vpop.f32.mrb[0].mxu0
    %1971 = vdwg.mxu0
    %v1972 = vadd.f32 %v191, %v1959
    %v1973 = vadd.f32 %v194, %v1964
    %v1974 = vadd.f32 %v199, %v1969
    %v1975 = vld [vmem:[%s3 + $0x1a] sm:$0x1]
    %v1976 = vld [vmem:[%s3 + $0x1b] sm:$0x1]
    %v1977 = vsel %vm206, %v1972, 0.0
    %1978 = vadd.xlane.f32.xlu0 %v1977
    %v1979 = vpop.xlane.xlu0 %1978
    %v1980 = vsel %vm206, %v1973, 0.0
    %1981 = vadd.xlane.f32.xlu0 %v1980
    %v1982 = vpop.xlane.xlu0 %1981
    %v1983 = vsel %vm213, %v1974, 0.0
    %1984 = vadd.xlane.f32.xlu0 %v1983
    %v1985 = vpop.xlane.xlu0 %1984
    %v1986 = vmul.f32 %v1979, %v217
    %v1987 = vmul.f32 %v1982, %v217
    %v1988 = vmul.f32 %v1985, %v217
    %v1989 = vsub.f32 %v1972, %v1986
    %v1990 = vsub.f32 %v1973, %v1987
    %v1991 = vsub.f32 %v1974, %v1988
    %v1992 = vmul.f32 %v1989, %v1989
    %v1993 = vmul.f32 %v1990, %v1990
    %v1994 = vmul.f32 %v1991, %v1991
    %v1995 = vsel %vm206, %v1992, 0.0
    %1996 = vadd.xlane.f32.xlu0 %v1995
    %v1997 = vpop.xlane.xlu0 %1996
    %v1998 = vsel %vm206, %v1993, 0.0
    %1999 = vadd.xlane.f32.xlu0 %v1998
    %v2000 = vpop.xlane.xlu0 %1999
    %v2001 = vsel %vm213, %v1994, 0.0
    %2002 = vadd.xlane.f32.xlu0 %v2001
    %v2003 = vpop.xlane.xlu0 %2002
    %v2004 = vmul.f32 %v1997, %v217
    %v2005 = vmul.f32 %v2000, %v217
    %v2006 = vmul.f32 %v2003, %v217
    %v2007 = vadd.f32 %v2004, 1e-05
    %v2008 = vadd.f32 %v2005, 1e-05
    %v2009 = vadd.f32 %v2006, 1e-05
    %v2010 = vrsqrt.pop %v2007
    %v2011 = vrsqrt.pop %v2008
    %v2012 = vrsqrt.pop %v2009
    %v2013 = vmul.f32 %v1989, %v2010
    %v2014 = vmul.f32 %v1990, %v2011
    %v2015 = vmul.f32 %v1991, %v2012
    %v2016 = vlaneseq
    %v2017 = vshrl.u32 %v2016, 7
    %v2018 = vsub.s32 0, %v2017
    %v2019 = vrot.slane %v1975, %v2018
    %v2020 = vmul.f32 %v2013, %v2019
    %v2021 = vmul.f32 %v2014, %v2019
    %v2022 = vmul.f32 %v2015, %v2019
    %v2023 = vlaneseq
    %v2024 = vshrl.u32 %v2023, 7
    %v2025 = vsub.s32 0, %v2024
    %v2026 = vrot.slane %v1976, %v2025
    %v2027 = vadd.f32 %v2020, %v2026
    %v2028 = vadd.f32 %v2021, %v2026
    %v2029 = vadd.f32 %v2022, %v2026
    %v2030 = vld [vmem:[%s3 + $0x1c] sm:$0x1]
    %v2031 = vpack.c.bf16 %v2028, %v2027
    %v2032 = vpack.c.bf16 %v2029, %v2029
    %s2033 = scalar_lea.vmem %s1, 64
    %v2034 = vld [vmem:[%s2033] sm:$0xf]
    %v2035 = vld [vmem:[%s2033 + $0x4] sm:$0xf]
    %v2036 = vld [vmem:[%s2033 + $0x8] sm:$0xf]
    %v2037 = vld [vmem:[%s2033 + $0xc] sm:$0xf]
    %v2039 = vsel %vm206, %v2031, 0
    %v2042 = vsel %vm206, %v2032, 0
    %v2045 = vsel %vm206, %v2034, 0
    %2047 = vmatprep.subr.bf16.mxu0 0
    %2048 = vmatpush1.bf16.xpose.msra.mxu0 %v2045
    %2049 = vmatprep.subr.bf16.mxu0 0
    %2050 = vmatpush1.bf16.xpose.msra.mxu0 0
    %2051 = vmatprep.subr.bf16.mxu0 0
    %2052 = vmatpush1.bf16.xpose.msra.mxu0 0
    %2053 = vmatprep.subr.bf16.mxu0 0
    %2054 = vmatpush1.bf16.xpose.msra.mxu0 0
    %2055 = vmatprep.subr.bf16.mxu0 0
    %2056 = vmatpush1.bf16.xpose.msra.mxu0 0
    %2057 = vmatprep.subr.bf16.mxu0 0
    %2058 = vmatpush1.bf16.xpose.msra.mxu0 0
    %2059 = vmatprep.subr.bf16.mxu0 0
    %2060 = vmatpush1.bf16.xpose.msra.mxu0 0
    %2061 = vmatprep.subr.bf16.mxu0 0
    %2062 = vmatpush1.bf16.xpose.msra.mxu0 0
    %2063 = vmatprep.subr.bf16.mxu0 0
    %2064 = vmatpush1.bf16.xpose.msra.mxu0 0
    %2065 = vmatprep.subr.bf16.mxu0 0
    %2066 = vmatpush1.bf16.xpose.msra.mxu0 0
    %2067 = vmatprep.subr.bf16.mxu0 0
    %2068 = vmatpush1.bf16.xpose.msra.mxu0 0
    %2069 = vmatprep.subr.bf16.mxu0 0
    %2070 = vmatpush1.bf16.xpose.msra.mxu0 0
    %2071 = vmatprep.subr.bf16.mxu0 0
    %2072 = vmatpush1.bf16.xpose.msra.mxu0 0
    %2073 = vmatprep.subr.bf16.mxu0 0
    %2074 = vmatpush1.bf16.xpose.msra.mxu0 0
    %2075 = vmatprep.subr.bf16.mxu0 0
    %2076 = vmatpush1.bf16.xpose.msra.mxu0 0
    %2077 = vmatprep.subr.bf16.mxu0 0
    %2078 = vmatpush1.bf16.xpose.msra.mxu0 0
    %2079 = vmatprep.mubr.bf16.mxu0 0
    %2080 = vmatmul.mubr.bf16.gmra.mrb[0].mxu0 %v2039
    %v2081 = vpop.f32.mrb[0].mxu0
    %v2082 = vadd.f32 0.0, %v2081
    %v2083 = vpop.f32.mrb[0].mxu0
    %v2084 = vpop.f32.mrb[0].mxu0
    %v2085 = vadd.f32 0.0, %v2084
    %v2086 = vpop.f32.mrb[0].mxu0
    %2087 = vmatprep.mubr.bf16.mxu0 0
    %2088 = vmatmul.mubr.bf16.gmra.mrb[0].mxu0 %v2042
    %v2089 = vpop.f32.mrb[0].mxu0
    %v2090 = vadd.f32 0.0, %v2089
    %v2091 = vpop.f32.mrb[0].mxu0
    %v2092 = vpop.f32.mrb[0].mxu0
    %v2093 = vpop.f32.mrb[0].mxu0
    %2094 = vdwg.mxu0
    %v2096 = vsel %vm206, %v2035, 0
    %2098 = vmatprep.subr.bf16.mxu0 0
    %2099 = vmatpush1.bf16.xpose.msra.mxu0 %v2096
    %2100 = vmatprep.subr.bf16.mxu0 0
    %2101 = vmatpush1.bf16.xpose.msra.mxu0 0
    %2102 = vmatprep.subr.bf16.mxu0 0
    %2103 = vmatpush1.bf16.xpose.msra.mxu0 0
    %2104 = vmatprep.subr.bf16.mxu0 0
    %2105 = vmatpush1.bf16.xpose.msra.mxu0 0
    %2106 = vmatprep.subr.bf16.mxu0 0
    %2107 = vmatpush1.bf16.xpose.msra.mxu0 0
    %2108 = vmatprep.subr.bf16.mxu0 0
    %2109 = vmatpush1.bf16.xpose.msra.mxu0 0
    %2110 = vmatprep.subr.bf16.mxu0 0
    %2111 = vmatpush1.bf16.xpose.msra.mxu0 0
    %2112 = vmatprep.subr.bf16.mxu0 0
    %2113 = vmatpush1.bf16.xpose.msra.mxu0 0
    %2114 = vmatprep.subr.bf16.mxu0 0
    %2115 = vmatpush1.bf16.xpose.msra.mxu0 0
    %2116 = vmatprep.subr.bf16.mxu0 0
    %2117 = vmatpush1.bf16.xpose.msra.mxu0 0
    %2118 = vmatprep.subr.bf16.mxu0 0
    %2119 = vmatpush1.bf16.xpose.msra.mxu0 0
    %2120 = vmatprep.subr.bf16.mxu0 0
    %2121 = vmatpush1.bf16.xpose.msra.mxu0 0
    %2122 = vmatprep.subr.bf16.mxu0 0
    %2123 = vmatpush1.bf16.xpose.msra.mxu0 0
    %2124 = vmatprep.subr.bf16.mxu0 0
    %2125 = vmatpush1.bf16.xpose.msra.mxu0 0
    %2126 = vmatprep.subr.bf16.mxu0 0
    %2127 = vmatpush1.bf16.xpose.msra.mxu0 0
    %2128 = vmatprep.subr.bf16.mxu0 0
    %2129 = vmatpush1.bf16.xpose.msra.mxu0 0
    %2130 = vmatprep.mubr.bf16.mxu0 0
    %2131 = vmatmul.mubr.bf16.gmra.mrb[0].mxu0 %v2039
    %v2132 = vpop.f32.mrb[0].mxu0
    %v2133 = vadd.f32 0.0, %v2132
    %v2134 = vpop.f32.mrb[0].mxu0
    %v2135 = vpop.f32.mrb[0].mxu0
    %v2136 = vadd.f32 0.0, %v2135
    %v2137 = vpop.f32.mrb[0].mxu0
    %2138 = vmatprep.mubr.bf16.mxu0 0
    %2139 = vmatmul.mubr.bf16.gmra.mrb[0].mxu0 %v2042
    %v2140 = vpop.f32.mrb[0].mxu0
    %v2141 = vadd.f32 0.0, %v2140
    %v2142 = vpop.f32.mrb[0].mxu0
    %v2143 = vpop.f32.mrb[0].mxu0
    %v2144 = vpop.f32.mrb[0].mxu0
    %2145 = vdwg.mxu0
    %v2147 = vsel %vm206, %v2036, 0
    %2149 = vmatprep.subr.bf16.mxu0 0
    %2150 = vmatpush1.bf16.xpose.msra.mxu0 %v2147
    %2151 = vmatprep.subr.bf16.mxu0 0
    %2152 = vmatpush1.bf16.xpose.msra.mxu0 0
    %2153 = vmatprep.subr.bf16.mxu0 0
    %2154 = vmatpush1.bf16.xpose.msra.mxu0 0
    %2155 = vmatprep.subr.bf16.mxu0 0
    %2156 = vmatpush1.bf16.xpose.msra.mxu0 0
    %2157 = vmatprep.subr.bf16.mxu0 0
    %2158 = vmatpush1.bf16.xpose.msra.mxu0 0
    %2159 = vmatprep.subr.bf16.mxu0 0
    %2160 = vmatpush1.bf16.xpose.msra.mxu0 0
    %2161 = vmatprep.subr.bf16.mxu0 0
    %2162 = vmatpush1.bf16.xpose.msra.mxu0 0
    %2163 = vmatprep.subr.bf16.mxu0 0
    %2164 = vmatpush1.bf16.xpose.msra.mxu0 0
    %2165 = vmatprep.subr.bf16.mxu0 0
    %2166 = vmatpush1.bf16.xpose.msra.mxu0 0
    %2167 = vmatprep.subr.bf16.mxu0 0
    %2168 = vmatpush1.bf16.xpose.msra.mxu0 0
    %2169 = vmatprep.subr.bf16.mxu0 0
    %2170 = vmatpush1.bf16.xpose.msra.mxu0 0
    %2171 = vmatprep.subr.bf16.mxu0 0
    %2172 = vmatpush1.bf16.xpose.msra.mxu0 0
    %2173 = vmatprep.subr.bf16.mxu0 0
    %2174 = vmatpush1.bf16.xpose.msra.mxu0 0
    %2175 = vmatprep.subr.bf16.mxu0 0
    %2176 = vmatpush1.bf16.xpose.msra.mxu0 0
    %2177 = vmatprep.subr.bf16.mxu0 0
    %2178 = vmatpush1.bf16.xpose.msra.mxu0 0
    %2179 = vmatprep.subr.bf16.mxu0 0
    %2180 = vmatpush1.bf16.xpose.msra.mxu0 0
    %2181 = vmatprep.mubr.bf16.mxu0 0
    %2182 = vmatmul.mubr.bf16.gmra.mrb[0].mxu0 %v2039
    %v2183 = vpop.f32.mrb[0].mxu0
    %v2184 = vadd.f32 0.0, %v2183
    %v2185 = vpop.f32.mrb[0].mxu0
    %v2186 = vpop.f32.mrb[0].mxu0
    %v2187 = vadd.f32 0.0, %v2186
    %v2188 = vpop.f32.mrb[0].mxu0
    %2189 = vmatprep.mubr.bf16.mxu0 0
    %2190 = vmatmul.mubr.bf16.gmra.mrb[0].mxu0 %v2042
    %v2191 = vpop.f32.mrb[0].mxu0
    %v2192 = vadd.f32 0.0, %v2191
    %v2193 = vpop.f32.mrb[0].mxu0
    %v2194 = vpop.f32.mrb[0].mxu0
    %v2195 = vpop.f32.mrb[0].mxu0
    %2196 = vdwg.mxu0
    %v2198 = vsel %vm206, %v2037, 0
    %2200 = vmatprep.subr.bf16.mxu0 0
    %2201 = vmatpush1.bf16.xpose.msra.mxu0 %v2198
    %2202 = vmatprep.subr.bf16.mxu0 0
    %2203 = vmatpush1.bf16.xpose.msra.mxu0 0
    %2204 = vmatprep.subr.bf16.mxu0 0
    %2205 = vmatpush1.bf16.xpose.msra.mxu0 0
    %2206 = vmatprep.subr.bf16.mxu0 0
    %2207 = vmatpush1.bf16.xpose.msra.mxu0 0
    %2208 = vmatprep.subr.bf16.mxu0 0
    %2209 = vmatpush1.bf16.xpose.msra.mxu0 0
    %2210 = vmatprep.subr.bf16.mxu0 0
    %2211 = vmatpush1.bf16.xpose.msra.mxu0 0
    %2212 = vmatprep.subr.bf16.mxu0 0
    %2213 = vmatpush1.bf16.xpose.msra.mxu0 0
    %2214 = vmatprep.subr.bf16.mxu0 0
    %2215 = vmatpush1.bf16.xpose.msra.mxu0 0
    %2216 = vmatprep.subr.bf16.mxu0 0
    %2217 = vmatpush1.bf16.xpose.msra.mxu0 0
    %2218 = vmatprep.subr.bf16.mxu0 0
    %2219 = vmatpush1.bf16.xpose.msra.mxu0 0
    %2220 = vmatprep.subr.bf16.mxu0 0
    %2221 = vmatpush1.bf16.xpose.msra.mxu0 0
    %2222 = vmatprep.subr.bf16.mxu0 0
    %2223 = vmatpush1.bf16.xpose.msra.mxu0 0
    %2224 = vmatprep.subr.bf16.mxu0 0
    %2225 = vmatpush1.bf16.xpose.msra.mxu0 0
    %2226 = vmatprep.subr.bf16.mxu0 0
    %2227 = vmatpush1.bf16.xpose.msra.mxu0 0
    %2228 = vmatprep.subr.bf16.mxu0 0
    %2229 = vmatpush1.bf16.xpose.msra.mxu0 0
    %2230 = vmatprep.subr.bf16.mxu0 0
    %2231 = vmatpush1.bf16.xpose.msra.mxu0 0
    %2232 = vmatprep.mubr.bf16.mxu0 0
    %2233 = vmatmul.mubr.bf16.gmra.mrb[0].mxu0 %v2039
    %v2234 = vpop.f32.mrb[0].mxu0
    %v2235 = vadd.f32 0.0, %v2234
    %v2236 = vpop.f32.mrb[0].mxu0
    %v2237 = vpop.f32.mrb[0].mxu0
    %v2238 = vadd.f32 0.0, %v2237
    %v2239 = vpop.f32.mrb[0].mxu0
    %2240 = vmatprep.mubr.bf16.mxu0 0
    %2241 = vmatmul.mubr.bf16.gmra.mrb[0].mxu0 %v2042
    %v2242 = vpop.f32.mrb[0].mxu0
    %v2243 = vadd.f32 0.0, %v2242
    %v2244 = vpop.f32.mrb[0].mxu0
    %v2245 = vpop.f32.mrb[0].mxu0
    %v2246 = vpop.f32.mrb[0].mxu0
    %2247 = vdwg.mxu0
    %s2248 = scalar_lea.vmem %s1, 80
    %v2249 = vld [vmem:[%s2248] sm:$0xf]
    %v2250 = vld [vmem:[%s2248 + $0x4] sm:$0xf]
    %v2251 = vld [vmem:[%s2248 + $0x8] sm:$0xf]
    %v2252 = vld [vmem:[%s2248 + $0xc] sm:$0xf]
    %v2254 = vsel %vm206, %v2249, 0
    %2256 = vmatprep.subr.bf16.mxu0 0
    %2257 = vmatpush1.bf16.xpose.msra.mxu0 %v2254
    %2258 = vmatprep.subr.bf16.mxu0 0
    %2259 = vmatpush1.bf16.xpose.msra.mxu0 0
    %2260 = vmatprep.subr.bf16.mxu0 0
    %2261 = vmatpush1.bf16.xpose.msra.mxu0 0
    %2262 = vmatprep.subr.bf16.mxu0 0
    %2263 = vmatpush1.bf16.xpose.msra.mxu0 0
    %2264 = vmatprep.subr.bf16.mxu0 0
    %2265 = vmatpush1.bf16.xpose.msra.mxu0 0
    %2266 = vmatprep.subr.bf16.mxu0 0
    %2267 = vmatpush1.bf16.xpose.msra.mxu0 0
    %2268 = vmatprep.subr.bf16.mxu0 0
    %2269 = vmatpush1.bf16.xpose.msra.mxu0 0
    %2270 = vmatprep.subr.bf16.mxu0 0
    %2271 = vmatpush1.bf16.xpose.msra.mxu0 0
    %2272 = vmatprep.subr.bf16.mxu0 0
    %2273 = vmatpush1.bf16.xpose.msra.mxu0 0
    %2274 = vmatprep.subr.bf16.mxu0 0
    %2275 = vmatpush1.bf16.xpose.msra.mxu0 0
    %2276 = vmatprep.subr.bf16.mxu0 0
    %2277 = vmatpush1.bf16.xpose.msra.mxu0 0
    %2278 = vmatprep.subr.bf16.mxu0 0
    %2279 = vmatpush1.bf16.xpose.msra.mxu0 0
    %2280 = vmatprep.subr.bf16.mxu0 0
    %2281 = vmatpush1.bf16.xpose.msra.mxu0 0
    %2282 = vmatprep.subr.bf16.mxu0 0
    %2283 = vmatpush1.bf16.xpose.msra.mxu0 0
    %2284 = vmatprep.subr.bf16.mxu0 0
    %2285 = vmatpush1.bf16.xpose.msra.mxu0 0
    %2286 = vmatprep.subr.bf16.mxu0 0
    %2287 = vmatpush1.bf16.xpose.msra.mxu0 0
    %2288 = vmatprep.mubr.bf16.mxu0 0
    %2289 = vmatmul.mubr.bf16.gmra.mrb[0].mxu0 %v2039
    %v2290 = vpop.f32.mrb[0].mxu0
    %v2291 = vadd.f32 0.0, %v2290
    %v2292 = vpop.f32.mrb[0].mxu0
    %v2293 = vpop.f32.mrb[0].mxu0
    %v2294 = vadd.f32 0.0, %v2293
    %v2295 = vpop.f32.mrb[0].mxu0
    %2296 = vmatprep.mubr.bf16.mxu0 0
    %2297 = vmatmul.mubr.bf16.gmra.mrb[0].mxu0 %v2042
    %v2298 = vpop.f32.mrb[0].mxu0
    %v2299 = vadd.f32 0.0, %v2298
    %v2300 = vpop.f32.mrb[0].mxu0
    %v2301 = vpop.f32.mrb[0].mxu0
    %v2302 = vpop.f32.mrb[0].mxu0
    %2303 = vdwg.mxu0
    %v2305 = vsel %vm206, %v2250, 0
    %2307 = vmatprep.subr.bf16.mxu0 0
    %2308 = vmatpush1.bf16.xpose.msra.mxu0 %v2305
    %2309 = vmatprep.subr.bf16.mxu0 0
    %2310 = vmatpush1.bf16.xpose.msra.mxu0 0
    %2311 = vmatprep.subr.bf16.mxu0 0
    %2312 = vmatpush1.bf16.xpose.msra.mxu0 0
    %2313 = vmatprep.subr.bf16.mxu0 0
    %2314 = vmatpush1.bf16.xpose.msra.mxu0 0
    %2315 = vmatprep.subr.bf16.mxu0 0
    %2316 = vmatpush1.bf16.xpose.msra.mxu0 0
    %2317 = vmatprep.subr.bf16.mxu0 0
    %2318 = vmatpush1.bf16.xpose.msra.mxu0 0
    %2319 = vmatprep.subr.bf16.mxu0 0
    %2320 = vmatpush1.bf16.xpose.msra.mxu0 0
    %2321 = vmatprep.subr.bf16.mxu0 0
    %2322 = vmatpush1.bf16.xpose.msra.mxu0 0
    %2323 = vmatprep.subr.bf16.mxu0 0
    %2324 = vmatpush1.bf16.xpose.msra.mxu0 0
    %2325 = vmatprep.subr.bf16.mxu0 0
    %2326 = vmatpush1.bf16.xpose.msra.mxu0 0
    %2327 = vmatprep.subr.bf16.mxu0 0
    %2328 = vmatpush1.bf16.xpose.msra.mxu0 0
    %2329 = vmatprep.subr.bf16.mxu0 0
    %2330 = vmatpush1.bf16.xpose.msra.mxu0 0
    %2331 = vmatprep.subr.bf16.mxu0 0
    %2332 = vmatpush1.bf16.xpose.msra.mxu0 0
    %2333 = vmatprep.subr.bf16.mxu0 0
    %2334 = vmatpush1.bf16.xpose.msra.mxu0 0
    %2335 = vmatprep.subr.bf16.mxu0 0
    %2336 = vmatpush1.bf16.xpose.msra.mxu0 0
    %2337 = vmatprep.subr.bf16.mxu0 0
    %2338 = vmatpush1.bf16.xpose.msra.mxu0 0
    %2339 = vmatprep.mubr.bf16.mxu0 0
    %2340 = vmatmul.mubr.bf16.gmra.mrb[0].mxu0 %v2039
    %v2341 = vpop.f32.mrb[0].mxu0
    %v2342 = vadd.f32 0.0, %v2341
    %v2343 = vpop.f32.mrb[0].mxu0
    %v2344 = vpop.f32.mrb[0].mxu0
    %v2345 = vadd.f32 0.0, %v2344
    %v2346 = vpop.f32.mrb[0].mxu0
    %2347 = vmatprep.mubr.bf16.mxu0 0
    %2348 = vmatmul.mubr.bf16.gmra.mrb[0].mxu0 %v2042
    %v2349 = vpop.f32.mrb[0].mxu0
    %v2350 = vadd.f32 0.0, %v2349
    %v2351 = vpop.f32.mrb[0].mxu0
    %v2352 = vpop.f32.mrb[0].mxu0
    %v2353 = vpop.f32.mrb[0].mxu0
    %2354 = vdwg.mxu0
    %v2356 = vsel %vm206, %v2251, 0
    %2358 = vmatprep.subr.bf16.mxu0 0
    %2359 = vmatpush1.bf16.xpose.msra.mxu0 %v2356
    %2360 = vmatprep.subr.bf16.mxu0 0
    %2361 = vmatpush1.bf16.xpose.msra.mxu0 0
    %2362 = vmatprep.subr.bf16.mxu0 0
    %2363 = vmatpush1.bf16.xpose.msra.mxu0 0
    %2364 = vmatprep.subr.bf16.mxu0 0
    %2365 = vmatpush1.bf16.xpose.msra.mxu0 0
    %2366 = vmatprep.subr.bf16.mxu0 0
    %2367 = vmatpush1.bf16.xpose.msra.mxu0 0
    %2368 = vmatprep.subr.bf16.mxu0 0
    %2369 = vmatpush1.bf16.xpose.msra.mxu0 0
    %2370 = vmatprep.subr.bf16.mxu0 0
    %2371 = vmatpush1.bf16.xpose.msra.mxu0 0
    %2372 = vmatprep.subr.bf16.mxu0 0
    %2373 = vmatpush1.bf16.xpose.msra.mxu0 0
    %2374 = vmatprep.subr.bf16.mxu0 0
    %2375 = vmatpush1.bf16.xpose.msra.mxu0 0
    %2376 = vmatprep.subr.bf16.mxu0 0
    %2377 = vmatpush1.bf16.xpose.msra.mxu0 0
    %2378 = vmatprep.subr.bf16.mxu0 0
    %2379 = vmatpush1.bf16.xpose.msra.mxu0 0
    %2380 = vmatprep.subr.bf16.mxu0 0
    %2381 = vmatpush1.bf16.xpose.msra.mxu0 0
    %2382 = vmatprep.subr.bf16.mxu0 0
    %2383 = vmatpush1.bf16.xpose.msra.mxu0 0
    %2384 = vmatprep.subr.bf16.mxu0 0
    %2385 = vmatpush1.bf16.xpose.msra.mxu0 0
    %2386 = vmatprep.subr.bf16.mxu0 0
    %2387 = vmatpush1.bf16.xpose.msra.mxu0 0
    %2388 = vmatprep.subr.bf16.mxu0 0
    %2389 = vmatpush1.bf16.xpose.msra.mxu0 0
    %2390 = vmatprep.mubr.bf16.mxu0 0
    %2391 = vmatmul.mubr.bf16.gmra.mrb[0].mxu0 %v2039
    %v2392 = vpop.f32.mrb[0].mxu0
    %v2393 = vadd.f32 0.0, %v2392
    %v2394 = vpop.f32.mrb[0].mxu0
    %v2395 = vpop.f32.mrb[0].mxu0
    %v2396 = vadd.f32 0.0, %v2395
    %v2397 = vpop.f32.mrb[0].mxu0
    %2398 = vmatprep.mubr.bf16.mxu0 0
    %2399 = vmatmul.mubr.bf16.gmra.mrb[0].mxu0 %v2042
    %v2400 = vpop.f32.mrb[0].mxu0
    %v2401 = vadd.f32 0.0, %v2400
    %v2402 = vpop.f32.mrb[0].mxu0
    %v2403 = vpop.f32.mrb[0].mxu0
    %v2404 = vpop.f32.mrb[0].mxu0
    %2405 = vdwg.mxu0
    %v2407 = vsel %vm206, %v2252, 0
    %2409 = vmatprep.subr.bf16.mxu0 0
    %2410 = vmatpush1.bf16.xpose.msra.mxu0 %v2407
    %2411 = vmatprep.subr.bf16.mxu0 0
    %2412 = vmatpush1.bf16.xpose.msra.mxu0 0
    %2413 = vmatprep.subr.bf16.mxu0 0
    %2414 = vmatpush1.bf16.xpose.msra.mxu0 0
    %2415 = vmatprep.subr.bf16.mxu0 0
    %2416 = vmatpush1.bf16.xpose.msra.mxu0 0
    %2417 = vmatprep.subr.bf16.mxu0 0
    %2418 = vmatpush1.bf16.xpose.msra.mxu0 0
    %2419 = vmatprep.subr.bf16.mxu0 0
    %2420 = vmatpush1.bf16.xpose.msra.mxu0 0
    %2421 = vmatprep.subr.bf16.mxu0 0
    %2422 = vmatpush1.bf16.xpose.msra.mxu0 0
    %2423 = vmatprep.subr.bf16.mxu0 0
    %2424 = vmatpush1.bf16.xpose.msra.mxu0 0
    %2425 = vmatprep.subr.bf16.mxu0 0
    %2426 = vmatpush1.bf16.xpose.msra.mxu0 0
    %2427 = vmatprep.subr.bf16.mxu0 0
    %2428 = vmatpush1.bf16.xpose.msra.mxu0 0
    %2429 = vmatprep.subr.bf16.mxu0 0
    %2430 = vmatpush1.bf16.xpose.msra.mxu0 0
    %2431 = vmatprep.subr.bf16.mxu0 0
    %2432 = vmatpush1.bf16.xpose.msra.mxu0 0
    %2433 = vmatprep.subr.bf16.mxu0 0
    %2434 = vmatpush1.bf16.xpose.msra.mxu0 0
    %2435 = vmatprep.subr.bf16.mxu0 0
    %2436 = vmatpush1.bf16.xpose.msra.mxu0 0
    %2437 = vmatprep.subr.bf16.mxu0 0
    %2438 = vmatpush1.bf16.xpose.msra.mxu0 0
    %2439 = vmatprep.subr.bf16.mxu0 0
    %2440 = vmatpush1.bf16.xpose.msra.mxu0 0
    %2441 = vmatprep.mubr.bf16.mxu0 0
    %2442 = vmatmul.mubr.bf16.gmra.mrb[0].mxu0 %v2039
    %v2443 = vpop.f32.mrb[0].mxu0
    %v2444 = vadd.f32 0.0, %v2443
    %v2445 = vpop.f32.mrb[0].mxu0
    %v2446 = vpop.f32.mrb[0].mxu0
    %v2447 = vadd.f32 0.0, %v2446
    %v2448 = vpop.f32.mrb[0].mxu0
    %2449 = vmatprep.mubr.bf16.mxu0 0
    %2450 = vmatmul.mubr.bf16.gmra.mrb[0].mxu0 %v2042
    %v2451 = vpop.f32.mrb[0].mxu0
    %v2452 = vadd.f32 0.0, %v2451
    %v2453 = vpop.f32.mrb[0].mxu0
    %v2454 = vpop.f32.mrb[0].mxu0
    %v2455 = vpop.f32.mrb[0].mxu0
    %2456 = vdwg.mxu0
    %s2457 = scalar_lea.vmem %s1, 96
    %v2458 = vld [vmem:[%s2457] sm:$0xf]
    %v2459 = vld [vmem:[%s2457 + $0x4] sm:$0xf]
    %v2460 = vld [vmem:[%s2457 + $0x8] sm:$0xf]
    %v2461 = vld [vmem:[%s2457 + $0xc] sm:$0xf]
    %v2463 = vsel %vm206, %v2458, 0
    %2465 = vmatprep.subr.bf16.mxu0 0
    %2466 = vmatpush1.bf16.xpose.msra.mxu0 %v2463
    %2467 = vmatprep.subr.bf16.mxu0 0
    %2468 = vmatpush1.bf16.xpose.msra.mxu0 0
    %2469 = vmatprep.subr.bf16.mxu0 0
    %2470 = vmatpush1.bf16.xpose.msra.mxu0 0
    %2471 = vmatprep.subr.bf16.mxu0 0
    %2472 = vmatpush1.bf16.xpose.msra.mxu0 0
    %2473 = vmatprep.subr.bf16.mxu0 0
    %2474 = vmatpush1.bf16.xpose.msra.mxu0 0
    %2475 = vmatprep.subr.bf16.mxu0 0
    %2476 = vmatpush1.bf16.xpose.msra.mxu0 0
    %2477 = vmatprep.subr.bf16.mxu0 0
    %2478 = vmatpush1.bf16.xpose.msra.mxu0 0
    %2479 = vmatprep.subr.bf16.mxu0 0
    %2480 = vmatpush1.bf16.xpose.msra.mxu0 0
    %2481 = vmatprep.subr.bf16.mxu0 0
    %2482 = vmatpush1.bf16.xpose.msra.mxu0 0
    %2483 = vmatprep.subr.bf16.mxu0 0
    %2484 = vmatpush1.bf16.xpose.msra.mxu0 0
    %2485 = vmatprep.subr.bf16.mxu0 0
    %2486 = vmatpush1.bf16.xpose.msra.mxu0 0
    %2487 = vmatprep.subr.bf16.mxu0 0
    %2488 = vmatpush1.bf16.xpose.msra.mxu0 0
    %2489 = vmatprep.subr.bf16.mxu0 0
    %2490 = vmatpush1.bf16.xpose.msra.mxu0 0
    %2491 = vmatprep.subr.bf16.mxu0 0
    %2492 = vmatpush1.bf16.xpose.msra.mxu0 0
    %2493 = vmatprep.subr.bf16.mxu0 0
    %2494 = vmatpush1.bf16.xpose.msra.mxu0 0
    %2495 = vmatprep.subr.bf16.mxu0 0
    %2496 = vmatpush1.bf16.xpose.msra.mxu0 0
    %2497 = vmatprep.mubr.bf16.mxu0 0
    %2498 = vmatmul.mubr.bf16.gmra.mrb[0].mxu0 %v2039
    %v2499 = vpop.f32.mrb[0].mxu0
    %v2500 = vadd.f32 0.0, %v2499
    %v2501 = vpop.f32.mrb[0].mxu0
    %v2502 = vpop.f32.mrb[0].mxu0
    %v2503 = vadd.f32 0.0, %v2502
    %v2504 = vpop.f32.mrb[0].mxu0
    %2505 = vmatprep.mubr.bf16.mxu0 0
    %2506 = vmatmul.mubr.bf16.gmra.mrb[0].mxu0 %v2042
    %v2507 = vpop.f32.mrb[0].mxu0
    %v2508 = vadd.f32 0.0, %v2507
    %v2509 = vpop.f32.mrb[0].mxu0
    %v2510 = vpop.f32.mrb[0].mxu0
    %v2511 = vpop.f32.mrb[0].mxu0
    %2512 = vdwg.mxu0
    %v2514 = vsel %vm206, %v2459, 0
    %2516 = vmatprep.subr.bf16.mxu0 0
    %2517 = vmatpush1.bf16.xpose.msra.mxu0 %v2514
    %2518 = vmatprep.subr.bf16.mxu0 0
    %2519 = vmatpush1.bf16.xpose.msra.mxu0 0
    %2520 = vmatprep.subr.bf16.mxu0 0
    %2521 = vmatpush1.bf16.xpose.msra.mxu0 0
    %2522 = vmatprep.subr.bf16.mxu0 0
    %2523 = vmatpush1.bf16.xpose.msra.mxu0 0
    %2524 = vmatprep.subr.bf16.mxu0 0
    %2525 = vmatpush1.bf16.xpose.msra.mxu0 0
    %2526 = vmatprep.subr.bf16.mxu0 0
    %2527 = vmatpush1.bf16.xpose.msra.mxu0 0
    %2528 = vmatprep.subr.bf16.mxu0 0
    %2529 = vmatpush1.bf16.xpose.msra.mxu0 0
    %2530 = vmatprep.subr.bf16.mxu0 0
    %2531 = vmatpush1.bf16.xpose.msra.mxu0 0
    %2532 = vmatprep.subr.bf16.mxu0 0
    %2533 = vmatpush1.bf16.xpose.msra.mxu0 0
    %2534 = vmatprep.subr.bf16.mxu0 0
    %2535 = vmatpush1.bf16.xpose.msra.mxu0 0
    %2536 = vmatprep.subr.bf16.mxu0 0
    %2537 = vmatpush1.bf16.xpose.msra.mxu0 0
    %2538 = vmatprep.subr.bf16.mxu0 0
    %2539 = vmatpush1.bf16.xpose.msra.mxu0 0
    %2540 = vmatprep.subr.bf16.mxu0 0
    %2541 = vmatpush1.bf16.xpose.msra.mxu0 0
    %2542 = vmatprep.subr.bf16.mxu0 0
    %2543 = vmatpush1.bf16.xpose.msra.mxu0 0
    %2544 = vmatprep.subr.bf16.mxu0 0
    %2545 = vmatpush1.bf16.xpose.msra.mxu0 0
    %2546 = vmatprep.subr.bf16.mxu0 0
    %2547 = vmatpush1.bf16.xpose.msra.mxu0 0
    %2548 = vmatprep.mubr.bf16.mxu0 0
    %2549 = vmatmul.mubr.bf16.gmra.mrb[0].mxu0 %v2039
    %v2550 = vpop.f32.mrb[0].mxu0
    %v2551 = vadd.f32 0.0, %v2550
    %v2552 = vpop.f32.mrb[0].mxu0
    %v2553 = vpop.f32.mrb[0].mxu0
    %v2554 = vadd.f32 0.0, %v2553
    %v2555 = vpop.f32.mrb[0].mxu0
    %2556 = vmatprep.mubr.bf16.mxu0 0
    %2557 = vmatmul.mubr.bf16.gmra.mrb[0].mxu0 %v2042
    %v2558 = vpop.f32.mrb[0].mxu0
    %v2559 = vadd.f32 0.0, %v2558
    %v2560 = vpop.f32.mrb[0].mxu0
    %v2561 = vpop.f32.mrb[0].mxu0
    %v2562 = vpop.f32.mrb[0].mxu0
    %2563 = vdwg.mxu0
    %v2565 = vsel %vm206, %v2460, 0
    %2567 = vmatprep.subr.bf16.mxu0 0
    %2568 = vmatpush1.bf16.xpose.msra.mxu0 %v2565
    %2569 = vmatprep.subr.bf16.mxu0 0
    %2570 = vmatpush1.bf16.xpose.msra.mxu0 0
    %2571 = vmatprep.subr.bf16.mxu0 0
    %2572 = vmatpush1.bf16.xpose.msra.mxu0 0
    %2573 = vmatprep.subr.bf16.mxu0 0
    %2574 = vmatpush1.bf16.xpose.msra.mxu0 0
    %2575 = vmatprep.subr.bf16.mxu0 0
    %2576 = vmatpush1.bf16.xpose.msra.mxu0 0
    %2577 = vmatprep.subr.bf16.mxu0 0
    %2578 = vmatpush1.bf16.xpose.msra.mxu0 0
    %2579 = vmatprep.subr.bf16.mxu0 0
    %2580 = vmatpush1.bf16.xpose.msra.mxu0 0
    %2581 = vmatprep.subr.bf16.mxu0 0
    %2582 = vmatpush1.bf16.xpose.msra.mxu0 0
    %2583 = vmatprep.subr.bf16.mxu0 0
    %2584 = vmatpush1.bf16.xpose.msra.mxu0 0
    %2585 = vmatprep.subr.bf16.mxu0 0
    %2586 = vmatpush1.bf16.xpose.msra.mxu0 0
    %2587 = vmatprep.subr.bf16.mxu0 0
    %2588 = vmatpush1.bf16.xpose.msra.mxu0 0
    %2589 = vmatprep.subr.bf16.mxu0 0
    %2590 = vmatpush1.bf16.xpose.msra.mxu0 0
    %2591 = vmatprep.subr.bf16.mxu0 0
    %2592 = vmatpush1.bf16.xpose.msra.mxu0 0
    %2593 = vmatprep.subr.bf16.mxu0 0
    %2594 = vmatpush1.bf16.xpose.msra.mxu0 0
    %2595 = vmatprep.subr.bf16.mxu0 0
    %2596 = vmatpush1.bf16.xpose.msra.mxu0 0
    %2597 = vmatprep.subr.bf16.mxu0 0
    %2598 = vmatpush1.bf16.xpose.msra.mxu0 0
    %2599 = vmatprep.mubr.bf16.mxu0 0
    %2600 = vmatmul.mubr.bf16.gmra.mrb[0].mxu0 %v2039
    %v2601 = vpop.f32.mrb[0].mxu0
    %v2602 = vadd.f32 0.0, %v2601
    %v2603 = vpop.f32.mrb[0].mxu0
    %v2604 = vpop.f32.mrb[0].mxu0
    %v2605 = vadd.f32 0.0, %v2604
    %v2606 = vpop.f32.mrb[0].mxu0
    %2607 = vmatprep.mubr.bf16.mxu0 0
    %2608 = vmatmul.mubr.bf16.gmra.mrb[0].mxu0 %v2042
    %v2609 = vpop.f32.mrb[0].mxu0
    %v2610 = vadd.f32 0.0, %v2609
    %v2611 = vpop.f32.mrb[0].mxu0
    %v2612 = vpop.f32.mrb[0].mxu0
    %v2613 = vpop.f32.mrb[0].mxu0
    %2614 = vdwg.mxu0
    %v2616 = vsel %vm206, %v2461, 0
    %2618 = vmatprep.subr.bf16.mxu0 0
    %2619 = vmatpush1.bf16.xpose.msra.mxu0 %v2616
    %2620 = vmatprep.subr.bf16.mxu0 0
    %2621 = vmatpush1.bf16.xpose.msra.mxu0 0
    %2622 = vmatprep.subr.bf16.mxu0 0
    %2623 = vmatpush1.bf16.xpose.msra.mxu0 0
    %2624 = vmatprep.subr.bf16.mxu0 0
    %2625 = vmatpush1.bf16.xpose.msra.mxu0 0
    %2626 = vmatprep.subr.bf16.mxu0 0
    %2627 = vmatpush1.bf16.xpose.msra.mxu0 0
    %2628 = vmatprep.subr.bf16.mxu0 0
    %2629 = vmatpush1.bf16.xpose.msra.mxu0 0
    %2630 = vmatprep.subr.bf16.mxu0 0
    %2631 = vmatpush1.bf16.xpose.msra.mxu0 0
    %2632 = vmatprep.subr.bf16.mxu0 0
    %2633 = vmatpush1.bf16.xpose.msra.mxu0 0
    %2634 = vmatprep.subr.bf16.mxu0 0
    %2635 = vmatpush1.bf16.xpose.msra.mxu0 0
    %2636 = vmatprep.subr.bf16.mxu0 0
    %2637 = vmatpush1.bf16.xpose.msra.mxu0 0
    %2638 = vmatprep.subr.bf16.mxu0 0
    %2639 = vmatpush1.bf16.xpose.msra.mxu0 0
    %2640 = vmatprep.subr.bf16.mxu0 0
    %2641 = vmatpush1.bf16.xpose.msra.mxu0 0
    %2642 = vmatprep.subr.bf16.mxu0 0
    %2643 = vmatpush1.bf16.xpose.msra.mxu0 0
    %2644 = vmatprep.subr.bf16.mxu0 0
    %2645 = vmatpush1.bf16.xpose.msra.mxu0 0
    %2646 = vmatprep.subr.bf16.mxu0 0
    %2647 = vmatpush1.bf16.xpose.msra.mxu0 0
    %2648 = vmatprep.subr.bf16.mxu0 0
    %2649 = vmatpush1.bf16.xpose.msra.mxu0 0
    %2650 = vmatprep.mubr.bf16.mxu0 0
    %2651 = vmatmul.mubr.bf16.gmra.mrb[0].mxu0 %v2039
    %v2652 = vpop.f32.mrb[0].mxu0
    %v2653 = vadd.f32 0.0, %v2652
    %v2654 = vpop.f32.mrb[0].mxu0
    %v2655 = vpop.f32.mrb[0].mxu0
    %v2656 = vadd.f32 0.0, %v2655
    %v2657 = vpop.f32.mrb[0].mxu0
    %2658 = vmatprep.mubr.bf16.mxu0 0
    %2659 = vmatmul.mubr.bf16.gmra.mrb[0].mxu0 %v2042
    %v2660 = vpop.f32.mrb[0].mxu0
    %v2661 = vadd.f32 0.0, %v2660
    %v2662 = vpop.f32.mrb[0].mxu0
    %v2663 = vpop.f32.mrb[0].mxu0
    %v2664 = vpop.f32.mrb[0].mxu0
    %2665 = vdwg.mxu0
    %v2666 = vpack.c.bf16 %v2085, %v2082
    %v2667 = vpack.c.bf16 %v2090, %v2090
    %v2668 = vpack.c.bf16 %v2136, %v2133
    %v2669 = vpack.c.bf16 %v2141, %v2141
    %v2670 = vpack.c.bf16 %v2187, %v2184
    %v2671 = vpack.c.bf16 %v2192, %v2192
    %v2672 = vpack.c.bf16 %v2238, %v2235
    %v2673 = vpack.c.bf16 %v2243, %v2243
    %v2674 = vpack.c.bf16 %v2294, %v2291
    %v2675 = vpack.c.bf16 %v2299, %v2299
    %v2676 = vpack.c.bf16 %v2345, %v2342
    %v2677 = vpack.c.bf16 %v2350, %v2350
    %v2678 = vpack.c.bf16 %v2396, %v2393
    %v2679 = vpack.c.bf16 %v2401, %v2401
    %v2680 = vpack.c.bf16 %v2447, %v2444
    %v2681 = vpack.c.bf16 %v2452, %v2452
    %v2683 = vsel %vm913, %v2666, 0
    %v2686 = vsel %vm913, %v2667, 0
    %v2689 = vsel %vm913, %v2674, 0
    %v2692 = vsel %vm913, %v2675, 0
    %2694 = vmatprep.subr.bf16.mxu0 0
    %2695 = vmatpush1.bf16.xpose.msra.mxu0 %v2689
    %2696 = vmatprep.subr.bf16.mxu0 0
    %2697 = vmatpush1.bf16.xpose.msra.mxu0 %v2692
    %2698 = vmatprep.subr.bf16.mxu0 0
    %2699 = vmatpush1.bf16.xpose.msra.mxu0 0
    %2700 = vmatprep.subr.bf16.mxu0 0
    %2701 = vmatpush1.bf16.xpose.msra.mxu0 0
    %2702 = vmatprep.subr.bf16.mxu0 0
    %2703 = vmatpush1.bf16.xpose.msra.mxu0 0
    %2704 = vmatprep.subr.bf16.mxu0 0
    %2705 = vmatpush1.bf16.xpose.msra.mxu0 0
    %2706 = vmatprep.subr.bf16.mxu0 0
    %2707 = vmatpush1.bf16.xpose.msra.mxu0 0
    %2708 = vmatprep.subr.bf16.mxu0 0
    %2709 = vmatpush1.bf16.xpose.msra.mxu0 0
    %2710 = vmatprep.subr.bf16.mxu0 0
    %2711 = vmatpush1.bf16.xpose.msra.mxu0 0
    %2712 = vmatprep.subr.bf16.mxu0 0
    %2713 = vmatpush1.bf16.xpose.msra.mxu0 0
    %2714 = vmatprep.subr.bf16.mxu0 0
    %2715 = vmatpush1.bf16.xpose.msra.mxu0 0
    %2716 = vmatprep.subr.bf16.mxu0 0
    %2717 = vmatpush1.bf16.xpose.msra.mxu0 0
    %2718 = vmatprep.subr.bf16.mxu0 0
    %2719 = vmatpush1.bf16.xpose.msra.mxu0 0
    %2720 = vmatprep.subr.bf16.mxu0 0
    %2721 = vmatpush1.bf16.xpose.msra.mxu0 0
    %2722 = vmatprep.subr.bf16.mxu0 0
    %2723 = vmatpush1.bf16.xpose.msra.mxu0 0
    %2724 = vmatprep.subr.bf16.mxu0 0
    %2725 = vmatpush1.bf16.xpose.msra.mxu0 0
    %2726 = vmatprep.mubr.bf16.mxu0 0
    %2727 = vmatmul.mubr.bf16.gmra.mrb[0].mxu0 %v2683
    %v2728 = vpop.f32.mrb[0].mxu0
    %v2729 = vadd.f32 %v29, %v2728
    %v2730 = vpop.f32.mrb[0].mxu0
    %v2731 = vpop.f32.mrb[0].mxu0
    %v2732 = vadd.f32 %v30, %v2731
    %v2733 = vpop.f32.mrb[0].mxu0
    %2734 = vmatprep.mubr.bf16.mxu0 0
    %2735 = vmatmul.mubr.bf16.gmra.mrb[0].mxu0 %v2686
    %v2736 = vpop.f32.mrb[0].mxu0
    %v2737 = vadd.f32 %v31, %v2736
    %v2738 = vpop.f32.mrb[0].mxu0
    %v2739 = vpop.f32.mrb[0].mxu0
    %v2740 = vpop.f32.mrb[0].mxu0
    %2741 = vdwg.mxu0
    %v2743 = vsel %vm913, %v2668, 0
    %v2746 = vsel %vm913, %v2669, 0
    %v2749 = vsel %vm913, %v2676, 0
    %v2752 = vsel %vm913, %v2677, 0
    %2754 = vmatprep.subr.bf16.mxu0 0
    %2755 = vmatpush1.bf16.xpose.msra.mxu0 %v2749
    %2756 = vmatprep.subr.bf16.mxu0 0
    %2757 = vmatpush1.bf16.xpose.msra.mxu0 %v2752
    %2758 = vmatprep.subr.bf16.mxu0 0
    %2759 = vmatpush1.bf16.xpose.msra.mxu0 0
    %2760 = vmatprep.subr.bf16.mxu0 0
    %2761 = vmatpush1.bf16.xpose.msra.mxu0 0
    %2762 = vmatprep.subr.bf16.mxu0 0
    %2763 = vmatpush1.bf16.xpose.msra.mxu0 0
    %2764 = vmatprep.subr.bf16.mxu0 0
    %2765 = vmatpush1.bf16.xpose.msra.mxu0 0
    %2766 = vmatprep.subr.bf16.mxu0 0
    %2767 = vmatpush1.bf16.xpose.msra.mxu0 0
    %2768 = vmatprep.subr.bf16.mxu0 0
    %2769 = vmatpush1.bf16.xpose.msra.mxu0 0
    %2770 = vmatprep.subr.bf16.mxu0 0
    %2771 = vmatpush1.bf16.xpose.msra.mxu0 0
    %2772 = vmatprep.subr.bf16.mxu0 0
    %2773 = vmatpush1.bf16.xpose.msra.mxu0 0
    %2774 = vmatprep.subr.bf16.mxu0 0
    %2775 = vmatpush1.bf16.xpose.msra.mxu0 0
    %2776 = vmatprep.subr.bf16.mxu0 0
    %2777 = vmatpush1.bf16.xpose.msra.mxu0 0
    %2778 = vmatprep.subr.bf16.mxu0 0
    %2779 = vmatpush1.bf16.xpose.msra.mxu0 0
    %2780 = vmatprep.subr.bf16.mxu0 0
    %2781 = vmatpush1.bf16.xpose.msra.mxu0 0
    %2782 = vmatprep.subr.bf16.mxu0 0
    %2783 = vmatpush1.bf16.xpose.msra.mxu0 0
    %2784 = vmatprep.subr.bf16.mxu0 0
    %2785 = vmatpush1.bf16.xpose.msra.mxu0 0
    %2786 = vmatprep.mubr.bf16.mxu0 0
    %2787 = vmatmul.mubr.bf16.gmra.mrb[0].mxu0 %v2743
    %v2788 = vpop.f32.mrb[0].mxu0
    %v2789 = vadd.f32 %v29, %v2788
    %v2790 = vpop.f32.mrb[0].mxu0
    %v2791 = vpop.f32.mrb[0].mxu0
    %v2792 = vadd.f32 %v30, %v2791
    %v2793 = vpop.f32.mrb[0].mxu0
    %2794 = vmatprep.mubr.bf16.mxu0 0
    %2795 = vmatmul.mubr.bf16.gmra.mrb[0].mxu0 %v2746
    %v2796 = vpop.f32.mrb[0].mxu0
    %v2797 = vadd.f32 %v31, %v2796
    %v2798 = vpop.f32.mrb[0].mxu0
    %v2799 = vpop.f32.mrb[0].mxu0
    %v2800 = vpop.f32.mrb[0].mxu0
    %2801 = vdwg.mxu0
    %v2803 = vsel %vm913, %v2670, 0
    %v2806 = vsel %vm913, %v2671, 0
    %v2809 = vsel %vm913, %v2678, 0
    %v2812 = vsel %vm913, %v2679, 0
    %2814 = vmatprep.subr.bf16.mxu0 0
    %2815 = vmatpush1.bf16.xpose.msra.mxu0 %v2809
    %2816 = vmatprep.subr.bf16.mxu0 0
    %2817 = vmatpush1.bf16.xpose.msra.mxu0 %v2812
    %2818 = vmatprep.subr.bf16.mxu0 0
    %2819 = vmatpush1.bf16.xpose.msra.mxu0 0
    %2820 = vmatprep.subr.bf16.mxu0 0
    %2821 = vmatpush1.bf16.xpose.msra.mxu0 0
    %2822 = vmatprep.subr.bf16.mxu0 0
    %2823 = vmatpush1.bf16.xpose.msra.mxu0 0
    %2824 = vmatprep.subr.bf16.mxu0 0
    %2825 = vmatpush1.bf16.xpose.msra.mxu0 0
    %2826 = vmatprep.subr.bf16.mxu0 0
    %2827 = vmatpush1.bf16.xpose.msra.mxu0 0
    %2828 = vmatprep.subr.bf16.mxu0 0
    %2829 = vmatpush1.bf16.xpose.msra.mxu0 0
    %2830 = vmatprep.subr.bf16.mxu0 0
    %2831 = vmatpush1.bf16.xpose.msra.mxu0 0
    %2832 = vmatprep.subr.bf16.mxu0 0
    %2833 = vmatpush1.bf16.xpose.msra.mxu0 0
    %2834 = vmatprep.subr.bf16.mxu0 0
    %2835 = vmatpush1.bf16.xpose.msra.mxu0 0
    %2836 = vmatprep.subr.bf16.mxu0 0
    %2837 = vmatpush1.bf16.xpose.msra.mxu0 0
    %2838 = vmatprep.subr.bf16.mxu0 0
    %2839 = vmatpush1.bf16.xpose.msra.mxu0 0
    %2840 = vmatprep.subr.bf16.mxu0 0
    %2841 = vmatpush1.bf16.xpose.msra.mxu0 0
    %2842 = vmatprep.subr.bf16.mxu0 0
    %2843 = vmatpush1.bf16.xpose.msra.mxu0 0
    %2844 = vmatprep.subr.bf16.mxu0 0
    %2845 = vmatpush1.bf16.xpose.msra.mxu0 0
    %2846 = vmatprep.mubr.bf16.mxu0 0
    %2847 = vmatmul.mubr.bf16.gmra.mrb[0].mxu0 %v2803
    %v2848 = vpop.f32.mrb[0].mxu0
    %v2849 = vadd.f32 %v29, %v2848
    %v2850 = vpop.f32.mrb[0].mxu0
    %v2851 = vpop.f32.mrb[0].mxu0
    %v2852 = vadd.f32 %v30, %v2851
    %v2853 = vpop.f32.mrb[0].mxu0
    %2854 = vmatprep.mubr.bf16.mxu0 0
    %2855 = vmatmul.mubr.bf16.gmra.mrb[0].mxu0 %v2806
    %v2856 = vpop.f32.mrb[0].mxu0
    %v2857 = vadd.f32 %v31, %v2856
    %v2858 = vpop.f32.mrb[0].mxu0
    %v2859 = vpop.f32.mrb[0].mxu0
    %v2860 = vpop.f32.mrb[0].mxu0
    %2861 = vdwg.mxu0
    %v2863 = vsel %vm913, %v2672, 0
    %v2866 = vsel %vm913, %v2673, 0
    %v2869 = vsel %vm913, %v2680, 0
    %v2872 = vsel %vm913, %v2681, 0
    %2874 = vmatprep.subr.bf16.mxu0 0
    %2875 = vmatpush1.bf16.xpose.msra.mxu0 %v2869
    %2876 = vmatprep.subr.bf16.mxu0 0
    %2877 = vmatpush1.bf16.xpose.msra.mxu0 %v2872
    %2878 = vmatprep.subr.bf16.mxu0 0
    %2879 = vmatpush1.bf16.xpose.msra.mxu0 0
    %2880 = vmatprep.subr.bf16.mxu0 0
    %2881 = vmatpush1.bf16.xpose.msra.mxu0 0
    %2882 = vmatprep.subr.bf16.mxu0 0
    %2883 = vmatpush1.bf16.xpose.msra.mxu0 0
    %2884 = vmatprep.subr.bf16.mxu0 0
    %2885 = vmatpush1.bf16.xpose.msra.mxu0 0
    %2886 = vmatprep.subr.bf16.mxu0 0
    %2887 = vmatpush1.bf16.xpose.msra.mxu0 0
    %2888 = vmatprep.subr.bf16.mxu0 0
    %2889 = vmatpush1.bf16.xpose.msra.mxu0 0
    %2890 = vmatprep.subr.bf16.mxu0 0
    %2891 = vmatpush1.bf16.xpose.msra.mxu0 0
    %2892 = vmatprep.subr.bf16.mxu0 0
    %2893 = vmatpush1.bf16.xpose.msra.mxu0 0
    %2894 = vmatprep.subr.bf16.mxu0 0
    %2895 = vmatpush1.bf16.xpose.msra.mxu0 0
    %2896 = vmatprep.subr.bf16.mxu0 0
    %2897 = vmatpush1.bf16.xpose.msra.mxu0 0
    %2898 = vmatprep.subr.bf16.mxu0 0
    %2899 = vmatpush1.bf16.xpose.msra.mxu0 0
    %2900 = vmatprep.subr.bf16.mxu0 0
    %2901 = vmatpush1.bf16.xpose.msra.mxu0 0
    %2902 = vmatprep.subr.bf16.mxu0 0
    %2903 = vmatpush1.bf16.xpose.msra.mxu0 0
    %2904 = vmatprep.subr.bf16.mxu0 0
    %2905 = vmatpush1.bf16.xpose.msra.mxu0 0
    %2906 = vmatprep.mubr.bf16.mxu0 0
    %2907 = vmatmul.mubr.bf16.gmra.mrb[0].mxu0 %v2863
    %v2908 = vpop.f32.mrb[0].mxu0
    %v2909 = vadd.f32 %v29, %v2908
    %v2910 = vpop.f32.mrb[0].mxu0
    %v2911 = vpop.f32.mrb[0].mxu0
    %v2912 = vadd.f32 %v30, %v2911
    %v2913 = vpop.f32.mrb[0].mxu0
    %2914 = vmatprep.mubr.bf16.mxu0 0
    %2915 = vmatmul.mubr.bf16.gmra.mrb[0].mxu0 %v2866
    %v2916 = vpop.f32.mrb[0].mxu0
    %v2917 = vadd.f32 %v31, %v2916
    %v2918 = vpop.f32.mrb[0].mxu0
    %v2919 = vpop.f32.mrb[0].mxu0
    %v2920 = vpop.f32.mrb[0].mxu0
    %2921 = vdwg.mxu0
    %v2922 = vsel %vm1154, %v2729, -inf
    %2923 = vmax.xlane.f32.xlu0 %v2922
    %v2924 = vpop.xlane.xlu0 %2923
    %v2925 = vsel %vm1154, %v2732, -inf
    %2926 = vmax.xlane.f32.xlu0 %v2925
    %v2927 = vpop.xlane.xlu0 %2926
    %v2928 = vsel %vm1161, %v2737, -inf
    %2929 = vmax.xlane.f32.xlu0 %v2928
    %v2930 = vpop.xlane.xlu0 %2929
    %v2931 = vsel %vm1154, %v2789, -inf
    %2932 = vmax.xlane.f32.xlu0 %v2931
    %v2933 = vpop.xlane.xlu0 %2932
    %v2934 = vsel %vm1154, %v2792, -inf
    %2935 = vmax.xlane.f32.xlu0 %v2934
    %v2936 = vpop.xlane.xlu0 %2935
    %v2937 = vsel %vm1161, %v2797, -inf
    %2938 = vmax.xlane.f32.xlu0 %v2937
    %v2939 = vpop.xlane.xlu0 %2938
    %v2940 = vsel %vm1154, %v2849, -inf
    %2941 = vmax.xlane.f32.xlu0 %v2940
    %v2942 = vpop.xlane.xlu0 %2941
    %v2943 = vsel %vm1154, %v2852, -inf
    %2944 = vmax.xlane.f32.xlu0 %v2943
    %v2945 = vpop.xlane.xlu0 %2944
    %v2946 = vsel %vm1161, %v2857, -inf
    %2947 = vmax.xlane.f32.xlu0 %v2946
    %v2948 = vpop.xlane.xlu0 %2947
    %v2949 = vsel %vm1154, %v2909, -inf
    %2950 = vmax.xlane.f32.xlu0 %v2949
    %v2951 = vpop.xlane.xlu0 %2950
    %v2952 = vsel %vm1154, %v2912, -inf
    %2953 = vmax.xlane.f32.xlu0 %v2952
    %v2954 = vpop.xlane.xlu0 %2953
    %v2955 = vsel %vm1161, %v2917, -inf
    %2956 = vmax.xlane.f32.xlu0 %v2955
    %v2957 = vpop.xlane.xlu0 %2956
    %v2958 = vsub.f32 %v2729, %v2924
    %v2959 = vsub.f32 %v2732, %v2927
    %v2960 = vsub.f32 %v2737, %v2930
    %v2961 = vsub.f32 %v2789, %v2933
    %v2962 = vsub.f32 %v2792, %v2936
    %v2963 = vsub.f32 %v2797, %v2939
    %v2964 = vsub.f32 %v2849, %v2942
    %v2965 = vsub.f32 %v2852, %v2945
    %v2966 = vsub.f32 %v2857, %v2948
    %v2967 = vsub.f32 %v2909, %v2951
    %v2968 = vsub.f32 %v2912, %v2954
    %v2969 = vsub.f32 %v2917, %v2957
    %v2970 = vmul.f32 %v2958, 1.442695
    %v2971 = vpow.pop %v2970
    %v2972 = vmul.f32 %v2959, 1.442695
    %v2973 = vpow.pop %v2972
    %v2974 = vmul.f32 %v2960, 1.442695
    %v2975 = vpow.pop %v2974
    %v2976 = vmul.f32 %v2961, 1.442695
    %v2977 = vpow.pop %v2976
    %v2978 = vmul.f32 %v2962, 1.442695
    %v2979 = vpow.pop %v2978
    %v2980 = vmul.f32 %v2963, 1.442695
    %v2981 = vpow.pop %v2980
    %v2982 = vmul.f32 %v2964, 1.442695
    %v2983 = vpow.pop %v2982
    %v2984 = vmul.f32 %v2965, 1.442695
    %v2985 = vpow.pop %v2984
    %v2986 = vmul.f32 %v2966, 1.442695
    %v2987 = vpow.pop %v2986
    %v2988 = vmul.f32 %v2967, 1.442695
    %v2989 = vpow.pop %v2988
    %v2990 = vmul.f32 %v2968, 1.442695
    %v2991 = vpow.pop %v2990
    %v2992 = vmul.f32 %v2969, 1.442695
    %v2993 = vpow.pop %v2992
    %v2994 = vsel %vm1154, %v2971, 0.0
    %2995 = vadd.xlane.f32.xlu0 %v2994
    %v2996 = vpop.xlane.xlu0 %2995
    %v2997 = vsel %vm1154, %v2973, 0.0
    %2998 = vadd.xlane.f32.xlu0 %v2997
    %v2999 = vpop.xlane.xlu0 %2998
    %v3000 = vsel %vm1161, %v2975, 0.0
    %3001 = vadd.xlane.f32.xlu0 %v3000
    %v3002 = vpop.xlane.xlu0 %3001
    %v3003 = vsel %vm1154, %v2977, 0.0
    %3004 = vadd.xlane.f32.xlu0 %v3003
    %v3005 = vpop.xlane.xlu0 %3004
    %v3006 = vsel %vm1154, %v2979, 0.0
    %3007 = vadd.xlane.f32.xlu0 %v3006
    %v3008 = vpop.xlane.xlu0 %3007
    %v3009 = vsel %vm1161, %v2981, 0.0
    %3010 = vadd.xlane.f32.xlu0 %v3009
    %v3011 = vpop.xlane.xlu0 %3010
    %v3012 = vsel %vm1154, %v2983, 0.0
    %3013 = vadd.xlane.f32.xlu0 %v3012
    %v3014 = vpop.xlane.xlu0 %3013
    %v3015 = vsel %vm1154, %v2985, 0.0
    %3016 = vadd.xlane.f32.xlu0 %v3015
    %v3017 = vpop.xlane.xlu0 %3016
    %v3018 = vsel %vm1161, %v2987, 0.0
    %3019 = vadd.xlane.f32.xlu0 %v3018
    %v3020 = vpop.xlane.xlu0 %3019
    %v3021 = vsel %vm1154, %v2989, 0.0
    %3022 = vadd.xlane.f32.xlu0 %v3021
    %v3023 = vpop.xlane.xlu0 %3022
    %v3024 = vsel %vm1154, %v2991, 0.0
    %3025 = vadd.xlane.f32.xlu0 %v3024
    %v3026 = vpop.xlane.xlu0 %3025
    %v3027 = vsel %vm1161, %v2993, 0.0
    %3028 = vadd.xlane.f32.xlu0 %v3027
    %v3029 = vpop.xlane.xlu0 %3028
    %v3030 = vrcp.pop %v2996
    %v3031 = vrcp.pop %v2999
    %v3032 = vrcp.pop %v3002
    %v3033 = vrcp.pop %v3005
    %v3034 = vrcp.pop %v3008
    %v3035 = vrcp.pop %v3011
    %v3036 = vrcp.pop %v3014
    %v3037 = vrcp.pop %v3017
    %v3038 = vrcp.pop %v3020
    %v3039 = vrcp.pop %v3023
    %v3040 = vrcp.pop %v3026
    %v3041 = vrcp.pop %v3029
    %v3042 = vmul.f32 %v2971, %v3030
    %v3043 = vmul.f32 %v2973, %v3031
    %v3044 = vmul.f32 %v2975, %v3032
    %v3045 = vmul.f32 %v2977, %v3033
    %v3046 = vmul.f32 %v2979, %v3034
    %v3047 = vmul.f32 %v2981, %v3035
    %v3048 = vmul.f32 %v2983, %v3036
    %v3049 = vmul.f32 %v2985, %v3037
    %v3050 = vmul.f32 %v2987, %v3038
    %v3051 = vmul.f32 %v2989, %v3039
    %v3052 = vmul.f32 %v2991, %v3040
    %v3053 = vmul.f32 %v2993, %v3041
    %v3054 = vpack.c.bf16 %v3043, %v3042
    %v3055 = vpack.c.bf16 %v3044, %v3044
    %v3056 = vpack.c.bf16 %v3046, %v3045
    %v3057 = vpack.c.bf16 %v3047, %v3047
    %v3058 = vpack.c.bf16 %v3049, %v3048
    %v3059 = vpack.c.bf16 %v3050, %v3050
    %v3060 = vpack.c.bf16 %v3052, %v3051
    %v3061 = vpack.c.bf16 %v3053, %v3053
    %v3062 = vpack.c.bf16 %v2503, %v2500
    %v3063 = vpack.c.bf16 %v2508, %v2508
    %v3064 = vpack.c.bf16 %v2554, %v2551
    %v3065 = vpack.c.bf16 %v2559, %v2559
    %v3066 = vpack.c.bf16 %v2605, %v2602
    %v3067 = vpack.c.bf16 %v2610, %v2610
    %v3068 = vpack.c.bf16 %v2656, %v2653
    %v3069 = vpack.c.bf16 %v2661, %v2661
    %v3071 = vsel %vm1154, %v3054, 0
    %v3074 = vsel %vm1154, %v3055, 0
    %v3077 = vsel %vm1310, %v3063, 0
    %3079 = vmatprep.subr.bf16.mxu0 0
    %3080 = vmatpush1.bf16.msra.mxu0 %v3062
    %3081 = vmatprep.subr.bf16.mxu0 0
    %3082 = vmatpush1.bf16.msra.mxu0 %v3077
    %3083 = vmatprep.subr.bf16.mxu0 0
    %3084 = vmatpush1.bf16.msra.mxu0 0
    %3085 = vmatprep.subr.bf16.mxu0 0
    %3086 = vmatpush1.bf16.msra.mxu0 0
    %3087 = vmatprep.subr.bf16.mxu0 0
    %3088 = vmatpush1.bf16.msra.mxu0 0
    %3089 = vmatprep.subr.bf16.mxu0 0
    %3090 = vmatpush1.bf16.msra.mxu0 0
    %3091 = vmatprep.subr.bf16.mxu0 0
    %3092 = vmatpush1.bf16.msra.mxu0 0
    %3093 = vmatprep.subr.bf16.mxu0 0
    %3094 = vmatpush1.bf16.msra.mxu0 0
    %3095 = vmatprep.subr.bf16.mxu0 0
    %3096 = vmatpush1.bf16.msra.mxu0 0
    %3097 = vmatprep.subr.bf16.mxu0 0
    %3098 = vmatpush1.bf16.msra.mxu0 0
    %3099 = vmatprep.subr.bf16.mxu0 0
    %3100 = vmatpush1.bf16.msra.mxu0 0
    %3101 = vmatprep.subr.bf16.mxu0 0
    %3102 = vmatpush1.bf16.msra.mxu0 0
    %3103 = vmatprep.subr.bf16.mxu0 0
    %3104 = vmatpush1.bf16.msra.mxu0 0
    %3105 = vmatprep.subr.bf16.mxu0 0
    %3106 = vmatpush1.bf16.msra.mxu0 0
    %3107 = vmatprep.subr.bf16.mxu0 0
    %3108 = vmatpush1.bf16.msra.mxu0 0
    %3109 = vmatprep.subr.bf16.mxu0 0
    %3110 = vmatpush1.bf16.msra.mxu0 0
    %3111 = vmatprep.mubr.bf16.mxu0 0
    %3112 = vmatmul.mubr.bf16.gmra.mrb[0].mxu0 %v3071
    %v3113 = vpop.f32.mrb[0].mxu0
    %v3114 = vadd.f32 0.0, %v3113
    %v3115 = vpop.f32.mrb[0].mxu0
    %v3116 = vpop.f32.mrb[0].mxu0
    %v3117 = vadd.f32 0.0, %v3116
    %v3118 = vpop.f32.mrb[0].mxu0
    %3119 = vmatprep.mubr.bf16.mxu0 0
    %3120 = vmatmul.mubr.bf16.gmra.mrb[0].mxu0 %v3074
    %v3121 = vpop.f32.mrb[0].mxu0
    %v3122 = vadd.f32 0.0, %v3121
    %v3123 = vpop.f32.mrb[0].mxu0
    %v3124 = vpop.f32.mrb[0].mxu0
    %v3125 = vpop.f32.mrb[0].mxu0
    %3126 = vdwg.mxu0
    %v3128 = vsel %vm1154, %v3056, 0
    %v3131 = vsel %vm1154, %v3057, 0
    %v3134 = vsel %vm1310, %v3065, 0
    %3136 = vmatprep.subr.bf16.mxu0 0
    %3137 = vmatpush1.bf16.msra.mxu0 %v3064
    %3138 = vmatprep.subr.bf16.mxu0 0
    %3139 = vmatpush1.bf16.msra.mxu0 %v3134
    %3140 = vmatprep.subr.bf16.mxu0 0
    %3141 = vmatpush1.bf16.msra.mxu0 0
    %3142 = vmatprep.subr.bf16.mxu0 0
    %3143 = vmatpush1.bf16.msra.mxu0 0
    %3144 = vmatprep.subr.bf16.mxu0 0
    %3145 = vmatpush1.bf16.msra.mxu0 0
    %3146 = vmatprep.subr.bf16.mxu0 0
    %3147 = vmatpush1.bf16.msra.mxu0 0
    %3148 = vmatprep.subr.bf16.mxu0 0
    %3149 = vmatpush1.bf16.msra.mxu0 0
    %3150 = vmatprep.subr.bf16.mxu0 0
    %3151 = vmatpush1.bf16.msra.mxu0 0
    %3152 = vmatprep.subr.bf16.mxu0 0
    %3153 = vmatpush1.bf16.msra.mxu0 0
    %3154 = vmatprep.subr.bf16.mxu0 0
    %3155 = vmatpush1.bf16.msra.mxu0 0
    %3156 = vmatprep.subr.bf16.mxu0 0
    %3157 = vmatpush1.bf16.msra.mxu0 0
    %3158 = vmatprep.subr.bf16.mxu0 0
    %3159 = vmatpush1.bf16.msra.mxu0 0
    %3160 = vmatprep.subr.bf16.mxu0 0
    %3161 = vmatpush1.bf16.msra.mxu0 0
    %3162 = vmatprep.subr.bf16.mxu0 0
    %3163 = vmatpush1.bf16.msra.mxu0 0
    %3164 = vmatprep.subr.bf16.mxu0 0
    %3165 = vmatpush1.bf16.msra.mxu0 0
    %3166 = vmatprep.subr.bf16.mxu0 0
    %3167 = vmatpush1.bf16.msra.mxu0 0
    %3168 = vmatprep.mubr.bf16.mxu0 0
    %3169 = vmatmul.mubr.bf16.gmra.mrb[0].mxu0 %v3128
    %v3170 = vpop.f32.mrb[0].mxu0
    %v3171 = vadd.f32 0.0, %v3170
    %v3172 = vpop.f32.mrb[0].mxu0
    %v3173 = vpop.f32.mrb[0].mxu0
    %v3174 = vadd.f32 0.0, %v3173
    %v3175 = vpop.f32.mrb[0].mxu0
    %3176 = vmatprep.mubr.bf16.mxu0 0
    %3177 = vmatmul.mubr.bf16.gmra.mrb[0].mxu0 %v3131
    %v3178 = vpop.f32.mrb[0].mxu0
    %v3179 = vadd.f32 0.0, %v3178
    %v3180 = vpop.f32.mrb[0].mxu0
    %v3181 = vpop.f32.mrb[0].mxu0
    %v3182 = vpop.f32.mrb[0].mxu0
    %3183 = vdwg.mxu0
    %v3185 = vsel %vm1154, %v3058, 0
    %v3188 = vsel %vm1154, %v3059, 0
    %v3191 = vsel %vm1310, %v3067, 0
    %3193 = vmatprep.subr.bf16.mxu0 0
    %3194 = vmatpush1.bf16.msra.mxu0 %v3066
    %3195 = vmatprep.subr.bf16.mxu0 0
    %3196 = vmatpush1.bf16.msra.mxu0 %v3191
    %3197 = vmatprep.subr.bf16.mxu0 0
    %3198 = vmatpush1.bf16.msra.mxu0 0
    %3199 = vmatprep.subr.bf16.mxu0 0
    %3200 = vmatpush1.bf16.msra.mxu0 0
    %3201 = vmatprep.subr.bf16.mxu0 0
    %3202 = vmatpush1.bf16.msra.mxu0 0
    %3203 = vmatprep.subr.bf16.mxu0 0
    %3204 = vmatpush1.bf16.msra.mxu0 0
    %3205 = vmatprep.subr.bf16.mxu0 0
    %3206 = vmatpush1.bf16.msra.mxu0 0
    %3207 = vmatprep.subr.bf16.mxu0 0
    %3208 = vmatpush1.bf16.msra.mxu0 0
    %3209 = vmatprep.subr.bf16.mxu0 0
    %3210 = vmatpush1.bf16.msra.mxu0 0
    %3211 = vmatprep.subr.bf16.mxu0 0
    %3212 = vmatpush1.bf16.msra.mxu0 0
    %3213 = vmatprep.subr.bf16.mxu0 0
    %3214 = vmatpush1.bf16.msra.mxu0 0
    %3215 = vmatprep.subr.bf16.mxu0 0
    %3216 = vmatpush1.bf16.msra.mxu0 0
    %3217 = vmatprep.subr.bf16.mxu0 0
    %3218 = vmatpush1.bf16.msra.mxu0 0
    %3219 = vmatprep.subr.bf16.mxu0 0
    %3220 = vmatpush1.bf16.msra.mxu0 0
    %3221 = vmatprep.subr.bf16.mxu0 0
    %3222 = vmatpush1.bf16.msra.mxu0 0
    %3223 = vmatprep.subr.bf16.mxu0 0
    %3224 = vmatpush1.bf16.msra.mxu0 0
    %3225 = vmatprep.mubr.bf16.mxu0 0
    %3226 = vmatmul.mubr.bf16.gmra.mrb[0].mxu0 %v3185
    %v3227 = vpop.f32.mrb[0].mxu0
    %v3228 = vadd.f32 0.0, %v3227
    %v3229 = vpop.f32.mrb[0].mxu0
    %v3230 = vpop.f32.mrb[0].mxu0
    %v3231 = vadd.f32 0.0, %v3230
    %v3232 = vpop.f32.mrb[0].mxu0
    %3233 = vmatprep.mubr.bf16.mxu0 0
    %3234 = vmatmul.mubr.bf16.gmra.mrb[0].mxu0 %v3188
    %v3235 = vpop.f32.mrb[0].mxu0
    %v3236 = vadd.f32 0.0, %v3235
    %v3237 = vpop.f32.mrb[0].mxu0
    %v3238 = vpop.f32.mrb[0].mxu0
    %v3239 = vpop.f32.mrb[0].mxu0
    %3240 = vdwg.mxu0
    %v3242 = vsel %vm1154, %v3060, 0
    %v3245 = vsel %vm1154, %v3061, 0
    %v3248 = vsel %vm1310, %v3069, 0
    %3250 = vmatprep.subr.bf16.mxu0 0
    %3251 = vmatpush1.bf16.msra.mxu0 %v3068
    %3252 = vmatprep.subr.bf16.mxu0 0
    %3253 = vmatpush1.bf16.msra.mxu0 %v3248
    %3254 = vmatprep.subr.bf16.mxu0 0
    %3255 = vmatpush1.bf16.msra.mxu0 0
    %3256 = vmatprep.subr.bf16.mxu0 0
    %3257 = vmatpush1.bf16.msra.mxu0 0
    %3258 = vmatprep.subr.bf16.mxu0 0
    %3259 = vmatpush1.bf16.msra.mxu0 0
    %3260 = vmatprep.subr.bf16.mxu0 0
    %3261 = vmatpush1.bf16.msra.mxu0 0
    %3262 = vmatprep.subr.bf16.mxu0 0
    %3263 = vmatpush1.bf16.msra.mxu0 0
    %3264 = vmatprep.subr.bf16.mxu0 0
    %3265 = vmatpush1.bf16.msra.mxu0 0
    %3266 = vmatprep.subr.bf16.mxu0 0
    %3267 = vmatpush1.bf16.msra.mxu0 0
    %3268 = vmatprep.subr.bf16.mxu0 0
    %3269 = vmatpush1.bf16.msra.mxu0 0
    %3270 = vmatprep.subr.bf16.mxu0 0
    %3271 = vmatpush1.bf16.msra.mxu0 0
    %3272 = vmatprep.subr.bf16.mxu0 0
    %3273 = vmatpush1.bf16.msra.mxu0 0
    %3274 = vmatprep.subr.bf16.mxu0 0
    %3275 = vmatpush1.bf16.msra.mxu0 0
    %3276 = vmatprep.subr.bf16.mxu0 0
    %3277 = vmatpush1.bf16.msra.mxu0 0
    %3278 = vmatprep.subr.bf16.mxu0 0
    %3279 = vmatpush1.bf16.msra.mxu0 0
    %3280 = vmatprep.subr.bf16.mxu0 0
    %3281 = vmatpush1.bf16.msra.mxu0 0
    %3282 = vmatprep.mubr.bf16.mxu0 0
    %3283 = vmatmul.mubr.bf16.gmra.mrb[0].mxu0 %v3242
    %v3284 = vpop.f32.mrb[0].mxu0
    %v3285 = vadd.f32 0.0, %v3284
    %v3286 = vpop.f32.mrb[0].mxu0
    %v3287 = vpop.f32.mrb[0].mxu0
    %v3288 = vadd.f32 0.0, %v3287
    %v3289 = vpop.f32.mrb[0].mxu0
    %3290 = vmatprep.mubr.bf16.mxu0 0
    %3291 = vmatmul.mubr.bf16.gmra.mrb[0].mxu0 %v3245
    %v3292 = vpop.f32.mrb[0].mxu0
    %v3293 = vadd.f32 0.0, %v3292
    %v3294 = vpop.f32.mrb[0].mxu0
    %v3295 = vpop.f32.mrb[0].mxu0
    %v3296 = vpop.f32.mrb[0].mxu0
    %3297 = vdwg.mxu0
    %v3298 = vpack.c.bf16 %v3117, %v3114
    %v3299 = vpack.c.bf16 %v3122, %v3122
    %v3300 = vpack.c.bf16 %v3174, %v3171
    %v3301 = vpack.c.bf16 %v3179, %v3179
    %v3302 = vpack.c.bf16 %v3231, %v3228
    %v3303 = vpack.c.bf16 %v3236, %v3236
    %v3304 = vpack.c.bf16 %v3288, %v3285
    %v3305 = vpack.c.bf16 %v3293, %v3293
    %s3306 = scalar_lea.vmem %s1, 112
    %v3307 = vld [vmem:[%s3306] sm:$0xf]
    %v3308 = vld [vmem:[%s3306 + $0x4] sm:$0xf]
    %v3309 = vld [vmem:[%s3306 + $0x8] sm:$0xf]
    %v3310 = vld [vmem:[%s3306 + $0xc] sm:$0xf]
    %v3312 = vsel %vm913, %v3298, 0
    %v3315 = vsel %vm913, %v3299, 0
    %v3318 = vsel %vm1552, %v3307, 0
    %3320 = vmatprep.subr.bf16.mxu0 0
    %3321 = vmatpush1.bf16.msra.mxu0 %v3318
    %3322 = vmatprep.subr.bf16.mxu0 0
    %3323 = vmatpush1.bf16.msra.mxu0 0
    %3324 = vmatprep.subr.bf16.mxu0 0
    %3325 = vmatpush1.bf16.msra.mxu0 0
    %3326 = vmatprep.subr.bf16.mxu0 0
    %3327 = vmatpush1.bf16.msra.mxu0 0
    %3328 = vmatprep.subr.bf16.mxu0 0
    %3329 = vmatpush1.bf16.msra.mxu0 0
    %3330 = vmatprep.subr.bf16.mxu0 0
    %3331 = vmatpush1.bf16.msra.mxu0 0
    %3332 = vmatprep.subr.bf16.mxu0 0
    %3333 = vmatpush1.bf16.msra.mxu0 0
    %3334 = vmatprep.subr.bf16.mxu0 0
    %3335 = vmatpush1.bf16.msra.mxu0 0
    %3336 = vmatprep.subr.bf16.mxu0 0
    %3337 = vmatpush1.bf16.msra.mxu0 0
    %3338 = vmatprep.subr.bf16.mxu0 0
    %3339 = vmatpush1.bf16.msra.mxu0 0
    %3340 = vmatprep.subr.bf16.mxu0 0
    %3341 = vmatpush1.bf16.msra.mxu0 0
    %3342 = vmatprep.subr.bf16.mxu0 0
    %3343 = vmatpush1.bf16.msra.mxu0 0
    %3344 = vmatprep.subr.bf16.mxu0 0
    %3345 = vmatpush1.bf16.msra.mxu0 0
    %3346 = vmatprep.subr.bf16.mxu0 0
    %3347 = vmatpush1.bf16.msra.mxu0 0
    %3348 = vmatprep.subr.bf16.mxu0 0
    %3349 = vmatpush1.bf16.msra.mxu0 0
    %3350 = vmatprep.subr.bf16.mxu0 0
    %3351 = vmatpush1.bf16.msra.mxu0 0
    %3352 = vmatprep.mubr.bf16.mxu0 0
    %3353 = vmatmul.mubr.bf16.gmra.mrb[0].mxu0 %v3312
    %v3354 = vpop.f32.mrb[0].mxu0
    %v3355 = vadd.f32 0.0, %v3354
    %v3356 = vpop.f32.mrb[0].mxu0
    %v3357 = vpop.f32.mrb[0].mxu0
    %v3358 = vadd.f32 0.0, %v3357
    %v3359 = vpop.f32.mrb[0].mxu0
    %3360 = vmatprep.mubr.bf16.mxu0 0
    %3361 = vmatmul.mubr.bf16.gmra.mrb[0].mxu0 %v3315
    %v3362 = vpop.f32.mrb[0].mxu0
    %v3363 = vadd.f32 0.0, %v3362
    %v3364 = vpop.f32.mrb[0].mxu0
    %v3365 = vpop.f32.mrb[0].mxu0
    %v3366 = vpop.f32.mrb[0].mxu0
    %3367 = vdwg.mxu0
    %v3369 = vsel %vm913, %v3300, 0
    %v3372 = vsel %vm913, %v3301, 0
    %v3375 = vsel %vm1552, %v3308, 0
    %3377 = vmatprep.subr.bf16.mxu0 0
    %3378 = vmatpush1.bf16.msra.mxu0 %v3375
    %3379 = vmatprep.subr.bf16.mxu0 0
    %3380 = vmatpush1.bf16.msra.mxu0 0
    %3381 = vmatprep.subr.bf16.mxu0 0
    %3382 = vmatpush1.bf16.msra.mxu0 0
    %3383 = vmatprep.subr.bf16.mxu0 0
    %3384 = vmatpush1.bf16.msra.mxu0 0
    %3385 = vmatprep.subr.bf16.mxu0 0
    %3386 = vmatpush1.bf16.msra.mxu0 0
    %3387 = vmatprep.subr.bf16.mxu0 0
    %3388 = vmatpush1.bf16.msra.mxu0 0
    %3389 = vmatprep.subr.bf16.mxu0 0
    %3390 = vmatpush1.bf16.msra.mxu0 0
    %3391 = vmatprep.subr.bf16.mxu0 0
    %3392 = vmatpush1.bf16.msra.mxu0 0
    %3393 = vmatprep.subr.bf16.mxu0 0
    %3394 = vmatpush1.bf16.msra.mxu0 0
    %3395 = vmatprep.subr.bf16.mxu0 0
    %3396 = vmatpush1.bf16.msra.mxu0 0
    %3397 = vmatprep.subr.bf16.mxu0 0
    %3398 = vmatpush1.bf16.msra.mxu0 0
    %3399 = vmatprep.subr.bf16.mxu0 0
    %3400 = vmatpush1.bf16.msra.mxu0 0
    %3401 = vmatprep.subr.bf16.mxu0 0
    %3402 = vmatpush1.bf16.msra.mxu0 0
    %3403 = vmatprep.subr.bf16.mxu0 0
    %3404 = vmatpush1.bf16.msra.mxu0 0
    %3405 = vmatprep.subr.bf16.mxu0 0
    %3406 = vmatpush1.bf16.msra.mxu0 0
    %3407 = vmatprep.subr.bf16.mxu0 0
    %3408 = vmatpush1.bf16.msra.mxu0 0
    %3409 = vmatprep.mubr.bf16.mxu0 0
    %3410 = vmatmul.mubr.bf16.gmra.mrb[0].mxu0 %v3369
    %v3411 = vpop.f32.mrb[0].mxu0
    %v3412 = vadd.f32 0.0, %v3411
    %v3413 = vpop.f32.mrb[0].mxu0
    %v3414 = vpop.f32.mrb[0].mxu0
    %v3415 = vadd.f32 0.0, %v3414
    %v3416 = vpop.f32.mrb[0].mxu0
    %3417 = vmatprep.mubr.bf16.mxu0 0
    %3418 = vmatmul.mubr.bf16.gmra.mrb[0].mxu0 %v3372
    %v3419 = vpop.f32.mrb[0].mxu0
    %v3420 = vadd.f32 0.0, %v3419
    %v3421 = vpop.f32.mrb[0].mxu0
    %v3422 = vpop.f32.mrb[0].mxu0
    %v3423 = vpop.f32.mrb[0].mxu0
    %3424 = vdwg.mxu0
    %v3426 = vsel %vm913, %v3302, 0
    %v3429 = vsel %vm913, %v3303, 0
    %v3432 = vsel %vm1552, %v3309, 0
    %3434 = vmatprep.subr.bf16.mxu0 0
    %3435 = vmatpush1.bf16.msra.mxu0 %v3432
    %3436 = vmatprep.subr.bf16.mxu0 0
    %3437 = vmatpush1.bf16.msra.mxu0 0
    %3438 = vmatprep.subr.bf16.mxu0 0
    %3439 = vmatpush1.bf16.msra.mxu0 0
    %3440 = vmatprep.subr.bf16.mxu0 0
    %3441 = vmatpush1.bf16.msra.mxu0 0
    %3442 = vmatprep.subr.bf16.mxu0 0
    %3443 = vmatpush1.bf16.msra.mxu0 0
    %3444 = vmatprep.subr.bf16.mxu0 0
    %3445 = vmatpush1.bf16.msra.mxu0 0
    %3446 = vmatprep.subr.bf16.mxu0 0
    %3447 = vmatpush1.bf16.msra.mxu0 0
    %3448 = vmatprep.subr.bf16.mxu0 0
    %3449 = vmatpush1.bf16.msra.mxu0 0
    %3450 = vmatprep.subr.bf16.mxu0 0
    %3451 = vmatpush1.bf16.msra.mxu0 0
    %3452 = vmatprep.subr.bf16.mxu0 0
    %3453 = vmatpush1.bf16.msra.mxu0 0
    %3454 = vmatprep.subr.bf16.mxu0 0
    %3455 = vmatpush1.bf16.msra.mxu0 0
    %3456 = vmatprep.subr.bf16.mxu0 0
    %3457 = vmatpush1.bf16.msra.mxu0 0
    %3458 = vmatprep.subr.bf16.mxu0 0
    %3459 = vmatpush1.bf16.msra.mxu0 0
    %3460 = vmatprep.subr.bf16.mxu0 0
    %3461 = vmatpush1.bf16.msra.mxu0 0
    %3462 = vmatprep.subr.bf16.mxu0 0
    %3463 = vmatpush1.bf16.msra.mxu0 0
    %3464 = vmatprep.subr.bf16.mxu0 0
    %3465 = vmatpush1.bf16.msra.mxu0 0
    %3466 = vmatprep.mubr.bf16.mxu0 0
    %3467 = vmatmul.mubr.bf16.gmra.mrb[0].mxu0 %v3426
    %v3468 = vpop.f32.mrb[0].mxu0
    %v3469 = vadd.f32 0.0, %v3468
    %v3470 = vpop.f32.mrb[0].mxu0
    %v3471 = vpop.f32.mrb[0].mxu0
    %v3472 = vadd.f32 0.0, %v3471
    %v3473 = vpop.f32.mrb[0].mxu0
    %3474 = vmatprep.mubr.bf16.mxu0 0
    %3475 = vmatmul.mubr.bf16.gmra.mrb[0].mxu0 %v3429
    %v3476 = vpop.f32.mrb[0].mxu0
    %v3477 = vadd.f32 0.0, %v3476
    %v3478 = vpop.f32.mrb[0].mxu0
    %v3479 = vpop.f32.mrb[0].mxu0
    %v3480 = vpop.f32.mrb[0].mxu0
    %3481 = vdwg.mxu0
    %v3483 = vsel %vm913, %v3304, 0
    %v3486 = vsel %vm913, %v3305, 0
    %v3489 = vsel %vm1552, %v3310, 0
    %3491 = vmatprep.subr.bf16.mxu0 0
    %3492 = vmatpush1.bf16.msra.mxu0 %v3489
    %3493 = vmatprep.subr.bf16.mxu0 0
    %3494 = vmatpush1.bf16.msra.mxu0 0
    %3495 = vmatprep.subr.bf16.mxu0 0
    %3496 = vmatpush1.bf16.msra.mxu0 0
    %3497 = vmatprep.subr.bf16.mxu0 0
    %3498 = vmatpush1.bf16.msra.mxu0 0
    %3499 = vmatprep.subr.bf16.mxu0 0
    %3500 = vmatpush1.bf16.msra.mxu0 0
    %3501 = vmatprep.subr.bf16.mxu0 0
    %3502 = vmatpush1.bf16.msra.mxu0 0
    %3503 = vmatprep.subr.bf16.mxu0 0
    %3504 = vmatpush1.bf16.msra.mxu0 0
    %3505 = vmatprep.subr.bf16.mxu0 0
    %3506 = vmatpush1.bf16.msra.mxu0 0
    %3507 = vmatprep.subr.bf16.mxu0 0
    %3508 = vmatpush1.bf16.msra.mxu0 0
    %3509 = vmatprep.subr.bf16.mxu0 0
    %3510 = vmatpush1.bf16.msra.mxu0 0
    %3511 = vmatprep.subr.bf16.mxu0 0
    %3512 = vmatpush1.bf16.msra.mxu0 0
    %3513 = vmatprep.subr.bf16.mxu0 0
    %3514 = vmatpush1.bf16.msra.mxu0 0
    %3515 = vmatprep.subr.bf16.mxu0 0
    %3516 = vmatpush1.bf16.msra.mxu0 0
    %3517 = vmatprep.subr.bf16.mxu0 0
    %3518 = vmatpush1.bf16.msra.mxu0 0
    %3519 = vmatprep.subr.bf16.mxu0 0
    %3520 = vmatpush1.bf16.msra.mxu0 0
    %3521 = vmatprep.subr.bf16.mxu0 0
    %3522 = vmatpush1.bf16.msra.mxu0 0
    %3523 = vmatprep.mubr.bf16.mxu0 0
    %3524 = vmatmul.mubr.bf16.gmra.mrb[0].mxu0 %v3483
    %v3525 = vpop.f32.mrb[0].mxu0
    %v3526 = vadd.f32 0.0, %v3525
    %v3527 = vpop.f32.mrb[0].mxu0
    %v3528 = vpop.f32.mrb[0].mxu0
    %v3529 = vadd.f32 0.0, %v3528
    %v3530 = vpop.f32.mrb[0].mxu0
    %3531 = vmatprep.mubr.bf16.mxu0 0
    %3532 = vmatmul.mubr.bf16.gmra.mrb[0].mxu0 %v3486
    %v3533 = vpop.f32.mrb[0].mxu0
    %v3534 = vadd.f32 0.0, %v3533
    %v3535 = vpop.f32.mrb[0].mxu0
    %v3536 = vpop.f32.mrb[0].mxu0
    %v3537 = vpop.f32.mrb[0].mxu0
    %3538 = vdwg.mxu0
    %v3539 = vsel %vm206, %v3355, 0.0
    %v3540 = vsel %vm206, %v3412, 0.0
    %v3541 = vadd.f32 %v3539, %v3540
    %v3542 = vsel %vm206, %v3469, 0.0
    %v3543 = vadd.f32 %v3541, %v3542
    %v3544 = vsel %vm206, %v3526, 0.0
    %v3545 = vadd.f32 %v3543, %v3544
    %v3546 = vsel %vm206, %v3358, 0.0
    %v3547 = vsel %vm206, %v3415, 0.0
    %v3548 = vadd.f32 %v3546, %v3547
    %v3549 = vsel %vm206, %v3472, 0.0
    %v3550 = vadd.f32 %v3548, %v3549
    %v3551 = vsel %vm206, %v3529, 0.0
    %v3552 = vadd.f32 %v3550, %v3551
    %v3553 = vsel %vm213, %v3363, 0.0
    %v3554 = vsel %vm213, %v3420, 0.0
    %v3555 = vadd.f32 %v3553, %v3554
    %v3556 = vsel %vm213, %v3477, 0.0
    %v3557 = vadd.f32 %v3555, %v3556
    %v3558 = vsel %vm213, %v3534, 0.0
    %v3559 = vadd.f32 %v3557, %v3558
    %v3560 = vlaneseq
    %v3561 = vshrl.u32 %v3560, 7
    %v3562 = vsub.s32 0, %v3561
    %v3563 = vrot.slane %v2030, %v3562
    %v3564 = vadd.f32 %v3545, %v3563
    %v3565 = vadd.f32 %v3552, %v3563
    %v3566 = vadd.f32 %v3559, %v3563
    %v3568 = vsel %vm1154, %v37, 0
    %v3571 = vsel %vm1154, %v38, 0
    %v3574 = vsel %vm1154, %v39, 0
    %v3577 = vsel %vm1552, %v3566, 0
    %3579 = vmatprep.subr.mxu0 0.0
    %3580 = vmatpush1.msra.mxu0 %v3564
    %3581 = vmatprep.subr.mxu0 0.0
    %3582 = vmatpush1.msra.mxu0 %v3565
    %3583 = vmatprep.subr.mxu0 0.0
    %3584 = vmatpush1.msra.mxu0 %v3577
    %3585 = vmatprep.subr.mxu0 0.0
    %3586 = vmatpush1.msra.mxu0 0.0
    %3587 = vmatprep.subr.mxu0 0.0
    %3588 = vmatpush1.msra.mxu0 0.0
    %3589 = vmatprep.subr.mxu0 0.0
    %3590 = vmatpush1.msra.mxu0 0.0
    %3591 = vmatprep.subr.mxu0 0.0
    %3592 = vmatpush1.msra.mxu0 0.0
    %3593 = vmatprep.subr.mxu0 0.0
    %3594 = vmatpush1.msra.mxu0 0.0
    %3595 = vmatprep.subr.mxu0 0.0
    %3596 = vmatpush1.msra.mxu0 0.0
    %3597 = vmatprep.subr.mxu0 0.0
    %3598 = vmatpush1.msra.mxu0 0.0
    %3599 = vmatprep.subr.mxu0 0.0
    %3600 = vmatpush1.msra.mxu0 0.0
    %3601 = vmatprep.subr.mxu0 0.0
    %3602 = vmatpush1.msra.mxu0 0.0
    %3603 = vmatprep.subr.mxu0 0.0
    %3604 = vmatpush1.msra.mxu0 0.0
    %3605 = vmatprep.subr.mxu0 0.0
    %3606 = vmatpush1.msra.mxu0 0.0
    %3607 = vmatprep.subr.mxu0 0.0
    %3608 = vmatpush1.msra.mxu0 0.0
    %3609 = vmatprep.subr.mxu0 0.0
    %3610 = vmatpush1.msra.mxu0 0.0
    %3611 = vmatprep.subr.mxu0 0.0
    %3612 = vmatpush1.msra.mxu0 0.0
    %3613 = vmatprep.subr.mxu0 0.0
    %3614 = vmatpush1.msra.mxu0 0.0
    %3615 = vmatprep.subr.mxu0 0.0
    %3616 = vmatpush1.msra.mxu0 0.0
    %3617 = vmatprep.subr.mxu0 0.0
    %3618 = vmatpush1.msra.mxu0 0.0
    %3619 = vmatprep.subr.mxu0 0.0
    %3620 = vmatpush1.msra.mxu0 0.0
    %3621 = vmatprep.subr.mxu0 0.0
    %3622 = vmatpush1.msra.mxu0 0.0
    %3623 = vmatprep.subr.mxu0 0.0
    %3624 = vmatpush1.msra.mxu0 0.0
    %3625 = vmatprep.subr.mxu0 0.0
    %3626 = vmatpush1.msra.mxu0 0.0
    %3627 = vmatprep.subr.mxu0 0.0
    %3628 = vmatpush1.msra.mxu0 0.0
    %3629 = vmatprep.subr.mxu0 0.0
    %3630 = vmatpush1.msra.mxu0 0.0
    %3631 = vmatprep.subr.mxu0 0.0
    %3632 = vmatpush1.msra.mxu0 0.0
    %3633 = vmatprep.subr.mxu0 0.0
    %3634 = vmatpush1.msra.mxu0 0.0
    %3635 = vmatprep.subr.mxu0 0.0
    %3636 = vmatpush1.msra.mxu0 0.0
    %3637 = vmatprep.subr.mxu0 0.0
    %3638 = vmatpush1.msra.mxu0 0.0
    %3639 = vmatprep.subr.mxu0 0.0
    %3640 = vmatpush1.msra.mxu0 0.0
    %3641 = vmatprep.subr.mxu0 0.0
    %3642 = vmatpush1.msra.mxu0 0.0
    %3643 = vmatprep.mubr.f32.mxu0 0.0
    %3644 = vmatmul.mubr.f32.gmra.mrb[0].mxu0 %v3568
    %v3645 = vpop.f32.mrb[0].mxu0
    %v3646 = vadd.f32 0.0, %v3645
    %v3647 = vpop.f32.mrb[0].mxu0
    %3648 = vmatprep.mubr.f32.mxu0 0.0
    %3649 = vmatmul.mubr.f32.gmra.mrb[0].mxu0 %v3571
    %v3650 = vpop.f32.mrb[0].mxu0
    %v3651 = vadd.f32 0.0, %v3650
    %v3652 = vpop.f32.mrb[0].mxu0
    %3653 = vmatprep.mubr.f32.mxu0 0.0
    %3654 = vmatmul.mubr.f32.gmra.mrb[0].mxu0 %v3574
    %v3655 = vpop.f32.mrb[0].mxu0
    %v3656 = vadd.f32 0.0, %v3655
    %v3657 = vpop.f32.mrb[0].mxu0
    %3658 = vdwg.mxu0
    %v3659 = vadd.f32 %v1972, %v3646
    %v3660 = vadd.f32 %v1973, %v3651
    %v3661 = vadd.f32 %v1974, %v3656
    %v3662 = vld [vmem:[%s3 + $0x1d] sm:$0x1]
    %v3663 = vld [vmem:[%s3 + $0x1e] sm:$0x1]
    %v3664 = vsel %vm206, %v3659, 0.0
    %3665 = vadd.xlane.f32.xlu0 %v3664
    %v3666 = vpop.xlane.xlu0 %3665
    %v3667 = vsel %vm206, %v3660, 0.0
    %3668 = vadd.xlane.f32.xlu0 %v3667
    %v3669 = vpop.xlane.xlu0 %3668
    %v3670 = vsel %vm213, %v3661, 0.0
    %3671 = vadd.xlane.f32.xlu0 %v3670
    %v3672 = vpop.xlane.xlu0 %3671
    %v3673 = vmul.f32 %v3666, %v217
    %v3674 = vmul.f32 %v3669, %v217
    %v3675 = vmul.f32 %v3672, %v217
    %v3676 = vsub.f32 %v3659, %v3673
    %v3677 = vsub.f32 %v3660, %v3674
    %v3678 = vsub.f32 %v3661, %v3675
    %v3679 = vmul.f32 %v3676, %v3676
    %v3680 = vmul.f32 %v3677, %v3677
    %v3681 = vmul.f32 %v3678, %v3678
    %v3682 = vsel %vm206, %v3679, 0.0
    %3683 = vadd.xlane.f32.xlu0 %v3682
    %v3684 = vpop.xlane.xlu0 %3683
    %v3685 = vsel %vm206, %v3680, 0.0
    %3686 = vadd.xlane.f32.xlu0 %v3685
    %v3687 = vpop.xlane.xlu0 %3686
    %v3688 = vsel %vm213, %v3681, 0.0
    %3689 = vadd.xlane.f32.xlu0 %v3688
    %v3690 = vpop.xlane.xlu0 %3689
    %v3691 = vmul.f32 %v3684, %v217
    %v3692 = vmul.f32 %v3687, %v217
    %v3693 = vmul.f32 %v3690, %v217
    %v3694 = vadd.f32 %v3691, 1e-05
    %v3695 = vadd.f32 %v3692, 1e-05
    %v3696 = vadd.f32 %v3693, 1e-05
    %v3697 = vrsqrt.pop %v3694
    %v3698 = vrsqrt.pop %v3695
    %v3699 = vrsqrt.pop %v3696
    %v3700 = vmul.f32 %v3676, %v3697
    %v3701 = vmul.f32 %v3677, %v3698
    %v3702 = vmul.f32 %v3678, %v3699
    %v3703 = vlaneseq
    %v3704 = vshrl.u32 %v3703, 7
    %v3705 = vsub.s32 0, %v3704
    %v3706 = vrot.slane %v3662, %v3705
    %v3707 = vmul.f32 %v3700, %v3706
    %v3708 = vmul.f32 %v3701, %v3706
    %v3709 = vmul.f32 %v3702, %v3706
    %v3710 = vlaneseq
    %v3711 = vshrl.u32 %v3710, 7
    %v3712 = vsub.s32 0, %v3711
    %v3713 = vrot.slane %v3663, %v3712
    %v3714 = vadd.f32 %v3707, %v3713
    %v3715 = vadd.f32 %v3708, %v3713
    %v3716 = vadd.f32 %v3709, %v3713
    %v3717 = vpack.c.bf16 %v3715, %v3714
    %v3718 = vpack.c.bf16 %v3716, %v3716
    %v3719 = vld [vmem:[%s2 + $0x70] sm:$0xf]
    %v3720 = vld [vmem:[%s2 + $0x74] sm:$0xf]
    %v3721 = vld [vmem:[%s2 + $0x78] sm:$0xf]
    %v3722 = vld [vmem:[%s2 + $0x7c] sm:$0xf]
    %v3723 = vld [vmem:[%s2 + $0x80] sm:$0xf]
    %v3724 = vld [vmem:[%s2 + $0x84] sm:$0xf]
    %v3725 = vld [vmem:[%s2 + $0x88] sm:$0xf]
    %v3726 = vld [vmem:[%s2 + $0x8c] sm:$0xf]
    %v3727 = vld [vmem:[%s2 + $0x90] sm:$0xf]
    %v3728 = vld [vmem:[%s2 + $0x94] sm:$0xf]
    %v3729 = vld [vmem:[%s2 + $0x98] sm:$0xf]
    %v3730 = vld [vmem:[%s2 + $0x9c] sm:$0xf]
    %v3731 = vld [vmem:[%s2 + $0xa0] sm:$0xf]
    %v3732 = vld [vmem:[%s2 + $0xa4] sm:$0xf]
    %v3733 = vld [vmem:[%s2 + $0xa8] sm:$0xf]
    %v3734 = vld [vmem:[%s2 + $0xac] sm:$0xf]
    %v3735 = vld [vmem:[%s5] sm:$0x1]
    %v3737 = vlaneseq
    %v3738 = vshrl.u32 %v3737, 7
    %v3739 = vsub.s32 0, %v3738
    %v3740 = vrot.slane %v3735, %v3739
    %v3758 = vunpack.c.l.b16 %v3719
    %v3759 = vunpack.c.l.b16 %v3720
    %v3760 = vunpack.c.l.b16 %v3721
    %v3761 = vunpack.c.l.b16 %v3722
    %v3762 = vunpack.c.l.b16 %v3723
    %v3763 = vunpack.c.l.b16 %v3724
    %v3764 = vunpack.c.l.b16 %v3725
    %v3765 = vunpack.c.l.b16 %v3726
    %v3766 = vunpack.c.l.b16 %v3727
    %v3767 = vunpack.c.l.b16 %v3728
    %v3768 = vunpack.c.l.b16 %v3729
    %v3769 = vunpack.c.l.b16 %v3730
    %v3770 = vunpack.c.l.b16 %v3731
    %v3771 = vunpack.c.l.b16 %v3732
    %v3772 = vunpack.c.l.b16 %v3733
    %v3773 = vunpack.c.l.b16 %v3734
    %v3774 = vpack.c.b16 %v3759, %v3758
    %v3775 = vpack.c.b16 %v3761, %v3760
    %v3776 = vpack.c.b16 %v3763, %v3762
    %v3777 = vpack.c.b16 %v3765, %v3764
    %v3778 = vpack.c.b16 %v3767, %v3766
    %v3779 = vpack.c.b16 %v3769, %v3768
    %v3780 = vpack.c.b16 %v3771, %v3770
    %v3781 = vpack.c.b16 %v3773, %v3772
    %v3783 = vsel %vm206, %v3717, 0
    %v3786 = vsel %vm206, %v3718, 0
    %v3789 = vsel %vm206, %v3774, 0
    %v3792 = vsel %vm206, %v3775, 0
    %v3795 = vsel %vm206, %v3776, 0
    %v3798 = vsel %vm206, %v3777, 0
    %v3801 = vsel %vm206, %v3778, 0
    %v3804 = vsel %vm206, %v3779, 0
    %v3807 = vsel %vm206, %v3780, 0
    %v3810 = vsel %vm206, %v3781, 0
    %3812 = vmatprep.subr.bf16.mxu0 0
    %3813 = vmatpush1.bf16.xpose.msra.mxu0 %v3789
    %3814 = vmatprep.subr.bf16.mxu0 0
    %3815 = vmatpush1.bf16.xpose.msra.mxu0 %v3792
    %3816 = vmatprep.subr.bf16.mxu0 0
    %3817 = vmatpush1.bf16.xpose.msra.mxu0 %v3795
    %3818 = vmatprep.subr.bf16.mxu0 0
    %3819 = vmatpush1.bf16.xpose.msra.mxu0 %v3798
    %3820 = vmatprep.subr.bf16.mxu0 0
    %3821 = vmatpush1.bf16.xpose.msra.mxu0 %v3801
    %3822 = vmatprep.subr.bf16.mxu0 0
    %3823 = vmatpush1.bf16.xpose.msra.mxu0 %v3804
    %3824 = vmatprep.subr.bf16.mxu0 0
    %3825 = vmatpush1.bf16.xpose.msra.mxu0 %v3807
    %3826 = vmatprep.subr.bf16.mxu0 0
    %3827 = vmatpush1.bf16.xpose.msra.mxu0 %v3810
    %3828 = vmatprep.subr.bf16.mxu0 0
    %3829 = vmatpush1.bf16.xpose.msra.mxu0 0
    %3830 = vmatprep.subr.bf16.mxu0 0
    %3831 = vmatpush1.bf16.xpose.msra.mxu0 0
    %3832 = vmatprep.subr.bf16.mxu0 0
    %3833 = vmatpush1.bf16.xpose.msra.mxu0 0
    %3834 = vmatprep.subr.bf16.mxu0 0
    %3835 = vmatpush1.bf16.xpose.msra.mxu0 0
    %3836 = vmatprep.subr.bf16.mxu0 0
    %3837 = vmatpush1.bf16.xpose.msra.mxu0 0
    %3838 = vmatprep.subr.bf16.mxu0 0
    %3839 = vmatpush1.bf16.xpose.msra.mxu0 0
    %3840 = vmatprep.subr.bf16.mxu0 0
    %3841 = vmatpush1.bf16.xpose.msra.mxu0 0
    %3842 = vmatprep.subr.bf16.mxu0 0
    %3843 = vmatpush1.bf16.xpose.msra.mxu0 0
    %3844 = vmatprep.mubr.bf16.mxu0 0
    %3845 = vmatmul.mubr.bf16.gmra.mrb[0].mxu0 %v3783
    %v3846 = vpop.f32.mrb[0].mxu0
    %v3847 = vadd.f32 %v3740, %v3846
    %v3848 = vpop.f32.mrb[0].mxu0
    %v3849 = vpop.f32.mrb[0].mxu0
    %v3850 = vadd.f32 %v3740, %v3849
    %v3851 = vpop.f32.mrb[0].mxu0
    %3852 = vmatprep.mubr.bf16.mxu0 0
    %3853 = vmatmul.mubr.bf16.gmra.mrb[0].mxu0 %v3786
    %v3854 = vpop.f32.mrb[0].mxu0
    %v3855 = vadd.f32 %v3740, %v3854
    %v3856 = vpop.f32.mrb[0].mxu0
    %v3857 = vpop.f32.mrb[0].mxu0
    %v3858 = vpop.f32.mrb[0].mxu0
    %3859 = vdwg.mxu0
    %v3860 = vmul.f32 %v3847, 0.5
    %v3861 = vmul.f32 %v3850, 0.5
    %v3862 = vmul.f32 %v3855, 0.5
    %v3863 = vmul.f32 %v3847, 0.70710677
    %v3864 = vmul.f32 %v3850, 0.70710677
    %v3865 = vmul.f32 %v3855, 0.70710677
    %v3866 = verf.f32.pop %v3863
    %v3867 = verf.f32.pop %v3864
    %v3868 = verf.f32.pop %v3865
    %v3869 = vadd.f32 %v3866, 1.0
    %v3870 = vadd.f32 %v3867, 1.0
    %v3871 = vadd.f32 %v3868, 1.0
    %v3872 = vmul.f32 %v3860, %v3869
    %v3873 = vmul.f32 %v3861, %v3870
    %v3874 = vmul.f32 %v3862, %v3871
    %v3875 = vpack.c.bf16 %v3873, %v3872
    %v3876 = vpack.c.bf16 %v3874, %v3874
    %v3877 = vld [vmem:[%s2 + $0xb0] sm:$0xf]
    %v3878 = vld [vmem:[%s2 + $0xb4] sm:$0xf]
    %v3879 = vld [vmem:[%s2 + $0xb8] sm:$0xf]
    %v3880 = vld [vmem:[%s2 + $0xbc] sm:$0xf]
    %v3881 = vld [vmem:[%s2 + $0xc0] sm:$0xf]
    %v3882 = vld [vmem:[%s2 + $0xc4] sm:$0xf]
    %v3883 = vld [vmem:[%s2 + $0xc8] sm:$0xf]
    %v3884 = vld [vmem:[%s2 + $0xcc] sm:$0xf]
    %v3885 = vld [vmem:[%s2 + $0xd0] sm:$0xf]
    %v3886 = vld [vmem:[%s2 + $0xd4] sm:$0xf]
    %v3887 = vld [vmem:[%s2 + $0xd8] sm:$0xf]
    %v3888 = vld [vmem:[%s2 + $0xdc] sm:$0xf]
    %v3889 = vld [vmem:[%s2 + $0xe0] sm:$0xf]
    %v3890 = vld [vmem:[%s2 + $0xe4] sm:$0xf]
    %v3891 = vld [vmem:[%s2 + $0xe8] sm:$0xf]
    %v3892 = vld [vmem:[%s2 + $0xec] sm:$0xf]
    %v3893 = vld [vmem:[%s3 + $0x1f] sm:$0x1]
    %v3894 = vlaneseq
    %v3895 = vshrl.u32 %v3894, 7
    %v3896 = vsub.s32 0, %v3895
    %v3897 = vrot.slane %v3893, %v3896
    %v3914 = vunpack.c.l.b16 %v3877
    %v3915 = vunpack.c.l.b16 %v3878
    %v3916 = vunpack.c.l.b16 %v3879
    %v3917 = vunpack.c.l.b16 %v3880
    %v3918 = vunpack.c.l.b16 %v3881
    %v3919 = vunpack.c.l.b16 %v3882
    %v3920 = vunpack.c.l.b16 %v3883
    %v3921 = vunpack.c.l.b16 %v3884
    %v3922 = vunpack.c.l.b16 %v3885
    %v3923 = vunpack.c.l.b16 %v3886
    %v3924 = vunpack.c.l.b16 %v3887
    %v3925 = vunpack.c.l.b16 %v3888
    %v3926 = vunpack.c.l.b16 %v3889
    %v3927 = vunpack.c.l.b16 %v3890
    %v3928 = vunpack.c.l.b16 %v3891
    %v3929 = vunpack.c.l.b16 %v3892
    %v3930 = vpack.c.b16 %v3915, %v3914
    %v3931 = vpack.c.b16 %v3917, %v3916
    %v3932 = vpack.c.b16 %v3919, %v3918
    %v3933 = vpack.c.b16 %v3921, %v3920
    %v3934 = vpack.c.b16 %v3923, %v3922
    %v3935 = vpack.c.b16 %v3925, %v3924
    %v3936 = vpack.c.b16 %v3927, %v3926
    %v3937 = vpack.c.b16 %v3929, %v3928
    %3946 = vmatprep.subr.bf16.mxu0 0
    %3947 = vmatpush1.bf16.msra.mxu0 %v3930
    %3948 = vmatprep.subr.bf16.mxu0 0
    %3949 = vmatpush1.bf16.msra.mxu0 %v3931
    %3950 = vmatprep.subr.bf16.mxu0 0
    %3951 = vmatpush1.bf16.msra.mxu0 %v3932
    %3952 = vmatprep.subr.bf16.mxu0 0
    %3953 = vmatpush1.bf16.msra.mxu0 %v3933
    %3954 = vmatprep.subr.bf16.mxu0 0
    %3955 = vmatpush1.bf16.msra.mxu0 %v3934
    %3956 = vmatprep.subr.bf16.mxu0 0
    %3957 = vmatpush1.bf16.msra.mxu0 %v3935
    %3958 = vmatprep.subr.bf16.mxu0 0
    %3959 = vmatpush1.bf16.msra.mxu0 %v3936
    %3960 = vmatprep.subr.bf16.mxu0 0
    %3961 = vmatpush1.bf16.msra.mxu0 %v3937
    %3962 = vmatprep.subr.bf16.mxu0 0
    %3963 = vmatpush1.bf16.msra.mxu0 0
    %3964 = vmatprep.subr.bf16.mxu0 0
    %3965 = vmatpush1.bf16.msra.mxu0 0
    %3966 = vmatprep.subr.bf16.mxu0 0
    %3967 = vmatpush1.bf16.msra.mxu0 0
    %3968 = vmatprep.subr.bf16.mxu0 0
    %3969 = vmatpush1.bf16.msra.mxu0 0
    %3970 = vmatprep.subr.bf16.mxu0 0
    %3971 = vmatpush1.bf16.msra.mxu0 0
    %3972 = vmatprep.subr.bf16.mxu0 0
    %3973 = vmatpush1.bf16.msra.mxu0 0
    %3974 = vmatprep.subr.bf16.mxu0 0
    %3975 = vmatpush1.bf16.msra.mxu0 0
    %3976 = vmatprep.subr.bf16.mxu0 0
    %3977 = vmatpush1.bf16.msra.mxu0 0
    %3978 = vmatprep.mubr.bf16.mxu0 0
    %3979 = vmatmul.mubr.bf16.gmra.mrb[0].mxu0 %v3875
    %v3980 = vpop.f32.mrb[0].mxu0
    %v3981 = vadd.f32 %v3897, %v3980
    %v3982 = vpop.f32.mrb[0].mxu0
    %v3983 = vpop.f32.mrb[0].mxu0
    %v3984 = vadd.f32 %v3897, %v3983
    %v3985 = vpop.f32.mrb[0].mxu0
    %3986 = vmatprep.mubr.bf16.mxu0 0
    %3987 = vmatmul.mubr.bf16.gmra.mrb[0].mxu0 %v3876
    %v3988 = vpop.f32.mrb[0].mxu0
    %v3989 = vadd.f32 %v3897, %v3988
    %v3990 = vpop.f32.mrb[0].mxu0
    %v3991 = vpop.f32.mrb[0].mxu0
    %v3992 = vpop.f32.mrb[0].mxu0
    %3993 = vdwg.mxu0
    %v3994 = vadd.f32 %v3659, %v3981
    %v3995 = vadd.f32 %v3660, %v3984
    %v3996 = vadd.f32 %v3661, %v3989
    %v3997 = vld [vmem:[%s3 + $0x20] sm:$0x1]
    %v3998 = vld [vmem:[%s3 + $0x21] sm:$0x1]
    %v3999 = vsel %vm206, %v3994, 0.0
    %4000 = vadd.xlane.f32.xlu0 %v3999
    %v4001 = vpop.xlane.xlu0 %4000
    %v4002 = vsel %vm206, %v3995, 0.0
    %4003 = vadd.xlane.f32.xlu0 %v4002
    %v4004 = vpop.xlane.xlu0 %4003
    %v4005 = vsel %vm213, %v3996, 0.0
    %4006 = vadd.xlane.f32.xlu0 %v4005
    %v4007 = vpop.xlane.xlu0 %4006
    %v4008 = vmul.f32 %v4001, %v217
    %v4009 = vmul.f32 %v4004, %v217
    %v4010 = vmul.f32 %v4007, %v217
    %v4011 = vsub.f32 %v3994, %v4008
    %v4012 = vsub.f32 %v3995, %v4009
    %v4013 = vsub.f32 %v3996, %v4010
    %v4014 = vmul.f32 %v4011, %v4011
    %v4015 = vmul.f32 %v4012, %v4012
    %v4016 = vmul.f32 %v4013, %v4013
    %v4017 = vsel %vm206, %v4014, 0.0
    %4018 = vadd.xlane.f32.xlu0 %v4017
    %v4019 = vpop.xlane.xlu0 %4018
    %v4020 = vsel %vm206, %v4015, 0.0
    %4021 = vadd.xlane.f32.xlu0 %v4020
    %v4022 = vpop.xlane.xlu0 %4021
    %v4023 = vsel %vm213, %v4016, 0.0
    %4024 = vadd.xlane.f32.xlu0 %v4023
    %v4025 = vpop.xlane.xlu0 %4024
    %v4026 = vmul.f32 %v4019, %v217
    %v4027 = vmul.f32 %v4022, %v217
    %v4028 = vmul.f32 %v4025, %v217
    %v4029 = vadd.f32 %v4026, 1e-05
    %v4030 = vadd.f32 %v4027, 1e-05
    %v4031 = vadd.f32 %v4028, 1e-05
    %v4032 = vrsqrt.pop %v4029
    %v4033 = vrsqrt.pop %v4030
    %v4034 = vrsqrt.pop %v4031
    %v4035 = vmul.f32 %v4011, %v4032
    %v4036 = vmul.f32 %v4012, %v4033
    %v4037 = vmul.f32 %v4013, %v4034
    %v4038 = vlaneseq
    %v4039 = vshrl.u32 %v4038, 7
    %v4040 = vsub.s32 0, %v4039
    %v4041 = vrot.slane %v3997, %v4040
    %v4042 = vmul.f32 %v4035, %v4041
    %v4043 = vmul.f32 %v4036, %v4041
    %v4044 = vmul.f32 %v4037, %v4041
    %v4045 = vlaneseq
    %v4046 = vshrl.u32 %v4045, 7
    %v4047 = vsub.s32 0, %v4046
    %v4048 = vrot.slane %v3998, %v4047
    %v4049 = vadd.f32 %v4042, %v4048
    %v4050 = vadd.f32 %v4043, %v4048
    %v4051 = vadd.f32 %v4044, %v4048
    %v4052 = vld [vmem:[%s3 + $0x22] sm:$0x1]
    %v4053 = vpack.c.bf16 %v4050, %v4049
    %v4054 = vpack.c.bf16 %v4051, %v4051
    %s4055 = scalar_lea.vmem %s1, 128
    %v4056 = vld [vmem:[%s4055] sm:$0xf]
    %v4057 = vld [vmem:[%s4055 + $0x4] sm:$0xf]
    %v4058 = vld [vmem:[%s4055 + $0x8] sm:$0xf]
    %v4059 = vld [vmem:[%s4055 + $0xc] sm:$0xf]
    %v4061 = vsel %vm206, %v4053, 0
    %v4064 = vsel %vm206, %v4054, 0
    %v4067 = vsel %vm206, %v4056, 0
    %4069 = vmatprep.subr.bf16.mxu0 0
    %4070 = vmatpush1.bf16.xpose.msra.mxu0 %v4067
    %4071 = vmatprep.subr.bf16.mxu0 0
    %4072 = vmatpush1.bf16.xpose.msra.mxu0 0
    %4073 = vmatprep.subr.bf16.mxu0 0
    %4074 = vmatpush1.bf16.xpose.msra.mxu0 0
    %4075 = vmatprep.subr.bf16.mxu0 0
    %4076 = vmatpush1.bf16.xpose.msra.mxu0 0
    %4077 = vmatprep.subr.bf16.mxu0 0
    %4078 = vmatpush1.bf16.xpose.msra.mxu0 0
    %4079 = vmatprep.subr.bf16.mxu0 0
    %4080 = vmatpush1.bf16.xpose.msra.mxu0 0
    %4081 = vmatprep.subr.bf16.mxu0 0
    %4082 = vmatpush1.bf16.xpose.msra.mxu0 0
    %4083 = vmatprep.subr.bf16.mxu0 0
    %4084 = vmatpush1.bf16.xpose.msra.mxu0 0
    %4085 = vmatprep.subr.bf16.mxu0 0
    %4086 = vmatpush1.bf16.xpose.msra.mxu0 0
    %4087 = vmatprep.subr.bf16.mxu0 0
    %4088 = vmatpush1.bf16.xpose.msra.mxu0 0
    %4089 = vmatprep.subr.bf16.mxu0 0
    %4090 = vmatpush1.bf16.xpose.msra.mxu0 0
    %4091 = vmatprep.subr.bf16.mxu0 0
    %4092 = vmatpush1.bf16.xpose.msra.mxu0 0
    %4093 = vmatprep.subr.bf16.mxu0 0
    %4094 = vmatpush1.bf16.xpose.msra.mxu0 0
    %4095 = vmatprep.subr.bf16.mxu0 0
    %4096 = vmatpush1.bf16.xpose.msra.mxu0 0
    %4097 = vmatprep.subr.bf16.mxu0 0
    %4098 = vmatpush1.bf16.xpose.msra.mxu0 0
    %4099 = vmatprep.subr.bf16.mxu0 0
    %4100 = vmatpush1.bf16.xpose.msra.mxu0 0
    %4101 = vmatprep.mubr.bf16.mxu0 0
    %4102 = vmatmul.mubr.bf16.gmra.mrb[0].mxu0 %v4061
    %v4103 = vpop.f32.mrb[0].mxu0
    %v4104 = vadd.f32 0.0, %v4103
    %v4105 = vpop.f32.mrb[0].mxu0
    %v4106 = vpop.f32.mrb[0].mxu0
    %v4107 = vadd.f32 0.0, %v4106
    %v4108 = vpop.f32.mrb[0].mxu0
    %4109 = vmatprep.mubr.bf16.mxu0 0
    %4110 = vmatmul.mubr.bf16.gmra.mrb[0].mxu0 %v4064
    %v4111 = vpop.f32.mrb[0].mxu0
    %v4112 = vadd.f32 0.0, %v4111
    %v4113 = vpop.f32.mrb[0].mxu0
    %v4114 = vpop.f32.mrb[0].mxu0
    %v4115 = vpop.f32.mrb[0].mxu0
    %4116 = vdwg.mxu0
    %v4118 = vsel %vm206, %v4057, 0
    %4120 = vmatprep.subr.bf16.mxu0 0
    %4121 = vmatpush1.bf16.xpose.msra.mxu0 %v4118
    %4122 = vmatprep.subr.bf16.mxu0 0
    %4123 = vmatpush1.bf16.xpose.msra.mxu0 0
    %4124 = vmatprep.subr.bf16.mxu0 0
    %4125 = vmatpush1.bf16.xpose.msra.mxu0 0
    %4126 = vmatprep.subr.bf16.mxu0 0
    %4127 = vmatpush1.bf16.xpose.msra.mxu0 0
    %4128 = vmatprep.subr.bf16.mxu0 0
    %4129 = vmatpush1.bf16.xpose.msra.mxu0 0
    %4130 = vmatprep.subr.bf16.mxu0 0
    %4131 = vmatpush1.bf16.xpose.msra.mxu0 0
    %4132 = vmatprep.subr.bf16.mxu0 0
    %4133 = vmatpush1.bf16.xpose.msra.mxu0 0
    %4134 = vmatprep.subr.bf16.mxu0 0
    %4135 = vmatpush1.bf16.xpose.msra.mxu0 0
    %4136 = vmatprep.subr.bf16.mxu0 0
    %4137 = vmatpush1.bf16.xpose.msra.mxu0 0
    %4138 = vmatprep.subr.bf16.mxu0 0
    %4139 = vmatpush1.bf16.xpose.msra.mxu0 0
    %4140 = vmatprep.subr.bf16.mxu0 0
    %4141 = vmatpush1.bf16.xpose.msra.mxu0 0
    %4142 = vmatprep.subr.bf16.mxu0 0
    %4143 = vmatpush1.bf16.xpose.msra.mxu0 0
    %4144 = vmatprep.subr.bf16.mxu0 0
    %4145 = vmatpush1.bf16.xpose.msra.mxu0 0
    %4146 = vmatprep.subr.bf16.mxu0 0
    %4147 = vmatpush1.bf16.xpose.msra.mxu0 0
    %4148 = vmatprep.subr.bf16.mxu0 0
    %4149 = vmatpush1.bf16.xpose.msra.mxu0 0
    %4150 = vmatprep.subr.bf16.mxu0 0
    %4151 = vmatpush1.bf16.xpose.msra.mxu0 0
    %4152 = vmatprep.mubr.bf16.mxu0 0
    %4153 = vmatmul.mubr.bf16.gmra.mrb[0].mxu0 %v4061
    %v4154 = vpop.f32.mrb[0].mxu0
    %v4155 = vadd.f32 0.0, %v4154
    %v4156 = vpop.f32.mrb[0].mxu0
    %v4157 = vpop.f32.mrb[0].mxu0
    %v4158 = vadd.f32 0.0, %v4157
    %v4159 = vpop.f32.mrb[0].mxu0
    %4160 = vmatprep.mubr.bf16.mxu0 0
    %4161 = vmatmul.mubr.bf16.gmra.mrb[0].mxu0 %v4064
    %v4162 = vpop.f32.mrb[0].mxu0
    %v4163 = vadd.f32 0.0, %v4162
    %v4164 = vpop.f32.mrb[0].mxu0
    %v4165 = vpop.f32.mrb[0].mxu0
    %v4166 = vpop.f32.mrb[0].mxu0
    %4167 = vdwg.mxu0
    %v4169 = vsel %vm206, %v4058, 0
    %4171 = vmatprep.subr.bf16.mxu0 0
    %4172 = vmatpush1.bf16.xpose.msra.mxu0 %v4169
    %4173 = vmatprep.subr.bf16.mxu0 0
    %4174 = vmatpush1.bf16.xpose.msra.mxu0 0
    %4175 = vmatprep.subr.bf16.mxu0 0
    %4176 = vmatpush1.bf16.xpose.msra.mxu0 0
    %4177 = vmatprep.subr.bf16.mxu0 0
    %4178 = vmatpush1.bf16.xpose.msra.mxu0 0
    %4179 = vmatprep.subr.bf16.mxu0 0
    %4180 = vmatpush1.bf16.xpose.msra.mxu0 0
    %4181 = vmatprep.subr.bf16.mxu0 0
    %4182 = vmatpush1.bf16.xpose.msra.mxu0 0
    %4183 = vmatprep.subr.bf16.mxu0 0
    %4184 = vmatpush1.bf16.xpose.msra.mxu0 0
    %4185 = vmatprep.subr.bf16.mxu0 0
    %4186 = vmatpush1.bf16.xpose.msra.mxu0 0
    %4187 = vmatprep.subr.bf16.mxu0 0
    %4188 = vmatpush1.bf16.xpose.msra.mxu0 0
    %4189 = vmatprep.subr.bf16.mxu0 0
    %4190 = vmatpush1.bf16.xpose.msra.mxu0 0
    %4191 = vmatprep.subr.bf16.mxu0 0
    %4192 = vmatpush1.bf16.xpose.msra.mxu0 0
    %4193 = vmatprep.subr.bf16.mxu0 0
    %4194 = vmatpush1.bf16.xpose.msra.mxu0 0
    %4195 = vmatprep.subr.bf16.mxu0 0
    %4196 = vmatpush1.bf16.xpose.msra.mxu0 0
    %4197 = vmatprep.subr.bf16.mxu0 0
    %4198 = vmatpush1.bf16.xpose.msra.mxu0 0
    %4199 = vmatprep.subr.bf16.mxu0 0
    %4200 = vmatpush1.bf16.xpose.msra.mxu0 0
    %4201 = vmatprep.subr.bf16.mxu0 0
    %4202 = vmatpush1.bf16.xpose.msra.mxu0 0
    %4203 = vmatprep.mubr.bf16.mxu0 0
    %4204 = vmatmul.mubr.bf16.gmra.mrb[0].mxu0 %v4061
    %v4205 = vpop.f32.mrb[0].mxu0
    %v4206 = vadd.f32 0.0, %v4205
    %v4207 = vpop.f32.mrb[0].mxu0
    %v4208 = vpop.f32.mrb[0].mxu0
    %v4209 = vadd.f32 0.0, %v4208
    %v4210 = vpop.f32.mrb[0].mxu0
    %4211 = vmatprep.mubr.bf16.mxu0 0
    %4212 = vmatmul.mubr.bf16.gmra.mrb[0].mxu0 %v4064
    %v4213 = vpop.f32.mrb[0].mxu0
    %v4214 = vadd.f32 0.0, %v4213
    %v4215 = vpop.f32.mrb[0].mxu0
    %v4216 = vpop.f32.mrb[0].mxu0
    %v4217 = vpop.f32.mrb[0].mxu0
    %4218 = vdwg.mxu0
    %v4220 = vsel %vm206, %v4059, 0
    %4222 = vmatprep.subr.bf16.mxu0 0
    %4223 = vmatpush1.bf16.xpose.msra.mxu0 %v4220
    %4224 = vmatprep.subr.bf16.mxu0 0
    %4225 = vmatpush1.bf16.xpose.msra.mxu0 0
    %4226 = vmatprep.subr.bf16.mxu0 0
    %4227 = vmatpush1.bf16.xpose.msra.mxu0 0
    %4228 = vmatprep.subr.bf16.mxu0 0
    %4229 = vmatpush1.bf16.xpose.msra.mxu0 0
    %4230 = vmatprep.subr.bf16.mxu0 0
    %4231 = vmatpush1.bf16.xpose.msra.mxu0 0
    %4232 = vmatprep.subr.bf16.mxu0 0
    %4233 = vmatpush1.bf16.xpose.msra.mxu0 0
    %4234 = vmatprep.subr.bf16.mxu0 0
    %4235 = vmatpush1.bf16.xpose.msra.mxu0 0
    %4236 = vmatprep.subr.bf16.mxu0 0
    %4237 = vmatpush1.bf16.xpose.msra.mxu0 0
    %4238 = vmatprep.subr.bf16.mxu0 0
    %4239 = vmatpush1.bf16.xpose.msra.mxu0 0
    %4240 = vmatprep.subr.bf16.mxu0 0
    %4241 = vmatpush1.bf16.xpose.msra.mxu0 0
    %4242 = vmatprep.subr.bf16.mxu0 0
    %4243 = vmatpush1.bf16.xpose.msra.mxu0 0
    %4244 = vmatprep.subr.bf16.mxu0 0
    %4245 = vmatpush1.bf16.xpose.msra.mxu0 0
    %4246 = vmatprep.subr.bf16.mxu0 0
    %4247 = vmatpush1.bf16.xpose.msra.mxu0 0
    %4248 = vmatprep.subr.bf16.mxu0 0
    %4249 = vmatpush1.bf16.xpose.msra.mxu0 0
    %4250 = vmatprep.subr.bf16.mxu0 0
    %4251 = vmatpush1.bf16.xpose.msra.mxu0 0
    %4252 = vmatprep.subr.bf16.mxu0 0
    %4253 = vmatpush1.bf16.xpose.msra.mxu0 0
    %4254 = vmatprep.mubr.bf16.mxu0 0
    %4255 = vmatmul.mubr.bf16.gmra.mrb[0].mxu0 %v4061
    %v4256 = vpop.f32.mrb[0].mxu0
    %v4257 = vadd.f32 0.0, %v4256
    %v4258 = vpop.f32.mrb[0].mxu0
    %v4259 = vpop.f32.mrb[0].mxu0
    %v4260 = vadd.f32 0.0, %v4259
    %v4261 = vpop.f32.mrb[0].mxu0
    %4262 = vmatprep.mubr.bf16.mxu0 0
    %4263 = vmatmul.mubr.bf16.gmra.mrb[0].mxu0 %v4064
    %v4264 = vpop.f32.mrb[0].mxu0
    %v4265 = vadd.f32 0.0, %v4264
    %v4266 = vpop.f32.mrb[0].mxu0
    %v4267 = vpop.f32.mrb[0].mxu0
    %v4268 = vpop.f32.mrb[0].mxu0
    %4269 = vdwg.mxu0
    %s4270 = scalar_lea.vmem %s1, 144
    %v4271 = vld [vmem:[%s4270] sm:$0xf]
    %v4272 = vld [vmem:[%s4270 + $0x4] sm:$0xf]
    %v4273 = vld [vmem:[%s4270 + $0x8] sm:$0xf]
    %v4274 = vld [vmem:[%s4270 + $0xc] sm:$0xf]
    %v4276 = vsel %vm206, %v4271, 0
    %4278 = vmatprep.subr.bf16.mxu0 0
    %4279 = vmatpush1.bf16.xpose.msra.mxu0 %v4276
    %4280 = vmatprep.subr.bf16.mxu0 0
    %4281 = vmatpush1.bf16.xpose.msra.mxu0 0
    %4282 = vmatprep.subr.bf16.mxu0 0
    %4283 = vmatpush1.bf16.xpose.msra.mxu0 0
    %4284 = vmatprep.subr.bf16.mxu0 0
    %4285 = vmatpush1.bf16.xpose.msra.mxu0 0
    %4286 = vmatprep.subr.bf16.mxu0 0
    %4287 = vmatpush1.bf16.xpose.msra.mxu0 0
    %4288 = vmatprep.subr.bf16.mxu0 0
    %4289 = vmatpush1.bf16.xpose.msra.mxu0 0
    %4290 = vmatprep.subr.bf16.mxu0 0
    %4291 = vmatpush1.bf16.xpose.msra.mxu0 0
    %4292 = vmatprep.subr.bf16.mxu0 0
    %4293 = vmatpush1.bf16.xpose.msra.mxu0 0
    %4294 = vmatprep.subr.bf16.mxu0 0
    %4295 = vmatpush1.bf16.xpose.msra.mxu0 0
    %4296 = vmatprep.subr.bf16.mxu0 0
    %4297 = vmatpush1.bf16.xpose.msra.mxu0 0
    %4298 = vmatprep.subr.bf16.mxu0 0
    %4299 = vmatpush1.bf16.xpose.msra.mxu0 0
    %4300 = vmatprep.subr.bf16.mxu0 0
    %4301 = vmatpush1.bf16.xpose.msra.mxu0 0
    %4302 = vmatprep.subr.bf16.mxu0 0
    %4303 = vmatpush1.bf16.xpose.msra.mxu0 0
    %4304 = vmatprep.subr.bf16.mxu0 0
    %4305 = vmatpush1.bf16.xpose.msra.mxu0 0
    %4306 = vmatprep.subr.bf16.mxu0 0
    %4307 = vmatpush1.bf16.xpose.msra.mxu0 0
    %4308 = vmatprep.subr.bf16.mxu0 0
    %4309 = vmatpush1.bf16.xpose.msra.mxu0 0
    %4310 = vmatprep.mubr.bf16.mxu0 0
    %4311 = vmatmul.mubr.bf16.gmra.mrb[0].mxu0 %v4061
    %v4312 = vpop.f32.mrb[0].mxu0
    %v4313 = vadd.f32 0.0, %v4312
    %v4314 = vpop.f32.mrb[0].mxu0
    %v4315 = vpop.f32.mrb[0].mxu0
    %v4316 = vadd.f32 0.0, %v4315
    %v4317 = vpop.f32.mrb[0].mxu0
    %4318 = vmatprep.mubr.bf16.mxu0 0
    %4319 = vmatmul.mubr.bf16.gmra.mrb[0].mxu0 %v4064
    %v4320 = vpop.f32.mrb[0].mxu0
    %v4321 = vadd.f32 0.0, %v4320
    %v4322 = vpop.f32.mrb[0].mxu0
    %v4323 = vpop.f32.mrb[0].mxu0
    %v4324 = vpop.f32.mrb[0].mxu0
    %4325 = vdwg.mxu0
    %v4327 = vsel %vm206, %v4272, 0
    %4329 = vmatprep.subr.bf16.mxu0 0
    %4330 = vmatpush1.bf16.xpose.msra.mxu0 %v4327
    %4331 = vmatprep.subr.bf16.mxu0 0
    %4332 = vmatpush1.bf16.xpose.msra.mxu0 0
    %4333 = vmatprep.subr.bf16.mxu0 0
    %4334 = vmatpush1.bf16.xpose.msra.mxu0 0
    %4335 = vmatprep.subr.bf16.mxu0 0
    %4336 = vmatpush1.bf16.xpose.msra.mxu0 0
    %4337 = vmatprep.subr.bf16.mxu0 0
    %4338 = vmatpush1.bf16.xpose.msra.mxu0 0
    %4339 = vmatprep.subr.bf16.mxu0 0
    %4340 = vmatpush1.bf16.xpose.msra.mxu0 0
    %4341 = vmatprep.subr.bf16.mxu0 0
    %4342 = vmatpush1.bf16.xpose.msra.mxu0 0
    %4343 = vmatprep.subr.bf16.mxu0 0
    %4344 = vmatpush1.bf16.xpose.msra.mxu0 0
    %4345 = vmatprep.subr.bf16.mxu0 0
    %4346 = vmatpush1.bf16.xpose.msra.mxu0 0
    %4347 = vmatprep.subr.bf16.mxu0 0
    %4348 = vmatpush1.bf16.xpose.msra.mxu0 0
    %4349 = vmatprep.subr.bf16.mxu0 0
    %4350 = vmatpush1.bf16.xpose.msra.mxu0 0
    %4351 = vmatprep.subr.bf16.mxu0 0
    %4352 = vmatpush1.bf16.xpose.msra.mxu0 0
    %4353 = vmatprep.subr.bf16.mxu0 0
    %4354 = vmatpush1.bf16.xpose.msra.mxu0 0
    %4355 = vmatprep.subr.bf16.mxu0 0
    %4356 = vmatpush1.bf16.xpose.msra.mxu0 0
    %4357 = vmatprep.subr.bf16.mxu0 0
    %4358 = vmatpush1.bf16.xpose.msra.mxu0 0
    %4359 = vmatprep.subr.bf16.mxu0 0
    %4360 = vmatpush1.bf16.xpose.msra.mxu0 0
    %4361 = vmatprep.mubr.bf16.mxu0 0
    %4362 = vmatmul.mubr.bf16.gmra.mrb[0].mxu0 %v4061
    %v4363 = vpop.f32.mrb[0].mxu0
    %v4364 = vadd.f32 0.0, %v4363
    %v4365 = vpop.f32.mrb[0].mxu0
    %v4366 = vpop.f32.mrb[0].mxu0
    %v4367 = vadd.f32 0.0, %v4366
    %v4368 = vpop.f32.mrb[0].mxu0
    %4369 = vmatprep.mubr.bf16.mxu0 0
    %4370 = vmatmul.mubr.bf16.gmra.mrb[0].mxu0 %v4064
    %v4371 = vpop.f32.mrb[0].mxu0
    %v4372 = vadd.f32 0.0, %v4371
    %v4373 = vpop.f32.mrb[0].mxu0
    %v4374 = vpop.f32.mrb[0].mxu0
    %v4375 = vpop.f32.mrb[0].mxu0
    %4376 = vdwg.mxu0
    %v4378 = vsel %vm206, %v4273, 0
    %4380 = vmatprep.subr.bf16.mxu0 0
    %4381 = vmatpush1.bf16.xpose.msra.mxu0 %v4378
    %4382 = vmatprep.subr.bf16.mxu0 0
    %4383 = vmatpush1.bf16.xpose.msra.mxu0 0
    %4384 = vmatprep.subr.bf16.mxu0 0
    %4385 = vmatpush1.bf16.xpose.msra.mxu0 0
    %4386 = vmatprep.subr.bf16.mxu0 0
    %4387 = vmatpush1.bf16.xpose.msra.mxu0 0
    %4388 = vmatprep.subr.bf16.mxu0 0
    %4389 = vmatpush1.bf16.xpose.msra.mxu0 0
    %4390 = vmatprep.subr.bf16.mxu0 0
    %4391 = vmatpush1.bf16.xpose.msra.mxu0 0
    %4392 = vmatprep.subr.bf16.mxu0 0
    %4393 = vmatpush1.bf16.xpose.msra.mxu0 0
    %4394 = vmatprep.subr.bf16.mxu0 0
    %4395 = vmatpush1.bf16.xpose.msra.mxu0 0
    %4396 = vmatprep.subr.bf16.mxu0 0
    %4397 = vmatpush1.bf16.xpose.msra.mxu0 0
    %4398 = vmatprep.subr.bf16.mxu0 0
    %4399 = vmatpush1.bf16.xpose.msra.mxu0 0
    %4400 = vmatprep.subr.bf16.mxu0 0
    %4401 = vmatpush1.bf16.xpose.msra.mxu0 0
    %4402 = vmatprep.subr.bf16.mxu0 0
    %4403 = vmatpush1.bf16.xpose.msra.mxu0 0
    %4404 = vmatprep.subr.bf16.mxu0 0
    %4405 = vmatpush1.bf16.xpose.msra.mxu0 0
    %4406 = vmatprep.subr.bf16.mxu0 0
    %4407 = vmatpush1.bf16.xpose.msra.mxu0 0
    %4408 = vmatprep.subr.bf16.mxu0 0
    %4409 = vmatpush1.bf16.xpose.msra.mxu0 0
    %4410 = vmatprep.subr.bf16.mxu0 0
    %4411 = vmatpush1.bf16.xpose.msra.mxu0 0
    %4412 = vmatprep.mubr.bf16.mxu0 0
    %4413 = vmatmul.mubr.bf16.gmra.mrb[0].mxu0 %v4061
    %v4414 = vpop.f32.mrb[0].mxu0
    %v4415 = vadd.f32 0.0, %v4414
    %v4416 = vpop.f32.mrb[0].mxu0
    %v4417 = vpop.f32.mrb[0].mxu0
    %v4418 = vadd.f32 0.0, %v4417
    %v4419 = vpop.f32.mrb[0].mxu0
    %4420 = vmatprep.mubr.bf16.mxu0 0
    %4421 = vmatmul.mubr.bf16.gmra.mrb[0].mxu0 %v4064
    %v4422 = vpop.f32.mrb[0].mxu0
    %v4423 = vadd.f32 0.0, %v4422
    %v4424 = vpop.f32.mrb[0].mxu0
    %v4425 = vpop.f32.mrb[0].mxu0
    %v4426 = vpop.f32.mrb[0].mxu0
    %4427 = vdwg.mxu0
    %v4429 = vsel %vm206, %v4274, 0
    %4431 = vmatprep.subr.bf16.mxu0 0
    %4432 = vmatpush1.bf16.xpose.msra.mxu0 %v4429
    %4433 = vmatprep.subr.bf16.mxu0 0
    %4434 = vmatpush1.bf16.xpose.msra.mxu0 0
    %4435 = vmatprep.subr.bf16.mxu0 0
    %4436 = vmatpush1.bf16.xpose.msra.mxu0 0
    %4437 = vmatprep.subr.bf16.mxu0 0
    %4438 = vmatpush1.bf16.xpose.msra.mxu0 0
    %4439 = vmatprep.subr.bf16.mxu0 0
    %4440 = vmatpush1.bf16.xpose.msra.mxu0 0
    %4441 = vmatprep.subr.bf16.mxu0 0
    %4442 = vmatpush1.bf16.xpose.msra.mxu0 0
    %4443 = vmatprep.subr.bf16.mxu0 0
    %4444 = vmatpush1.bf16.xpose.msra.mxu0 0
    %4445 = vmatprep.subr.bf16.mxu0 0
    %4446 = vmatpush1.bf16.xpose.msra.mxu0 0
    %4447 = vmatprep.subr.bf16.mxu0 0
    %4448 = vmatpush1.bf16.xpose.msra.mxu0 0
    %4449 = vmatprep.subr.bf16.mxu0 0
    %4450 = vmatpush1.bf16.xpose.msra.mxu0 0
    %4451 = vmatprep.subr.bf16.mxu0 0
    %4452 = vmatpush1.bf16.xpose.msra.mxu0 0
    %4453 = vmatprep.subr.bf16.mxu0 0
    %4454 = vmatpush1.bf16.xpose.msra.mxu0 0
    %4455 = vmatprep.subr.bf16.mxu0 0
    %4456 = vmatpush1.bf16.xpose.msra.mxu0 0
    %4457 = vmatprep.subr.bf16.mxu0 0
    %4458 = vmatpush1.bf16.xpose.msra.mxu0 0
    %4459 = vmatprep.subr.bf16.mxu0 0
    %4460 = vmatpush1.bf16.xpose.msra.mxu0 0
    %4461 = vmatprep.subr.bf16.mxu0 0
    %4462 = vmatpush1.bf16.xpose.msra.mxu0 0
    %4463 = vmatprep.mubr.bf16.mxu0 0
    %4464 = vmatmul.mubr.bf16.gmra.mrb[0].mxu0 %v4061
    %v4465 = vpop.f32.mrb[0].mxu0
    %v4466 = vadd.f32 0.0, %v4465
    %v4467 = vpop.f32.mrb[0].mxu0
    %v4468 = vpop.f32.mrb[0].mxu0
    %v4469 = vadd.f32 0.0, %v4468
    %v4470 = vpop.f32.mrb[0].mxu0
    %4471 = vmatprep.mubr.bf16.mxu0 0
    %4472 = vmatmul.mubr.bf16.gmra.mrb[0].mxu0 %v4064
    %v4473 = vpop.f32.mrb[0].mxu0
    %v4474 = vadd.f32 0.0, %v4473
    %v4475 = vpop.f32.mrb[0].mxu0
    %v4476 = vpop.f32.mrb[0].mxu0
    %v4477 = vpop.f32.mrb[0].mxu0
    %4478 = vdwg.mxu0
    %s4479 = scalar_lea.vmem %s1, 160
    %v4480 = vld [vmem:[%s4479] sm:$0xf]
    %v4481 = vld [vmem:[%s4479 + $0x4] sm:$0xf]
    %v4482 = vld [vmem:[%s4479 + $0x8] sm:$0xf]
    %v4483 = vld [vmem:[%s4479 + $0xc] sm:$0xf]
    %v4485 = vsel %vm206, %v4480, 0
    %4487 = vmatprep.subr.bf16.mxu0 0
    %4488 = vmatpush1.bf16.xpose.msra.mxu0 %v4485
    %4489 = vmatprep.subr.bf16.mxu0 0
    %4490 = vmatpush1.bf16.xpose.msra.mxu0 0
    %4491 = vmatprep.subr.bf16.mxu0 0
    %4492 = vmatpush1.bf16.xpose.msra.mxu0 0
    %4493 = vmatprep.subr.bf16.mxu0 0
    %4494 = vmatpush1.bf16.xpose.msra.mxu0 0
    %4495 = vmatprep.subr.bf16.mxu0 0
    %4496 = vmatpush1.bf16.xpose.msra.mxu0 0
    %4497 = vmatprep.subr.bf16.mxu0 0
    %4498 = vmatpush1.bf16.xpose.msra.mxu0 0
    %4499 = vmatprep.subr.bf16.mxu0 0
    %4500 = vmatpush1.bf16.xpose.msra.mxu0 0
    %4501 = vmatprep.subr.bf16.mxu0 0
    %4502 = vmatpush1.bf16.xpose.msra.mxu0 0
    %4503 = vmatprep.subr.bf16.mxu0 0
    %4504 = vmatpush1.bf16.xpose.msra.mxu0 0
    %4505 = vmatprep.subr.bf16.mxu0 0
    %4506 = vmatpush1.bf16.xpose.msra.mxu0 0
    %4507 = vmatprep.subr.bf16.mxu0 0
    %4508 = vmatpush1.bf16.xpose.msra.mxu0 0
    %4509 = vmatprep.subr.bf16.mxu0 0
    %4510 = vmatpush1.bf16.xpose.msra.mxu0 0
    %4511 = vmatprep.subr.bf16.mxu0 0
    %4512 = vmatpush1.bf16.xpose.msra.mxu0 0
    %4513 = vmatprep.subr.bf16.mxu0 0
    %4514 = vmatpush1.bf16.xpose.msra.mxu0 0
    %4515 = vmatprep.subr.bf16.mxu0 0
    %4516 = vmatpush1.bf16.xpose.msra.mxu0 0
    %4517 = vmatprep.subr.bf16.mxu0 0
    %4518 = vmatpush1.bf16.xpose.msra.mxu0 0
    %4519 = vmatprep.mubr.bf16.mxu0 0
    %4520 = vmatmul.mubr.bf16.gmra.mrb[0].mxu0 %v4061
    %v4521 = vpop.f32.mrb[0].mxu0
    %v4522 = vadd.f32 0.0, %v4521
    %v4523 = vpop.f32.mrb[0].mxu0
    %v4524 = vpop.f32.mrb[0].mxu0
    %v4525 = vadd.f32 0.0, %v4524
    %v4526 = vpop.f32.mrb[0].mxu0
    %4527 = vmatprep.mubr.bf16.mxu0 0
    %4528 = vmatmul.mubr.bf16.gmra.mrb[0].mxu0 %v4064
    %v4529 = vpop.f32.mrb[0].mxu0
    %v4530 = vadd.f32 0.0, %v4529
    %v4531 = vpop.f32.mrb[0].mxu0
    %v4532 = vpop.f32.mrb[0].mxu0
    %v4533 = vpop.f32.mrb[0].mxu0
    %4534 = vdwg.mxu0
    %v4536 = vsel %vm206, %v4481, 0
    %4538 = vmatprep.subr.bf16.mxu0 0
    %4539 = vmatpush1.bf16.xpose.msra.mxu0 %v4536
    %4540 = vmatprep.subr.bf16.mxu0 0
    %4541 = vmatpush1.bf16.xpose.msra.mxu0 0
    %4542 = vmatprep.subr.bf16.mxu0 0
    %4543 = vmatpush1.bf16.xpose.msra.mxu0 0
    %4544 = vmatprep.subr.bf16.mxu0 0
    %4545 = vmatpush1.bf16.xpose.msra.mxu0 0
    %4546 = vmatprep.subr.bf16.mxu0 0
    %4547 = vmatpush1.bf16.xpose.msra.mxu0 0
    %4548 = vmatprep.subr.bf16.mxu0 0
    %4549 = vmatpush1.bf16.xpose.msra.mxu0 0
    %4550 = vmatprep.subr.bf16.mxu0 0
    %4551 = vmatpush1.bf16.xpose.msra.mxu0 0
    %4552 = vmatprep.subr.bf16.mxu0 0
    %4553 = vmatpush1.bf16.xpose.msra.mxu0 0
    %4554 = vmatprep.subr.bf16.mxu0 0
    %4555 = vmatpush1.bf16.xpose.msra.mxu0 0
    %4556 = vmatprep.subr.bf16.mxu0 0
    %4557 = vmatpush1.bf16.xpose.msra.mxu0 0
    %4558 = vmatprep.subr.bf16.mxu0 0
    %4559 = vmatpush1.bf16.xpose.msra.mxu0 0
    %4560 = vmatprep.subr.bf16.mxu0 0
    %4561 = vmatpush1.bf16.xpose.msra.mxu0 0
    %4562 = vmatprep.subr.bf16.mxu0 0
    %4563 = vmatpush1.bf16.xpose.msra.mxu0 0
    %4564 = vmatprep.subr.bf16.mxu0 0
    %4565 = vmatpush1.bf16.xpose.msra.mxu0 0
    %4566 = vmatprep.subr.bf16.mxu0 0
    %4567 = vmatpush1.bf16.xpose.msra.mxu0 0
    %4568 = vmatprep.subr.bf16.mxu0 0
    %4569 = vmatpush1.bf16.xpose.msra.mxu0 0
    %4570 = vmatprep.mubr.bf16.mxu0 0
    %4571 = vmatmul.mubr.bf16.gmra.mrb[0].mxu0 %v4061
    %v4572 = vpop.f32.mrb[0].mxu0
    %v4573 = vadd.f32 0.0, %v4572
    %v4574 = vpop.f32.mrb[0].mxu0
    %v4575 = vpop.f32.mrb[0].mxu0
    %v4576 = vadd.f32 0.0, %v4575
    %v4577 = vpop.f32.mrb[0].mxu0
    %4578 = vmatprep.mubr.bf16.mxu0 0
    %4579 = vmatmul.mubr.bf16.gmra.mrb[0].mxu0 %v4064
    %v4580 = vpop.f32.mrb[0].mxu0
    %v4581 = vadd.f32 0.0, %v4580
    %v4582 = vpop.f32.mrb[0].mxu0
    %v4583 = vpop.f32.mrb[0].mxu0
    %v4584 = vpop.f32.mrb[0].mxu0
    %4585 = vdwg.mxu0
    %v4587 = vsel %vm206, %v4482, 0
    %4589 = vmatprep.subr.bf16.mxu0 0
    %4590 = vmatpush1.bf16.xpose.msra.mxu0 %v4587
    %4591 = vmatprep.subr.bf16.mxu0 0
    %4592 = vmatpush1.bf16.xpose.msra.mxu0 0
    %4593 = vmatprep.subr.bf16.mxu0 0
    %4594 = vmatpush1.bf16.xpose.msra.mxu0 0
    %4595 = vmatprep.subr.bf16.mxu0 0
    %4596 = vmatpush1.bf16.xpose.msra.mxu0 0
    %4597 = vmatprep.subr.bf16.mxu0 0
    %4598 = vmatpush1.bf16.xpose.msra.mxu0 0
    %4599 = vmatprep.subr.bf16.mxu0 0
    %4600 = vmatpush1.bf16.xpose.msra.mxu0 0
    %4601 = vmatprep.subr.bf16.mxu0 0
    %4602 = vmatpush1.bf16.xpose.msra.mxu0 0
    %4603 = vmatprep.subr.bf16.mxu0 0
    %4604 = vmatpush1.bf16.xpose.msra.mxu0 0
    %4605 = vmatprep.subr.bf16.mxu0 0
    %4606 = vmatpush1.bf16.xpose.msra.mxu0 0
    %4607 = vmatprep.subr.bf16.mxu0 0
    %4608 = vmatpush1.bf16.xpose.msra.mxu0 0
    %4609 = vmatprep.subr.bf16.mxu0 0
    %4610 = vmatpush1.bf16.xpose.msra.mxu0 0
    %4611 = vmatprep.subr.bf16.mxu0 0
    %4612 = vmatpush1.bf16.xpose.msra.mxu0 0
    %4613 = vmatprep.subr.bf16.mxu0 0
    %4614 = vmatpush1.bf16.xpose.msra.mxu0 0
    %4615 = vmatprep.subr.bf16.mxu0 0
    %4616 = vmatpush1.bf16.xpose.msra.mxu0 0
    %4617 = vmatprep.subr.bf16.mxu0 0
    %4618 = vmatpush1.bf16.xpose.msra.mxu0 0
    %4619 = vmatprep.subr.bf16.mxu0 0
    %4620 = vmatpush1.bf16.xpose.msra.mxu0 0
    %4621 = vmatprep.mubr.bf16.mxu0 0
    %4622 = vmatmul.mubr.bf16.gmra.mrb[0].mxu0 %v4061
    %v4623 = vpop.f32.mrb[0].mxu0
    %v4624 = vadd.f32 0.0, %v4623
    %v4625 = vpop.f32.mrb[0].mxu0
    %v4626 = vpop.f32.mrb[0].mxu0
    %v4627 = vadd.f32 0.0, %v4626
    %v4628 = vpop.f32.mrb[0].mxu0
    %4629 = vmatprep.mubr.bf16.mxu0 0
    %4630 = vmatmul.mubr.bf16.gmra.mrb[0].mxu0 %v4064
    %v4631 = vpop.f32.mrb[0].mxu0
    %v4632 = vadd.f32 0.0, %v4631
    %v4633 = vpop.f32.mrb[0].mxu0
    %v4634 = vpop.f32.mrb[0].mxu0
    %v4635 = vpop.f32.mrb[0].mxu0
    %4636 = vdwg.mxu0
    %v4638 = vsel %vm206, %v4483, 0
    %4640 = vmatprep.subr.bf16.mxu0 0
    %4641 = vmatpush1.bf16.xpose.msra.mxu0 %v4638
    %4642 = vmatprep.subr.bf16.mxu0 0
    %4643 = vmatpush1.bf16.xpose.msra.mxu0 0
    %4644 = vmatprep.subr.bf16.mxu0 0
    %4645 = vmatpush1.bf16.xpose.msra.mxu0 0
    %4646 = vmatprep.subr.bf16.mxu0 0
    %4647 = vmatpush1.bf16.xpose.msra.mxu0 0
    %4648 = vmatprep.subr.bf16.mxu0 0
    %4649 = vmatpush1.bf16.xpose.msra.mxu0 0
    %4650 = vmatprep.subr.bf16.mxu0 0
    %4651 = vmatpush1.bf16.xpose.msra.mxu0 0
    %4652 = vmatprep.subr.bf16.mxu0 0
    %4653 = vmatpush1.bf16.xpose.msra.mxu0 0
    %4654 = vmatprep.subr.bf16.mxu0 0
    %4655 = vmatpush1.bf16.xpose.msra.mxu0 0
    %4656 = vmatprep.subr.bf16.mxu0 0
    %4657 = vmatpush1.bf16.xpose.msra.mxu0 0
    %4658 = vmatprep.subr.bf16.mxu0 0
    %4659 = vmatpush1.bf16.xpose.msra.mxu0 0
    %4660 = vmatprep.subr.bf16.mxu0 0
    %4661 = vmatpush1.bf16.xpose.msra.mxu0 0
    %4662 = vmatprep.subr.bf16.mxu0 0
    %4663 = vmatpush1.bf16.xpose.msra.mxu0 0
    %4664 = vmatprep.subr.bf16.mxu0 0
    %4665 = vmatpush1.bf16.xpose.msra.mxu0 0
    %4666 = vmatprep.subr.bf16.mxu0 0
    %4667 = vmatpush1.bf16.xpose.msra.mxu0 0
    %4668 = vmatprep.subr.bf16.mxu0 0
    %4669 = vmatpush1.bf16.xpose.msra.mxu0 0
    %4670 = vmatprep.subr.bf16.mxu0 0
    %4671 = vmatpush1.bf16.xpose.msra.mxu0 0
    %4672 = vmatprep.mubr.bf16.mxu0 0
    %4673 = vmatmul.mubr.bf16.gmra.mrb[0].mxu0 %v4061
    %v4674 = vpop.f32.mrb[0].mxu0
    %v4675 = vadd.f32 0.0, %v4674
    %v4676 = vpop.f32.mrb[0].mxu0
    %v4677 = vpop.f32.mrb[0].mxu0
    %v4678 = vadd.f32 0.0, %v4677
    %v4679 = vpop.f32.mrb[0].mxu0
    %4680 = vmatprep.mubr.bf16.mxu0 0
    %4681 = vmatmul.mubr.bf16.gmra.mrb[0].mxu0 %v4064
    %v4682 = vpop.f32.mrb[0].mxu0
    %v4683 = vadd.f32 0.0, %v4682
    %v4684 = vpop.f32.mrb[0].mxu0
    %v4685 = vpop.f32.mrb[0].mxu0
    %v4686 = vpop.f32.mrb[0].mxu0
    %4687 = vdwg.mxu0
    %v4688 = vpack.c.bf16 %v4107, %v4104
    %v4689 = vpack.c.bf16 %v4112, %v4112
    %v4690 = vpack.c.bf16 %v4158, %v4155
    %v4691 = vpack.c.bf16 %v4163, %v4163
    %v4692 = vpack.c.bf16 %v4209, %v4206
    %v4693 = vpack.c.bf16 %v4214, %v4214
    %v4694 = vpack.c.bf16 %v4260, %v4257
    %v4695 = vpack.c.bf16 %v4265, %v4265
    %v4696 = vpack.c.bf16 %v4316, %v4313
    %v4697 = vpack.c.bf16 %v4321, %v4321
    %v4698 = vpack.c.bf16 %v4367, %v4364
    %v4699 = vpack.c.bf16 %v4372, %v4372
    %v4700 = vpack.c.bf16 %v4418, %v4415
    %v4701 = vpack.c.bf16 %v4423, %v4423
    %v4702 = vpack.c.bf16 %v4469, %v4466
    %v4703 = vpack.c.bf16 %v4474, %v4474
    %v4705 = vsel %vm913, %v4688, 0
    %v4708 = vsel %vm913, %v4689, 0
    %v4711 = vsel %vm913, %v4696, 0
    %v4714 = vsel %vm913, %v4697, 0
    %4716 = vmatprep.subr.bf16.mxu0 0
    %4717 = vmatpush1.bf16.xpose.msra.mxu0 %v4711
    %4718 = vmatprep.subr.bf16.mxu0 0
    %4719 = vmatpush1.bf16.xpose.msra.mxu0 %v4714
    %4720 = vmatprep.subr.bf16.mxu0 0
    %4721 = vmatpush1.bf16.xpose.msra.mxu0 0
    %4722 = vmatprep.subr.bf16.mxu0 0
    %4723 = vmatpush1.bf16.xpose.msra.mxu0 0
    %4724 = vmatprep.subr.bf16.mxu0 0
    %4725 = vmatpush1.bf16.xpose.msra.mxu0 0
    %4726 = vmatprep.subr.bf16.mxu0 0
    %4727 = vmatpush1.bf16.xpose.msra.mxu0 0
    %4728 = vmatprep.subr.bf16.mxu0 0
    %4729 = vmatpush1.bf16.xpose.msra.mxu0 0
    %4730 = vmatprep.subr.bf16.mxu0 0
    %4731 = vmatpush1.bf16.xpose.msra.mxu0 0
    %4732 = vmatprep.subr.bf16.mxu0 0
    %4733 = vmatpush1.bf16.xpose.msra.mxu0 0
    %4734 = vmatprep.subr.bf16.mxu0 0
    %4735 = vmatpush1.bf16.xpose.msra.mxu0 0
    %4736 = vmatprep.subr.bf16.mxu0 0
    %4737 = vmatpush1.bf16.xpose.msra.mxu0 0
    %4738 = vmatprep.subr.bf16.mxu0 0
    %4739 = vmatpush1.bf16.xpose.msra.mxu0 0
    %4740 = vmatprep.subr.bf16.mxu0 0
    %4741 = vmatpush1.bf16.xpose.msra.mxu0 0
    %4742 = vmatprep.subr.bf16.mxu0 0
    %4743 = vmatpush1.bf16.xpose.msra.mxu0 0
    %4744 = vmatprep.subr.bf16.mxu0 0
    %4745 = vmatpush1.bf16.xpose.msra.mxu0 0
    %4746 = vmatprep.subr.bf16.mxu0 0
    %4747 = vmatpush1.bf16.xpose.msra.mxu0 0
    %4748 = vmatprep.mubr.bf16.mxu0 0
    %4749 = vmatmul.mubr.bf16.gmra.mrb[0].mxu0 %v4705
    %v4750 = vpop.f32.mrb[0].mxu0
    %v4751 = vadd.f32 %v25, %v4750
    %v4752 = vpop.f32.mrb[0].mxu0
    %v4753 = vpop.f32.mrb[0].mxu0
    %v4754 = vadd.f32 %v26, %v4753
    %v4755 = vpop.f32.mrb[0].mxu0
    %4756 = vmatprep.mubr.bf16.mxu0 0
    %4757 = vmatmul.mubr.bf16.gmra.mrb[0].mxu0 %v4708
    %v4758 = vpop.f32.mrb[0].mxu0
    %v4759 = vadd.f32 %v27, %v4758
    %v4760 = vpop.f32.mrb[0].mxu0
    %v4761 = vpop.f32.mrb[0].mxu0
    %v4762 = vpop.f32.mrb[0].mxu0
    %4763 = vdwg.mxu0
    %v4765 = vsel %vm913, %v4690, 0
    %v4768 = vsel %vm913, %v4691, 0
    %v4771 = vsel %vm913, %v4698, 0
    %v4774 = vsel %vm913, %v4699, 0
    %4776 = vmatprep.subr.bf16.mxu0 0
    %4777 = vmatpush1.bf16.xpose.msra.mxu0 %v4771
    %4778 = vmatprep.subr.bf16.mxu0 0
    %4779 = vmatpush1.bf16.xpose.msra.mxu0 %v4774
    %4780 = vmatprep.subr.bf16.mxu0 0
    %4781 = vmatpush1.bf16.xpose.msra.mxu0 0
    %4782 = vmatprep.subr.bf16.mxu0 0
    %4783 = vmatpush1.bf16.xpose.msra.mxu0 0
    %4784 = vmatprep.subr.bf16.mxu0 0
    %4785 = vmatpush1.bf16.xpose.msra.mxu0 0
    %4786 = vmatprep.subr.bf16.mxu0 0
    %4787 = vmatpush1.bf16.xpose.msra.mxu0 0
    %4788 = vmatprep.subr.bf16.mxu0 0
    %4789 = vmatpush1.bf16.xpose.msra.mxu0 0
    %4790 = vmatprep.subr.bf16.mxu0 0
    %4791 = vmatpush1.bf16.xpose.msra.mxu0 0
    %4792 = vmatprep.subr.bf16.mxu0 0
    %4793 = vmatpush1.bf16.xpose.msra.mxu0 0
    %4794 = vmatprep.subr.bf16.mxu0 0
    %4795 = vmatpush1.bf16.xpose.msra.mxu0 0
    %4796 = vmatprep.subr.bf16.mxu0 0
    %4797 = vmatpush1.bf16.xpose.msra.mxu0 0
    %4798 = vmatprep.subr.bf16.mxu0 0
    %4799 = vmatpush1.bf16.xpose.msra.mxu0 0
    %4800 = vmatprep.subr.bf16.mxu0 0
    %4801 = vmatpush1.bf16.xpose.msra.mxu0 0
    %4802 = vmatprep.subr.bf16.mxu0 0
    %4803 = vmatpush1.bf16.xpose.msra.mxu0 0
    %4804 = vmatprep.subr.bf16.mxu0 0
    %4805 = vmatpush1.bf16.xpose.msra.mxu0 0
    %4806 = vmatprep.subr.bf16.mxu0 0
    %4807 = vmatpush1.bf16.xpose.msra.mxu0 0
    %4808 = vmatprep.mubr.bf16.mxu0 0
    %4809 = vmatmul.mubr.bf16.gmra.mrb[0].mxu0 %v4765
    %v4810 = vpop.f32.mrb[0].mxu0
    %v4811 = vadd.f32 %v25, %v4810
    %v4812 = vpop.f32.mrb[0].mxu0
    %v4813 = vpop.f32.mrb[0].mxu0
    %v4814 = vadd.f32 %v26, %v4813
    %v4815 = vpop.f32.mrb[0].mxu0
    %4816 = vmatprep.mubr.bf16.mxu0 0
    %4817 = vmatmul.mubr.bf16.gmra.mrb[0].mxu0 %v4768
    %v4818 = vpop.f32.mrb[0].mxu0
    %v4819 = vadd.f32 %v27, %v4818
    %v4820 = vpop.f32.mrb[0].mxu0
    %v4821 = vpop.f32.mrb[0].mxu0
    %v4822 = vpop.f32.mrb[0].mxu0
    %4823 = vdwg.mxu0
    %v4825 = vsel %vm913, %v4692, 0
    %v4828 = vsel %vm913, %v4693, 0
    %v4831 = vsel %vm913, %v4700, 0
    %v4834 = vsel %vm913, %v4701, 0
    %4836 = vmatprep.subr.bf16.mxu0 0
    %4837 = vmatpush1.bf16.xpose.msra.mxu0 %v4831
    %4838 = vmatprep.subr.bf16.mxu0 0
    %4839 = vmatpush1.bf16.xpose.msra.mxu0 %v4834
    %4840 = vmatprep.subr.bf16.mxu0 0
    %4841 = vmatpush1.bf16.xpose.msra.mxu0 0
    %4842 = vmatprep.subr.bf16.mxu0 0
    %4843 = vmatpush1.bf16.xpose.msra.mxu0 0
    %4844 = vmatprep.subr.bf16.mxu0 0
    %4845 = vmatpush1.bf16.xpose.msra.mxu0 0
    %4846 = vmatprep.subr.bf16.mxu0 0
    %4847 = vmatpush1.bf16.xpose.msra.mxu0 0
    %4848 = vmatprep.subr.bf16.mxu0 0
    %4849 = vmatpush1.bf16.xpose.msra.mxu0 0
    %4850 = vmatprep.subr.bf16.mxu0 0
    %4851 = vmatpush1.bf16.xpose.msra.mxu0 0
    %4852 = vmatprep.subr.bf16.mxu0 0
    %4853 = vmatpush1.bf16.xpose.msra.mxu0 0
    %4854 = vmatprep.subr.bf16.mxu0 0
    %4855 = vmatpush1.bf16.xpose.msra.mxu0 0
    %4856 = vmatprep.subr.bf16.mxu0 0
    %4857 = vmatpush1.bf16.xpose.msra.mxu0 0
    %4858 = vmatprep.subr.bf16.mxu0 0
    %4859 = vmatpush1.bf16.xpose.msra.mxu0 0
    %4860 = vmatprep.subr.bf16.mxu0 0
    %4861 = vmatpush1.bf16.xpose.msra.mxu0 0
    %4862 = vmatprep.subr.bf16.mxu0 0
    %4863 = vmatpush1.bf16.xpose.msra.mxu0 0
    %4864 = vmatprep.subr.bf16.mxu0 0
    %4865 = vmatpush1.bf16.xpose.msra.mxu0 0
    %4866 = vmatprep.subr.bf16.mxu0 0
    %4867 = vmatpush1.bf16.xpose.msra.mxu0 0
    %4868 = vmatprep.mubr.bf16.mxu0 0
    %4869 = vmatmul.mubr.bf16.gmra.mrb[0].mxu0 %v4825
    %v4870 = vpop.f32.mrb[0].mxu0
    %v4871 = vadd.f32 %v25, %v4870
    %v4872 = vpop.f32.mrb[0].mxu0
    %v4873 = vpop.f32.mrb[0].mxu0
    %v4874 = vadd.f32 %v26, %v4873
    %v4875 = vpop.f32.mrb[0].mxu0
    %4876 = vmatprep.mubr.bf16.mxu0 0
    %4877 = vmatmul.mubr.bf16.gmra.mrb[0].mxu0 %v4828
    %v4878 = vpop.f32.mrb[0].mxu0
    %v4879 = vadd.f32 %v27, %v4878
    %v4880 = vpop.f32.mrb[0].mxu0
    %v4881 = vpop.f32.mrb[0].mxu0
    %v4882 = vpop.f32.mrb[0].mxu0
    %4883 = vdwg.mxu0
    %v4885 = vsel %vm913, %v4694, 0
    %v4888 = vsel %vm913, %v4695, 0
    %v4891 = vsel %vm913, %v4702, 0
    %v4894 = vsel %vm913, %v4703, 0
    %4896 = vmatprep.subr.bf16.mxu0 0
    %4897 = vmatpush1.bf16.xpose.msra.mxu0 %v4891
    %4898 = vmatprep.subr.bf16.mxu0 0
    %4899 = vmatpush1.bf16.xpose.msra.mxu0 %v4894
    %4900 = vmatprep.subr.bf16.mxu0 0
    %4901 = vmatpush1.bf16.xpose.msra.mxu0 0
    %4902 = vmatprep.subr.bf16.mxu0 0
    %4903 = vmatpush1.bf16.xpose.msra.mxu0 0
    %4904 = vmatprep.subr.bf16.mxu0 0
    %4905 = vmatpush1.bf16.xpose.msra.mxu0 0
    %4906 = vmatprep.subr.bf16.mxu0 0
    %4907 = vmatpush1.bf16.xpose.msra.mxu0 0
    %4908 = vmatprep.subr.bf16.mxu0 0
    %4909 = vmatpush1.bf16.xpose.msra.mxu0 0
    %4910 = vmatprep.subr.bf16.mxu0 0
    %4911 = vmatpush1.bf16.xpose.msra.mxu0 0
    %4912 = vmatprep.subr.bf16.mxu0 0
    %4913 = vmatpush1.bf16.xpose.msra.mxu0 0
    %4914 = vmatprep.subr.bf16.mxu0 0
    %4915 = vmatpush1.bf16.xpose.msra.mxu0 0
    %4916 = vmatprep.subr.bf16.mxu0 0
    %4917 = vmatpush1.bf16.xpose.msra.mxu0 0
    %4918 = vmatprep.subr.bf16.mxu0 0
    %4919 = vmatpush1.bf16.xpose.msra.mxu0 0
    %4920 = vmatprep.subr.bf16.mxu0 0
    %4921 = vmatpush1.bf16.xpose.msra.mxu0 0
    %4922 = vmatprep.subr.bf16.mxu0 0
    %4923 = vmatpush1.bf16.xpose.msra.mxu0 0
    %4924 = vmatprep.subr.bf16.mxu0 0
    %4925 = vmatpush1.bf16.xpose.msra.mxu0 0
    %4926 = vmatprep.subr.bf16.mxu0 0
    %4927 = vmatpush1.bf16.xpose.msra.mxu0 0
    %4928 = vmatprep.mubr.bf16.mxu0 0
    %4929 = vmatmul.mubr.bf16.gmra.mrb[0].mxu0 %v4885
    %v4930 = vpop.f32.mrb[0].mxu0
    %v4931 = vadd.f32 %v25, %v4930
    %v4932 = vpop.f32.mrb[0].mxu0
    %v4933 = vpop.f32.mrb[0].mxu0
    %v4934 = vadd.f32 %v26, %v4933
    %v4935 = vpop.f32.mrb[0].mxu0
    %4936 = vmatprep.mubr.bf16.mxu0 0
    %4937 = vmatmul.mubr.bf16.gmra.mrb[0].mxu0 %v4888
    %v4938 = vpop.f32.mrb[0].mxu0
    %v4939 = vadd.f32 %v27, %v4938
    %v4940 = vpop.f32.mrb[0].mxu0
    %v4941 = vpop.f32.mrb[0].mxu0
    %v4942 = vpop.f32.mrb[0].mxu0
    %4943 = vdwg.mxu0
    %v4944 = vsel %vm1154, %v4751, -inf
    %4945 = vmax.xlane.f32.xlu0 %v4944
    %v4946 = vpop.xlane.xlu0 %4945
    %v4947 = vsel %vm1154, %v4754, -inf
    %4948 = vmax.xlane.f32.xlu0 %v4947
    %v4949 = vpop.xlane.xlu0 %4948
    %v4950 = vsel %vm1161, %v4759, -inf
    %4951 = vmax.xlane.f32.xlu0 %v4950
    %v4952 = vpop.xlane.xlu0 %4951
    %v4953 = vsel %vm1154, %v4811, -inf
    %4954 = vmax.xlane.f32.xlu0 %v4953
    %v4955 = vpop.xlane.xlu0 %4954
    %v4956 = vsel %vm1154, %v4814, -inf
    %4957 = vmax.xlane.f32.xlu0 %v4956
    %v4958 = vpop.xlane.xlu0 %4957
    %v4959 = vsel %vm1161, %v4819, -inf
    %4960 = vmax.xlane.f32.xlu0 %v4959
    %v4961 = vpop.xlane.xlu0 %4960
    %v4962 = vsel %vm1154, %v4871, -inf
    %4963 = vmax.xlane.f32.xlu0 %v4962
    %v4964 = vpop.xlane.xlu0 %4963
    %v4965 = vsel %vm1154, %v4874, -inf
    %4966 = vmax.xlane.f32.xlu0 %v4965
    %v4967 = vpop.xlane.xlu0 %4966
    %v4968 = vsel %vm1161, %v4879, -inf
    %4969 = vmax.xlane.f32.xlu0 %v4968
    %v4970 = vpop.xlane.xlu0 %4969
    %v4971 = vsel %vm1154, %v4931, -inf
    %4972 = vmax.xlane.f32.xlu0 %v4971
    %v4973 = vpop.xlane.xlu0 %4972
    %v4974 = vsel %vm1154, %v4934, -inf
    %4975 = vmax.xlane.f32.xlu0 %v4974
    %v4976 = vpop.xlane.xlu0 %4975
    %v4977 = vsel %vm1161, %v4939, -inf
    %4978 = vmax.xlane.f32.xlu0 %v4977
    %v4979 = vpop.xlane.xlu0 %4978
    %v4980 = vsub.f32 %v4751, %v4946
    %v4981 = vsub.f32 %v4754, %v4949
    %v4982 = vsub.f32 %v4759, %v4952
    %v4983 = vsub.f32 %v4811, %v4955
    %v4984 = vsub.f32 %v4814, %v4958
    %v4985 = vsub.f32 %v4819, %v4961
    %v4986 = vsub.f32 %v4871, %v4964
    %v4987 = vsub.f32 %v4874, %v4967
    %v4988 = vsub.f32 %v4879, %v4970
    %v4989 = vsub.f32 %v4931, %v4973
    %v4990 = vsub.f32 %v4934, %v4976
    %v4991 = vsub.f32 %v4939, %v4979
    %v4992 = vmul.f32 %v4980, 1.442695
    %v4993 = vpow.pop %v4992
    %v4994 = vmul.f32 %v4981, 1.442695
    %v4995 = vpow.pop %v4994
    %v4996 = vmul.f32 %v4982, 1.442695
    %v4997 = vpow.pop %v4996
    %v4998 = vmul.f32 %v4983, 1.442695
    %v4999 = vpow.pop %v4998
    %v5000 = vmul.f32 %v4984, 1.442695
    %v5001 = vpow.pop %v5000
    %v5002 = vmul.f32 %v4985, 1.442695
    %v5003 = vpow.pop %v5002
    %v5004 = vmul.f32 %v4986, 1.442695
    %v5005 = vpow.pop %v5004
    %v5006 = vmul.f32 %v4987, 1.442695
    %v5007 = vpow.pop %v5006
    %v5008 = vmul.f32 %v4988, 1.442695
    %v5009 = vpow.pop %v5008
    %v5010 = vmul.f32 %v4989, 1.442695
    %v5011 = vpow.pop %v5010
    %v5012 = vmul.f32 %v4990, 1.442695
    %v5013 = vpow.pop %v5012
    %v5014 = vmul.f32 %v4991, 1.442695
    %v5015 = vpow.pop %v5014
    %v5016 = vsel %vm1154, %v4993, 0.0
    %5017 = vadd.xlane.f32.xlu0 %v5016
    %v5018 = vpop.xlane.xlu0 %5017
    %v5019 = vsel %vm1154, %v4995, 0.0
    %5020 = vadd.xlane.f32.xlu0 %v5019
    %v5021 = vpop.xlane.xlu0 %5020
    %v5022 = vsel %vm1161, %v4997, 0.0
    %5023 = vadd.xlane.f32.xlu0 %v5022
    %v5024 = vpop.xlane.xlu0 %5023
    %v5025 = vsel %vm1154, %v4999, 0.0
    %5026 = vadd.xlane.f32.xlu0 %v5025
    %v5027 = vpop.xlane.xlu0 %5026
    %v5028 = vsel %vm1154, %v5001, 0.0
    %5029 = vadd.xlane.f32.xlu0 %v5028
    %v5030 = vpop.xlane.xlu0 %5029
    %v5031 = vsel %vm1161, %v5003, 0.0
    %5032 = vadd.xlane.f32.xlu0 %v5031
    %v5033 = vpop.xlane.xlu0 %5032
    %v5034 = vsel %vm1154, %v5005, 0.0
    %5035 = vadd.xlane.f32.xlu0 %v5034
    %v5036 = vpop.xlane.xlu0 %5035
    %v5037 = vsel %vm1154, %v5007, 0.0
    %5038 = vadd.xlane.f32.xlu0 %v5037
    %v5039 = vpop.xlane.xlu0 %5038
    %v5040 = vsel %vm1161, %v5009, 0.0
    %5041 = vadd.xlane.f32.xlu0 %v5040
    %v5042 = vpop.xlane.xlu0 %5041
    %v5043 = vsel %vm1154, %v5011, 0.0
    %5044 = vadd.xlane.f32.xlu0 %v5043
    %v5045 = vpop.xlane.xlu0 %5044
    %v5046 = vsel %vm1154, %v5013, 0.0
    %5047 = vadd.xlane.f32.xlu0 %v5046
    %v5048 = vpop.xlane.xlu0 %5047
    %v5049 = vsel %vm1161, %v5015, 0.0
    %5050 = vadd.xlane.f32.xlu0 %v5049
    %v5051 = vpop.xlane.xlu0 %5050
    %v5052 = vrcp.pop %v5018
    %v5053 = vrcp.pop %v5021
    %v5054 = vrcp.pop %v5024
    %v5055 = vrcp.pop %v5027
    %v5056 = vrcp.pop %v5030
    %v5057 = vrcp.pop %v5033
    %v5058 = vrcp.pop %v5036
    %v5059 = vrcp.pop %v5039
    %v5060 = vrcp.pop %v5042
    %v5061 = vrcp.pop %v5045
    %v5062 = vrcp.pop %v5048
    %v5063 = vrcp.pop %v5051
    %v5064 = vmul.f32 %v4993, %v5052
    %v5065 = vmul.f32 %v4995, %v5053
    %v5066 = vmul.f32 %v4997, %v5054
    %v5067 = vmul.f32 %v4999, %v5055
    %v5068 = vmul.f32 %v5001, %v5056
    %v5069 = vmul.f32 %v5003, %v5057
    %v5070 = vmul.f32 %v5005, %v5058
    %v5071 = vmul.f32 %v5007, %v5059
    %v5072 = vmul.f32 %v5009, %v5060
    %v5073 = vmul.f32 %v5011, %v5061
    %v5074 = vmul.f32 %v5013, %v5062
    %v5075 = vmul.f32 %v5015, %v5063
    %v5076 = vpack.c.bf16 %v5065, %v5064
    %v5077 = vpack.c.bf16 %v5066, %v5066
    %v5078 = vpack.c.bf16 %v5068, %v5067
    %v5079 = vpack.c.bf16 %v5069, %v5069
    %v5080 = vpack.c.bf16 %v5071, %v5070
    %v5081 = vpack.c.bf16 %v5072, %v5072
    %v5082 = vpack.c.bf16 %v5074, %v5073
    %v5083 = vpack.c.bf16 %v5075, %v5075
    %v5084 = vpack.c.bf16 %v4525, %v4522
    %v5085 = vpack.c.bf16 %v4530, %v4530
    %v5086 = vpack.c.bf16 %v4576, %v4573
    %v5087 = vpack.c.bf16 %v4581, %v4581
    %v5088 = vpack.c.bf16 %v4627, %v4624
    %v5089 = vpack.c.bf16 %v4632, %v4632
    %v5090 = vpack.c.bf16 %v4678, %v4675
    %v5091 = vpack.c.bf16 %v4683, %v4683
    %v5093 = vsel %vm1154, %v5076, 0
    %v5096 = vsel %vm1154, %v5077, 0
    %v5099 = vsel %vm1310, %v5085, 0
    %5101 = vmatprep.subr.bf16.mxu0 0
    %5102 = vmatpush1.bf16.msra.mxu0 %v5084
    %5103 = vmatprep.subr.bf16.mxu0 0
    %5104 = vmatpush1.bf16.msra.mxu0 %v5099
    %5105 = vmatprep.subr.bf16.mxu0 0
    %5106 = vmatpush1.bf16.msra.mxu0 0
    %5107 = vmatprep.subr.bf16.mxu0 0
    %5108 = vmatpush1.bf16.msra.mxu0 0
    %5109 = vmatprep.subr.bf16.mxu0 0
    %5110 = vmatpush1.bf16.msra.mxu0 0
    %5111 = vmatprep.subr.bf16.mxu0 0
    %5112 = vmatpush1.bf16.msra.mxu0 0
    %5113 = vmatprep.subr.bf16.mxu0 0
    %5114 = vmatpush1.bf16.msra.mxu0 0
    %5115 = vmatprep.subr.bf16.mxu0 0
    %5116 = vmatpush1.bf16.msra.mxu0 0
    %5117 = vmatprep.subr.bf16.mxu0 0
    %5118 = vmatpush1.bf16.msra.mxu0 0
    %5119 = vmatprep.subr.bf16.mxu0 0
    %5120 = vmatpush1.bf16.msra.mxu0 0
    %5121 = vmatprep.subr.bf16.mxu0 0
    %5122 = vmatpush1.bf16.msra.mxu0 0
    %5123 = vmatprep.subr.bf16.mxu0 0
    %5124 = vmatpush1.bf16.msra.mxu0 0
    %5125 = vmatprep.subr.bf16.mxu0 0
    %5126 = vmatpush1.bf16.msra.mxu0 0
    %5127 = vmatprep.subr.bf16.mxu0 0
    %5128 = vmatpush1.bf16.msra.mxu0 0
    %5129 = vmatprep.subr.bf16.mxu0 0
    %5130 = vmatpush1.bf16.msra.mxu0 0
    %5131 = vmatprep.subr.bf16.mxu0 0
    %5132 = vmatpush1.bf16.msra.mxu0 0
    %5133 = vmatprep.mubr.bf16.mxu0 0
    %5134 = vmatmul.mubr.bf16.gmra.mrb[0].mxu0 %v5093
    %v5135 = vpop.f32.mrb[0].mxu0
    %v5136 = vadd.f32 0.0, %v5135
    %v5137 = vpop.f32.mrb[0].mxu0
    %v5138 = vpop.f32.mrb[0].mxu0
    %v5139 = vadd.f32 0.0, %v5138
    %v5140 = vpop.f32.mrb[0].mxu0
    %5141 = vmatprep.mubr.bf16.mxu0 0
    %5142 = vmatmul.mubr.bf16.gmra.mrb[0].mxu0 %v5096
    %v5143 = vpop.f32.mrb[0].mxu0
    %v5144 = vadd.f32 0.0, %v5143
    %v5145 = vpop.f32.mrb[0].mxu0
    %v5146 = vpop.f32.mrb[0].mxu0
    %v5147 = vpop.f32.mrb[0].mxu0
    %5148 = vdwg.mxu0
    %v5150 = vsel %vm1154, %v5078, 0
    %v5153 = vsel %vm1154, %v5079, 0
    %v5156 = vsel %vm1310, %v5087, 0
    %5158 = vmatprep.subr.bf16.mxu0 0
    %5159 = vmatpush1.bf16.msra.mxu0 %v5086
    %5160 = vmatprep.subr.bf16.mxu0 0
    %5161 = vmatpush1.bf16.msra.mxu0 %v5156
    %5162 = vmatprep.subr.bf16.mxu0 0
    %5163 = vmatpush1.bf16.msra.mxu0 0
    %5164 = vmatprep.subr.bf16.mxu0 0
    %5165 = vmatpush1.bf16.msra.mxu0 0
    %5166 = vmatprep.subr.bf16.mxu0 0
    %5167 = vmatpush1.bf16.msra.mxu0 0
    %5168 = vmatprep.subr.bf16.mxu0 0
    %5169 = vmatpush1.bf16.msra.mxu0 0
    %5170 = vmatprep.subr.bf16.mxu0 0
    %5171 = vmatpush1.bf16.msra.mxu0 0
    %5172 = vmatprep.subr.bf16.mxu0 0
    %5173 = vmatpush1.bf16.msra.mxu0 0
    %5174 = vmatprep.subr.bf16.mxu0 0
    %5175 = vmatpush1.bf16.msra.mxu0 0
    %5176 = vmatprep.subr.bf16.mxu0 0
    %5177 = vmatpush1.bf16.msra.mxu0 0
    %5178 = vmatprep.subr.bf16.mxu0 0
    %5179 = vmatpush1.bf16.msra.mxu0 0
    %5180 = vmatprep.subr.bf16.mxu0 0
    %5181 = vmatpush1.bf16.msra.mxu0 0
    %5182 = vmatprep.subr.bf16.mxu0 0
    %5183 = vmatpush1.bf16.msra.mxu0 0
    %5184 = vmatprep.subr.bf16.mxu0 0
    %5185 = vmatpush1.bf16.msra.mxu0 0
    %5186 = vmatprep.subr.bf16.mxu0 0
    %5187 = vmatpush1.bf16.msra.mxu0 0
    %5188 = vmatprep.subr.bf16.mxu0 0
    %5189 = vmatpush1.bf16.msra.mxu0 0
    %5190 = vmatprep.mubr.bf16.mxu0 0
    %5191 = vmatmul.mubr.bf16.gmra.mrb[0].mxu0 %v5150
    %v5192 = vpop.f32.mrb[0].mxu0
    %v5193 = vadd.f32 0.0, %v5192
    %v5194 = vpop.f32.mrb[0].mxu0
    %v5195 = vpop.f32.mrb[0].mxu0
    %v5196 = vadd.f32 0.0, %v5195
    %v5197 = vpop.f32.mrb[0].mxu0
    %5198 = vmatprep.mubr.bf16.mxu0 0
    %5199 = vmatmul.mubr.bf16.gmra.mrb[0].mxu0 %v5153
    %v5200 = vpop.f32.mrb[0].mxu0
    %v5201 = vadd.f32 0.0, %v5200
    %v5202 = vpop.f32.mrb[0].mxu0
    %v5203 = vpop.f32.mrb[0].mxu0
    %v5204 = vpop.f32.mrb[0].mxu0
    %5205 = vdwg.mxu0
    %v5207 = vsel %vm1154, %v5080, 0
    %v5210 = vsel %vm1154, %v5081, 0
    %v5213 = vsel %vm1310, %v5089, 0
    %5215 = vmatprep.subr.bf16.mxu0 0
    %5216 = vmatpush1.bf16.msra.mxu0 %v5088
    %5217 = vmatprep.subr.bf16.mxu0 0
    %5218 = vmatpush1.bf16.msra.mxu0 %v5213
    %5219 = vmatprep.subr.bf16.mxu0 0
    %5220 = vmatpush1.bf16.msra.mxu0 0
    %5221 = vmatprep.subr.bf16.mxu0 0
    %5222 = vmatpush1.bf16.msra.mxu0 0
    %5223 = vmatprep.subr.bf16.mxu0 0
    %5224 = vmatpush1.bf16.msra.mxu0 0
    %5225 = vmatprep.subr.bf16.mxu0 0
    %5226 = vmatpush1.bf16.msra.mxu0 0
    %5227 = vmatprep.subr.bf16.mxu0 0
    %5228 = vmatpush1.bf16.msra.mxu0 0
    %5229 = vmatprep.subr.bf16.mxu0 0
    %5230 = vmatpush1.bf16.msra.mxu0 0
    %5231 = vmatprep.subr.bf16.mxu0 0
    %5232 = vmatpush1.bf16.msra.mxu0 0
    %5233 = vmatprep.subr.bf16.mxu0 0
    %5234 = vmatpush1.bf16.msra.mxu0 0
    %5235 = vmatprep.subr.bf16.mxu0 0
    %5236 = vmatpush1.bf16.msra.mxu0 0
    %5237 = vmatprep.subr.bf16.mxu0 0
    %5238 = vmatpush1.bf16.msra.mxu0 0
    %5239 = vmatprep.subr.bf16.mxu0 0
    %5240 = vmatpush1.bf16.msra.mxu0 0
    %5241 = vmatprep.subr.bf16.mxu0 0
    %5242 = vmatpush1.bf16.msra.mxu0 0
    %5243 = vmatprep.subr.bf16.mxu0 0
    %5244 = vmatpush1.bf16.msra.mxu0 0
    %5245 = vmatprep.subr.bf16.mxu0 0
    %5246 = vmatpush1.bf16.msra.mxu0 0
    %5247 = vmatprep.mubr.bf16.mxu0 0
    %5248 = vmatmul.mubr.bf16.gmra.mrb[0].mxu0 %v5207
    %v5249 = vpop.f32.mrb[0].mxu0
    %v5250 = vadd.f32 0.0, %v5249
    %v5251 = vpop.f32.mrb[0].mxu0
    %v5252 = vpop.f32.mrb[0].mxu0
    %v5253 = vadd.f32 0.0, %v5252
    %v5254 = vpop.f32.mrb[0].mxu0
    %5255 = vmatprep.mubr.bf16.mxu0 0
    %5256 = vmatmul.mubr.bf16.gmra.mrb[0].mxu0 %v5210
    %v5257 = vpop.f32.mrb[0].mxu0
    %v5258 = vadd.f32 0.0, %v5257
    %v5259 = vpop.f32.mrb[0].mxu0
    %v5260 = vpop.f32.mrb[0].mxu0
    %v5261 = vpop.f32.mrb[0].mxu0
    %5262 = vdwg.mxu0
    %v5264 = vsel %vm1154, %v5082, 0
    %v5267 = vsel %vm1154, %v5083, 0
    %v5270 = vsel %vm1310, %v5091, 0
    %5272 = vmatprep.subr.bf16.mxu0 0
    %5273 = vmatpush1.bf16.msra.mxu0 %v5090
    %5274 = vmatprep.subr.bf16.mxu0 0
    %5275 = vmatpush1.bf16.msra.mxu0 %v5270
    %5276 = vmatprep.subr.bf16.mxu0 0
    %5277 = vmatpush1.bf16.msra.mxu0 0
    %5278 = vmatprep.subr.bf16.mxu0 0
    %5279 = vmatpush1.bf16.msra.mxu0 0
    %5280 = vmatprep.subr.bf16.mxu0 0
    %5281 = vmatpush1.bf16.msra.mxu0 0
    %5282 = vmatprep.subr.bf16.mxu0 0
    %5283 = vmatpush1.bf16.msra.mxu0 0
    %5284 = vmatprep.subr.bf16.mxu0 0
    %5285 = vmatpush1.bf16.msra.mxu0 0
    %5286 = vmatprep.subr.bf16.mxu0 0
    %5287 = vmatpush1.bf16.msra.mxu0 0
    %5288 = vmatprep.subr.bf16.mxu0 0
    %5289 = vmatpush1.bf16.msra.mxu0 0
    %5290 = vmatprep.subr.bf16.mxu0 0
    %5291 = vmatpush1.bf16.msra.mxu0 0
    %5292 = vmatprep.subr.bf16.mxu0 0
    %5293 = vmatpush1.bf16.msra.mxu0 0
    %5294 = vmatprep.subr.bf16.mxu0 0
    %5295 = vmatpush1.bf16.msra.mxu0 0
    %5296 = vmatprep.subr.bf16.mxu0 0
    %5297 = vmatpush1.bf16.msra.mxu0 0
    %5298 = vmatprep.subr.bf16.mxu0 0
    %5299 = vmatpush1.bf16.msra.mxu0 0
    %5300 = vmatprep.subr.bf16.mxu0 0
    %5301 = vmatpush1.bf16.msra.mxu0 0
    %5302 = vmatprep.subr.bf16.mxu0 0
    %5303 = vmatpush1.bf16.msra.mxu0 0
    %5304 = vmatprep.mubr.bf16.mxu0 0
    %5305 = vmatmul.mubr.bf16.gmra.mrb[0].mxu0 %v5264
    %v5306 = vpop.f32.mrb[0].mxu0
    %v5307 = vadd.f32 0.0, %v5306
    %v5308 = vpop.f32.mrb[0].mxu0
    %v5309 = vpop.f32.mrb[0].mxu0
    %v5310 = vadd.f32 0.0, %v5309
    %v5311 = vpop.f32.mrb[0].mxu0
    %5312 = vmatprep.mubr.bf16.mxu0 0
    %5313 = vmatmul.mubr.bf16.gmra.mrb[0].mxu0 %v5267
    %v5314 = vpop.f32.mrb[0].mxu0
    %v5315 = vadd.f32 0.0, %v5314
    %v5316 = vpop.f32.mrb[0].mxu0
    %v5317 = vpop.f32.mrb[0].mxu0
    %v5318 = vpop.f32.mrb[0].mxu0
    %5319 = vdwg.mxu0
    %v5320 = vpack.c.bf16 %v5139, %v5136
    %v5321 = vpack.c.bf16 %v5144, %v5144
    %v5322 = vpack.c.bf16 %v5196, %v5193
    %v5323 = vpack.c.bf16 %v5201, %v5201
    %v5324 = vpack.c.bf16 %v5253, %v5250
    %v5325 = vpack.c.bf16 %v5258, %v5258
    %v5326 = vpack.c.bf16 %v5310, %v5307
    %v5327 = vpack.c.bf16 %v5315, %v5315
    %s5328 = scalar_lea.vmem %s1, 176
    %v5329 = vld [vmem:[%s5328] sm:$0xf]
    %v5330 = vld [vmem:[%s5328 + $0x4] sm:$0xf]
    %v5331 = vld [vmem:[%s5328 + $0x8] sm:$0xf]
    %v5332 = vld [vmem:[%s5328 + $0xc] sm:$0xf]
    %v5334 = vsel %vm913, %v5320, 0
    %v5337 = vsel %vm913, %v5321, 0
    %v5340 = vsel %vm1552, %v5329, 0
    %5342 = vmatprep.subr.bf16.mxu0 0
    %5343 = vmatpush1.bf16.msra.mxu0 %v5340
    %5344 = vmatprep.subr.bf16.mxu0 0
    %5345 = vmatpush1.bf16.msra.mxu0 0
    %5346 = vmatprep.subr.bf16.mxu0 0
    %5347 = vmatpush1.bf16.msra.mxu0 0
    %5348 = vmatprep.subr.bf16.mxu0 0
    %5349 = vmatpush1.bf16.msra.mxu0 0
    %5350 = vmatprep.subr.bf16.mxu0 0
    %5351 = vmatpush1.bf16.msra.mxu0 0
    %5352 = vmatprep.subr.bf16.mxu0 0
    %5353 = vmatpush1.bf16.msra.mxu0 0
    %5354 = vmatprep.subr.bf16.mxu0 0
    %5355 = vmatpush1.bf16.msra.mxu0 0
    %5356 = vmatprep.subr.bf16.mxu0 0
    %5357 = vmatpush1.bf16.msra.mxu0 0
    %5358 = vmatprep.subr.bf16.mxu0 0
    %5359 = vmatpush1.bf16.msra.mxu0 0
    %5360 = vmatprep.subr.bf16.mxu0 0
    %5361 = vmatpush1.bf16.msra.mxu0 0
    %5362 = vmatprep.subr.bf16.mxu0 0
    %5363 = vmatpush1.bf16.msra.mxu0 0
    %5364 = vmatprep.subr.bf16.mxu0 0
    %5365 = vmatpush1.bf16.msra.mxu0 0
    %5366 = vmatprep.subr.bf16.mxu0 0
    %5367 = vmatpush1.bf16.msra.mxu0 0
    %5368 = vmatprep.subr.bf16.mxu0 0
    %5369 = vmatpush1.bf16.msra.mxu0 0
    %5370 = vmatprep.subr.bf16.mxu0 0
    %5371 = vmatpush1.bf16.msra.mxu0 0
    %5372 = vmatprep.subr.bf16.mxu0 0
    %5373 = vmatpush1.bf16.msra.mxu0 0
    %5374 = vmatprep.mubr.bf16.mxu0 0
    %5375 = vmatmul.mubr.bf16.gmra.mrb[0].mxu0 %v5334
    %v5376 = vpop.f32.mrb[0].mxu0
    %v5377 = vadd.f32 0.0, %v5376
    %v5378 = vpop.f32.mrb[0].mxu0
    %v5379 = vpop.f32.mrb[0].mxu0
    %v5380 = vadd.f32 0.0, %v5379
    %v5381 = vpop.f32.mrb[0].mxu0
    %5382 = vmatprep.mubr.bf16.mxu0 0
    %5383 = vmatmul.mubr.bf16.gmra.mrb[0].mxu0 %v5337
    %v5384 = vpop.f32.mrb[0].mxu0
    %v5385 = vadd.f32 0.0, %v5384
    %v5386 = vpop.f32.mrb[0].mxu0
    %v5387 = vpop.f32.mrb[0].mxu0
    %v5388 = vpop.f32.mrb[0].mxu0
    %5389 = vdwg.mxu0
    %v5391 = vsel %vm913, %v5322, 0
    %v5394 = vsel %vm913, %v5323, 0
    %v5397 = vsel %vm1552, %v5330, 0
    %5399 = vmatprep.subr.bf16.mxu0 0
    %5400 = vmatpush1.bf16.msra.mxu0 %v5397
    %5401 = vmatprep.subr.bf16.mxu0 0
    %5402 = vmatpush1.bf16.msra.mxu0 0
    %5403 = vmatprep.subr.bf16.mxu0 0
    %5404 = vmatpush1.bf16.msra.mxu0 0
    %5405 = vmatprep.subr.bf16.mxu0 0
    %5406 = vmatpush1.bf16.msra.mxu0 0
    %5407 = vmatprep.subr.bf16.mxu0 0
    %5408 = vmatpush1.bf16.msra.mxu0 0
    %5409 = vmatprep.subr.bf16.mxu0 0
    %5410 = vmatpush1.bf16.msra.mxu0 0
    %5411 = vmatprep.subr.bf16.mxu0 0
    %5412 = vmatpush1.bf16.msra.mxu0 0
    %5413 = vmatprep.subr.bf16.mxu0 0
    %5414 = vmatpush1.bf16.msra.mxu0 0
    %5415 = vmatprep.subr.bf16.mxu0 0
    %5416 = vmatpush1.bf16.msra.mxu0 0
    %5417 = vmatprep.subr.bf16.mxu0 0
    %5418 = vmatpush1.bf16.msra.mxu0 0
    %5419 = vmatprep.subr.bf16.mxu0 0
    %5420 = vmatpush1.bf16.msra.mxu0 0
    %5421 = vmatprep.subr.bf16.mxu0 0
    %5422 = vmatpush1.bf16.msra.mxu0 0
    %5423 = vmatprep.subr.bf16.mxu0 0
    %5424 = vmatpush1.bf16.msra.mxu0 0
    %5425 = vmatprep.subr.bf16.mxu0 0
    %5426 = vmatpush1.bf16.msra.mxu0 0
    %5427 = vmatprep.subr.bf16.mxu0 0
    %5428 = vmatpush1.bf16.msra.mxu0 0
    %5429 = vmatprep.subr.bf16.mxu0 0
    %5430 = vmatpush1.bf16.msra.mxu0 0
    %5431 = vmatprep.mubr.bf16.mxu0 0
    %5432 = vmatmul.mubr.bf16.gmra.mrb[0].mxu0 %v5391
    %v5433 = vpop.f32.mrb[0].mxu0
    %v5434 = vadd.f32 0.0, %v5433
    %v5435 = vpop.f32.mrb[0].mxu0
    %v5436 = vpop.f32.mrb[0].mxu0
    %v5437 = vadd.f32 0.0, %v5436
    %v5438 = vpop.f32.mrb[0].mxu0
    %5439 = vmatprep.mubr.bf16.mxu0 0
    %5440 = vmatmul.mubr.bf16.gmra.mrb[0].mxu0 %v5394
    %v5441 = vpop.f32.mrb[0].mxu0
    %v5442 = vadd.f32 0.0, %v5441
    %v5443 = vpop.f32.mrb[0].mxu0
    %v5444 = vpop.f32.mrb[0].mxu0
    %v5445 = vpop.f32.mrb[0].mxu0
    %5446 = vdwg.mxu0
    %v5448 = vsel %vm913, %v5324, 0
    %v5451 = vsel %vm913, %v5325, 0
    %v5454 = vsel %vm1552, %v5331, 0
    %5456 = vmatprep.subr.bf16.mxu0 0
    %5457 = vmatpush1.bf16.msra.mxu0 %v5454
    %5458 = vmatprep.subr.bf16.mxu0 0
    %5459 = vmatpush1.bf16.msra.mxu0 0
    %5460 = vmatprep.subr.bf16.mxu0 0
    %5461 = vmatpush1.bf16.msra.mxu0 0
    %5462 = vmatprep.subr.bf16.mxu0 0
    %5463 = vmatpush1.bf16.msra.mxu0 0
    %5464 = vmatprep.subr.bf16.mxu0 0
    %5465 = vmatpush1.bf16.msra.mxu0 0
    %5466 = vmatprep.subr.bf16.mxu0 0
    %5467 = vmatpush1.bf16.msra.mxu0 0
    %5468 = vmatprep.subr.bf16.mxu0 0
    %5469 = vmatpush1.bf16.msra.mxu0 0
    %5470 = vmatprep.subr.bf16.mxu0 0
    %5471 = vmatpush1.bf16.msra.mxu0 0
    %5472 = vmatprep.subr.bf16.mxu0 0
    %5473 = vmatpush1.bf16.msra.mxu0 0
    %5474 = vmatprep.subr.bf16.mxu0 0
    %5475 = vmatpush1.bf16.msra.mxu0 0
    %5476 = vmatprep.subr.bf16.mxu0 0
    %5477 = vmatpush1.bf16.msra.mxu0 0
    %5478 = vmatprep.subr.bf16.mxu0 0
    %5479 = vmatpush1.bf16.msra.mxu0 0
    %5480 = vmatprep.subr.bf16.mxu0 0
    %5481 = vmatpush1.bf16.msra.mxu0 0
    %5482 = vmatprep.subr.bf16.mxu0 0
    %5483 = vmatpush1.bf16.msra.mxu0 0
    %5484 = vmatprep.subr.bf16.mxu0 0
    %5485 = vmatpush1.bf16.msra.mxu0 0
    %5486 = vmatprep.subr.bf16.mxu0 0
    %5487 = vmatpush1.bf16.msra.mxu0 0
    %5488 = vmatprep.mubr.bf16.mxu0 0
    %5489 = vmatmul.mubr.bf16.gmra.mrb[0].mxu0 %v5448
    %v5490 = vpop.f32.mrb[0].mxu0
    %v5491 = vadd.f32 0.0, %v5490
    %v5492 = vpop.f32.mrb[0].mxu0
    %v5493 = vpop.f32.mrb[0].mxu0
    %v5494 = vadd.f32 0.0, %v5493
    %v5495 = vpop.f32.mrb[0].mxu0
    %5496 = vmatprep.mubr.bf16.mxu0 0
    %5497 = vmatmul.mubr.bf16.gmra.mrb[0].mxu0 %v5451
    %v5498 = vpop.f32.mrb[0].mxu0
    %v5499 = vadd.f32 0.0, %v5498
    %v5500 = vpop.f32.mrb[0].mxu0
    %v5501 = vpop.f32.mrb[0].mxu0
    %v5502 = vpop.f32.mrb[0].mxu0
    %5503 = vdwg.mxu0
    %v5505 = vsel %vm913, %v5326, 0
    %v5508 = vsel %vm913, %v5327, 0
    %v5511 = vsel %vm1552, %v5332, 0
    %5513 = vmatprep.subr.bf16.mxu0 0
    %5514 = vmatpush1.bf16.msra.mxu0 %v5511
    %5515 = vmatprep.subr.bf16.mxu0 0
    %5516 = vmatpush1.bf16.msra.mxu0 0
    %5517 = vmatprep.subr.bf16.mxu0 0
    %5518 = vmatpush1.bf16.msra.mxu0 0
    %5519 = vmatprep.subr.bf16.mxu0 0
    %5520 = vmatpush1.bf16.msra.mxu0 0
    %5521 = vmatprep.subr.bf16.mxu0 0
    %5522 = vmatpush1.bf16.msra.mxu0 0
    %5523 = vmatprep.subr.bf16.mxu0 0
    %5524 = vmatpush1.bf16.msra.mxu0 0
    %5525 = vmatprep.subr.bf16.mxu0 0
    %5526 = vmatpush1.bf16.msra.mxu0 0
    %5527 = vmatprep.subr.bf16.mxu0 0
    %5528 = vmatpush1.bf16.msra.mxu0 0
    %5529 = vmatprep.subr.bf16.mxu0 0
    %5530 = vmatpush1.bf16.msra.mxu0 0
    %5531 = vmatprep.subr.bf16.mxu0 0
    %5532 = vmatpush1.bf16.msra.mxu0 0
    %5533 = vmatprep.subr.bf16.mxu0 0
    %5534 = vmatpush1.bf16.msra.mxu0 0
    %5535 = vmatprep.subr.bf16.mxu0 0
    %5536 = vmatpush1.bf16.msra.mxu0 0
    %5537 = vmatprep.subr.bf16.mxu0 0
    %5538 = vmatpush1.bf16.msra.mxu0 0
    %5539 = vmatprep.subr.bf16.mxu0 0
    %5540 = vmatpush1.bf16.msra.mxu0 0
    %5541 = vmatprep.subr.bf16.mxu0 0
    %5542 = vmatpush1.bf16.msra.mxu0 0
    %5543 = vmatprep.subr.bf16.mxu0 0
    %5544 = vmatpush1.bf16.msra.mxu0 0
    %5545 = vmatprep.mubr.bf16.mxu0 0
    %5546 = vmatmul.mubr.bf16.gmra.mrb[0].mxu0 %v5505
    %v5547 = vpop.f32.mrb[0].mxu0
    %v5548 = vadd.f32 0.0, %v5547
    %v5549 = vpop.f32.mrb[0].mxu0
    %v5550 = vpop.f32.mrb[0].mxu0
    %v5551 = vadd.f32 0.0, %v5550
    %v5552 = vpop.f32.mrb[0].mxu0
    %5553 = vmatprep.mubr.bf16.mxu0 0
    %5554 = vmatmul.mubr.bf16.gmra.mrb[0].mxu0 %v5508
    %v5555 = vpop.f32.mrb[0].mxu0
    %v5556 = vadd.f32 0.0, %v5555
    %v5557 = vpop.f32.mrb[0].mxu0
    %v5558 = vpop.f32.mrb[0].mxu0
    %v5559 = vpop.f32.mrb[0].mxu0
    %5560 = vdwg.mxu0
    %v5561 = vsel %vm206, %v5377, 0.0
    %v5562 = vsel %vm206, %v5434, 0.0
    %v5563 = vadd.f32 %v5561, %v5562
    %v5564 = vsel %vm206, %v5491, 0.0
    %v5565 = vadd.f32 %v5563, %v5564
    %v5566 = vsel %vm206, %v5548, 0.0
    %v5567 = vadd.f32 %v5565, %v5566
    %v5568 = vsel %vm206, %v5380, 0.0
    %v5569 = vsel %vm206, %v5437, 0.0
    %v5570 = vadd.f32 %v5568, %v5569
    %v5571 = vsel %vm206, %v5494, 0.0
    %v5572 = vadd.f32 %v5570, %v5571
    %v5573 = vsel %vm206, %v5551, 0.0
    %v5574 = vadd.f32 %v5572, %v5573
    %v5575 = vsel %vm213, %v5385, 0.0
    %v5576 = vsel %vm213, %v5442, 0.0
    %v5577 = vadd.f32 %v5575, %v5576
    %v5578 = vsel %vm213, %v5499, 0.0
    %v5579 = vadd.f32 %v5577, %v5578
    %v5580 = vsel %vm213, %v5556, 0.0
    %v5581 = vadd.f32 %v5579, %v5580
    %v5582 = vlaneseq
    %v5583 = vshrl.u32 %v5582, 7
    %v5584 = vsub.s32 0, %v5583
    %v5585 = vrot.slane %v4052, %v5584
    %v5586 = vadd.f32 %v5567, %v5585
    %v5587 = vadd.f32 %v5574, %v5585
    %v5588 = vadd.f32 %v5581, %v5585
    %v5589 = vpack.c.bf16 %v5587, %v5586
    %v5590 = vpack.c.bf16 %v5588, %v5588
    %v5591 = vld [vmem:[%s2 + $0xf0] sm:$0xf]
    %v5592 = vld [vmem:[%s2 + $0xf4] sm:$0xf]
    %v5593 = vld [vmem:[%s2 + $0xf8] sm:$0xf]
    %v5594 = vld [vmem:[%s2 + $0xfc] sm:$0xf]
    %v5595 = vld [vmem:[%s3 + $0x23] sm:$0x1]
    %v5596 = vlaneseq
    %v5597 = vshrl.u32 %v5596, 7
    %v5598 = vsub.s32 0, %v5597
    %v5599 = vrot.slane %v5595, %v5598
    %v5604 = vunpack.c.l.b16 %v5591
    %v5605 = vunpack.c.l.b16 %v5592
    %v5606 = vunpack.c.l.b16 %v5593
    %v5607 = vunpack.c.l.b16 %v5594
    %v5608 = vpack.c.b16 %v5605, %v5604
    %v5609 = vpack.c.b16 %v5607, %v5606
    %v5613 = vsel %vm206, %v5589, 0
    %v5616 = vsel %vm206, %v5590, 0
    %5618 = vmatprep.subr.bf16.mxu0 0
    %5619 = vmatpush1.bf16.msra.mxu0 %v5608
    %5620 = vmatprep.subr.bf16.mxu0 0
    %5621 = vmatpush1.bf16.msra.mxu0 %v5609
    %5622 = vmatprep.subr.bf16.mxu0 0
    %5623 = vmatpush1.bf16.msra.mxu0 0
    %5624 = vmatprep.subr.bf16.mxu0 0
    %5625 = vmatpush1.bf16.msra.mxu0 0
    %5626 = vmatprep.subr.bf16.mxu0 0
    %5627 = vmatpush1.bf16.msra.mxu0 0
    %5628 = vmatprep.subr.bf16.mxu0 0
    %5629 = vmatpush1.bf16.msra.mxu0 0
    %5630 = vmatprep.subr.bf16.mxu0 0
    %5631 = vmatpush1.bf16.msra.mxu0 0
    %5632 = vmatprep.subr.bf16.mxu0 0
    %5633 = vmatpush1.bf16.msra.mxu0 0
    %5634 = vmatprep.subr.bf16.mxu0 0
    %5635 = vmatpush1.bf16.msra.mxu0 0
    %5636 = vmatprep.subr.bf16.mxu0 0
    %5637 = vmatpush1.bf16.msra.mxu0 0
    %5638 = vmatprep.subr.bf16.mxu0 0
    %5639 = vmatpush1.bf16.msra.mxu0 0
    %5640 = vmatprep.subr.bf16.mxu0 0
    %5641 = vmatpush1.bf16.msra.mxu0 0
    %5642 = vmatprep.subr.bf16.mxu0 0
    %5643 = vmatpush1.bf16.msra.mxu0 0
    %5644 = vmatprep.subr.bf16.mxu0 0
    %5645 = vmatpush1.bf16.msra.mxu0 0
    %5646 = vmatprep.subr.bf16.mxu0 0
    %5647 = vmatpush1.bf16.msra.mxu0 0
    %5648 = vmatprep.subr.bf16.mxu0 0
    %5649 = vmatpush1.bf16.msra.mxu0 0
    %5650 = vmatprep.mubr.bf16.mxu0 0
    %5651 = vmatmul.mubr.bf16.gmra.mrb[0].mxu0 %v5613
    %v5652 = vpop.f32.mrb[0].mxu0
    %v5653 = vadd.f32 %v5599, %v5652
    %v5654 = vpop.f32.mrb[0].mxu0
    %v5655 = vpop.f32.mrb[0].mxu0
    %v5656 = vadd.f32 %v5599, %v5655
    %v5657 = vpop.f32.mrb[0].mxu0
    %5658 = vmatprep.mubr.bf16.mxu0 0
    %5659 = vmatmul.mubr.bf16.gmra.mrb[0].mxu0 %v5616
    %v5660 = vpop.f32.mrb[0].mxu0
    %v5661 = vadd.f32 %v5599, %v5660
    %v5662 = vpop.f32.mrb[0].mxu0
    %v5663 = vpop.f32.mrb[0].mxu0
    %v5664 = vpop.f32.mrb[0].mxu0
    %5665 = vdwg.mxu0
    %v5667 = vsel %vm1552, %v5661, 0
    %5669 = vmatprep.subr.mxu0 0.0
    %5670 = vmatpush1.msra.mxu0 %v5653
    %5671 = vmatprep.subr.mxu0 0.0
    %5672 = vmatpush1.msra.mxu0 %v5656
    %5673 = vmatprep.subr.mxu0 0.0
    %5674 = vmatpush1.msra.mxu0 %v5667
    %5675 = vmatprep.subr.mxu0 0.0
    %5676 = vmatpush1.msra.mxu0 0.0
    %5677 = vmatprep.subr.mxu0 0.0
    %5678 = vmatpush1.msra.mxu0 0.0
    %5679 = vmatprep.subr.mxu0 0.0
    %5680 = vmatpush1.msra.mxu0 0.0
    %5681 = vmatprep.subr.mxu0 0.0
    %5682 = vmatpush1.msra.mxu0 0.0
    %5683 = vmatprep.subr.mxu0 0.0
    %5684 = vmatpush1.msra.mxu0 0.0
    %5685 = vmatprep.subr.mxu0 0.0
    %5686 = vmatpush1.msra.mxu0 0.0
    %5687 = vmatprep.subr.mxu0 0.0
    %5688 = vmatpush1.msra.mxu0 0.0
    %5689 = vmatprep.subr.mxu0 0.0
    %5690 = vmatpush1.msra.mxu0 0.0
    %5691 = vmatprep.subr.mxu0 0.0
    %5692 = vmatpush1.msra.mxu0 0.0
    %5693 = vmatprep.subr.mxu0 0.0
    %5694 = vmatpush1.msra.mxu0 0.0
    %5695 = vmatprep.subr.mxu0 0.0
    %5696 = vmatpush1.msra.mxu0 0.0
    %5697 = vmatprep.subr.mxu0 0.0
    %5698 = vmatpush1.msra.mxu0 0.0
    %5699 = vmatprep.subr.mxu0 0.0
    %5700 = vmatpush1.msra.mxu0 0.0
    %5701 = vmatprep.subr.mxu0 0.0
    %5702 = vmatpush1.msra.mxu0 0.0
    %5703 = vmatprep.subr.mxu0 0.0
    %5704 = vmatpush1.msra.mxu0 0.0
    %5705 = vmatprep.subr.mxu0 0.0
    %5706 = vmatpush1.msra.mxu0 0.0
    %5707 = vmatprep.subr.mxu0 0.0
    %5708 = vmatpush1.msra.mxu0 0.0
    %5709 = vmatprep.subr.mxu0 0.0
    %5710 = vmatpush1.msra.mxu0 0.0
    %5711 = vmatprep.subr.mxu0 0.0
    %5712 = vmatpush1.msra.mxu0 0.0
    %5713 = vmatprep.subr.mxu0 0.0
    %5714 = vmatpush1.msra.mxu0 0.0
    %5715 = vmatprep.subr.mxu0 0.0
    %5716 = vmatpush1.msra.mxu0 0.0
    %5717 = vmatprep.subr.mxu0 0.0
    %5718 = vmatpush1.msra.mxu0 0.0
    %5719 = vmatprep.subr.mxu0 0.0
    %5720 = vmatpush1.msra.mxu0 0.0
    %5721 = vmatprep.subr.mxu0 0.0
    %5722 = vmatpush1.msra.mxu0 0.0
    %5723 = vmatprep.subr.mxu0 0.0
    %5724 = vmatpush1.msra.mxu0 0.0
    %5725 = vmatprep.subr.mxu0 0.0
    %5726 = vmatpush1.msra.mxu0 0.0
    %5727 = vmatprep.subr.mxu0 0.0
    %5728 = vmatpush1.msra.mxu0 0.0
    %5729 = vmatprep.subr.mxu0 0.0
    %5730 = vmatpush1.msra.mxu0 0.0
    %5731 = vmatprep.subr.mxu0 0.0
    %5732 = vmatpush1.msra.mxu0 0.0
    %5733 = vmatprep.mubr.f32.mxu0 0.0
    %5734 = vmatmul.mubr.f32.gmra.mrb[0].mxu0 %v1881
    %v5735 = vpop.f32.mrb[0].mxu0
    %v5736 = vadd.f32 0.0, %v5735
    %v5737 = vpop.f32.mrb[0].mxu0
    %5738 = vmatprep.mubr.f32.mxu0 0.0
    %5739 = vmatmul.mubr.f32.gmra.mrb[0].mxu0 %v1884
    %v5740 = vpop.f32.mrb[0].mxu0
    %v5741 = vadd.f32 0.0, %v5740
    %v5742 = vpop.f32.mrb[0].mxu0
    %5743 = vmatprep.mubr.f32.mxu0 0.0
    %5744 = vmatmul.mubr.f32.gmra.mrb[0].mxu0 %v1887
    %v5745 = vpop.f32.mrb[0].mxu0
    %v5746 = vadd.f32 0.0, %v5745
    %v5747 = vpop.f32.mrb[0].mxu0
    %5748 = vdwg.mxu0
    %v5749 = vadd.f32 %v3994, %v5736
    %v5750 = vadd.f32 %v3995, %v5741
    %v5751 = vadd.f32 %v3996, %v5746
    %v5752 = vld [vmem:[%s3 + $0x24] sm:$0x1]
    %v5753 = vld [vmem:[%s3 + $0x25] sm:$0x1]
    %v5754 = vsel %vm206, %v5749, 0.0
    %5755 = vadd.xlane.f32.xlu0 %v5754
    %v5756 = vpop.xlane.xlu0 %5755
    %v5757 = vsel %vm206, %v5750, 0.0
    %5758 = vadd.xlane.f32.xlu0 %v5757
    %v5759 = vpop.xlane.xlu0 %5758
    %v5760 = vsel %vm213, %v5751, 0.0
    %5761 = vadd.xlane.f32.xlu0 %v5760
    %v5762 = vpop.xlane.xlu0 %5761
    %v5763 = vmul.f32 %v5756, %v217
    %v5764 = vmul.f32 %v5759, %v217
    %v5765 = vmul.f32 %v5762, %v217
    %v5766 = vsub.f32 %v5749, %v5763
    %v5767 = vsub.f32 %v5750, %v5764
    %v5768 = vsub.f32 %v5751, %v5765
    %v5769 = vmul.f32 %v5766, %v5766
    %v5770 = vmul.f32 %v5767, %v5767
    %v5771 = vmul.f32 %v5768, %v5768
    %v5772 = vsel %vm206, %v5769, 0.0
    %5773 = vadd.xlane.f32.xlu0 %v5772
    %v5774 = vpop.xlane.xlu0 %5773
    %v5775 = vsel %vm206, %v5770, 0.0
    %5776 = vadd.xlane.f32.xlu0 %v5775
    %v5777 = vpop.xlane.xlu0 %5776
    %v5778 = vsel %vm213, %v5771, 0.0
    %5779 = vadd.xlane.f32.xlu0 %v5778
    %v5780 = vpop.xlane.xlu0 %5779
    %v5781 = vmul.f32 %v5774, %v217
    %v5782 = vmul.f32 %v5777, %v217
    %v5783 = vmul.f32 %v5780, %v217
    %v5784 = vadd.f32 %v5781, 1e-05
    %v5785 = vadd.f32 %v5782, 1e-05
    %v5786 = vadd.f32 %v5783, 1e-05
    %v5787 = vrsqrt.pop %v5784
    %v5788 = vrsqrt.pop %v5785
    %v5789 = vrsqrt.pop %v5786
    %v5790 = vmul.f32 %v5766, %v5787
    %v5791 = vmul.f32 %v5767, %v5788
    %v5792 = vmul.f32 %v5768, %v5789
    %v5793 = vlaneseq
    %v5794 = vshrl.u32 %v5793, 7
    %v5795 = vsub.s32 0, %v5794
    %v5796 = vrot.slane %v5752, %v5795
    %v5797 = vmul.f32 %v5790, %v5796
    %v5798 = vmul.f32 %v5791, %v5796
    %v5799 = vmul.f32 %v5792, %v5796
    %v5800 = vlaneseq
    %v5801 = vshrl.u32 %v5800, 7
    %v5802 = vsub.s32 0, %v5801
    %v5803 = vrot.slane %v5753, %v5802
    %v5804 = vadd.f32 %v5797, %v5803
    %v5805 = vadd.f32 %v5798, %v5803
    %v5806 = vadd.f32 %v5799, %v5803
    %v5807 = vld [vmem:[%s3 + $0x26] sm:$0x1]
    %v5808 = vpack.c.bf16 %v5805, %v5804
    %v5809 = vpack.c.bf16 %v5806, %v5806
    %s5810 = scalar_lea.vmem %s1, 192
    %v5811 = vld [vmem:[%s5810] sm:$0xf]
    %v5812 = vld [vmem:[%s5810 + $0x4] sm:$0xf]
    %v5813 = vld [vmem:[%s5810 + $0x8] sm:$0xf]
    %v5814 = vld [vmem:[%s5810 + $0xc] sm:$0xf]
    %v5816 = vsel %vm206, %v5808, 0
    %v5819 = vsel %vm206, %v5809, 0
    %v5822 = vsel %vm206, %v5811, 0
    %5824 = vmatprep.subr.bf16.mxu0 0
    %5825 = vmatpush1.bf16.xpose.msra.mxu0 %v5822
    %5826 = vmatprep.subr.bf16.mxu0 0
    %5827 = vmatpush1.bf16.xpose.msra.mxu0 0
    %5828 = vmatprep.subr.bf16.mxu0 0
    %5829 = vmatpush1.bf16.xpose.msra.mxu0 0
    %5830 = vmatprep.subr.bf16.mxu0 0
    %5831 = vmatpush1.bf16.xpose.msra.mxu0 0
    %5832 = vmatprep.subr.bf16.mxu0 0
    %5833 = vmatpush1.bf16.xpose.msra.mxu0 0
    %5834 = vmatprep.subr.bf16.mxu0 0
    %5835 = vmatpush1.bf16.xpose.msra.mxu0 0
    %5836 = vmatprep.subr.bf16.mxu0 0
    %5837 = vmatpush1.bf16.xpose.msra.mxu0 0
    %5838 = vmatprep.subr.bf16.mxu0 0
    %5839 = vmatpush1.bf16.xpose.msra.mxu0 0
    %5840 = vmatprep.subr.bf16.mxu0 0
    %5841 = vmatpush1.bf16.xpose.msra.mxu0 0
    %5842 = vmatprep.subr.bf16.mxu0 0
    %5843 = vmatpush1.bf16.xpose.msra.mxu0 0
    %5844 = vmatprep.subr.bf16.mxu0 0
    %5845 = vmatpush1.bf16.xpose.msra.mxu0 0
    %5846 = vmatprep.subr.bf16.mxu0 0
    %5847 = vmatpush1.bf16.xpose.msra.mxu0 0
    %5848 = vmatprep.subr.bf16.mxu0 0
    %5849 = vmatpush1.bf16.xpose.msra.mxu0 0
    %5850 = vmatprep.subr.bf16.mxu0 0
    %5851 = vmatpush1.bf16.xpose.msra.mxu0 0
    %5852 = vmatprep.subr.bf16.mxu0 0
    %5853 = vmatpush1.bf16.xpose.msra.mxu0 0
    %5854 = vmatprep.subr.bf16.mxu0 0
    %5855 = vmatpush1.bf16.xpose.msra.mxu0 0
    %5856 = vmatprep.mubr.bf16.mxu0 0
    %5857 = vmatmul.mubr.bf16.gmra.mrb[0].mxu0 %v5816
    %v5858 = vpop.f32.mrb[0].mxu0
    %v5859 = vadd.f32 0.0, %v5858
    %v5860 = vpop.f32.mrb[0].mxu0
    %v5861 = vpop.f32.mrb[0].mxu0
    %v5862 = vadd.f32 0.0, %v5861
    %v5863 = vpop.f32.mrb[0].mxu0
    %5864 = vmatprep.mubr.bf16.mxu0 0
    %5865 = vmatmul.mubr.bf16.gmra.mrb[0].mxu0 %v5819
    %v5866 = vpop.f32.mrb[0].mxu0
    %v5867 = vadd.f32 0.0, %v5866
    %v5868 = vpop.f32.mrb[0].mxu0
    %v5869 = vpop.f32.mrb[0].mxu0
    %v5870 = vpop.f32.mrb[0].mxu0
    %5871 = vdwg.mxu0
    %v5873 = vsel %vm206, %v5812, 0
    %5875 = vmatprep.subr.bf16.mxu0 0
    %5876 = vmatpush1.bf16.xpose.msra.mxu0 %v5873
    %5877 = vmatprep.subr.bf16.mxu0 0
    %5878 = vmatpush1.bf16.xpose.msra.mxu0 0
    %5879 = vmatprep.subr.bf16.mxu0 0
    %5880 = vmatpush1.bf16.xpose.msra.mxu0 0
    %5881 = vmatprep.subr.bf16.mxu0 0
    %5882 = vmatpush1.bf16.xpose.msra.mxu0 0
    %5883 = vmatprep.subr.bf16.mxu0 0
    %5884 = vmatpush1.bf16.xpose.msra.mxu0 0
    %5885 = vmatprep.subr.bf16.mxu0 0
    %5886 = vmatpush1.bf16.xpose.msra.mxu0 0
    %5887 = vmatprep.subr.bf16.mxu0 0
    %5888 = vmatpush1.bf16.xpose.msra.mxu0 0
    %5889 = vmatprep.subr.bf16.mxu0 0
    %5890 = vmatpush1.bf16.xpose.msra.mxu0 0
    %5891 = vmatprep.subr.bf16.mxu0 0
    %5892 = vmatpush1.bf16.xpose.msra.mxu0 0
    %5893 = vmatprep.subr.bf16.mxu0 0
    %5894 = vmatpush1.bf16.xpose.msra.mxu0 0
    %5895 = vmatprep.subr.bf16.mxu0 0
    %5896 = vmatpush1.bf16.xpose.msra.mxu0 0
    %5897 = vmatprep.subr.bf16.mxu0 0
    %5898 = vmatpush1.bf16.xpose.msra.mxu0 0
    %5899 = vmatprep.subr.bf16.mxu0 0
    %5900 = vmatpush1.bf16.xpose.msra.mxu0 0
    %5901 = vmatprep.subr.bf16.mxu0 0
    %5902 = vmatpush1.bf16.xpose.msra.mxu0 0
    %5903 = vmatprep.subr.bf16.mxu0 0
    %5904 = vmatpush1.bf16.xpose.msra.mxu0 0
    %5905 = vmatprep.subr.bf16.mxu0 0
    %5906 = vmatpush1.bf16.xpose.msra.mxu0 0
    %5907 = vmatprep.mubr.bf16.mxu0 0
    %5908 = vmatmul.mubr.bf16.gmra.mrb[0].mxu0 %v5816
    %v5909 = vpop.f32.mrb[0].mxu0
    %v5910 = vadd.f32 0.0, %v5909
    %v5911 = vpop.f32.mrb[0].mxu0
    %v5912 = vpop.f32.mrb[0].mxu0
    %v5913 = vadd.f32 0.0, %v5912
    %v5914 = vpop.f32.mrb[0].mxu0
    %5915 = vmatprep.mubr.bf16.mxu0 0
    %5916 = vmatmul.mubr.bf16.gmra.mrb[0].mxu0 %v5819
    %v5917 = vpop.f32.mrb[0].mxu0
    %v5918 = vadd.f32 0.0, %v5917
    %v5919 = vpop.f32.mrb[0].mxu0
    %v5920 = vpop.f32.mrb[0].mxu0
    %v5921 = vpop.f32.mrb[0].mxu0
    %5922 = vdwg.mxu0
    %v5924 = vsel %vm206, %v5813, 0
    %5926 = vmatprep.subr.bf16.mxu0 0
    %5927 = vmatpush1.bf16.xpose.msra.mxu0 %v5924
    %5928 = vmatprep.subr.bf16.mxu0 0
    %5929 = vmatpush1.bf16.xpose.msra.mxu0 0
    %5930 = vmatprep.subr.bf16.mxu0 0
    %5931 = vmatpush1.bf16.xpose.msra.mxu0 0
    %5932 = vmatprep.subr.bf16.mxu0 0
    %5933 = vmatpush1.bf16.xpose.msra.mxu0 0
    %5934 = vmatprep.subr.bf16.mxu0 0
    %5935 = vmatpush1.bf16.xpose.msra.mxu0 0
    %5936 = vmatprep.subr.bf16.mxu0 0
    %5937 = vmatpush1.bf16.xpose.msra.mxu0 0
    %5938 = vmatprep.subr.bf16.mxu0 0
    %5939 = vmatpush1.bf16.xpose.msra.mxu0 0
    %5940 = vmatprep.subr.bf16.mxu0 0
    %5941 = vmatpush1.bf16.xpose.msra.mxu0 0
    %5942 = vmatprep.subr.bf16.mxu0 0
    %5943 = vmatpush1.bf16.xpose.msra.mxu0 0
    %5944 = vmatprep.subr.bf16.mxu0 0
    %5945 = vmatpush1.bf16.xpose.msra.mxu0 0
    %5946 = vmatprep.subr.bf16.mxu0 0
    %5947 = vmatpush1.bf16.xpose.msra.mxu0 0
    %5948 = vmatprep.subr.bf16.mxu0 0
    %5949 = vmatpush1.bf16.xpose.msra.mxu0 0
    %5950 = vmatprep.subr.bf16.mxu0 0
    %5951 = vmatpush1.bf16.xpose.msra.mxu0 0
    %5952 = vmatprep.subr.bf16.mxu0 0
    %5953 = vmatpush1.bf16.xpose.msra.mxu0 0
    %5954 = vmatprep.subr.bf16.mxu0 0
    %5955 = vmatpush1.bf16.xpose.msra.mxu0 0
    %5956 = vmatprep.subr.bf16.mxu0 0
    %5957 = vmatpush1.bf16.xpose.msra.mxu0 0
    %5958 = vmatprep.mubr.bf16.mxu0 0
    %5959 = vmatmul.mubr.bf16.gmra.mrb[0].mxu0 %v5816
    %v5960 = vpop.f32.mrb[0].mxu0
    %v5961 = vadd.f32 0.0, %v5960
    %v5962 = vpop.f32.mrb[0].mxu0
    %v5963 = vpop.f32.mrb[0].mxu0
    %v5964 = vadd.f32 0.0, %v5963
    %v5965 = vpop.f32.mrb[0].mxu0
    %5966 = vmatprep.mubr.bf16.mxu0 0
    %5967 = vmatmul.mubr.bf16.gmra.mrb[0].mxu0 %v5819
    %v5968 = vpop.f32.mrb[0].mxu0
    %v5969 = vadd.f32 0.0, %v5968
    %v5970 = vpop.f32.mrb[0].mxu0
    %v5971 = vpop.f32.mrb[0].mxu0
    %v5972 = vpop.f32.mrb[0].mxu0
    %5973 = vdwg.mxu0
    %v5975 = vsel %vm206, %v5814, 0
    %5977 = vmatprep.subr.bf16.mxu0 0
    %5978 = vmatpush1.bf16.xpose.msra.mxu0 %v5975
    %5979 = vmatprep.subr.bf16.mxu0 0
    %5980 = vmatpush1.bf16.xpose.msra.mxu0 0
    %5981 = vmatprep.subr.bf16.mxu0 0
    %5982 = vmatpush1.bf16.xpose.msra.mxu0 0
    %5983 = vmatprep.subr.bf16.mxu0 0
    %5984 = vmatpush1.bf16.xpose.msra.mxu0 0
    %5985 = vmatprep.subr.bf16.mxu0 0
    %5986 = vmatpush1.bf16.xpose.msra.mxu0 0
    %5987 = vmatprep.subr.bf16.mxu0 0
    %5988 = vmatpush1.bf16.xpose.msra.mxu0 0
    %5989 = vmatprep.subr.bf16.mxu0 0
    %5990 = vmatpush1.bf16.xpose.msra.mxu0 0
    %5991 = vmatprep.subr.bf16.mxu0 0
    %5992 = vmatpush1.bf16.xpose.msra.mxu0 0
    %5993 = vmatprep.subr.bf16.mxu0 0
    %5994 = vmatpush1.bf16.xpose.msra.mxu0 0
    %5995 = vmatprep.subr.bf16.mxu0 0
    %5996 = vmatpush1.bf16.xpose.msra.mxu0 0
    %5997 = vmatprep.subr.bf16.mxu0 0
    %5998 = vmatpush1.bf16.xpose.msra.mxu0 0
    %5999 = vmatprep.subr.bf16.mxu0 0
    %6000 = vmatpush1.bf16.xpose.msra.mxu0 0
    %6001 = vmatprep.subr.bf16.mxu0 0
    %6002 = vmatpush1.bf16.xpose.msra.mxu0 0
    %6003 = vmatprep.subr.bf16.mxu0 0
    %6004 = vmatpush1.bf16.xpose.msra.mxu0 0
    %6005 = vmatprep.subr.bf16.mxu0 0
    %6006 = vmatpush1.bf16.xpose.msra.mxu0 0
    %6007 = vmatprep.subr.bf16.mxu0 0
    %6008 = vmatpush1.bf16.xpose.msra.mxu0 0
    %6009 = vmatprep.mubr.bf16.mxu0 0
    %6010 = vmatmul.mubr.bf16.gmra.mrb[0].mxu0 %v5816
    %v6011 = vpop.f32.mrb[0].mxu0
    %v6012 = vadd.f32 0.0, %v6011
    %v6013 = vpop.f32.mrb[0].mxu0
    %v6014 = vpop.f32.mrb[0].mxu0
    %v6015 = vadd.f32 0.0, %v6014
    %v6016 = vpop.f32.mrb[0].mxu0
    %6017 = vmatprep.mubr.bf16.mxu0 0
    %6018 = vmatmul.mubr.bf16.gmra.mrb[0].mxu0 %v5819
    %v6019 = vpop.f32.mrb[0].mxu0
    %v6020 = vadd.f32 0.0, %v6019
    %v6021 = vpop.f32.mrb[0].mxu0
    %v6022 = vpop.f32.mrb[0].mxu0
    %v6023 = vpop.f32.mrb[0].mxu0
    %6024 = vdwg.mxu0
    %s6025 = scalar_lea.vmem %s1, 208
    %v6026 = vld [vmem:[%s6025] sm:$0xf]
    %v6027 = vld [vmem:[%s6025 + $0x4] sm:$0xf]
    %v6028 = vld [vmem:[%s6025 + $0x8] sm:$0xf]
    %v6029 = vld [vmem:[%s6025 + $0xc] sm:$0xf]
    %v6031 = vsel %vm206, %v6026, 0
    %6033 = vmatprep.subr.bf16.mxu0 0
    %6034 = vmatpush1.bf16.xpose.msra.mxu0 %v6031
    %6035 = vmatprep.subr.bf16.mxu0 0
    %6036 = vmatpush1.bf16.xpose.msra.mxu0 0
    %6037 = vmatprep.subr.bf16.mxu0 0
    %6038 = vmatpush1.bf16.xpose.msra.mxu0 0
    %6039 = vmatprep.subr.bf16.mxu0 0
    %6040 = vmatpush1.bf16.xpose.msra.mxu0 0
    %6041 = vmatprep.subr.bf16.mxu0 0
    %6042 = vmatpush1.bf16.xpose.msra.mxu0 0
    %6043 = vmatprep.subr.bf16.mxu0 0
    %6044 = vmatpush1.bf16.xpose.msra.mxu0 0
    %6045 = vmatprep.subr.bf16.mxu0 0
    %6046 = vmatpush1.bf16.xpose.msra.mxu0 0
    %6047 = vmatprep.subr.bf16.mxu0 0
    %6048 = vmatpush1.bf16.xpose.msra.mxu0 0
    %6049 = vmatprep.subr.bf16.mxu0 0
    %6050 = vmatpush1.bf16.xpose.msra.mxu0 0
    %6051 = vmatprep.subr.bf16.mxu0 0
    %6052 = vmatpush1.bf16.xpose.msra.mxu0 0
    %6053 = vmatprep.subr.bf16.mxu0 0
    %6054 = vmatpush1.bf16.xpose.msra.mxu0 0
    %6055 = vmatprep.subr.bf16.mxu0 0
    %6056 = vmatpush1.bf16.xpose.msra.mxu0 0
    %6057 = vmatprep.subr.bf16.mxu0 0
    %6058 = vmatpush1.bf16.xpose.msra.mxu0 0
    %6059 = vmatprep.subr.bf16.mxu0 0
    %6060 = vmatpush1.bf16.xpose.msra.mxu0 0
    %6061 = vmatprep.subr.bf16.mxu0 0
    %6062 = vmatpush1.bf16.xpose.msra.mxu0 0
    %6063 = vmatprep.subr.bf16.mxu0 0
    %6064 = vmatpush1.bf16.xpose.msra.mxu0 0
    %6065 = vmatprep.mubr.bf16.mxu0 0
    %6066 = vmatmul.mubr.bf16.gmra.mrb[0].mxu0 %v5816
    %v6067 = vpop.f32.mrb[0].mxu0
    %v6068 = vadd.f32 0.0, %v6067
    %v6069 = vpop.f32.mrb[0].mxu0
    %v6070 = vpop.f32.mrb[0].mxu0
    %v6071 = vadd.f32 0.0, %v6070
    %v6072 = vpop.f32.mrb[0].mxu0
    %6073 = vmatprep.mubr.bf16.mxu0 0
    %6074 = vmatmul.mubr.bf16.gmra.mrb[0].mxu0 %v5819
    %v6075 = vpop.f32.mrb[0].mxu0
    %v6076 = vadd.f32 0.0, %v6075
    %v6077 = vpop.f32.mrb[0].mxu0
    %v6078 = vpop.f32.mrb[0].mxu0
    %v6079 = vpop.f32.mrb[0].mxu0
    %6080 = vdwg.mxu0
    %v6082 = vsel %vm206, %v6027, 0
    %6084 = vmatprep.subr.bf16.mxu0 0
    %6085 = vmatpush1.bf16.xpose.msra.mxu0 %v6082
    %6086 = vmatprep.subr.bf16.mxu0 0
    %6087 = vmatpush1.bf16.xpose.msra.mxu0 0
    %6088 = vmatprep.subr.bf16.mxu0 0
    %6089 = vmatpush1.bf16.xpose.msra.mxu0 0
    %6090 = vmatprep.subr.bf16.mxu0 0
    %6091 = vmatpush1.bf16.xpose.msra.mxu0 0
    %6092 = vmatprep.subr.bf16.mxu0 0
    %6093 = vmatpush1.bf16.xpose.msra.mxu0 0
    %6094 = vmatprep.subr.bf16.mxu0 0
    %6095 = vmatpush1.bf16.xpose.msra.mxu0 0
    %6096 = vmatprep.subr.bf16.mxu0 0
    %6097 = vmatpush1.bf16.xpose.msra.mxu0 0
    %6098 = vmatprep.subr.bf16.mxu0 0
    %6099 = vmatpush1.bf16.xpose.msra.mxu0 0
    %6100 = vmatprep.subr.bf16.mxu0 0
    %6101 = vmatpush1.bf16.xpose.msra.mxu0 0
    %6102 = vmatprep.subr.bf16.mxu0 0
    %6103 = vmatpush1.bf16.xpose.msra.mxu0 0
    %6104 = vmatprep.subr.bf16.mxu0 0
    %6105 = vmatpush1.bf16.xpose.msra.mxu0 0
    %6106 = vmatprep.subr.bf16.mxu0 0
    %6107 = vmatpush1.bf16.xpose.msra.mxu0 0
    %6108 = vmatprep.subr.bf16.mxu0 0
    %6109 = vmatpush1.bf16.xpose.msra.mxu0 0
    %6110 = vmatprep.subr.bf16.mxu0 0
    %6111 = vmatpush1.bf16.xpose.msra.mxu0 0
    %6112 = vmatprep.subr.bf16.mxu0 0
    %6113 = vmatpush1.bf16.xpose.msra.mxu0 0
    %6114 = vmatprep.subr.bf16.mxu0 0
    %6115 = vmatpush1.bf16.xpose.msra.mxu0 0
    %6116 = vmatprep.mubr.bf16.mxu0 0
    %6117 = vmatmul.mubr.bf16.gmra.mrb[0].mxu0 %v5816
    %v6118 = vpop.f32.mrb[0].mxu0
    %v6119 = vadd.f32 0.0, %v6118
    %v6120 = vpop.f32.mrb[0].mxu0
    %v6121 = vpop.f32.mrb[0].mxu0
    %v6122 = vadd.f32 0.0, %v6121
    %v6123 = vpop.f32.mrb[0].mxu0
    %6124 = vmatprep.mubr.bf16.mxu0 0
    %6125 = vmatmul.mubr.bf16.gmra.mrb[0].mxu0 %v5819
    %v6126 = vpop.f32.mrb[0].mxu0
    %v6127 = vadd.f32 0.0, %v6126
    %v6128 = vpop.f32.mrb[0].mxu0
    %v6129 = vpop.f32.mrb[0].mxu0
    %v6130 = vpop.f32.mrb[0].mxu0
    %6131 = vdwg.mxu0
    %v6133 = vsel %vm206, %v6028, 0
    %6135 = vmatprep.subr.bf16.mxu0 0
    %6136 = vmatpush1.bf16.xpose.msra.mxu0 %v6133
    %6137 = vmatprep.subr.bf16.mxu0 0
    %6138 = vmatpush1.bf16.xpose.msra.mxu0 0
    %6139 = vmatprep.subr.bf16.mxu0 0
    %6140 = vmatpush1.bf16.xpose.msra.mxu0 0
    %6141 = vmatprep.subr.bf16.mxu0 0
    %6142 = vmatpush1.bf16.xpose.msra.mxu0 0
    %6143 = vmatprep.subr.bf16.mxu0 0
    %6144 = vmatpush1.bf16.xpose.msra.mxu0 0
    %6145 = vmatprep.subr.bf16.mxu0 0
    %6146 = vmatpush1.bf16.xpose.msra.mxu0 0
    %6147 = vmatprep.subr.bf16.mxu0 0
    %6148 = vmatpush1.bf16.xpose.msra.mxu0 0
    %6149 = vmatprep.subr.bf16.mxu0 0
    %6150 = vmatpush1.bf16.xpose.msra.mxu0 0
    %6151 = vmatprep.subr.bf16.mxu0 0
    %6152 = vmatpush1.bf16.xpose.msra.mxu0 0
    %6153 = vmatprep.subr.bf16.mxu0 0
    %6154 = vmatpush1.bf16.xpose.msra.mxu0 0
    %6155 = vmatprep.subr.bf16.mxu0 0
    %6156 = vmatpush1.bf16.xpose.msra.mxu0 0
    %6157 = vmatprep.subr.bf16.mxu0 0
    %6158 = vmatpush1.bf16.xpose.msra.mxu0 0
    %6159 = vmatprep.subr.bf16.mxu0 0
    %6160 = vmatpush1.bf16.xpose.msra.mxu0 0
    %6161 = vmatprep.subr.bf16.mxu0 0
    %6162 = vmatpush1.bf16.xpose.msra.mxu0 0
    %6163 = vmatprep.subr.bf16.mxu0 0
    %6164 = vmatpush1.bf16.xpose.msra.mxu0 0
    %6165 = vmatprep.subr.bf16.mxu0 0
    %6166 = vmatpush1.bf16.xpose.msra.mxu0 0
    %6167 = vmatprep.mubr.bf16.mxu0 0
    %6168 = vmatmul.mubr.bf16.gmra.mrb[0].mxu0 %v5816
    %v6169 = vpop.f32.mrb[0].mxu0
    %v6170 = vadd.f32 0.0, %v6169
    %v6171 = vpop.f32.mrb[0].mxu0
    %v6172 = vpop.f32.mrb[0].mxu0
    %v6173 = vadd.f32 0.0, %v6172
    %v6174 = vpop.f32.mrb[0].mxu0
    %6175 = vmatprep.mubr.bf16.mxu0 0
    %6176 = vmatmul.mubr.bf16.gmra.mrb[0].mxu0 %v5819
    %v6177 = vpop.f32.mrb[0].mxu0
    %v6178 = vadd.f32 0.0, %v6177
    %v6179 = vpop.f32.mrb[0].mxu0
    %v6180 = vpop.f32.mrb[0].mxu0
    %v6181 = vpop.f32.mrb[0].mxu0
    %6182 = vdwg.mxu0
    %v6184 = vsel %vm206, %v6029, 0
    %6186 = vmatprep.subr.bf16.mxu0 0
    %6187 = vmatpush1.bf16.xpose.msra.mxu0 %v6184
    %6188 = vmatprep.subr.bf16.mxu0 0
    %6189 = vmatpush1.bf16.xpose.msra.mxu0 0
    %6190 = vmatprep.subr.bf16.mxu0 0
    %6191 = vmatpush1.bf16.xpose.msra.mxu0 0
    %6192 = vmatprep.subr.bf16.mxu0 0
    %6193 = vmatpush1.bf16.xpose.msra.mxu0 0
    %6194 = vmatprep.subr.bf16.mxu0 0
    %6195 = vmatpush1.bf16.xpose.msra.mxu0 0
    %6196 = vmatprep.subr.bf16.mxu0 0
    %6197 = vmatpush1.bf16.xpose.msra.mxu0 0
    %6198 = vmatprep.subr.bf16.mxu0 0
    %6199 = vmatpush1.bf16.xpose.msra.mxu0 0
    %6200 = vmatprep.subr.bf16.mxu0 0
    %6201 = vmatpush1.bf16.xpose.msra.mxu0 0
    %6202 = vmatprep.subr.bf16.mxu0 0
    %6203 = vmatpush1.bf16.xpose.msra.mxu0 0
    %6204 = vmatprep.subr.bf16.mxu0 0
    %6205 = vmatpush1.bf16.xpose.msra.mxu0 0
    %6206 = vmatprep.subr.bf16.mxu0 0
    %6207 = vmatpush1.bf16.xpose.msra.mxu0 0
    %6208 = vmatprep.subr.bf16.mxu0 0
    %6209 = vmatpush1.bf16.xpose.msra.mxu0 0
    %6210 = vmatprep.subr.bf16.mxu0 0
    %6211 = vmatpush1.bf16.xpose.msra.mxu0 0
    %6212 = vmatprep.subr.bf16.mxu0 0
    %6213 = vmatpush1.bf16.xpose.msra.mxu0 0
    %6214 = vmatprep.subr.bf16.mxu0 0
    %6215 = vmatpush1.bf16.xpose.msra.mxu0 0
    %6216 = vmatprep.subr.bf16.mxu0 0
    %6217 = vmatpush1.bf16.xpose.msra.mxu0 0
    %6218 = vmatprep.mubr.bf16.mxu0 0
    %6219 = vmatmul.mubr.bf16.gmra.mrb[0].mxu0 %v5816
    %v6220 = vpop.f32.mrb[0].mxu0
    %v6221 = vadd.f32 0.0, %v6220
    %v6222 = vpop.f32.mrb[0].mxu0
    %v6223 = vpop.f32.mrb[0].mxu0
    %v6224 = vadd.f32 0.0, %v6223
    %v6225 = vpop.f32.mrb[0].mxu0
    %6226 = vmatprep.mubr.bf16.mxu0 0
    %6227 = vmatmul.mubr.bf16.gmra.mrb[0].mxu0 %v5819
    %v6228 = vpop.f32.mrb[0].mxu0
    %v6229 = vadd.f32 0.0, %v6228
    %v6230 = vpop.f32.mrb[0].mxu0
    %v6231 = vpop.f32.mrb[0].mxu0
    %v6232 = vpop.f32.mrb[0].mxu0
    %6233 = vdwg.mxu0
    %s6234 = scalar_lea.vmem %s1, 224
    %v6235 = vld [vmem:[%s6234] sm:$0xf]
    %v6236 = vld [vmem:[%s6234 + $0x4] sm:$0xf]
    %v6237 = vld [vmem:[%s6234 + $0x8] sm:$0xf]
    %v6238 = vld [vmem:[%s6234 + $0xc] sm:$0xf]
    %v6240 = vsel %vm206, %v6235, 0
    %6242 = vmatprep.subr.bf16.mxu0 0
    %6243 = vmatpush1.bf16.xpose.msra.mxu0 %v6240
    %6244 = vmatprep.subr.bf16.mxu0 0
    %6245 = vmatpush1.bf16.xpose.msra.mxu0 0
    %6246 = vmatprep.subr.bf16.mxu0 0
    %6247 = vmatpush1.bf16.xpose.msra.mxu0 0
    %6248 = vmatprep.subr.bf16.mxu0 0
    %6249 = vmatpush1.bf16.xpose.msra.mxu0 0
    %6250 = vmatprep.subr.bf16.mxu0 0
    %6251 = vmatpush1.bf16.xpose.msra.mxu0 0
    %6252 = vmatprep.subr.bf16.mxu0 0
    %6253 = vmatpush1.bf16.xpose.msra.mxu0 0
    %6254 = vmatprep.subr.bf16.mxu0 0
    %6255 = vmatpush1.bf16.xpose.msra.mxu0 0
    %6256 = vmatprep.subr.bf16.mxu0 0
    %6257 = vmatpush1.bf16.xpose.msra.mxu0 0
    %6258 = vmatprep.subr.bf16.mxu0 0
    %6259 = vmatpush1.bf16.xpose.msra.mxu0 0
    %6260 = vmatprep.subr.bf16.mxu0 0
    %6261 = vmatpush1.bf16.xpose.msra.mxu0 0
    %6262 = vmatprep.subr.bf16.mxu0 0
    %6263 = vmatpush1.bf16.xpose.msra.mxu0 0
    %6264 = vmatprep.subr.bf16.mxu0 0
    %6265 = vmatpush1.bf16.xpose.msra.mxu0 0
    %6266 = vmatprep.subr.bf16.mxu0 0
    %6267 = vmatpush1.bf16.xpose.msra.mxu0 0
    %6268 = vmatprep.subr.bf16.mxu0 0
    %6269 = vmatpush1.bf16.xpose.msra.mxu0 0
    %6270 = vmatprep.subr.bf16.mxu0 0
    %6271 = vmatpush1.bf16.xpose.msra.mxu0 0
    %6272 = vmatprep.subr.bf16.mxu0 0
    %6273 = vmatpush1.bf16.xpose.msra.mxu0 0
    %6274 = vmatprep.mubr.bf16.mxu0 0
    %6275 = vmatmul.mubr.bf16.gmra.mrb[0].mxu0 %v5816
    %v6276 = vpop.f32.mrb[0].mxu0
    %v6277 = vadd.f32 0.0, %v6276
    %v6278 = vpop.f32.mrb[0].mxu0
    %v6279 = vpop.f32.mrb[0].mxu0
    %v6280 = vadd.f32 0.0, %v6279
    %v6281 = vpop.f32.mrb[0].mxu0
    %6282 = vmatprep.mubr.bf16.mxu0 0
    %6283 = vmatmul.mubr.bf16.gmra.mrb[0].mxu0 %v5819
    %v6284 = vpop.f32.mrb[0].mxu0
    %v6285 = vadd.f32 0.0, %v6284
    %v6286 = vpop.f32.mrb[0].mxu0
    %v6287 = vpop.f32.mrb[0].mxu0
    %v6288 = vpop.f32.mrb[0].mxu0
    %6289 = vdwg.mxu0
    %v6291 = vsel %vm206, %v6236, 0
    %6293 = vmatprep.subr.bf16.mxu0 0
    %6294 = vmatpush1.bf16.xpose.msra.mxu0 %v6291
    %6295 = vmatprep.subr.bf16.mxu0 0
    %6296 = vmatpush1.bf16.xpose.msra.mxu0 0
    %6297 = vmatprep.subr.bf16.mxu0 0
    %6298 = vmatpush1.bf16.xpose.msra.mxu0 0
    %6299 = vmatprep.subr.bf16.mxu0 0
    %6300 = vmatpush1.bf16.xpose.msra.mxu0 0
    %6301 = vmatprep.subr.bf16.mxu0 0
    %6302 = vmatpush1.bf16.xpose.msra.mxu0 0
    %6303 = vmatprep.subr.bf16.mxu0 0
    %6304 = vmatpush1.bf16.xpose.msra.mxu0 0
    %6305 = vmatprep.subr.bf16.mxu0 0
    %6306 = vmatpush1.bf16.xpose.msra.mxu0 0
    %6307 = vmatprep.subr.bf16.mxu0 0
    %6308 = vmatpush1.bf16.xpose.msra.mxu0 0
    %6309 = vmatprep.subr.bf16.mxu0 0
    %6310 = vmatpush1.bf16.xpose.msra.mxu0 0
    %6311 = vmatprep.subr.bf16.mxu0 0
    %6312 = vmatpush1.bf16.xpose.msra.mxu0 0
    %6313 = vmatprep.subr.bf16.mxu0 0
    %6314 = vmatpush1.bf16.xpose.msra.mxu0 0
    %6315 = vmatprep.subr.bf16.mxu0 0
    %6316 = vmatpush1.bf16.xpose.msra.mxu0 0
    %6317 = vmatprep.subr.bf16.mxu0 0
    %6318 = vmatpush1.bf16.xpose.msra.mxu0 0
    %6319 = vmatprep.subr.bf16.mxu0 0
    %6320 = vmatpush1.bf16.xpose.msra.mxu0 0
    %6321 = vmatprep.subr.bf16.mxu0 0
    %6322 = vmatpush1.bf16.xpose.msra.mxu0 0
    %6323 = vmatprep.subr.bf16.mxu0 0
    %6324 = vmatpush1.bf16.xpose.msra.mxu0 0
    %6325 = vmatprep.mubr.bf16.mxu0 0
    %6326 = vmatmul.mubr.bf16.gmra.mrb[0].mxu0 %v5816
    %v6327 = vpop.f32.mrb[0].mxu0
    %v6328 = vadd.f32 0.0, %v6327
    %v6329 = vpop.f32.mrb[0].mxu0
    %v6330 = vpop.f32.mrb[0].mxu0
    %v6331 = vadd.f32 0.0, %v6330
    %v6332 = vpop.f32.mrb[0].mxu0
    %6333 = vmatprep.mubr.bf16.mxu0 0
    %6334 = vmatmul.mubr.bf16.gmra.mrb[0].mxu0 %v5819
    %v6335 = vpop.f32.mrb[0].mxu0
    %v6336 = vadd.f32 0.0, %v6335
    %v6337 = vpop.f32.mrb[0].mxu0
    %v6338 = vpop.f32.mrb[0].mxu0
    %v6339 = vpop.f32.mrb[0].mxu0
    %6340 = vdwg.mxu0
    %v6342 = vsel %vm206, %v6237, 0
    %6344 = vmatprep.subr.bf16.mxu0 0
    %6345 = vmatpush1.bf16.xpose.msra.mxu0 %v6342
    %6346 = vmatprep.subr.bf16.mxu0 0
    %6347 = vmatpush1.bf16.xpose.msra.mxu0 0
    %6348 = vmatprep.subr.bf16.mxu0 0
    %6349 = vmatpush1.bf16.xpose.msra.mxu0 0
    %6350 = vmatprep.subr.bf16.mxu0 0
    %6351 = vmatpush1.bf16.xpose.msra.mxu0 0
    %6352 = vmatprep.subr.bf16.mxu0 0
    %6353 = vmatpush1.bf16.xpose.msra.mxu0 0
    %6354 = vmatprep.subr.bf16.mxu0 0
    %6355 = vmatpush1.bf16.xpose.msra.mxu0 0
    %6356 = vmatprep.subr.bf16.mxu0 0
    %6357 = vmatpush1.bf16.xpose.msra.mxu0 0
    %6358 = vmatprep.subr.bf16.mxu0 0
    %6359 = vmatpush1.bf16.xpose.msra.mxu0 0
    %6360 = vmatprep.subr.bf16.mxu0 0
    %6361 = vmatpush1.bf16.xpose.msra.mxu0 0
    %6362 = vmatprep.subr.bf16.mxu0 0
    %6363 = vmatpush1.bf16.xpose.msra.mxu0 0
    %6364 = vmatprep.subr.bf16.mxu0 0
    %6365 = vmatpush1.bf16.xpose.msra.mxu0 0
    %6366 = vmatprep.subr.bf16.mxu0 0
    %6367 = vmatpush1.bf16.xpose.msra.mxu0 0
    %6368 = vmatprep.subr.bf16.mxu0 0
    %6369 = vmatpush1.bf16.xpose.msra.mxu0 0
    %6370 = vmatprep.subr.bf16.mxu0 0
    %6371 = vmatpush1.bf16.xpose.msra.mxu0 0
    %6372 = vmatprep.subr.bf16.mxu0 0
    %6373 = vmatpush1.bf16.xpose.msra.mxu0 0
    %6374 = vmatprep.subr.bf16.mxu0 0
    %6375 = vmatpush1.bf16.xpose.msra.mxu0 0
    %6376 = vmatprep.mubr.bf16.mxu0 0
    %6377 = vmatmul.mubr.bf16.gmra.mrb[0].mxu0 %v5816
    %v6378 = vpop.f32.mrb[0].mxu0
    %v6379 = vadd.f32 0.0, %v6378
    %v6380 = vpop.f32.mrb[0].mxu0
    %v6381 = vpop.f32.mrb[0].mxu0
    %v6382 = vadd.f32 0.0, %v6381
    %v6383 = vpop.f32.mrb[0].mxu0
    %6384 = vmatprep.mubr.bf16.mxu0 0
    %6385 = vmatmul.mubr.bf16.gmra.mrb[0].mxu0 %v5819
    %v6386 = vpop.f32.mrb[0].mxu0
    %v6387 = vadd.f32 0.0, %v6386
    %v6388 = vpop.f32.mrb[0].mxu0
    %v6389 = vpop.f32.mrb[0].mxu0
    %v6390 = vpop.f32.mrb[0].mxu0
    %6391 = vdwg.mxu0
    %v6393 = vsel %vm206, %v6238, 0
    %6395 = vmatprep.subr.bf16.mxu0 0
    %6396 = vmatpush1.bf16.xpose.msra.mxu0 %v6393
    %6397 = vmatprep.subr.bf16.mxu0 0
    %6398 = vmatpush1.bf16.xpose.msra.mxu0 0
    %6399 = vmatprep.subr.bf16.mxu0 0
    %6400 = vmatpush1.bf16.xpose.msra.mxu0 0
    %6401 = vmatprep.subr.bf16.mxu0 0
    %6402 = vmatpush1.bf16.xpose.msra.mxu0 0
    %6403 = vmatprep.subr.bf16.mxu0 0
    %6404 = vmatpush1.bf16.xpose.msra.mxu0 0
    %6405 = vmatprep.subr.bf16.mxu0 0
    %6406 = vmatpush1.bf16.xpose.msra.mxu0 0
    %6407 = vmatprep.subr.bf16.mxu0 0
    %6408 = vmatpush1.bf16.xpose.msra.mxu0 0
    %6409 = vmatprep.subr.bf16.mxu0 0
    %6410 = vmatpush1.bf16.xpose.msra.mxu0 0
    %6411 = vmatprep.subr.bf16.mxu0 0
    %6412 = vmatpush1.bf16.xpose.msra.mxu0 0
    %6413 = vmatprep.subr.bf16.mxu0 0
    %6414 = vmatpush1.bf16.xpose.msra.mxu0 0
    %6415 = vmatprep.subr.bf16.mxu0 0
    %6416 = vmatpush1.bf16.xpose.msra.mxu0 0
    %6417 = vmatprep.subr.bf16.mxu0 0
    %6418 = vmatpush1.bf16.xpose.msra.mxu0 0
    %6419 = vmatprep.subr.bf16.mxu0 0
    %6420 = vmatpush1.bf16.xpose.msra.mxu0 0
    %6421 = vmatprep.subr.bf16.mxu0 0
    %6422 = vmatpush1.bf16.xpose.msra.mxu0 0
    %6423 = vmatprep.subr.bf16.mxu0 0
    %6424 = vmatpush1.bf16.xpose.msra.mxu0 0
    %6425 = vmatprep.subr.bf16.mxu0 0
    %6426 = vmatpush1.bf16.xpose.msra.mxu0 0
    %6427 = vmatprep.mubr.bf16.mxu0 0
    %6428 = vmatmul.mubr.bf16.gmra.mrb[0].mxu0 %v5816
    %v6429 = vpop.f32.mrb[0].mxu0
    %v6430 = vadd.f32 0.0, %v6429
    %v6431 = vpop.f32.mrb[0].mxu0
    %v6432 = vpop.f32.mrb[0].mxu0
    %v6433 = vadd.f32 0.0, %v6432
    %v6434 = vpop.f32.mrb[0].mxu0
    %6435 = vmatprep.mubr.bf16.mxu0 0
    %6436 = vmatmul.mubr.bf16.gmra.mrb[0].mxu0 %v5819
    %v6437 = vpop.f32.mrb[0].mxu0
    %v6438 = vadd.f32 0.0, %v6437
    %v6439 = vpop.f32.mrb[0].mxu0
    %v6440 = vpop.f32.mrb[0].mxu0
    %v6441 = vpop.f32.mrb[0].mxu0
    %6442 = vdwg.mxu0
    %v6443 = vpack.c.bf16 %v5862, %v5859
    %v6444 = vpack.c.bf16 %v5867, %v5867
    %v6445 = vpack.c.bf16 %v5913, %v5910
    %v6446 = vpack.c.bf16 %v5918, %v5918
    %v6447 = vpack.c.bf16 %v5964, %v5961
    %v6448 = vpack.c.bf16 %v5969, %v5969
    %v6449 = vpack.c.bf16 %v6015, %v6012
    %v6450 = vpack.c.bf16 %v6020, %v6020
    %v6451 = vpack.c.bf16 %v6071, %v6068
    %v6452 = vpack.c.bf16 %v6076, %v6076
    %v6453 = vpack.c.bf16 %v6122, %v6119
    %v6454 = vpack.c.bf16 %v6127, %v6127
    %v6455 = vpack.c.bf16 %v6173, %v6170
    %v6456 = vpack.c.bf16 %v6178, %v6178
    %v6457 = vpack.c.bf16 %v6224, %v6221
    %v6458 = vpack.c.bf16 %v6229, %v6229
    %v6460 = vsel %vm913, %v6443, 0
    %v6463 = vsel %vm913, %v6444, 0
    %v6466 = vsel %vm913, %v6451, 0
    %v6469 = vsel %vm913, %v6452, 0
    %6471 = vmatprep.subr.bf16.mxu0 0
    %6472 = vmatpush1.bf16.xpose.msra.mxu0 %v6466
    %6473 = vmatprep.subr.bf16.mxu0 0
    %6474 = vmatpush1.bf16.xpose.msra.mxu0 %v6469
    %6475 = vmatprep.subr.bf16.mxu0 0
    %6476 = vmatpush1.bf16.xpose.msra.mxu0 0
    %6477 = vmatprep.subr.bf16.mxu0 0
    %6478 = vmatpush1.bf16.xpose.msra.mxu0 0
    %6479 = vmatprep.subr.bf16.mxu0 0
    %6480 = vmatpush1.bf16.xpose.msra.mxu0 0
    %6481 = vmatprep.subr.bf16.mxu0 0
    %6482 = vmatpush1.bf16.xpose.msra.mxu0 0
    %6483 = vmatprep.subr.bf16.mxu0 0
    %6484 = vmatpush1.bf16.xpose.msra.mxu0 0
    %6485 = vmatprep.subr.bf16.mxu0 0
    %6486 = vmatpush1.bf16.xpose.msra.mxu0 0
    %6487 = vmatprep.subr.bf16.mxu0 0
    %6488 = vmatpush1.bf16.xpose.msra.mxu0 0
    %6489 = vmatprep.subr.bf16.mxu0 0
    %6490 = vmatpush1.bf16.xpose.msra.mxu0 0
    %6491 = vmatprep.subr.bf16.mxu0 0
    %6492 = vmatpush1.bf16.xpose.msra.mxu0 0
    %6493 = vmatprep.subr.bf16.mxu0 0
    %6494 = vmatpush1.bf16.xpose.msra.mxu0 0
    %6495 = vmatprep.subr.bf16.mxu0 0
    %6496 = vmatpush1.bf16.xpose.msra.mxu0 0
    %6497 = vmatprep.subr.bf16.mxu0 0
    %6498 = vmatpush1.bf16.xpose.msra.mxu0 0
    %6499 = vmatprep.subr.bf16.mxu0 0
    %6500 = vmatpush1.bf16.xpose.msra.mxu0 0
    %6501 = vmatprep.subr.bf16.mxu0 0
    %6502 = vmatpush1.bf16.xpose.msra.mxu0 0
    %6503 = vmatprep.mubr.bf16.mxu0 0
    %6504 = vmatmul.mubr.bf16.gmra.mrb[0].mxu0 %v6460
    %v6505 = vpop.f32.mrb[0].mxu0
    %v6506 = vadd.f32 %v29, %v6505
    %v6507 = vpop.f32.mrb[0].mxu0
    %v6508 = vpop.f32.mrb[0].mxu0
    %v6509 = vadd.f32 %v30, %v6508
    %v6510 = vpop.f32.mrb[0].mxu0
    %6511 = vmatprep.mubr.bf16.mxu0 0
    %6512 = vmatmul.mubr.bf16.gmra.mrb[0].mxu0 %v6463
    %v6513 = vpop.f32.mrb[0].mxu0
    %v6514 = vadd.f32 %v31, %v6513
    %v6515 = vpop.f32.mrb[0].mxu0
    %v6516 = vpop.f32.mrb[0].mxu0
    %v6517 = vpop.f32.mrb[0].mxu0
    %6518 = vdwg.mxu0
    %v6520 = vsel %vm913, %v6445, 0
    %v6523 = vsel %vm913, %v6446, 0
    %v6526 = vsel %vm913, %v6453, 0
    %v6529 = vsel %vm913, %v6454, 0
    %6531 = vmatprep.subr.bf16.mxu0 0
    %6532 = vmatpush1.bf16.xpose.msra.mxu0 %v6526
    %6533 = vmatprep.subr.bf16.mxu0 0
    %6534 = vmatpush1.bf16.xpose.msra.mxu0 %v6529
    %6535 = vmatprep.subr.bf16.mxu0 0
    %6536 = vmatpush1.bf16.xpose.msra.mxu0 0
    %6537 = vmatprep.subr.bf16.mxu0 0
    %6538 = vmatpush1.bf16.xpose.msra.mxu0 0
    %6539 = vmatprep.subr.bf16.mxu0 0
    %6540 = vmatpush1.bf16.xpose.msra.mxu0 0
    %6541 = vmatprep.subr.bf16.mxu0 0
    %6542 = vmatpush1.bf16.xpose.msra.mxu0 0
    %6543 = vmatprep.subr.bf16.mxu0 0
    %6544 = vmatpush1.bf16.xpose.msra.mxu0 0
    %6545 = vmatprep.subr.bf16.mxu0 0
    %6546 = vmatpush1.bf16.xpose.msra.mxu0 0
    %6547 = vmatprep.subr.bf16.mxu0 0
    %6548 = vmatpush1.bf16.xpose.msra.mxu0 0
    %6549 = vmatprep.subr.bf16.mxu0 0
    %6550 = vmatpush1.bf16.xpose.msra.mxu0 0
    %6551 = vmatprep.subr.bf16.mxu0 0
    %6552 = vmatpush1.bf16.xpose.msra.mxu0 0
    %6553 = vmatprep.subr.bf16.mxu0 0
    %6554 = vmatpush1.bf16.xpose.msra.mxu0 0
    %6555 = vmatprep.subr.bf16.mxu0 0
    %6556 = vmatpush1.bf16.xpose.msra.mxu0 0
    %6557 = vmatprep.subr.bf16.mxu0 0
    %6558 = vmatpush1.bf16.xpose.msra.mxu0 0
    %6559 = vmatprep.subr.bf16.mxu0 0
    %6560 = vmatpush1.bf16.xpose.msra.mxu0 0
    %6561 = vmatprep.subr.bf16.mxu0 0
    %6562 = vmatpush1.bf16.xpose.msra.mxu0 0
    %6563 = vmatprep.mubr.bf16.mxu0 0
    %6564 = vmatmul.mubr.bf16.gmra.mrb[0].mxu0 %v6520
    %v6565 = vpop.f32.mrb[0].mxu0
    %v6566 = vadd.f32 %v29, %v6565
    %v6567 = vpop.f32.mrb[0].mxu0
    %v6568 = vpop.f32.mrb[0].mxu0
    %v6569 = vadd.f32 %v30, %v6568
    %v6570 = vpop.f32.mrb[0].mxu0
    %6571 = vmatprep.mubr.bf16.mxu0 0
    %6572 = vmatmul.mubr.bf16.gmra.mrb[0].mxu0 %v6523
    %v6573 = vpop.f32.mrb[0].mxu0
    %v6574 = vadd.f32 %v31, %v6573
    %v6575 = vpop.f32.mrb[0].mxu0
    %v6576 = vpop.f32.mrb[0].mxu0
    %v6577 = vpop.f32.mrb[0].mxu0
    %6578 = vdwg.mxu0
    %v6580 = vsel %vm913, %v6447, 0
    %v6583 = vsel %vm913, %v6448, 0
    %v6586 = vsel %vm913, %v6455, 0
    %v6589 = vsel %vm913, %v6456, 0
    %6591 = vmatprep.subr.bf16.mxu0 0
    %6592 = vmatpush1.bf16.xpose.msra.mxu0 %v6586
    %6593 = vmatprep.subr.bf16.mxu0 0
    %6594 = vmatpush1.bf16.xpose.msra.mxu0 %v6589
    %6595 = vmatprep.subr.bf16.mxu0 0
    %6596 = vmatpush1.bf16.xpose.msra.mxu0 0
    %6597 = vmatprep.subr.bf16.mxu0 0
    %6598 = vmatpush1.bf16.xpose.msra.mxu0 0
    %6599 = vmatprep.subr.bf16.mxu0 0
    %6600 = vmatpush1.bf16.xpose.msra.mxu0 0
    %6601 = vmatprep.subr.bf16.mxu0 0
    %6602 = vmatpush1.bf16.xpose.msra.mxu0 0
    %6603 = vmatprep.subr.bf16.mxu0 0
    %6604 = vmatpush1.bf16.xpose.msra.mxu0 0
    %6605 = vmatprep.subr.bf16.mxu0 0
    %6606 = vmatpush1.bf16.xpose.msra.mxu0 0
    %6607 = vmatprep.subr.bf16.mxu0 0
    %6608 = vmatpush1.bf16.xpose.msra.mxu0 0
    %6609 = vmatprep.subr.bf16.mxu0 0
    %6610 = vmatpush1.bf16.xpose.msra.mxu0 0
    %6611 = vmatprep.subr.bf16.mxu0 0
    %6612 = vmatpush1.bf16.xpose.msra.mxu0 0
    %6613 = vmatprep.subr.bf16.mxu0 0
    %6614 = vmatpush1.bf16.xpose.msra.mxu0 0
    %6615 = vmatprep.subr.bf16.mxu0 0
    %6616 = vmatpush1.bf16.xpose.msra.mxu0 0
    %6617 = vmatprep.subr.bf16.mxu0 0
    %6618 = vmatpush1.bf16.xpose.msra.mxu0 0
    %6619 = vmatprep.subr.bf16.mxu0 0
    %6620 = vmatpush1.bf16.xpose.msra.mxu0 0
    %6621 = vmatprep.subr.bf16.mxu0 0
    %6622 = vmatpush1.bf16.xpose.msra.mxu0 0
    %6623 = vmatprep.mubr.bf16.mxu0 0
    %6624 = vmatmul.mubr.bf16.gmra.mrb[0].mxu0 %v6580
    %v6625 = vpop.f32.mrb[0].mxu0
    %v6626 = vadd.f32 %v29, %v6625
    %v6627 = vpop.f32.mrb[0].mxu0
    %v6628 = vpop.f32.mrb[0].mxu0
    %v6629 = vadd.f32 %v30, %v6628
    %v6630 = vpop.f32.mrb[0].mxu0
    %6631 = vmatprep.mubr.bf16.mxu0 0
    %6632 = vmatmul.mubr.bf16.gmra.mrb[0].mxu0 %v6583
    %v6633 = vpop.f32.mrb[0].mxu0
    %v6634 = vadd.f32 %v31, %v6633
    %v6635 = vpop.f32.mrb[0].mxu0
    %v6636 = vpop.f32.mrb[0].mxu0
    %v6637 = vpop.f32.mrb[0].mxu0
    %6638 = vdwg.mxu0
    %v6640 = vsel %vm913, %v6449, 0
    %v6643 = vsel %vm913, %v6450, 0
    %v6646 = vsel %vm913, %v6457, 0
    %v6649 = vsel %vm913, %v6458, 0
    %6651 = vmatprep.subr.bf16.mxu0 0
    %6652 = vmatpush1.bf16.xpose.msra.mxu0 %v6646
    %6653 = vmatprep.subr.bf16.mxu0 0
    %6654 = vmatpush1.bf16.xpose.msra.mxu0 %v6649
    %6655 = vmatprep.subr.bf16.mxu0 0
    %6656 = vmatpush1.bf16.xpose.msra.mxu0 0
    %6657 = vmatprep.subr.bf16.mxu0 0
    %6658 = vmatpush1.bf16.xpose.msra.mxu0 0
    %6659 = vmatprep.subr.bf16.mxu0 0
    %6660 = vmatpush1.bf16.xpose.msra.mxu0 0
    %6661 = vmatprep.subr.bf16.mxu0 0
    %6662 = vmatpush1.bf16.xpose.msra.mxu0 0
    %6663 = vmatprep.subr.bf16.mxu0 0
    %6664 = vmatpush1.bf16.xpose.msra.mxu0 0
    %6665 = vmatprep.subr.bf16.mxu0 0
    %6666 = vmatpush1.bf16.xpose.msra.mxu0 0
    %6667 = vmatprep.subr.bf16.mxu0 0
    %6668 = vmatpush1.bf16.xpose.msra.mxu0 0
    %6669 = vmatprep.subr.bf16.mxu0 0
    %6670 = vmatpush1.bf16.xpose.msra.mxu0 0
    %6671 = vmatprep.subr.bf16.mxu0 0
    %6672 = vmatpush1.bf16.xpose.msra.mxu0 0
    %6673 = vmatprep.subr.bf16.mxu0 0
    %6674 = vmatpush1.bf16.xpose.msra.mxu0 0
    %6675 = vmatprep.subr.bf16.mxu0 0
    %6676 = vmatpush1.bf16.xpose.msra.mxu0 0
    %6677 = vmatprep.subr.bf16.mxu0 0
    %6678 = vmatpush1.bf16.xpose.msra.mxu0 0
    %6679 = vmatprep.subr.bf16.mxu0 0
    %6680 = vmatpush1.bf16.xpose.msra.mxu0 0
    %6681 = vmatprep.subr.bf16.mxu0 0
    %6682 = vmatpush1.bf16.xpose.msra.mxu0 0
    %6683 = vmatprep.mubr.bf16.mxu0 0
    %6684 = vmatmul.mubr.bf16.gmra.mrb[0].mxu0 %v6640
    %v6685 = vpop.f32.mrb[0].mxu0
    %v6686 = vadd.f32 %v29, %v6685
    %v6687 = vpop.f32.mrb[0].mxu0
    %v6688 = vpop.f32.mrb[0].mxu0
    %v6689 = vadd.f32 %v30, %v6688
    %v6690 = vpop.f32.mrb[0].mxu0
    %6691 = vmatprep.mubr.bf16.mxu0 0
    %6692 = vmatmul.mubr.bf16.gmra.mrb[0].mxu0 %v6643
    %v6693 = vpop.f32.mrb[0].mxu0
    %v6694 = vadd.f32 %v31, %v6693
    %v6695 = vpop.f32.mrb[0].mxu0
    %v6696 = vpop.f32.mrb[0].mxu0
    %v6697 = vpop.f32.mrb[0].mxu0
    %6698 = vdwg.mxu0
    %v6699 = vsel %vm1154, %v6506, -inf
    %6700 = vmax.xlane.f32.xlu0 %v6699
    %v6701 = vpop.xlane.xlu0 %6700
    %v6702 = vsel %vm1154, %v6509, -inf
    %6703 = vmax.xlane.f32.xlu0 %v6702
    %v6704 = vpop.xlane.xlu0 %6703
    %v6705 = vsel %vm1161, %v6514, -inf
    %6706 = vmax.xlane.f32.xlu0 %v6705
    %v6707 = vpop.xlane.xlu0 %6706
    %v6708 = vsel %vm1154, %v6566, -inf
    %6709 = vmax.xlane.f32.xlu0 %v6708
    %v6710 = vpop.xlane.xlu0 %6709
    %v6711 = vsel %vm1154, %v6569, -inf
    %6712 = vmax.xlane.f32.xlu0 %v6711
    %v6713 = vpop.xlane.xlu0 %6712
    %v6714 = vsel %vm1161, %v6574, -inf
    %6715 = vmax.xlane.f32.xlu0 %v6714
    %v6716 = vpop.xlane.xlu0 %6715
    %v6717 = vsel %vm1154, %v6626, -inf
    %6718 = vmax.xlane.f32.xlu0 %v6717
    %v6719 = vpop.xlane.xlu0 %6718
    %v6720 = vsel %vm1154, %v6629, -inf
    %6721 = vmax.xlane.f32.xlu0 %v6720
    %v6722 = vpop.xlane.xlu0 %6721
    %v6723 = vsel %vm1161, %v6634, -inf
    %6724 = vmax.xlane.f32.xlu0 %v6723
    %v6725 = vpop.xlane.xlu0 %6724
    %v6726 = vsel %vm1154, %v6686, -inf
    %6727 = vmax.xlane.f32.xlu0 %v6726
    %v6728 = vpop.xlane.xlu0 %6727
    %v6729 = vsel %vm1154, %v6689, -inf
    %6730 = vmax.xlane.f32.xlu0 %v6729
    %v6731 = vpop.xlane.xlu0 %6730
    %v6732 = vsel %vm1161, %v6694, -inf
    %6733 = vmax.xlane.f32.xlu0 %v6732
    %v6734 = vpop.xlane.xlu0 %6733
    %v6735 = vsub.f32 %v6506, %v6701
    %v6736 = vsub.f32 %v6509, %v6704
    %v6737 = vsub.f32 %v6514, %v6707
    %v6738 = vsub.f32 %v6566, %v6710
    %v6739 = vsub.f32 %v6569, %v6713
    %v6740 = vsub.f32 %v6574, %v6716
    %v6741 = vsub.f32 %v6626, %v6719
    %v6742 = vsub.f32 %v6629, %v6722
    %v6743 = vsub.f32 %v6634, %v6725
    %v6744 = vsub.f32 %v6686, %v6728
    %v6745 = vsub.f32 %v6689, %v6731
    %v6746 = vsub.f32 %v6694, %v6734
    %v6747 = vmul.f32 %v6735, 1.442695
    %v6748 = vpow.pop %v6747
    %v6749 = vmul.f32 %v6736, 1.442695
    %v6750 = vpow.pop %v6749
    %v6751 = vmul.f32 %v6737, 1.442695
    %v6752 = vpow.pop %v6751
    %v6753 = vmul.f32 %v6738, 1.442695
    %v6754 = vpow.pop %v6753
    %v6755 = vmul.f32 %v6739, 1.442695
    %v6756 = vpow.pop %v6755
    %v6757 = vmul.f32 %v6740, 1.442695
    %v6758 = vpow.pop %v6757
    %v6759 = vmul.f32 %v6741, 1.442695
    %v6760 = vpow.pop %v6759
    %v6761 = vmul.f32 %v6742, 1.442695
    %v6762 = vpow.pop %v6761
    %v6763 = vmul.f32 %v6743, 1.442695
    %v6764 = vpow.pop %v6763
    %v6765 = vmul.f32 %v6744, 1.442695
    %v6766 = vpow.pop %v6765
    %v6767 = vmul.f32 %v6745, 1.442695
    %v6768 = vpow.pop %v6767
    %v6769 = vmul.f32 %v6746, 1.442695
    %v6770 = vpow.pop %v6769
    %v6771 = vsel %vm1154, %v6748, 0.0
    %6772 = vadd.xlane.f32.xlu0 %v6771
    %v6773 = vpop.xlane.xlu0 %6772
    %v6774 = vsel %vm1154, %v6750, 0.0
    %6775 = vadd.xlane.f32.xlu0 %v6774
    %v6776 = vpop.xlane.xlu0 %6775
    %v6777 = vsel %vm1161, %v6752, 0.0
    %6778 = vadd.xlane.f32.xlu0 %v6777
    %v6779 = vpop.xlane.xlu0 %6778
    %v6780 = vsel %vm1154, %v6754, 0.0
    %6781 = vadd.xlane.f32.xlu0 %v6780
    %v6782 = vpop.xlane.xlu0 %6781
    %v6783 = vsel %vm1154, %v6756, 0.0
    %6784 = vadd.xlane.f32.xlu0 %v6783
    %v6785 = vpop.xlane.xlu0 %6784
    %v6786 = vsel %vm1161, %v6758, 0.0
    %6787 = vadd.xlane.f32.xlu0 %v6786
    %v6788 = vpop.xlane.xlu0 %6787
    %v6789 = vsel %vm1154, %v6760, 0.0
    %6790 = vadd.xlane.f32.xlu0 %v6789
    %v6791 = vpop.xlane.xlu0 %6790
    %v6792 = vsel %vm1154, %v6762, 0.0
    %6793 = vadd.xlane.f32.xlu0 %v6792
    %v6794 = vpop.xlane.xlu0 %6793
    %v6795 = vsel %vm1161, %v6764, 0.0
    %6796 = vadd.xlane.f32.xlu0 %v6795
    %v6797 = vpop.xlane.xlu0 %6796
    %v6798 = vsel %vm1154, %v6766, 0.0
    %6799 = vadd.xlane.f32.xlu0 %v6798
    %v6800 = vpop.xlane.xlu0 %6799
    %v6801 = vsel %vm1154, %v6768, 0.0
    %6802 = vadd.xlane.f32.xlu0 %v6801
    %v6803 = vpop.xlane.xlu0 %6802
    %v6804 = vsel %vm1161, %v6770, 0.0
    %6805 = vadd.xlane.f32.xlu0 %v6804
    %v6806 = vpop.xlane.xlu0 %6805
    %v6807 = vrcp.pop %v6773
    %v6808 = vrcp.pop %v6776
    %v6809 = vrcp.pop %v6779
    %v6810 = vrcp.pop %v6782
    %v6811 = vrcp.pop %v6785
    %v6812 = vrcp.pop %v6788
    %v6813 = vrcp.pop %v6791
    %v6814 = vrcp.pop %v6794
    %v6815 = vrcp.pop %v6797
    %v6816 = vrcp.pop %v6800
    %v6817 = vrcp.pop %v6803
    %v6818 = vrcp.pop %v6806
    %v6819 = vmul.f32 %v6748, %v6807
    %v6820 = vmul.f32 %v6750, %v6808
    %v6821 = vmul.f32 %v6752, %v6809
    %v6822 = vmul.f32 %v6754, %v6810
    %v6823 = vmul.f32 %v6756, %v6811
    %v6824 = vmul.f32 %v6758, %v6812
    %v6825 = vmul.f32 %v6760, %v6813
    %v6826 = vmul.f32 %v6762, %v6814
    %v6827 = vmul.f32 %v6764, %v6815
    %v6828 = vmul.f32 %v6766, %v6816
    %v6829 = vmul.f32 %v6768, %v6817
    %v6830 = vmul.f32 %v6770, %v6818
    %v6831 = vpack.c.bf16 %v6820, %v6819
    %v6832 = vpack.c.bf16 %v6821, %v6821
    %v6833 = vpack.c.bf16 %v6823, %v6822
    %v6834 = vpack.c.bf16 %v6824, %v6824
    %v6835 = vpack.c.bf16 %v6826, %v6825
    %v6836 = vpack.c.bf16 %v6827, %v6827
    %v6837 = vpack.c.bf16 %v6829, %v6828
    %v6838 = vpack.c.bf16 %v6830, %v6830
    %v6839 = vpack.c.bf16 %v6280, %v6277
    %v6840 = vpack.c.bf16 %v6285, %v6285
    %v6841 = vpack.c.bf16 %v6331, %v6328
    %v6842 = vpack.c.bf16 %v6336, %v6336
    %v6843 = vpack.c.bf16 %v6382, %v6379
    %v6844 = vpack.c.bf16 %v6387, %v6387
    %v6845 = vpack.c.bf16 %v6433, %v6430
    %v6846 = vpack.c.bf16 %v6438, %v6438
    %v6848 = vsel %vm1154, %v6831, 0
    %v6851 = vsel %vm1154, %v6832, 0
    %v6854 = vsel %vm1310, %v6840, 0
    %6856 = vmatprep.subr.bf16.mxu0 0
    %6857 = vmatpush1.bf16.msra.mxu0 %v6839
    %6858 = vmatprep.subr.bf16.mxu0 0
    %6859 = vmatpush1.bf16.msra.mxu0 %v6854
    %6860 = vmatprep.subr.bf16.mxu0 0
    %6861 = vmatpush1.bf16.msra.mxu0 0
    %6862 = vmatprep.subr.bf16.mxu0 0
    %6863 = vmatpush1.bf16.msra.mxu0 0
    %6864 = vmatprep.subr.bf16.mxu0 0
    %6865 = vmatpush1.bf16.msra.mxu0 0
    %6866 = vmatprep.subr.bf16.mxu0 0
    %6867 = vmatpush1.bf16.msra.mxu0 0
    %6868 = vmatprep.subr.bf16.mxu0 0
    %6869 = vmatpush1.bf16.msra.mxu0 0
    %6870 = vmatprep.subr.bf16.mxu0 0
    %6871 = vmatpush1.bf16.msra.mxu0 0
    %6872 = vmatprep.subr.bf16.mxu0 0
    %6873 = vmatpush1.bf16.msra.mxu0 0
    %6874 = vmatprep.subr.bf16.mxu0 0
    %6875 = vmatpush1.bf16.msra.mxu0 0
    %6876 = vmatprep.subr.bf16.mxu0 0
    %6877 = vmatpush1.bf16.msra.mxu0 0
    %6878 = vmatprep.subr.bf16.mxu0 0
    %6879 = vmatpush1.bf16.msra.mxu0 0
    %6880 = vmatprep.subr.bf16.mxu0 0
    %6881 = vmatpush1.bf16.msra.mxu0 0
    %6882 = vmatprep.subr.bf16.mxu0 0
    %6883 = vmatpush1.bf16.msra.mxu0 0
    %6884 = vmatprep.subr.bf16.mxu0 0
    %6885 = vmatpush1.bf16.msra.mxu0 0
    %6886 = vmatprep.subr.bf16.mxu0 0
    %6887 = vmatpush1.bf16.msra.mxu0 0
    %6888 = vmatprep.mubr.bf16.mxu0 0
    %6889 = vmatmul.mubr.bf16.gmra.mrb[0].mxu0 %v6848
    %v6890 = vpop.f32.mrb[0].mxu0
    %v6891 = vadd.f32 0.0, %v6890
    %v6892 = vpop.f32.mrb[0].mxu0
    %v6893 = vpop.f32.mrb[0].mxu0
    %v6894 = vadd.f32 0.0, %v6893
    %v6895 = vpop.f32.mrb[0].mxu0
    %6896 = vmatprep.mubr.bf16.mxu0 0
    %6897 = vmatmul.mubr.bf16.gmra.mrb[0].mxu0 %v6851
    %v6898 = vpop.f32.mrb[0].mxu0
    %v6899 = vadd.f32 0.0, %v6898
    %v6900 = vpop.f32.mrb[0].mxu0
    %v6901 = vpop.f32.mrb[0].mxu0
    %v6902 = vpop.f32.mrb[0].mxu0
    %6903 = vdwg.mxu0
    %v6905 = vsel %vm1154, %v6833, 0
    %v6908 = vsel %vm1154, %v6834, 0
    %v6911 = vsel %vm1310, %v6842, 0
    %6913 = vmatprep.subr.bf16.mxu0 0
    %6914 = vmatpush1.bf16.msra.mxu0 %v6841
    %6915 = vmatprep.subr.bf16.mxu0 0
    %6916 = vmatpush1.bf16.msra.mxu0 %v6911
    %6917 = vmatprep.subr.bf16.mxu0 0
    %6918 = vmatpush1.bf16.msra.mxu0 0
    %6919 = vmatprep.subr.bf16.mxu0 0
    %6920 = vmatpush1.bf16.msra.mxu0 0
    %6921 = vmatprep.subr.bf16.mxu0 0
    %6922 = vmatpush1.bf16.msra.mxu0 0
    %6923 = vmatprep.subr.bf16.mxu0 0
    %6924 = vmatpush1.bf16.msra.mxu0 0
    %6925 = vmatprep.subr.bf16.mxu0 0
    %6926 = vmatpush1.bf16.msra.mxu0 0
    %6927 = vmatprep.subr.bf16.mxu0 0
    %6928 = vmatpush1.bf16.msra.mxu0 0
    %6929 = vmatprep.subr.bf16.mxu0 0
    %6930 = vmatpush1.bf16.msra.mxu0 0
    %6931 = vmatprep.subr.bf16.mxu0 0
    %6932 = vmatpush1.bf16.msra.mxu0 0
    %6933 = vmatprep.subr.bf16.mxu0 0
    %6934 = vmatpush1.bf16.msra.mxu0 0
    %6935 = vmatprep.subr.bf16.mxu0 0
    %6936 = vmatpush1.bf16.msra.mxu0 0
    %6937 = vmatprep.subr.bf16.mxu0 0
    %6938 = vmatpush1.bf16.msra.mxu0 0
    %6939 = vmatprep.subr.bf16.mxu0 0
    %6940 = vmatpush1.bf16.msra.mxu0 0
    %6941 = vmatprep.subr.bf16.mxu0 0
    %6942 = vmatpush1.bf16.msra.mxu0 0
    %6943 = vmatprep.subr.bf16.mxu0 0
    %6944 = vmatpush1.bf16.msra.mxu0 0
    %6945 = vmatprep.mubr.bf16.mxu0 0
    %6946 = vmatmul.mubr.bf16.gmra.mrb[0].mxu0 %v6905
    %v6947 = vpop.f32.mrb[0].mxu0
    %v6948 = vadd.f32 0.0, %v6947
    %v6949 = vpop.f32.mrb[0].mxu0
    %v6950 = vpop.f32.mrb[0].mxu0
    %v6951 = vadd.f32 0.0, %v6950
    %v6952 = vpop.f32.mrb[0].mxu0
    %6953 = vmatprep.mubr.bf16.mxu0 0
    %6954 = vmatmul.mubr.bf16.gmra.mrb[0].mxu0 %v6908
    %v6955 = vpop.f32.mrb[0].mxu0
    %v6956 = vadd.f32 0.0, %v6955
    %v6957 = vpop.f32.mrb[0].mxu0
    %v6958 = vpop.f32.mrb[0].mxu0
    %v6959 = vpop.f32.mrb[0].mxu0
    %6960 = vdwg.mxu0
    %v6962 = vsel %vm1154, %v6835, 0
    %v6965 = vsel %vm1154, %v6836, 0
    %v6968 = vsel %vm1310, %v6844, 0
    %6970 = vmatprep.subr.bf16.mxu0 0
    %6971 = vmatpush1.bf16.msra.mxu0 %v6843
    %6972 = vmatprep.subr.bf16.mxu0 0
    %6973 = vmatpush1.bf16.msra.mxu0 %v6968
    %6974 = vmatprep.subr.bf16.mxu0 0
    %6975 = vmatpush1.bf16.msra.mxu0 0
    %6976 = vmatprep.subr.bf16.mxu0 0
    %6977 = vmatpush1.bf16.msra.mxu0 0
    %6978 = vmatprep.subr.bf16.mxu0 0
    %6979 = vmatpush1.bf16.msra.mxu0 0
    %6980 = vmatprep.subr.bf16.mxu0 0
    %6981 = vmatpush1.bf16.msra.mxu0 0
    %6982 = vmatprep.subr.bf16.mxu0 0
    %6983 = vmatpush1.bf16.msra.mxu0 0
    %6984 = vmatprep.subr.bf16.mxu0 0
    %6985 = vmatpush1.bf16.msra.mxu0 0
    %6986 = vmatprep.subr.bf16.mxu0 0
    %6987 = vmatpush1.bf16.msra.mxu0 0
    %6988 = vmatprep.subr.bf16.mxu0 0
    %6989 = vmatpush1.bf16.msra.mxu0 0
    %6990 = vmatprep.subr.bf16.mxu0 0
    %6991 = vmatpush1.bf16.msra.mxu0 0
    %6992 = vmatprep.subr.bf16.mxu0 0
    %6993 = vmatpush1.bf16.msra.mxu0 0
    %6994 = vmatprep.subr.bf16.mxu0 0
    %6995 = vmatpush1.bf16.msra.mxu0 0
    %6996 = vmatprep.subr.bf16.mxu0 0
    %6997 = vmatpush1.bf16.msra.mxu0 0
    %6998 = vmatprep.subr.bf16.mxu0 0
    %6999 = vmatpush1.bf16.msra.mxu0 0
    %7000 = vmatprep.subr.bf16.mxu0 0
    %7001 = vmatpush1.bf16.msra.mxu0 0
    %7002 = vmatprep.mubr.bf16.mxu0 0
    %7003 = vmatmul.mubr.bf16.gmra.mrb[0].mxu0 %v6962
    %v7004 = vpop.f32.mrb[0].mxu0
    %v7005 = vadd.f32 0.0, %v7004
    %v7006 = vpop.f32.mrb[0].mxu0
    %v7007 = vpop.f32.mrb[0].mxu0
    %v7008 = vadd.f32 0.0, %v7007
    %v7009 = vpop.f32.mrb[0].mxu0
    %7010 = vmatprep.mubr.bf16.mxu0 0
    %7011 = vmatmul.mubr.bf16.gmra.mrb[0].mxu0 %v6965
    %v7012 = vpop.f32.mrb[0].mxu0
    %v7013 = vadd.f32 0.0, %v7012
    %v7014 = vpop.f32.mrb[0].mxu0
    %v7015 = vpop.f32.mrb[0].mxu0
    %v7016 = vpop.f32.mrb[0].mxu0
    %7017 = vdwg.mxu0
    %v7019 = vsel %vm1154, %v6837, 0
    %v7022 = vsel %vm1154, %v6838, 0
    %v7025 = vsel %vm1310, %v6846, 0
    %7027 = vmatprep.subr.bf16.mxu0 0
    %7028 = vmatpush1.bf16.msra.mxu0 %v6845
    %7029 = vmatprep.subr.bf16.mxu0 0
    %7030 = vmatpush1.bf16.msra.mxu0 %v7025
    %7031 = vmatprep.subr.bf16.mxu0 0
    %7032 = vmatpush1.bf16.msra.mxu0 0
    %7033 = vmatprep.subr.bf16.mxu0 0
    %7034 = vmatpush1.bf16.msra.mxu0 0
    %7035 = vmatprep.subr.bf16.mxu0 0
    %7036 = vmatpush1.bf16.msra.mxu0 0
    %7037 = vmatprep.subr.bf16.mxu0 0
    %7038 = vmatpush1.bf16.msra.mxu0 0
    %7039 = vmatprep.subr.bf16.mxu0 0
    %7040 = vmatpush1.bf16.msra.mxu0 0
    %7041 = vmatprep.subr.bf16.mxu0 0
    %7042 = vmatpush1.bf16.msra.mxu0 0
    %7043 = vmatprep.subr.bf16.mxu0 0
    %7044 = vmatpush1.bf16.msra.mxu0 0
    %7045 = vmatprep.subr.bf16.mxu0 0
    %7046 = vmatpush1.bf16.msra.mxu0 0
    %7047 = vmatprep.subr.bf16.mxu0 0
    %7048 = vmatpush1.bf16.msra.mxu0 0
    %7049 = vmatprep.subr.bf16.mxu0 0
    %7050 = vmatpush1.bf16.msra.mxu0 0
    %7051 = vmatprep.subr.bf16.mxu0 0
    %7052 = vmatpush1.bf16.msra.mxu0 0
    %7053 = vmatprep.subr.bf16.mxu0 0
    %7054 = vmatpush1.bf16.msra.mxu0 0
    %7055 = vmatprep.subr.bf16.mxu0 0
    %7056 = vmatpush1.bf16.msra.mxu0 0
    %7057 = vmatprep.subr.bf16.mxu0 0
    %7058 = vmatpush1.bf16.msra.mxu0 0
    %7059 = vmatprep.mubr.bf16.mxu0 0
    %7060 = vmatmul.mubr.bf16.gmra.mrb[0].mxu0 %v7019
    %v7061 = vpop.f32.mrb[0].mxu0
    %v7062 = vadd.f32 0.0, %v7061
    %v7063 = vpop.f32.mrb[0].mxu0
    %v7064 = vpop.f32.mrb[0].mxu0
    %v7065 = vadd.f32 0.0, %v7064
    %v7066 = vpop.f32.mrb[0].mxu0
    %7067 = vmatprep.mubr.bf16.mxu0 0
    %7068 = vmatmul.mubr.bf16.gmra.mrb[0].mxu0 %v7022
    %v7069 = vpop.f32.mrb[0].mxu0
    %v7070 = vadd.f32 0.0, %v7069
    %v7071 = vpop.f32.mrb[0].mxu0
    %v7072 = vpop.f32.mrb[0].mxu0
    %v7073 = vpop.f32.mrb[0].mxu0
    %7074 = vdwg.mxu0
    %v7075 = vpack.c.bf16 %v6894, %v6891
    %v7076 = vpack.c.bf16 %v6899, %v6899
    %v7077 = vpack.c.bf16 %v6951, %v6948
    %v7078 = vpack.c.bf16 %v6956, %v6956
    %v7079 = vpack.c.bf16 %v7008, %v7005
    %v7080 = vpack.c.bf16 %v7013, %v7013
    %v7081 = vpack.c.bf16 %v7065, %v7062
    %v7082 = vpack.c.bf16 %v7070, %v7070
    %s7083 = scalar_lea.vmem %s1, 240
    %v7084 = vld [vmem:[%s7083] sm:$0xf]
    %v7085 = vld [vmem:[%s7083 + $0x4] sm:$0xf]
    %v7086 = vld [vmem:[%s7083 + $0x8] sm:$0xf]
    %v7087 = vld [vmem:[%s7083 + $0xc] sm:$0xf]
    %v7089 = vsel %vm913, %v7075, 0
    %v7092 = vsel %vm913, %v7076, 0
    %v7095 = vsel %vm1552, %v7084, 0
    %7097 = vmatprep.subr.bf16.mxu0 0
    %7098 = vmatpush1.bf16.msra.mxu0 %v7095
    %7099 = vmatprep.subr.bf16.mxu0 0
    %7100 = vmatpush1.bf16.msra.mxu0 0
    %7101 = vmatprep.subr.bf16.mxu0 0
    %7102 = vmatpush1.bf16.msra.mxu0 0
    %7103 = vmatprep.subr.bf16.mxu0 0
    %7104 = vmatpush1.bf16.msra.mxu0 0
    %7105 = vmatprep.subr.bf16.mxu0 0
    %7106 = vmatpush1.bf16.msra.mxu0 0
    %7107 = vmatprep.subr.bf16.mxu0 0
    %7108 = vmatpush1.bf16.msra.mxu0 0
    %7109 = vmatprep.subr.bf16.mxu0 0
    %7110 = vmatpush1.bf16.msra.mxu0 0
    %7111 = vmatprep.subr.bf16.mxu0 0
    %7112 = vmatpush1.bf16.msra.mxu0 0
    %7113 = vmatprep.subr.bf16.mxu0 0
    %7114 = vmatpush1.bf16.msra.mxu0 0
    %7115 = vmatprep.subr.bf16.mxu0 0
    %7116 = vmatpush1.bf16.msra.mxu0 0
    %7117 = vmatprep.subr.bf16.mxu0 0
    %7118 = vmatpush1.bf16.msra.mxu0 0
    %7119 = vmatprep.subr.bf16.mxu0 0
    %7120 = vmatpush1.bf16.msra.mxu0 0
    %7121 = vmatprep.subr.bf16.mxu0 0
    %7122 = vmatpush1.bf16.msra.mxu0 0
    %7123 = vmatprep.subr.bf16.mxu0 0
    %7124 = vmatpush1.bf16.msra.mxu0 0
    %7125 = vmatprep.subr.bf16.mxu0 0
    %7126 = vmatpush1.bf16.msra.mxu0 0
    %7127 = vmatprep.subr.bf16.mxu0 0
    %7128 = vmatpush1.bf16.msra.mxu0 0
    %7129 = vmatprep.mubr.bf16.mxu0 0
    %7130 = vmatmul.mubr.bf16.gmra.mrb[0].mxu0 %v7089
    %v7131 = vpop.f32.mrb[0].mxu0
    %v7132 = vadd.f32 0.0, %v7131
    %v7133 = vpop.f32.mrb[0].mxu0
    %v7134 = vpop.f32.mrb[0].mxu0
    %v7135 = vadd.f32 0.0, %v7134
    %v7136 = vpop.f32.mrb[0].mxu0
    %7137 = vmatprep.mubr.bf16.mxu0 0
    %7138 = vmatmul.mubr.bf16.gmra.mrb[0].mxu0 %v7092
    %v7139 = vpop.f32.mrb[0].mxu0
    %v7140 = vadd.f32 0.0, %v7139
    %v7141 = vpop.f32.mrb[0].mxu0
    %v7142 = vpop.f32.mrb[0].mxu0
    %v7143 = vpop.f32.mrb[0].mxu0
    %7144 = vdwg.mxu0
    %v7146 = vsel %vm913, %v7077, 0
    %v7149 = vsel %vm913, %v7078, 0
    %v7152 = vsel %vm1552, %v7085, 0
    %7154 = vmatprep.subr.bf16.mxu0 0
    %7155 = vmatpush1.bf16.msra.mxu0 %v7152
    %7156 = vmatprep.subr.bf16.mxu0 0
    %7157 = vmatpush1.bf16.msra.mxu0 0
    %7158 = vmatprep.subr.bf16.mxu0 0
    %7159 = vmatpush1.bf16.msra.mxu0 0
    %7160 = vmatprep.subr.bf16.mxu0 0
    %7161 = vmatpush1.bf16.msra.mxu0 0
    %7162 = vmatprep.subr.bf16.mxu0 0
    %7163 = vmatpush1.bf16.msra.mxu0 0
    %7164 = vmatprep.subr.bf16.mxu0 0
    %7165 = vmatpush1.bf16.msra.mxu0 0
    %7166 = vmatprep.subr.bf16.mxu0 0
    %7167 = vmatpush1.bf16.msra.mxu0 0
    %7168 = vmatprep.subr.bf16.mxu0 0
    %7169 = vmatpush1.bf16.msra.mxu0 0
    %7170 = vmatprep.subr.bf16.mxu0 0
    %7171 = vmatpush1.bf16.msra.mxu0 0
    %7172 = vmatprep.subr.bf16.mxu0 0
    %7173 = vmatpush1.bf16.msra.mxu0 0
    %7174 = vmatprep.subr.bf16.mxu0 0
    %7175 = vmatpush1.bf16.msra.mxu0 0
    %7176 = vmatprep.subr.bf16.mxu0 0
    %7177 = vmatpush1.bf16.msra.mxu0 0
    %7178 = vmatprep.subr.bf16.mxu0 0
    %7179 = vmatpush1.bf16.msra.mxu0 0
    %7180 = vmatprep.subr.bf16.mxu0 0
    %7181 = vmatpush1.bf16.msra.mxu0 0
    %7182 = vmatprep.subr.bf16.mxu0 0
    %7183 = vmatpush1.bf16.msra.mxu0 0
    %7184 = vmatprep.subr.bf16.mxu0 0
    %7185 = vmatpush1.bf16.msra.mxu0 0
    %7186 = vmatprep.mubr.bf16.mxu0 0
    %7187 = vmatmul.mubr.bf16.gmra.mrb[0].mxu0 %v7146
    %v7188 = vpop.f32.mrb[0].mxu0
    %v7189 = vadd.f32 0.0, %v7188
    %v7190 = vpop.f32.mrb[0].mxu0
    %v7191 = vpop.f32.mrb[0].mxu0
    %v7192 = vadd.f32 0.0, %v7191
    %v7193 = vpop.f32.mrb[0].mxu0
    %7194 = vmatprep.mubr.bf16.mxu0 0
    %7195 = vmatmul.mubr.bf16.gmra.mrb[0].mxu0 %v7149
    %v7196 = vpop.f32.mrb[0].mxu0
    %v7197 = vadd.f32 0.0, %v7196
    %v7198 = vpop.f32.mrb[0].mxu0
    %v7199 = vpop.f32.mrb[0].mxu0
    %v7200 = vpop.f32.mrb[0].mxu0
    %7201 = vdwg.mxu0
    %v7203 = vsel %vm913, %v7079, 0
    %v7206 = vsel %vm913, %v7080, 0
    %v7209 = vsel %vm1552, %v7086, 0
    %7211 = vmatprep.subr.bf16.mxu0 0
    %7212 = vmatpush1.bf16.msra.mxu0 %v7209
    %7213 = vmatprep.subr.bf16.mxu0 0
    %7214 = vmatpush1.bf16.msra.mxu0 0
    %7215 = vmatprep.subr.bf16.mxu0 0
    %7216 = vmatpush1.bf16.msra.mxu0 0
    %7217 = vmatprep.subr.bf16.mxu0 0
    %7218 = vmatpush1.bf16.msra.mxu0 0
    %7219 = vmatprep.subr.bf16.mxu0 0
    %7220 = vmatpush1.bf16.msra.mxu0 0
    %7221 = vmatprep.subr.bf16.mxu0 0
    %7222 = vmatpush1.bf16.msra.mxu0 0
    %7223 = vmatprep.subr.bf16.mxu0 0
    %7224 = vmatpush1.bf16.msra.mxu0 0
    %7225 = vmatprep.subr.bf16.mxu0 0
    %7226 = vmatpush1.bf16.msra.mxu0 0
    %7227 = vmatprep.subr.bf16.mxu0 0
    %7228 = vmatpush1.bf16.msra.mxu0 0
    %7229 = vmatprep.subr.bf16.mxu0 0
    %7230 = vmatpush1.bf16.msra.mxu0 0
    %7231 = vmatprep.subr.bf16.mxu0 0
    %7232 = vmatpush1.bf16.msra.mxu0 0
    %7233 = vmatprep.subr.bf16.mxu0 0
    %7234 = vmatpush1.bf16.msra.mxu0 0
    %7235 = vmatprep.subr.bf16.mxu0 0
    %7236 = vmatpush1.bf16.msra.mxu0 0
    %7237 = vmatprep.subr.bf16.mxu0 0
    %7238 = vmatpush1.bf16.msra.mxu0 0
    %7239 = vmatprep.subr.bf16.mxu0 0
    %7240 = vmatpush1.bf16.msra.mxu0 0
    %7241 = vmatprep.subr.bf16.mxu0 0
    %7242 = vmatpush1.bf16.msra.mxu0 0
    %7243 = vmatprep.mubr.bf16.mxu0 0
    %7244 = vmatmul.mubr.bf16.gmra.mrb[0].mxu0 %v7203
    %v7245 = vpop.f32.mrb[0].mxu0
    %v7246 = vadd.f32 0.0, %v7245
    %v7247 = vpop.f32.mrb[0].mxu0
    %v7248 = vpop.f32.mrb[0].mxu0
    %v7249 = vadd.f32 0.0, %v7248
    %v7250 = vpop.f32.mrb[0].mxu0
    %7251 = vmatprep.mubr.bf16.mxu0 0
    %7252 = vmatmul.mubr.bf16.gmra.mrb[0].mxu0 %v7206
    %v7253 = vpop.f32.mrb[0].mxu0
    %v7254 = vadd.f32 0.0, %v7253
    %v7255 = vpop.f32.mrb[0].mxu0
    %v7256 = vpop.f32.mrb[0].mxu0
    %v7257 = vpop.f32.mrb[0].mxu0
    %7258 = vdwg.mxu0
    %v7260 = vsel %vm913, %v7081, 0
    %v7263 = vsel %vm913, %v7082, 0
    %v7266 = vsel %vm1552, %v7087, 0
    %7268 = vmatprep.subr.bf16.mxu0 0
    %7269 = vmatpush1.bf16.msra.mxu0 %v7266
    %7270 = vmatprep.subr.bf16.mxu0 0
    %7271 = vmatpush1.bf16.msra.mxu0 0
    %7272 = vmatprep.subr.bf16.mxu0 0
    %7273 = vmatpush1.bf16.msra.mxu0 0
    %7274 = vmatprep.subr.bf16.mxu0 0
    %7275 = vmatpush1.bf16.msra.mxu0 0
    %7276 = vmatprep.subr.bf16.mxu0 0
    %7277 = vmatpush1.bf16.msra.mxu0 0
    %7278 = vmatprep.subr.bf16.mxu0 0
    %7279 = vmatpush1.bf16.msra.mxu0 0
    %7280 = vmatprep.subr.bf16.mxu0 0
    %7281 = vmatpush1.bf16.msra.mxu0 0
    %7282 = vmatprep.subr.bf16.mxu0 0
    %7283 = vmatpush1.bf16.msra.mxu0 0
    %7284 = vmatprep.subr.bf16.mxu0 0
    %7285 = vmatpush1.bf16.msra.mxu0 0
    %7286 = vmatprep.subr.bf16.mxu0 0
    %7287 = vmatpush1.bf16.msra.mxu0 0
    %7288 = vmatprep.subr.bf16.mxu0 0
    %7289 = vmatpush1.bf16.msra.mxu0 0
    %7290 = vmatprep.subr.bf16.mxu0 0
    %7291 = vmatpush1.bf16.msra.mxu0 0
    %7292 = vmatprep.subr.bf16.mxu0 0
    %7293 = vmatpush1.bf16.msra.mxu0 0
    %7294 = vmatprep.subr.bf16.mxu0 0
    %7295 = vmatpush1.bf16.msra.mxu0 0
    %7296 = vmatprep.subr.bf16.mxu0 0
    %7297 = vmatpush1.bf16.msra.mxu0 0
    %7298 = vmatprep.subr.bf16.mxu0 0
    %7299 = vmatpush1.bf16.msra.mxu0 0
    %7300 = vmatprep.mubr.bf16.mxu0 0
    %7301 = vmatmul.mubr.bf16.gmra.mrb[0].mxu0 %v7260
    %v7302 = vpop.f32.mrb[0].mxu0
    %v7303 = vadd.f32 0.0, %v7302
    %v7304 = vpop.f32.mrb[0].mxu0
    %v7305 = vpop.f32.mrb[0].mxu0
    %v7306 = vadd.f32 0.0, %v7305
    %v7307 = vpop.f32.mrb[0].mxu0
    %7308 = vmatprep.mubr.bf16.mxu0 0
    %7309 = vmatmul.mubr.bf16.gmra.mrb[0].mxu0 %v7263
    %v7310 = vpop.f32.mrb[0].mxu0
    %v7311 = vadd.f32 0.0, %v7310
    %v7312 = vpop.f32.mrb[0].mxu0
    %v7313 = vpop.f32.mrb[0].mxu0
    %v7314 = vpop.f32.mrb[0].mxu0
    %7315 = vdwg.mxu0
    %v7316 = vsel %vm206, %v7132, 0.0
    %v7317 = vsel %vm206, %v7189, 0.0
    %v7318 = vadd.f32 %v7316, %v7317
    %v7319 = vsel %vm206, %v7246, 0.0
    %v7320 = vadd.f32 %v7318, %v7319
    %v7321 = vsel %vm206, %v7303, 0.0
    %v7322 = vadd.f32 %v7320, %v7321
    %v7323 = vsel %vm206, %v7135, 0.0
    %v7324 = vsel %vm206, %v7192, 0.0
    %v7325 = vadd.f32 %v7323, %v7324
    %v7326 = vsel %vm206, %v7249, 0.0
    %v7327 = vadd.f32 %v7325, %v7326
    %v7328 = vsel %vm206, %v7306, 0.0
    %v7329 = vadd.f32 %v7327, %v7328
    %v7330 = vsel %vm213, %v7140, 0.0
    %v7331 = vsel %vm213, %v7197, 0.0
    %v7332 = vadd.f32 %v7330, %v7331
    %v7333 = vsel %vm213, %v7254, 0.0
    %v7334 = vadd.f32 %v7332, %v7333
    %v7335 = vsel %vm213, %v7311, 0.0
    %v7336 = vadd.f32 %v7334, %v7335
    %v7337 = vlaneseq
    %v7338 = vshrl.u32 %v7337, 7
    %v7339 = vsub.s32 0, %v7338
    %v7340 = vrot.slane %v5807, %v7339
    %v7341 = vadd.f32 %v7322, %v7340
    %v7342 = vadd.f32 %v7329, %v7340
    %v7343 = vadd.f32 %v7336, %v7340
    %v7345 = vsel %vm1552, %v7343, 0
    %7347 = vmatprep.subr.mxu0 0.0
    %7348 = vmatpush1.msra.mxu0 %v7341
    %7349 = vmatprep.subr.mxu0 0.0
    %7350 = vmatpush1.msra.mxu0 %v7342
    %7351 = vmatprep.subr.mxu0 0.0
    %7352 = vmatpush1.msra.mxu0 %v7345
    %7353 = vmatprep.subr.mxu0 0.0
    %7354 = vmatpush1.msra.mxu0 0.0
    %7355 = vmatprep.subr.mxu0 0.0
    %7356 = vmatpush1.msra.mxu0 0.0
    %7357 = vmatprep.subr.mxu0 0.0
    %7358 = vmatpush1.msra.mxu0 0.0
    %7359 = vmatprep.subr.mxu0 0.0
    %7360 = vmatpush1.msra.mxu0 0.0
    %7361 = vmatprep.subr.mxu0 0.0
    %7362 = vmatpush1.msra.mxu0 0.0
    %7363 = vmatprep.subr.mxu0 0.0
    %7364 = vmatpush1.msra.mxu0 0.0
    %7365 = vmatprep.subr.mxu0 0.0
    %7366 = vmatpush1.msra.mxu0 0.0
    %7367 = vmatprep.subr.mxu0 0.0
    %7368 = vmatpush1.msra.mxu0 0.0
    %7369 = vmatprep.subr.mxu0 0.0
    %7370 = vmatpush1.msra.mxu0 0.0
    %7371 = vmatprep.subr.mxu0 0.0
    %7372 = vmatpush1.msra.mxu0 0.0
    %7373 = vmatprep.subr.mxu0 0.0
    %7374 = vmatpush1.msra.mxu0 0.0
    %7375 = vmatprep.subr.mxu0 0.0
    %7376 = vmatpush1.msra.mxu0 0.0
    %7377 = vmatprep.subr.mxu0 0.0
    %7378 = vmatpush1.msra.mxu0 0.0
    %7379 = vmatprep.subr.mxu0 0.0
    %7380 = vmatpush1.msra.mxu0 0.0
    %7381 = vmatprep.subr.mxu0 0.0
    %7382 = vmatpush1.msra.mxu0 0.0
    %7383 = vmatprep.subr.mxu0 0.0
    %7384 = vmatpush1.msra.mxu0 0.0
    %7385 = vmatprep.subr.mxu0 0.0
    %7386 = vmatpush1.msra.mxu0 0.0
    %7387 = vmatprep.subr.mxu0 0.0
    %7388 = vmatpush1.msra.mxu0 0.0
    %7389 = vmatprep.subr.mxu0 0.0
    %7390 = vmatpush1.msra.mxu0 0.0
    %7391 = vmatprep.subr.mxu0 0.0
    %7392 = vmatpush1.msra.mxu0 0.0
    %7393 = vmatprep.subr.mxu0 0.0
    %7394 = vmatpush1.msra.mxu0 0.0
    %7395 = vmatprep.subr.mxu0 0.0
    %7396 = vmatpush1.msra.mxu0 0.0
    %7397 = vmatprep.subr.mxu0 0.0
    %7398 = vmatpush1.msra.mxu0 0.0
    %7399 = vmatprep.subr.mxu0 0.0
    %7400 = vmatpush1.msra.mxu0 0.0
    %7401 = vmatprep.subr.mxu0 0.0
    %7402 = vmatpush1.msra.mxu0 0.0
    %7403 = vmatprep.subr.mxu0 0.0
    %7404 = vmatpush1.msra.mxu0 0.0
    %7405 = vmatprep.subr.mxu0 0.0
    %7406 = vmatpush1.msra.mxu0 0.0
    %7407 = vmatprep.subr.mxu0 0.0
    %7408 = vmatpush1.msra.mxu0 0.0
    %7409 = vmatprep.subr.mxu0 0.0
    %7410 = vmatpush1.msra.mxu0 0.0
    %7411 = vmatprep.mubr.f32.mxu0 0.0
    %7412 = vmatmul.mubr.f32.gmra.mrb[0].mxu0 %v3568
    %v7413 = vpop.f32.mrb[0].mxu0
    %v7414 = vadd.f32 0.0, %v7413
    %v7415 = vpop.f32.mrb[0].mxu0
    %7416 = vmatprep.mubr.f32.mxu0 0.0
    %7417 = vmatmul.mubr.f32.gmra.mrb[0].mxu0 %v3571
    %v7418 = vpop.f32.mrb[0].mxu0
    %v7419 = vadd.f32 0.0, %v7418
    %v7420 = vpop.f32.mrb[0].mxu0
    %7421 = vmatprep.mubr.f32.mxu0 0.0
    %7422 = vmatmul.mubr.f32.gmra.mrb[0].mxu0 %v3574
    %v7423 = vpop.f32.mrb[0].mxu0
    %v7424 = vadd.f32 0.0, %v7423
    %v7425 = vpop.f32.mrb[0].mxu0
    %7426 = vdwg.mxu0
    %v7427 = vadd.f32 %v5749, %v7414
    %v7428 = vadd.f32 %v5750, %v7419
    %v7429 = vadd.f32 %v5751, %v7424
    %v7430 = vld [vmem:[%s3 + $0x27] sm:$0x1]
    %v7431 = vld [vmem:[%s3 + $0x28] sm:$0x1]
    %v7432 = vsel %vm206, %v7427, 0.0
    %7433 = vadd.xlane.f32.xlu0 %v7432
    %v7434 = vpop.xlane.xlu0 %7433
    %v7435 = vsel %vm206, %v7428, 0.0
    %7436 = vadd.xlane.f32.xlu0 %v7435
    %v7437 = vpop.xlane.xlu0 %7436
    %v7438 = vsel %vm213, %v7429, 0.0
    %7439 = vadd.xlane.f32.xlu0 %v7438
    %v7440 = vpop.xlane.xlu0 %7439
    %v7441 = vmul.f32 %v7434, %v217
    %v7442 = vmul.f32 %v7437, %v217
    %v7443 = vmul.f32 %v7440, %v217
    %v7444 = vsub.f32 %v7427, %v7441
    %v7445 = vsub.f32 %v7428, %v7442
    %v7446 = vsub.f32 %v7429, %v7443
    %v7447 = vmul.f32 %v7444, %v7444
    %v7448 = vmul.f32 %v7445, %v7445
    %v7449 = vmul.f32 %v7446, %v7446
    %v7450 = vsel %vm206, %v7447, 0.0
    %7451 = vadd.xlane.f32.xlu0 %v7450
    %v7452 = vpop.xlane.xlu0 %7451
    %v7453 = vsel %vm206, %v7448, 0.0
    %7454 = vadd.xlane.f32.xlu0 %v7453
    %v7455 = vpop.xlane.xlu0 %7454
    %v7456 = vsel %vm213, %v7449, 0.0
    %7457 = vadd.xlane.f32.xlu0 %v7456
    %v7458 = vpop.xlane.xlu0 %7457
    %v7459 = vmul.f32 %v7452, %v217
    %v7460 = vmul.f32 %v7455, %v217
    %v7461 = vmul.f32 %v7458, %v217
    %v7462 = vadd.f32 %v7459, 1e-05
    %v7463 = vadd.f32 %v7460, 1e-05
    %v7464 = vadd.f32 %v7461, 1e-05
    %v7465 = vrsqrt.pop %v7462
    %v7466 = vrsqrt.pop %v7463
    %v7467 = vrsqrt.pop %v7464
    %v7468 = vmul.f32 %v7444, %v7465
    %v7469 = vmul.f32 %v7445, %v7466
    %v7470 = vmul.f32 %v7446, %v7467
    %v7471 = vlaneseq
    %v7472 = vshrl.u32 %v7471, 7
    %v7473 = vsub.s32 0, %v7472
    %v7474 = vrot.slane %v7430, %v7473
    %v7475 = vmul.f32 %v7468, %v7474
    %v7476 = vmul.f32 %v7469, %v7474
    %v7477 = vmul.f32 %v7470, %v7474
    %v7478 = vlaneseq
    %v7479 = vshrl.u32 %v7478, 7
    %v7480 = vsub.s32 0, %v7479
    %v7481 = vrot.slane %v7431, %v7480
    %v7482 = vadd.f32 %v7475, %v7481
    %v7483 = vadd.f32 %v7476, %v7481
    %v7484 = vadd.f32 %v7477, %v7481
    %v7485 = vpack.c.bf16 %v7483, %v7482
    %v7486 = vpack.c.bf16 %v7484, %v7484
    %v7487 = vld [vmem:[%s2 + $0x100] sm:$0xf]
    %v7488 = vld [vmem:[%s2 + $0x104] sm:$0xf]
    %v7489 = vld [vmem:[%s2 + $0x108] sm:$0xf]
    %v7490 = vld [vmem:[%s2 + $0x10c] sm:$0xf]
    %v7491 = vld [vmem:[%s2 + $0x110] sm:$0xf]
    %v7492 = vld [vmem:[%s2 + $0x114] sm:$0xf]
    %v7493 = vld [vmem:[%s2 + $0x118] sm:$0xf]
    %v7494 = vld [vmem:[%s2 + $0x11c] sm:$0xf]
    %v7495 = vld [vmem:[%s2 + $0x120] sm:$0xf]
    %v7496 = vld [vmem:[%s2 + $0x124] sm:$0xf]
    %v7497 = vld [vmem:[%s2 + $0x128] sm:$0xf]
    %v7498 = vld [vmem:[%s2 + $0x12c] sm:$0xf]
    %v7499 = vld [vmem:[%s2 + $0x130] sm:$0xf]
    %v7500 = vld [vmem:[%s2 + $0x134] sm:$0xf]
    %v7501 = vld [vmem:[%s2 + $0x138] sm:$0xf]
    %v7502 = vld [vmem:[%s2 + $0x13c] sm:$0xf]
    %s7503 = scalar_lea.vmem %s5, 1
    %v7504 = vld [vmem:[%s7503] sm:$0x1]
    %v7506 = vlaneseq
    %v7507 = vshrl.u32 %v7506, 7
    %v7508 = vsub.s32 0, %v7507
    %v7509 = vrot.slane %v7504, %v7508
    %v7527 = vunpack.c.l.b16 %v7487
    %v7528 = vunpack.c.l.b16 %v7488
    %v7529 = vunpack.c.l.b16 %v7489
    %v7530 = vunpack.c.l.b16 %v7490
    %v7531 = vunpack.c.l.b16 %v7491
    %v7532 = vunpack.c.l.b16 %v7492
    %v7533 = vunpack.c.l.b16 %v7493
    %v7534 = vunpack.c.l.b16 %v7494
    %v7535 = vunpack.c.l.b16 %v7495
    %v7536 = vunpack.c.l.b16 %v7496
    %v7537 = vunpack.c.l.b16 %v7497
    %v7538 = vunpack.c.l.b16 %v7498
    %v7539 = vunpack.c.l.b16 %v7499
    %v7540 = vunpack.c.l.b16 %v7500
    %v7541 = vunpack.c.l.b16 %v7501
    %v7542 = vunpack.c.l.b16 %v7502
    %v7543 = vpack.c.b16 %v7528, %v7527
    %v7544 = vpack.c.b16 %v7530, %v7529
    %v7545 = vpack.c.b16 %v7532, %v7531
    %v7546 = vpack.c.b16 %v7534, %v7533
    %v7547 = vpack.c.b16 %v7536, %v7535
    %v7548 = vpack.c.b16 %v7538, %v7537
    %v7549 = vpack.c.b16 %v7540, %v7539
    %v7550 = vpack.c.b16 %v7542, %v7541
    %v7552 = vsel %vm206, %v7485, 0
    %v7555 = vsel %vm206, %v7486, 0
    %v7558 = vsel %vm206, %v7543, 0
    %v7561 = vsel %vm206, %v7544, 0
    %v7564 = vsel %vm206, %v7545, 0
    %v7567 = vsel %vm206, %v7546, 0
    %v7570 = vsel %vm206, %v7547, 0
    %v7573 = vsel %vm206, %v7548, 0
    %v7576 = vsel %vm206, %v7549, 0
    %v7579 = vsel %vm206, %v7550, 0
    %7581 = vmatprep.subr.bf16.mxu0 0
    %7582 = vmatpush1.bf16.xpose.msra.mxu0 %v7558
    %7583 = vmatprep.subr.bf16.mxu0 0
    %7584 = vmatpush1.bf16.xpose.msra.mxu0 %v7561
    %7585 = vmatprep.subr.bf16.mxu0 0
    %7586 = vmatpush1.bf16.xpose.msra.mxu0 %v7564
    %7587 = vmatprep.subr.bf16.mxu0 0
    %7588 = vmatpush1.bf16.xpose.msra.mxu0 %v7567
    %7589 = vmatprep.subr.bf16.mxu0 0
    %7590 = vmatpush1.bf16.xpose.msra.mxu0 %v7570
    %7591 = vmatprep.subr.bf16.mxu0 0
    %7592 = vmatpush1.bf16.xpose.msra.mxu0 %v7573
    %7593 = vmatprep.subr.bf16.mxu0 0
    %7594 = vmatpush1.bf16.xpose.msra.mxu0 %v7576
    %7595 = vmatprep.subr.bf16.mxu0 0
    %7596 = vmatpush1.bf16.xpose.msra.mxu0 %v7579
    %7597 = vmatprep.subr.bf16.mxu0 0
    %7598 = vmatpush1.bf16.xpose.msra.mxu0 0
    %7599 = vmatprep.subr.bf16.mxu0 0
    %7600 = vmatpush1.bf16.xpose.msra.mxu0 0
    %7601 = vmatprep.subr.bf16.mxu0 0
    %7602 = vmatpush1.bf16.xpose.msra.mxu0 0
    %7603 = vmatprep.subr.bf16.mxu0 0
    %7604 = vmatpush1.bf16.xpose.msra.mxu0 0
    %7605 = vmatprep.subr.bf16.mxu0 0
    %7606 = vmatpush1.bf16.xpose.msra.mxu0 0
    %7607 = vmatprep.subr.bf16.mxu0 0
    %7608 = vmatpush1.bf16.xpose.msra.mxu0 0
    %7609 = vmatprep.subr.bf16.mxu0 0
    %7610 = vmatpush1.bf16.xpose.msra.mxu0 0
    %7611 = vmatprep.subr.bf16.mxu0 0
    %7612 = vmatpush1.bf16.xpose.msra.mxu0 0
    %7613 = vmatprep.mubr.bf16.mxu0 0
    %7614 = vmatmul.mubr.bf16.gmra.mrb[0].mxu0 %v7552
    %v7615 = vpop.f32.mrb[0].mxu0
    %v7616 = vadd.f32 %v7509, %v7615
    %v7617 = vpop.f32.mrb[0].mxu0
    %v7618 = vpop.f32.mrb[0].mxu0
    %v7619 = vadd.f32 %v7509, %v7618
    %v7620 = vpop.f32.mrb[0].mxu0
    %7621 = vmatprep.mubr.bf16.mxu0 0
    %7622 = vmatmul.mubr.bf16.gmra.mrb[0].mxu0 %v7555
    %v7623 = vpop.f32.mrb[0].mxu0
    %v7624 = vadd.f32 %v7509, %v7623
    %v7625 = vpop.f32.mrb[0].mxu0
    %v7626 = vpop.f32.mrb[0].mxu0
    %v7627 = vpop.f32.mrb[0].mxu0
    %7628 = vdwg.mxu0
    %v7629 = vmul.f32 %v7616, 0.5
    %v7630 = vmul.f32 %v7619, 0.5
    %v7631 = vmul.f32 %v7624, 0.5
    %v7632 = vmul.f32 %v7616, 0.70710677
    %v7633 = vmul.f32 %v7619, 0.70710677
    %v7634 = vmul.f32 %v7624, 0.70710677
    %v7635 = verf.f32.pop %v7632
    %v7636 = verf.f32.pop %v7633
    %v7637 = verf.f32.pop %v7634
    %v7638 = vadd.f32 %v7635, 1.0
    %v7639 = vadd.f32 %v7636, 1.0
    %v7640 = vadd.f32 %v7637, 1.0
    %v7641 = vmul.f32 %v7629, %v7638
    %v7642 = vmul.f32 %v7630, %v7639
    %v7643 = vmul.f32 %v7631, %v7640
    %v7644 = vpack.c.bf16 %v7642, %v7641
    %v7645 = vpack.c.bf16 %v7643, %v7643
    %v7646 = vld [vmem:[%s2 + $0x140] sm:$0xf]
    %v7647 = vld [vmem:[%s2 + $0x144] sm:$0xf]
    %v7648 = vld [vmem:[%s2 + $0x148] sm:$0xf]
    %v7649 = vld [vmem:[%s2 + $0x14c] sm:$0xf]
    %v7650 = vld [vmem:[%s2 + $0x150] sm:$0xf]
    %v7651 = vld [vmem:[%s2 + $0x154] sm:$0xf]
    %v7652 = vld [vmem:[%s2 + $0x158] sm:$0xf]
    %v7653 = vld [vmem:[%s2 + $0x15c] sm:$0xf]
    %v7654 = vld [vmem:[%s2 + $0x160] sm:$0xf]
    %v7655 = vld [vmem:[%s2 + $0x164] sm:$0xf]
    %v7656 = vld [vmem:[%s2 + $0x168] sm:$0xf]
    %v7657 = vld [vmem:[%s2 + $0x16c] sm:$0xf]
    %v7658 = vld [vmem:[%s2 + $0x170] sm:$0xf]
    %v7659 = vld [vmem:[%s2 + $0x174] sm:$0xf]
    %v7660 = vld [vmem:[%s2 + $0x178] sm:$0xf]
    %v7661 = vld [vmem:[%s2 + $0x17c] sm:$0xf]
    %v7662 = vld [vmem:[%s3 + $0x29] sm:$0x1]
    %v7663 = vlaneseq
    %v7664 = vshrl.u32 %v7663, 7
    %v7665 = vsub.s32 0, %v7664
    %v7666 = vrot.slane %v7662, %v7665
    %v7683 = vunpack.c.l.b16 %v7646
    %v7684 = vunpack.c.l.b16 %v7647
    %v7685 = vunpack.c.l.b16 %v7648
    %v7686 = vunpack.c.l.b16 %v7649
    %v7687 = vunpack.c.l.b16 %v7650
    %v7688 = vunpack.c.l.b16 %v7651
    %v7689 = vunpack.c.l.b16 %v7652
    %v7690 = vunpack.c.l.b16 %v7653
    %v7691 = vunpack.c.l.b16 %v7654
    %v7692 = vunpack.c.l.b16 %v7655
    %v7693 = vunpack.c.l.b16 %v7656
    %v7694 = vunpack.c.l.b16 %v7657
    %v7695 = vunpack.c.l.b16 %v7658
    %v7696 = vunpack.c.l.b16 %v7659
    %v7697 = vunpack.c.l.b16 %v7660
    %v7698 = vunpack.c.l.b16 %v7661
    %v7699 = vpack.c.b16 %v7684, %v7683
    %v7700 = vpack.c.b16 %v7686, %v7685
    %v7701 = vpack.c.b16 %v7688, %v7687
    %v7702 = vpack.c.b16 %v7690, %v7689
    %v7703 = vpack.c.b16 %v7692, %v7691
    %v7704 = vpack.c.b16 %v7694, %v7693
    %v7705 = vpack.c.b16 %v7696, %v7695
    %v7706 = vpack.c.b16 %v7698, %v7697
    %7715 = vmatprep.subr.bf16.mxu0 0
    %7716 = vmatpush1.bf16.msra.mxu0 %v7699
    %7717 = vmatprep.subr.bf16.mxu0 0
    %7718 = vmatpush1.bf16.msra.mxu0 %v7700
    %7719 = vmatprep.subr.bf16.mxu0 0
    %7720 = vmatpush1.bf16.msra.mxu0 %v7701
    %7721 = vmatprep.subr.bf16.mxu0 0
    %7722 = vmatpush1.bf16.msra.mxu0 %v7702
    %7723 = vmatprep.subr.bf16.mxu0 0
    %7724 = vmatpush1.bf16.msra.mxu0 %v7703
    %7725 = vmatprep.subr.bf16.mxu0 0
    %7726 = vmatpush1.bf16.msra.mxu0 %v7704
    %7727 = vmatprep.subr.bf16.mxu0 0
    %7728 = vmatpush1.bf16.msra.mxu0 %v7705
    %7729 = vmatprep.subr.bf16.mxu0 0
    %7730 = vmatpush1.bf16.msra.mxu0 %v7706
    %7731 = vmatprep.subr.bf16.mxu0 0
    %7732 = vmatpush1.bf16.msra.mxu0 0
    %7733 = vmatprep.subr.bf16.mxu0 0
    %7734 = vmatpush1.bf16.msra.mxu0 0
    %7735 = vmatprep.subr.bf16.mxu0 0
    %7736 = vmatpush1.bf16.msra.mxu0 0
    %7737 = vmatprep.subr.bf16.mxu0 0
    %7738 = vmatpush1.bf16.msra.mxu0 0
    %7739 = vmatprep.subr.bf16.mxu0 0
    %7740 = vmatpush1.bf16.msra.mxu0 0
    %7741 = vmatprep.subr.bf16.mxu0 0
    %7742 = vmatpush1.bf16.msra.mxu0 0
    %7743 = vmatprep.subr.bf16.mxu0 0
    %7744 = vmatpush1.bf16.msra.mxu0 0
    %7745 = vmatprep.subr.bf16.mxu0 0
    %7746 = vmatpush1.bf16.msra.mxu0 0
    %7747 = vmatprep.mubr.bf16.mxu0 0
    %7748 = vmatmul.mubr.bf16.gmra.mrb[0].mxu0 %v7644
    %v7749 = vpop.f32.mrb[0].mxu0
    %v7750 = vadd.f32 %v7666, %v7749
    %v7751 = vpop.f32.mrb[0].mxu0
    %v7752 = vpop.f32.mrb[0].mxu0
    %v7753 = vadd.f32 %v7666, %v7752
    %v7754 = vpop.f32.mrb[0].mxu0
    %7755 = vmatprep.mubr.bf16.mxu0 0
    %7756 = vmatmul.mubr.bf16.gmra.mrb[0].mxu0 %v7645
    %v7757 = vpop.f32.mrb[0].mxu0
    %v7758 = vpop.f32.mrb[0].mxu0
    %v7759 = vpop.f32.mrb[0].mxu0
    %v7760 = vpop.f32.mrb[0].mxu0
    %7761 = vdwg.mxu0
    %v7762 = vadd.f32 %v7427, %v7750
    %v7763 = vadd.f32 %v7428, %v7753
    %v7764 = vld [vmem:[%s3 + $0x14] sm:$0x1]
    %v7765 = vld [vmem:[%s3 + $0x15] sm:$0x1]
    %v7766 = vsel %vm206, %v7762, 0.0
    %7767 = vadd.xlane.f32.xlu0 %v7766
    %v7768 = vpop.xlane.xlu0 %7767
    %v7769 = vsel %vm206, %v7763, 0.0
    %7770 = vadd.xlane.f32.xlu0 %v7769
    %v7771 = vpop.xlane.xlu0 %7770
    %v7772 = vmul.f32 %v7768, %v217
    %v7773 = vmul.f32 %v7771, %v217
    %v7774 = vsub.f32 %v7762, %v7772
    %v7775 = vsub.f32 %v7763, %v7773
    %v7776 = vmul.f32 %v7774, %v7774
    %v7777 = vmul.f32 %v7775, %v7775
    %v7778 = vsel %vm206, %v7776, 0.0
    %7779 = vadd.xlane.f32.xlu0 %v7778
    %v7780 = vpop.xlane.xlu0 %7779
    %v7781 = vsel %vm206, %v7777, 0.0
    %7782 = vadd.xlane.f32.xlu0 %v7781
    %v7783 = vpop.xlane.xlu0 %7782
    %v7784 = vmul.f32 %v7780, %v217
    %v7785 = vmul.f32 %v7783, %v217
    %v7786 = vadd.f32 %v7784, 1e-05
    %v7787 = vadd.f32 %v7785, 1e-05
    %v7788 = vrsqrt.pop %v7786
    %v7789 = vrsqrt.pop %v7787
    %v7790 = vmul.f32 %v7774, %v7788
    %v7791 = vmul.f32 %v7775, %v7789
    %v7792 = vlaneseq
    %v7793 = vshrl.u32 %v7792, 7
    %v7794 = vsub.s32 0, %v7793
    %v7795 = vrot.slane %v7764, %v7794
    %v7796 = vmul.f32 %v7790, %v7795
    %v7797 = vmul.f32 %v7791, %v7795
    %v7798 = vlaneseq
    %v7799 = vshrl.u32 %v7798, 7
    %v7800 = vsub.s32 0, %v7799
    %v7801 = vrot.slane %v7765, %v7800
    %v7802 = vadd.f32 %v7796, %v7801
    %v7803 = vadd.f32 %v7797, %v7801
    %vm7804 = vcmask 253952
    %7805 = vst.msk [vmem:[#allocation2] sm:$0x1] %vm7804, %v7802
    %vm7806 = vcmask 256002
    %7807 = vst.msk [vmem:[#allocation2 - $0x1] sm:$0x4] %vm7806, %v7803
    // Predicated region
    $region26: #{vit_forward.1} parent=1 // pred_check
      _
    $region27: #{vit_forward.1} parent=1 // pred_check_branch
      %7809 = sbr.rel (0) target = $region29
    $region28: #{vit_forward.1} parent=1 // pred_region
      %s7811 = ssub.s32 32, 32
      %7812 = vsyncadd [#allocation3], %s7811
      %s7814 = sshll.u32 [#allocation2], 4
      %s7815 = int_to_ptr.vmem [resolvable:$true] %s7814
      %7817 = dma.vmem_to_hbm [thread:$0]  %s7815, 32, %s6, [#allocation3]
    $region29: #{vit_forward.1} parent=1 // pred_fallthru
      _
    // Predicated region
    $region30: #{vit_forward.1} parent=1 // pred_check
      _
    $region31: #{vit_forward.1} parent=1 // pred_check_branch
      %7819 = sbr.rel (0) target = $region33
    $region32: #{vit_forward.1} parent=1 // pred_region
      %7820 = dma.done [#allocation3], 32
    $region33: #{vit_forward.1} parent=1 // pred_fallthru
      _
    %7821 = vsyncpa [#allocation3], 1

</llo_original>
